<compile_context>
chip_gen: v6e
topology: v6e:2x2x1
jax: 0.10.0
libtpu: 0.0.40
codegen_flags: <defaults>
</compile_context>

<pallas_src>
import functools

import jax
import jax.numpy as jnp
import numpy as np
from jax import lax
from jax.experimental import pallas as pl
from jax.experimental.pallas import tpu as pltpu


def _convlstm_kernel(xh_ref, c_ref, w_ref, m_ref, h_out_ref, c_out_ref,
                     patch_ref, *, K, W, Cpad, Cb):
    # xh_ref:    (Cpad, N)   combined [h | x] activations, channel-padded
    # c_ref:     (Cb, N)     this block's slice of the cell state
    # w_ref:     (1, 4*Cb, K*K*Cpad + 8) fused conv weight (+ bias column)
    # m_ref:     (K*K, 1, N) per-tap 0/1 validity masks (conv zero padding)
    # patch_ref: VMEM scratch (K*K*Cpad + 8, N) holding the im2col patch
    N = xh_ref.shape[1]
    pad = (K - 1) // 2

    comb = xh_ref[...]                         # (Cpad, N), lane-dense

    # Build the im2col patch directly into sublane-aligned VMEM scratch:
    # one XLU lane-roll + one mask multiply + one aligned slab store per tap.
    for kh in range(K):
        for kw in range(K):
            t = kh * K + kw
            off = (kh - pad) * W + (kw - pad)
            if off == 0:                       # centre tap: no shift, no mask
                slab = comb
            else:
                slab = pltpu.roll(comb, (-off) % N, 1) * m_ref[t]
            patch_ref[pl.ds(t * Cpad, Cpad), :] = slab.astype(jnp.float32)

    # Bias slab: 8 extra rows, row 0 = ones (first of the trailing weight
    # columns holds the bias) -> bias lands in the MXU accumulator for free.
    rows = lax.broadcasted_iota(jnp.int32, (8, N), 0)
    patch_ref[pl.ds(K * K * Cpad, 8), :] = (rows == 0).astype(jnp.float32)

    # One fused, deep-contraction MXU matmul: (4*Cb, Kdim) @ (Kdim, N).
    acc = jnp.dot(w_ref[0], patch_ref[...],
                  preferred_element_type=jnp.float32,
                  precision=lax.Precision.HIGHEST)

    # Gates: rows are ordered (i, f, o, g) x this block's Cb channels, so the
    # slices are full-width, sublane-aligned vregs.
    # sigmoid(x) = 0.5*(tanh(0.5*x)+1): one EUP op instead of exp + divide.
    sig = 0.5 * (jnp.tanh(0.5 * acc[:3 * Cb]) + 1.0)
    i = sig[0 * Cb:1 * Cb]
    f = sig[1 * Cb:2 * Cb]
    o = sig[2 * Cb:3 * Cb]
    g = jnp.tanh(acc[3 * Cb:4 * Cb])

    c_prev = c_ref[...].astype(jnp.float32)
    new_c = f * c_prev + i * g
    new_h = o * jnp.tanh(new_c)

    c_out_ref[...] = new_c.astype(c_out_ref.dtype)   # lane-dense stores
    h_out_ref[...] = new_h.astype(h_out_ref.dtype)


def _default_num_blocks():
    """2 channel blocks (one per TensorCore) on v7x, else 1 (single-TC)."""
    try:
        kind = jax.devices()[0].device_kind.lower()
    except Exception:
        return 1
    return 2 if ("v7" in kind or "tpu7" in kind) else 1


def _round_up(v, m):
    return (v + m - 1) // m * m


def conv_lstm_cell_forward(x, h, c, weight, bias, kernel_size,
                           num_blocks=None):
    """Matches ConvLSTMCell.forward; x/h/c are NCHW, returns (new_h, new_c)."""
    K = int(kernel_size)
    assert K % 2 == 1, "ConvLSTMCell requires odd kernel_size (padding=(K-1)/2)"
    pad = (K - 1) // 2
    B, Cin, H, W = x.shape
    Ch = h.shape[1]
    HW = H * W
    N = B * HW
    C4 = 4 * Ch

    # Channel padding to 8-sublane multiples (zero activations / zero weight
    # columns -> identical result, but every im2col slab is vreg-aligned).
    Ch_pad = _round_up(Ch, 8)
    Cin_pad = _round_up(Cin, 8)
    Cpad = Ch_pad + Cin_pad
    Kdim = K * K * Cpad + 8        # +8-row slab whose first row carries bias

    # Output-channel parallelism: 2 blocks on v7x (one per TensorCore), else 1
    # (v5e/v6e are single-TC, so extra grid steps are pure fixed overhead).
    nb = _default_num_blocks() if num_blocks is None else int(num_blocks)
    if nb < 1 or Ch % nb != 0 or (nb > 1 and (Ch // nb) % 8 != 0):
        nb = 1
    Cb = Ch // nb

    # --- Activations: fold batch into the lane dim, combined [h | x] layout.
    h2 = jnp.pad(jnp.transpose(h, (1, 0, 2, 3)).reshape(Ch, N),
                 ((0, Ch_pad - Ch), (0, 0)))
    x2 = jnp.pad(jnp.transpose(x, (1, 0, 2, 3)).reshape(Cin, N),
                 ((0, Cin_pad - Cin), (0, 0)))
    xh = jnp.concatenate([h2, x2], axis=0)                     # (Cpad, N)
    c2 = jnp.transpose(c, (1, 0, 2, 3)).reshape(Ch, N)         # (Ch, N)

    # --- Fused conv weight: tap-major columns in [h | x] channel order, plus
    # an 8-wide trailing column block whose first column is the bias.
    w_h = jnp.pad(weight[:, Cin:], ((0, 0), (0, Ch_pad - Ch), (0, 0), (0, 0)))
    w_x = jnp.pad(weight[:, :Cin], ((0, 0), (0, Cin_pad - Cin), (0, 0), (0, 0)))
    w_cat = jnp.concatenate([w_h, w_x], axis=1)                # (C4, Cpad, K, K)
    w_taps = jnp.transpose(w_cat, (0, 2, 3, 1)).reshape(C4, K * K * Cpad)
    b_cols = jnp.zeros((C4, 8), w_taps.dtype).at[:, 0].set(bias)
    w_comb = jnp.concatenate([w_taps, b_cols], axis=1)         # (C4, Kdim)
    # Reorder rows so block s holds all four gates of channels [s*Cb,(s+1)*Cb).
    w_blocks = (w_comb.reshape(4, nb, Cb, Kdim)
                .transpose(1, 0, 2, 3).reshape(nb, 4 * Cb, Kdim))

    # --- Static per-tap validity masks (conv zero padding), tiled per image;
    # they also zero lanes that a roll would carry across the image boundary.
    yy, xx = np.mgrid[0:H, 0:W]
    masks = np.empty((K * K, 1, HW), np.float32)
    for kh in range(K):
        for kw in range(K):
            dy, dx = kh - pad, kw - pad
            valid = ((yy + dy >= 0) & (yy + dy < H) &
                     (xx + dx >= 0) & (xx + dx < W))
            masks[kh * K + kw, 0] = valid.reshape(-1).astype(np.float32)
    masks = jnp.asarray(np.tile(masks, (1, 1, B)))             # (K*K, 1, N)

    # TODO(synk): for large H*W add a spatial grid axis with a (K-1)/2-row halo
    # (or per-tap accumulation) so the materialized patch stays inside v7x's
    # 64 MiB VMEM; and if this cell runs inside a time loop, lift that loop
    # into the kernel (extra "arbitrary" grid axis with h/c resident via
    # constant-index output BlockSpecs + input_output_aliases) so the weights
    # stay in VMEM across timesteps.
    kernel = functools.partial(_convlstm_kernel, K=K, W=W, Cpad=Cpad, Cb=Cb)
    new_h2, new_c2 = pl.pallas_call(
        kernel,
        out_shape=(
            jax.ShapeDtypeStruct((Ch, N), x.dtype),
            jax.ShapeDtypeStruct((Ch, N), x.dtype),
        ),
        grid=(nb,),
        in_specs=[
            pl.BlockSpec((Cpad, N), lambda s: (0, 0)),
            pl.BlockSpec((Cb, N), lambda s: (s, 0)),
            pl.BlockSpec((1, 4 * Cb, Kdim), lambda s: (s, 0, 0)),
            pl.BlockSpec((K * K, 1, N), lambda s: (0, 0, 0)),
        ],
        out_specs=(
            pl.BlockSpec((Cb, N), lambda s: (s, 0)),
            pl.BlockSpec((Cb, N), lambda s: (s, 0)),
        ),
        scratch_shapes=[pltpu.VMEM((Kdim, N), jnp.float32)],
        compiler_params=pltpu.CompilerParams(
            dimension_semantics=("parallel",),
            vmem_limit_bytes=32 * 1024 * 1024),
    )(xh, c2, w_blocks, masks)

    new_h = new_h2.reshape(Ch, B, H, W).transpose(1, 0, 2, 3)
    new_c = new_c2.reshape(Ch, B, H, W).transpose(1, 0, 2, 3)
    return new_h, new_c


def _reference_forward(x, h, c, weight_oihw, bias, kernel_size):
    """Pure-JAX reference mirroring the PyTorch module (NCHW)."""
    pad = (kernel_size - 1) // 2
    combined = jnp.concatenate([x, h], axis=1)
    A = lax.conv_general_dilated(
        combined, weight_oihw, window_strides=(1, 1),
        padding=[(pad, pad), (pad, pad)],
        dimension_numbers=("NCHW", "OIHW", "NCHW"),
        precision=lax.Precision.HIGHEST)
    A = A + bias[None, :, None, None]
    ai, af, ao, ag = jnp.split(A, 4, axis=1)
    i = jax.nn.sigmoid(ai)
    f = jax.nn.sigmoid(af)
    o = jax.nn.sigmoid(ao)
    g = jnp.tanh(ag)
    new_c = f * c + i * g
    new_h = o * jnp.tanh(new_c)
    return new_h, new_c


if __name__ == "__main__":
    B, Cin, Ch, H, W, K = 2, 4, 32, 16, 16, 3

    key = jax.random.PRNGKey(0)
    k_x, k_h, k_c, k_w, k_b = jax.random.split(key, 5)

    x = jax.random.normal(k_x, (B, Cin, H, W), dtype=jnp.float32)
    h = jax.random.normal(k_h, (B, Ch, H, W), dtype=jnp.float32)
    c = jax.random.normal(k_c, (B, Ch, H, W), dtype=jnp.float32)

    # Deterministic parameter init matching nn.Conv2d shapes:
    # weight (4*Ch, Cin+Ch, K, K), bias (4*Ch,)
    fan_in = (Cin + Ch) * K * K
    bound = 1.0 / np.sqrt(fan_in)
    weight = jax.random.uniform(k_w, (4 * Ch, Cin + Ch, K, K),
                                minval=-bound, maxval=bound, dtype=jnp.float32)
    bias = jax.random.uniform(k_b, (4 * Ch,),
                              minval=-bound, maxval=bound, dtype=jnp.float32)

    new_h, new_c = conv_lstm_cell_forward(x, h, c, weight, bias, K)
    jax.block_until_ready((new_h, new_c))

    ref_h, ref_c = _reference_forward(x, h, c, weight, bias, K)
    np.testing.assert_allclose(np.asarray(new_h), np.asarray(ref_h),
                               rtol=1e-5, atol=1e-5)
    np.testing.assert_allclose(np.asarray(new_c), np.asarray(ref_c),
                               rtol=1e-5, atol=1e-5)

    print("KERNEL_OK")
</pallas_src>

<mosaic_0001>
module attributes {stable_mosaic.version = 11 : i64} {
  func.func @_convlstm_kernel(%arg0: i32, %arg1: memref<40x512xf32, #tpu.memory_space<vmem>>, %arg2: memref<32x512xf32, #tpu.memory_space<vmem>>, %arg3: memref<1x128x368xf32, #tpu.memory_space<vmem>>, %arg4: memref<9x1x512xf32, #tpu.memory_space<vmem>>, %arg5: memref<32x512xf32, #tpu.memory_space<vmem>>, %arg6: memref<32x512xf32, #tpu.memory_space<vmem>>, %arg7: memref<368x512xf32, #tpu.memory_space<vmem>>) attributes {dimension_semantics = [#tpu.dimension_semantics<parallel>], iteration_bounds = array<i64: 1>, scalar_prefetch = 0 : i64, scratch_operands = 1 : i64, tpu.core_type = #tpu.core_type<tc>, window_params = [{pipeline_mode = #tpu.pipeline_mode<synchronous>, transform_indices = @transform_0, window_bounds = array<i64: 40, 512>}, {transform_indices = @transform_1, window_bounds = array<i64: 32, 512>}, {transform_indices = @transform_2, window_bounds = array<i64: 1, 128, 368>}, {pipeline_mode = #tpu.pipeline_mode<synchronous>, transform_indices = @transform_3, window_bounds = array<i64: 9, 1, 512>}, {transform_indices = @transform_4, window_bounds = array<i64: 32, 512>}, {transform_indices = @transform_5, window_bounds = array<i64: 32, 512>}]} {
    %c0 = arith.constant 0 : index
    %c0_0 = arith.constant 0 : index
    %0 = vector.load %arg1[%c0, %c0_0] : memref<40x512xf32, #tpu.memory_space<vmem>>, vector<40x512xf32>
    %c17_i32 = arith.constant 17 : i32
    %1 = tpu.dynamic_rotate %0 by %c17_i32 dim 1 : vector<40x512xf32>, i32 -> vector<40x512xf32>
    %c0_1 = arith.constant 0 : index
    %c0_2 = arith.constant 0 : index
    %c0_3 = arith.constant 0 : index
    %2 = vector.load %arg4[%c0_1, %c0_2, %c0_3] : memref<9x1x512xf32, #tpu.memory_space<vmem>>, vector<1x1x512xf32>
    %3 = vector.shape_cast %2 : vector<1x1x512xf32> to vector<1x512xf32>
    %4 = vector.broadcast %3 : vector<1x512xf32> to vector<40x512xf32>
    %5 = arith.mulf %1, %4 : vector<40x512xf32>
    %c0_4 = arith.constant 0 : index
    %c0_5 = arith.constant 0 : index
    %6 = vector.load %arg7[%c0_4, %c0_5] : memref<368x512xf32, #tpu.memory_space<vmem>>, vector<40x512xf32>
    tpu.vector_store %arg7[%c0_4, %c0_5], %5 {strides = array<i32>} : memref<368x512xf32, #tpu.memory_space<vmem>>, vector<40x512xf32>,
    %c16_i32 = arith.constant 16 : i32
    %7 = tpu.dynamic_rotate %0 by %c16_i32 dim 1 : vector<40x512xf32>, i32 -> vector<40x512xf32>
    %c1 = arith.constant 1 : index
    %c0_6 = arith.constant 0 : index
    %c0_7 = arith.constant 0 : index
    %8 = vector.load %arg4[%c1, %c0_6, %c0_7] : memref<9x1x512xf32, #tpu.memory_space<vmem>>, vector<1x1x512xf32>
    %9 = vector.shape_cast %8 : vector<1x1x512xf32> to vector<1x512xf32>
    %10 = vector.broadcast %9 : vector<1x512xf32> to vector<40x512xf32>
    %11 = arith.mulf %7, %10 : vector<40x512xf32>
    %c40 = arith.constant 40 : index
    %c0_8 = arith.constant 0 : index
    %12 = vector.load %arg7[%c40, %c0_8] : memref<368x512xf32, #tpu.memory_space<vmem>>, vector<40x512xf32>
    tpu.vector_store %arg7[%c40, %c0_8], %11 {strides = array<i32>} : memref<368x512xf32, #tpu.memory_space<vmem>>, vector<40x512xf32>,
    %c15_i32 = arith.constant 15 : i32
    %13 = tpu.dynamic_rotate %0 by %c15_i32 dim 1 : vector<40x512xf32>, i32 -> vector<40x512xf32>
    %c2 = arith.constant 2 : index
    %c0_9 = arith.constant 0 : index
    %c0_10 = arith.constant 0 : index
    %14 = vector.load %arg4[%c2, %c0_9, %c0_10] : memref<9x1x512xf32, #tpu.memory_space<vmem>>, vector<1x1x512xf32>
    %15 = vector.shape_cast %14 : vector<1x1x512xf32> to vector<1x512xf32>
    %16 = vector.broadcast %15 : vector<1x512xf32> to vector<40x512xf32>
    %17 = arith.mulf %13, %16 : vector<40x512xf32>
    %c80 = arith.constant 80 : index
    %c0_11 = arith.constant 0 : index
    %18 = vector.load %arg7[%c80, %c0_11] : memref<368x512xf32, #tpu.memory_space<vmem>>, vector<40x512xf32>
    tpu.vector_store %arg7[%c80, %c0_11], %17 {strides = array<i32>} : memref<368x512xf32, #tpu.memory_space<vmem>>, vector<40x512xf32>,
    %c1_i32 = arith.constant 1 : i32
    %19 = tpu.dynamic_rotate %0 by %c1_i32 dim 1 : vector<40x512xf32>, i32 -> vector<40x512xf32>
    %c3 = arith.constant 3 : index
    %c0_12 = arith.constant 0 : index
    %c0_13 = arith.constant 0 : index
    %20 = vector.load %arg4[%c3, %c0_12, %c0_13] : memref<9x1x512xf32, #tpu.memory_space<vmem>>, vector<1x1x512xf32>
    %21 = vector.shape_cast %20 : vector<1x1x512xf32> to vector<1x512xf32>
    %22 = vector.broadcast %21 : vector<1x512xf32> to vector<40x512xf32>
    %23 = arith.mulf %19, %22 : vector<40x512xf32>
    %c120 = arith.constant 120 : index
    %c0_14 = arith.constant 0 : index
    %24 = vector.load %arg7[%c120, %c0_14] : memref<368x512xf32, #tpu.memory_space<vmem>>, vector<40x512xf32>
    tpu.vector_store %arg7[%c120, %c0_14], %23 {strides = array<i32>} : memref<368x512xf32, #tpu.memory_space<vmem>>, vector<40x512xf32>,
    %c160 = arith.constant 160 : index
    %c0_15 = arith.constant 0 : index
    %25 = vector.load %arg7[%c160, %c0_15] : memref<368x512xf32, #tpu.memory_space<vmem>>, vector<40x512xf32>
    tpu.vector_store %arg7[%c160, %c0_15], %0 {strides = array<i32>} : memref<368x512xf32, #tpu.memory_space<vmem>>, vector<40x512xf32>,
    %c511_i32 = arith.constant 511 : i32
    %26 = tpu.dynamic_rotate %0 by %c511_i32 dim 1 : vector<40x512xf32>, i32 -> vector<40x512xf32>
    %c5 = arith.constant 5 : index
    %c0_16 = arith.constant 0 : index
    %c0_17 = arith.constant 0 : index
    %27 = vector.load %arg4[%c5, %c0_16, %c0_17] : memref<9x1x512xf32, #tpu.memory_space<vmem>>, vector<1x1x512xf32>
    %28 = vector.shape_cast %27 : vector<1x1x512xf32> to vector<1x512xf32>
    %29 = vector.broadcast %28 : vector<1x512xf32> to vector<40x512xf32>
    %30 = arith.mulf %26, %29 : vector<40x512xf32>
    %c200 = arith.constant 200 : index
    %c0_18 = arith.constant 0 : index
    %31 = vector.load %arg7[%c200, %c0_18] : memref<368x512xf32, #tpu.memory_space<vmem>>, vector<40x512xf32>
    tpu.vector_store %arg7[%c200, %c0_18], %30 {strides = array<i32>} : memref<368x512xf32, #tpu.memory_space<vmem>>, vector<40x512xf32>,
    %c497_i32 = arith.constant 497 : i32
    %32 = tpu.dynamic_rotate %0 by %c497_i32 dim 1 : vector<40x512xf32>, i32 -> vector<40x512xf32>
    %c6 = arith.constant 6 : index
    %c0_19 = arith.constant 0 : index
    %c0_20 = arith.constant 0 : index
    %33 = vector.load %arg4[%c6, %c0_19, %c0_20] : memref<9x1x512xf32, #tpu.memory_space<vmem>>, vector<1x1x512xf32>
    %34 = vector.shape_cast %33 : vector<1x1x512xf32> to vector<1x512xf32>
    %35 = vector.broadcast %34 : vector<1x512xf32> to vector<40x512xf32>
    %36 = arith.mulf %32, %35 : vector<40x512xf32>
    %c240 = arith.constant 240 : index
    %c0_21 = arith.constant 0 : index
    %37 = vector.load %arg7[%c240, %c0_21] : memref<368x512xf32, #tpu.memory_space<vmem>>, vector<40x512xf32>
    tpu.vector_store %arg7[%c240, %c0_21], %36 {strides = array<i32>} : memref<368x512xf32, #tpu.memory_space<vmem>>, vector<40x512xf32>,
    %c496_i32 = arith.constant 496 : i32
    %38 = tpu.dynamic_rotate %0 by %c496_i32 dim 1 : vector<40x512xf32>, i32 -> vector<40x512xf32>
    %c7 = arith.constant 7 : index
    %c0_22 = arith.constant 0 : index
    %c0_23 = arith.constant 0 : index
    %39 = vector.load %arg4[%c7, %c0_22, %c0_23] : memref<9x1x512xf32, #tpu.memory_space<vmem>>, vector<1x1x512xf32>
    %40 = vector.shape_cast %39 : vector<1x1x512xf32> to vector<1x512xf32>
    %41 = vector.broadcast %40 : vector<1x512xf32> to vector<40x512xf32>
    %42 = arith.mulf %38, %41 : vector<40x512xf32>
    %c280 = arith.constant 280 : index
    %c0_24 = arith.constant 0 : index
    %43 = vector.load %arg7[%c280, %c0_24] : memref<368x512xf32, #tpu.memory_space<vmem>>, vector<40x512xf32>
    tpu.vector_store %arg7[%c280, %c0_24], %42 {strides = array<i32>} : memref<368x512xf32, #tpu.memory_space<vmem>>, vector<40x512xf32>,
    %c495_i32 = arith.constant 495 : i32
    %44 = tpu.dynamic_rotate %0 by %c495_i32 dim 1 : vector<40x512xf32>, i32 -> vector<40x512xf32>
    %c8 = arith.constant 8 : index
    %c0_25 = arith.constant 0 : index
    %c0_26 = arith.constant 0 : index
    %45 = vector.load %arg4[%c8, %c0_25, %c0_26] : memref<9x1x512xf32, #tpu.memory_space<vmem>>, vector<1x1x512xf32>
    %46 = vector.shape_cast %45 : vector<1x1x512xf32> to vector<1x512xf32>
    %47 = vector.broadcast %46 : vector<1x512xf32> to vector<40x512xf32>
    %48 = arith.mulf %44, %47 : vector<40x512xf32>
    %c320 = arith.constant 320 : index
    %c0_27 = arith.constant 0 : index
    %49 = vector.load %arg7[%c320, %c0_27] : memref<368x512xf32, #tpu.memory_space<vmem>>, vector<40x512xf32>
    tpu.vector_store %arg7[%c320, %c0_27], %48 {strides = array<i32>} : memref<368x512xf32, #tpu.memory_space<vmem>>, vector<40x512xf32>,
    %50 = tpu.iota {dimensions = array<i32: 0>} : vector<8x512xi32>
    %c0_i32 = arith.constant 0 : i32
    %51 = vector.broadcast %c0_i32 : i32 to vector<8x512xi32>
    %52 = arith.cmpi eq, %50, %51 : vector<8x512xi32>
    %53 = arith.extui %52 : vector<8x512xi1> to vector<8x512xi32>
    %54 = arith.sitofp %53 : vector<8x512xi32> to vector<8x512xf32>
    %c360 = arith.constant 360 : index
    %c0_28 = arith.constant 0 : index
    %55 = vector.load %arg7[%c360, %c0_28] : memref<368x512xf32, #tpu.memory_space<vmem>>, vector<8x512xf32>
    tpu.vector_store %arg7[%c360, %c0_28], %54 {strides = array<i32>} : memref<368x512xf32, #tpu.memory_space<vmem>>, vector<8x512xf32>,
    %c0_29 = arith.constant 0 : index
    %c0_30 = arith.constant 0 : index
    %c0_31 = arith.constant 0 : index
    %56 = vector.load %arg3[%c0_29, %c0_30, %c0_31] : memref<1x128x368xf32, #tpu.memory_space<vmem>>, vector<1x128x368xf32>
    %57 = vector.shape_cast %56 : vector<1x128x368xf32> to vector<128x368xf32>
    %c0_32 = arith.constant 0 : index
    %c0_33 = arith.constant 0 : index
    %58 = vector.load %arg7[%c0_32, %c0_33] : memref<368x512xf32, #tpu.memory_space<vmem>>, vector<368x512xf32>
    %cst = arith.constant dense<0.000000e+00> : vector<128x512xf32>
    %59 = tpu.matmul %57, %58, %cst {dimension_numbers = #tpu.dot_dimension_numbers<[1], [0], [0], [1], [0, 0, 1, 1], [], []>, precision = #tpu.contract_precision<fp32>} : vector<128x368xf32>, vector<368x512xf32>, vector<128x512xf32> -> vector<128x512xf32>
    %60 = vector.extract_strided_slice %59 {offsets = [0, 0], sizes = [96, 512], strides = [1, 1]} : vector<128x512xf32> to vector<96x512xf32>
    %cst_34 = arith.constant 5.000000e-01 : f32
    %61 = vector.broadcast %cst_34 : f32 to vector<96x512xf32>
    %62 = arith.mulf %61, %60 : vector<96x512xf32>
    %63 = math.tanh %62 : vector<96x512xf32>
    %cst_35 = arith.constant 1.000000e+00 : f32
    %64 = vector.broadcast %cst_35 : f32 to vector<96x512xf32>
    %65 = arith.addf %63, %64 : vector<96x512xf32>
    %cst_36 = arith.constant 5.000000e-01 : f32
    %66 = vector.broadcast %cst_36 : f32 to vector<96x512xf32>
    %67 = arith.mulf %66, %65 : vector<96x512xf32>
    %68 = vector.extract_strided_slice %67 {offsets = [0, 0], sizes = [32, 512], strides = [1, 1]} : vector<96x512xf32> to vector<32x512xf32>
    %69 = vector.extract_strided_slice %67 {offsets = [32, 0], sizes = [32, 512], strides = [1, 1]} : vector<96x512xf32> to vector<32x512xf32>
    %70 = vector.extract_strided_slice %67 {offsets = [64, 0], sizes = [32, 512], strides = [1, 1]} : vector<96x512xf32> to vector<32x512xf32>
    %71 = vector.extract_strided_slice %59 {offsets = [96, 0], sizes = [32, 512], strides = [1, 1]} : vector<128x512xf32> to vector<32x512xf32>
    %72 = math.tanh %71 : vector<32x512xf32>
    %c0_37 = arith.constant 0 : index
    %c0_38 = arith.constant 0 : index
    %73 = vector.load %arg2[%c0_37, %c0_38] : memref<32x512xf32, #tpu.memory_space<vmem>>, vector<32x512xf32>
    %74 = arith.mulf %69, %73 : vector<32x512xf32>
    %75 = arith.mulf %68, %72 : vector<32x512xf32>
    %76 = arith.addf %74, %75 : vector<32x512xf32>
    %77 = math.tanh %76 : vector<32x512xf32>
    %78 = arith.mulf %70, %77 : vector<32x512xf32>
    %c0_39 = arith.constant 0 : index
    %c0_40 = arith.constant 0 : index
    %79 = vector.load %arg6[%c0_39, %c0_40] : memref<32x512xf32, #tpu.memory_space<vmem>>, vector<32x512xf32>
    tpu.vector_store %arg6[%c0_39, %c0_40], %76 {strides = array<i32>} : memref<32x512xf32, #tpu.memory_space<vmem>>, vector<32x512xf32>,
    %c0_41 = arith.constant 0 : index
    %c0_42 = arith.constant 0 : index
    %80 = vector.load %arg5[%c0_41, %c0_42] : memref<32x512xf32, #tpu.memory_space<vmem>>, vector<32x512xf32>
    tpu.vector_store %arg5[%c0_41, %c0_42], %78 {strides = array<i32>} : memref<32x512xf32, #tpu.memory_space<vmem>>, vector<32x512xf32>,
    return
  }
  func.func @transform_0(%arg0: i32) -> (i32, i32) {
    %c0_i32 = arith.constant 0 : i32
    %c0_i32_0 = arith.constant 0 : i32
    %c0_i32_1 = arith.constant 0 : i32
    return %c0_i32, %c0_i32_0 : i32, i32
  }
  func.func @transform_1(%arg0: i32) -> (i32, i32) {
    %c0_i32 = arith.constant 0 : i32
    %c0_i32_0 = arith.constant 0 : i32
    return %arg0, %c0_i32 : i32, i32
  }
  func.func @transform_2(%arg0: i32) -> (i32, i32, i32) {
    %c0_i32 = arith.constant 0 : i32
    %c0_i32_0 = arith.constant 0 : i32
    %c0_i32_1 = arith.constant 0 : i32
    return %arg0, %c0_i32, %c0_i32_0 : i32, i32, i32
  }
  func.func @transform_3(%arg0: i32) -> (i32, i32, i32) {
    %c0_i32 = arith.constant 0 : i32
    %c0_i32_0 = arith.constant 0 : i32
    %c0_i32_1 = arith.constant 0 : i32
    %c0_i32_2 = arith.constant 0 : i32
    return %c0_i32, %c0_i32_0, %c0_i32_1 : i32, i32, i32
  }
  func.func @transform_4(%arg0: i32) -> (i32, i32) {
    %c0_i32 = arith.constant 0 : i32
    %c0_i32_0 = arith.constant 0 : i32
    return %arg0, %c0_i32 : i32, i32
  }
  func.func @transform_5(%arg0: i32) -> (i32, i32) {
    %c0_i32 = arith.constant 0 : i32
    %c0_i32_0 = arith.constant 0 : i32
    return %arg0, %c0_i32 : i32, i32
  }
}

</mosaic_0001>

<llo_original>
// kernel: tpu_custom_call.1
$region0: #{tpu_custom_call.1}
  #allocation0 [shape = 'u32[]', space=smem, size = 0x4, offset = 0x4, fixed_abs, tag = 'smem constant byte address 0x4 - core index']
  #allocation1 [shape = 'u32[144,128]{1,0:T(1,128)}', space=vmem, size = 0x12000, scoped, tag = 'internal scratch']
  #allocation2 [shape = 'f32[368,512]{1,0:T(8,128)}', space=vmem, size = 0xb8000, scoped, tag = 'scratch operand']
  %s0 = inlined_call_operand.vmem [shape: f32[40,512], index: 0, kind: input, shape index: {}]
  %s1 = inlined_call_operand.vmem [shape: f32[32,512], index: 1, kind: input, shape index: {}]
  %s2 = inlined_call_operand.vmem [shape: f32[1,128,368], index: 2, kind: input, shape index: {}]
  %s3 = inlined_call_operand.vmem [shape: f32[9,1,512], index: 3, kind: input, shape index: {}]
  %s4 = inlined_call_operand.hbm [shape: f32[32,512], index: 4, kind: output, shape index: {0}]
  %s5 = inlined_call_operand.hbm [shape: f32[32,512], index: 5, kind: output, shape index: {1}]
  %6 = xla_tuple %s4, %s5
  %s7 = sld [smem:[#allocation0]]
  $region34: #{tpu_custom_call.1} parent=0
    _
  %s9 = ssub.s32 1, %s7
  %s10 = scalar_select 0, %s9, %s7
  $region1: #{tpu_custom_call.1} parent=0
    #allocation3 [shape = 'u8[65536]{0}', space=vmem, size = 0x10000, scoped, tag = 'output window, operand 0, single buffered']
    #allocation4 [shape = 's32[1]{0}', space=sflag, size = 0x4, scoped, tag = 'scoped memory for tpu_custom_call.1']
    #allocation5 [shape = 'u8[65536]{0}', space=vmem, size = 0x10000, scoped, tag = 'output window, operand 1, single buffered']
    #allocation6 [shape = 's32[1]{0}', space=sflag, size = 0x4, scoped, tag = 'scoped memory for tpu_custom_call.1']
    %11 = vsyncpa [#allocation4], 0
    %12 = vsyncpa [#allocation6], 0
    // Predicated region
    $region2: #{tpu_custom_call.1} parent=1 // pred_check
      _
    $region3: #{tpu_custom_call.1} parent=1 // pred_check_branch
      %14 = sbr.rel (0) target = $region5
    $region4: #{tpu_custom_call.1} parent=1 // pred_region
      _
    $region5: #{tpu_custom_call.1} parent=1 // pred_fallthru
      _
    // Predicated region
    $region6: #{tpu_custom_call.1} parent=1 // pred_check
      _
    $region7: #{tpu_custom_call.1} parent=1 // pred_check_branch
      %16 = sbr.rel (0) target = $region9
    $region8: #{tpu_custom_call.1} parent=1 // pred_region
      _
    $region9: #{tpu_custom_call.1} parent=1 // pred_fallthru
      _
    // Predicated region
    $region10: #{tpu_custom_call.1} parent=1 // pred_check
      _
    $region11: #{tpu_custom_call.1} parent=1 // pred_check_branch
      %18 = sbr.rel (0) target = $region13
    $region12: #{tpu_custom_call.1} parent=1 // pred_region
      _
    $region13: #{tpu_custom_call.1} parent=1 // pred_fallthru
      _
    // Predicated region
    $region14: #{tpu_custom_call.1} parent=1 // pred_check
      _
    $region15: #{tpu_custom_call.1} parent=1 // pred_check_branch
      %20 = sbr.rel (0) target = $region17
    $region16: #{tpu_custom_call.1} parent=1 // pred_region
      _
    $region17: #{tpu_custom_call.1} parent=1 // pred_fallthru
      _
    %v21 = vld [vmem:[%s0] sm:$0xff]
    %v22 = vld [vmem:[%s0 + $0x8] sm:$0xff]
    %v23 = vld [vmem:[%s0 + $0x10] sm:$0xff]
    %v24 = vld [vmem:[%s0 + $0x18] sm:$0xff]
    %v25 = vld [vmem:[%s0 + $0x20] sm:$0xff]
    %v26 = vld [vmem:[%s0 + $0x28] sm:$0xff]
    %v27 = vld [vmem:[%s0 + $0x30] sm:$0xff]
    %v28 = vld [vmem:[%s0 + $0x38] sm:$0xff]
    %v29 = vld [vmem:[%s0 + $0x40] sm:$0xff]
    %v30 = vld [vmem:[%s0 + $0x48] sm:$0xff]
    %v31 = vld [vmem:[%s0 + $0x50] sm:$0xff]
    %v32 = vld [vmem:[%s0 + $0x58] sm:$0xff]
    %v33 = vld [vmem:[%s0 + $0x60] sm:$0xff]
    %v34 = vld [vmem:[%s0 + $0x68] sm:$0xff]
    %v35 = vld [vmem:[%s0 + $0x70] sm:$0xff]
    %v36 = vld [vmem:[%s0 + $0x78] sm:$0xff]
    %v37 = vld [vmem:[%s0 + $0x80] sm:$0xff]
    %v38 = vld [vmem:[%s0 + $0x88] sm:$0xff]
    %v39 = vld [vmem:[%s0 + $0x90] sm:$0xff]
    %v40 = vld [vmem:[%s0 + $0x98] sm:$0xff]
    %41 = vrot.lane.b32.xlu0 %v21, 17
    %v42 = vpop.permute.xlu0 %41
    %43 = vrot.lane.b32.xlu0 %v25, 17
    %v44 = vpop.permute.xlu0 %43
    %45 = vrot.lane.b32.xlu0 %v29, 17
    %v46 = vpop.permute.xlu0 %45
    %47 = vrot.lane.b32.xlu0 %v33, 17
    %v48 = vpop.permute.xlu0 %47
    %49 = vrot.lane.b32.xlu0 %v37, 17
    %v50 = vpop.permute.xlu0 %49
    %51 = vrot.lane.b32.xlu0 %v22, 17
    %v52 = vpop.permute.xlu0 %51
    %53 = vrot.lane.b32.xlu0 %v26, 17
    %v54 = vpop.permute.xlu0 %53
    %55 = vrot.lane.b32.xlu0 %v30, 17
    %v56 = vpop.permute.xlu0 %55
    %57 = vrot.lane.b32.xlu0 %v34, 17
    %v58 = vpop.permute.xlu0 %57
    %59 = vrot.lane.b32.xlu0 %v38, 17
    %v60 = vpop.permute.xlu0 %59
    %61 = vrot.lane.b32.xlu0 %v23, 17
    %v62 = vpop.permute.xlu0 %61
    %63 = vrot.lane.b32.xlu0 %v27, 17
    %v64 = vpop.permute.xlu0 %63
    %65 = vrot.lane.b32.xlu0 %v31, 17
    %v66 = vpop.permute.xlu0 %65
    %67 = vrot.lane.b32.xlu0 %v35, 17
    %v68 = vpop.permute.xlu0 %67
    %69 = vrot.lane.b32.xlu0 %v39, 17
    %v70 = vpop.permute.xlu0 %69
    %71 = vrot.lane.b32.xlu0 %v24, 17
    %v72 = vpop.permute.xlu0 %71
    %73 = vrot.lane.b32.xlu0 %v28, 17
    %v74 = vpop.permute.xlu0 %73
    %75 = vrot.lane.b32.xlu0 %v32, 17
    %v76 = vpop.permute.xlu0 %75
    %77 = vrot.lane.b32.xlu0 %v36, 17
    %v78 = vpop.permute.xlu0 %77
    %79 = vrot.lane.b32.xlu0 %v40, 17
    %v80 = vpop.permute.xlu0 %79
    %v81 = vlaneseq
    %v82 = vand.u32 %v81, 127
    %vm83 = vcmp.lt.s32.totalorder %v82, 17
    %v84 = vsel %vm83, %v62, %v72
    %v85 = vsel %vm83, %v64, %v74
    %v86 = vsel %vm83, %v66, %v76
    %v87 = vsel %vm83, %v68, %v78
    %v88 = vsel %vm83, %v70, %v80
    %v89 = vsel %vm83, %v52, %v62
    %v90 = vsel %vm83, %v54, %v64
    %v91 = vsel %vm83, %v56, %v66
    %v92 = vsel %vm83, %v58, %v68
    %v93 = vsel %vm83, %v60, %v70
    %v94 = vsel %vm83, %v42, %v52
    %v95 = vsel %vm83, %v44, %v54
    %v96 = vsel %vm83, %v46, %v56
    %v97 = vsel %vm83, %v48, %v58
    %v98 = vsel %vm83, %v50, %v60
    %v99 = vsel %vm83, %v72, %v42
    %v100 = vsel %vm83, %v74, %v44
    %v101 = vsel %vm83, %v76, %v46
    %v102 = vsel %vm83, %v78, %v48
    %v103 = vsel %vm83, %v80, %v50
    %v104 = vld [vmem:[%s3] sm:$0xf]
    %v106 = vlaneseq
    %v107 = vshrl.u32 %v106, 7
    %v108 = vsub.s32 0, %v107
    %v109 = vrot.slane %v104, %v108
    %v110 = vlaneseq
    %v111 = vshrl.u32 %v110, 7
    %v112 = vsub.s32 1, %v111
    %v113 = vrot.slane %v104, %v112
    %v114 = vlaneseq
    %v115 = vshrl.u32 %v114, 7
    %v116 = vsub.s32 2, %v115
    %v117 = vrot.slane %v104, %v116
    %v118 = vlaneseq
    %v119 = vshrl.u32 %v118, 7
    %v120 = vsub.s32 3, %v119
    %v121 = vrot.slane %v104, %v120
    %v126 = vmul.f32 %v99, %v109
    %v127 = vmul.f32 %v94, %v113
    %v128 = vmul.f32 %v89, %v117
    %v129 = vmul.f32 %v84, %v121
    %v130 = vmul.f32 %v100, %v109
    %v131 = vmul.f32 %v95, %v113
    %v132 = vmul.f32 %v90, %v117
    %v133 = vmul.f32 %v85, %v121
    %v134 = vmul.f32 %v101, %v109
    %v135 = vmul.f32 %v96, %v113
    %v136 = vmul.f32 %v91, %v117
    %v137 = vmul.f32 %v86, %v121
    %v138 = vmul.f32 %v102, %v109
    %v139 = vmul.f32 %v97, %v113
    %v140 = vmul.f32 %v92, %v117
    %v141 = vmul.f32 %v87, %v121
    %v142 = vmul.f32 %v103, %v109
    %v143 = vmul.f32 %v98, %v113
    %v144 = vmul.f32 %v93, %v117
    %v145 = vmul.f32 %v88, %v121
    %146 = vst [vmem:[#allocation2] sm:$0xff] %v126
    %147 = vst [vmem:[#allocation2 + $0x8] sm:$0xff] %v127
    %148 = vst [vmem:[#allocation2 + $0x10] sm:$0xff] %v128
    %149 = vst [vmem:[#allocation2 + $0x18] sm:$0xff] %v129
    %150 = vst [vmem:[#allocation2 + $0x20] sm:$0xff] %v130
    %151 = vst [vmem:[#allocation2 + $0x28] sm:$0xff] %v131
    %152 = vst [vmem:[#allocation2 + $0x30] sm:$0xff] %v132
    %153 = vst [vmem:[#allocation2 + $0x38] sm:$0xff] %v133
    %154 = vst [vmem:[#allocation2 + $0x40] sm:$0xff] %v134
    %155 = vst [vmem:[#allocation2 + $0x48] sm:$0xff] %v135
    %156 = vst [vmem:[#allocation2 + $0x50] sm:$0xff] %v136
    %157 = vst [vmem:[#allocation2 + $0x58] sm:$0xff] %v137
    %158 = vst [vmem:[#allocation2 + $0x60] sm:$0xff] %v138
    %159 = vst [vmem:[#allocation2 + $0x68] sm:$0xff] %v139
    %160 = vst [vmem:[#allocation2 + $0x70] sm:$0xff] %v140
    %161 = vst [vmem:[#allocation2 + $0x78] sm:$0xff] %v141
    %162 = vst [vmem:[#allocation2 + $0x80] sm:$0xff] %v142
    %163 = vst [vmem:[#allocation2 + $0x88] sm:$0xff] %v143
    %164 = vst [vmem:[#allocation2 + $0x90] sm:$0xff] %v144
    %165 = vst [vmem:[#allocation2 + $0x98] sm:$0xff] %v145
    %166 = vrot.lane.b32.xlu0 %v21, 16
    %v167 = vpop.permute.xlu0 %166
    %168 = vrot.lane.b32.xlu0 %v25, 16
    %v169 = vpop.permute.xlu0 %168
    %170 = vrot.lane.b32.xlu0 %v29, 16
    %v171 = vpop.permute.xlu0 %170
    %172 = vrot.lane.b32.xlu0 %v33, 16
    %v173 = vpop.permute.xlu0 %172
    %174 = vrot.lane.b32.xlu0 %v37, 16
    %v175 = vpop.permute.xlu0 %174
    %176 = vrot.lane.b32.xlu0 %v22, 16
    %v177 = vpop.permute.xlu0 %176
    %178 = vrot.lane.b32.xlu0 %v26, 16
    %v179 = vpop.permute.xlu0 %178
    %180 = vrot.lane.b32.xlu0 %v30, 16
    %v181 = vpop.permute.xlu0 %180
    %182 = vrot.lane.b32.xlu0 %v34, 16
    %v183 = vpop.permute.xlu0 %182
    %184 = vrot.lane.b32.xlu0 %v38, 16
    %v185 = vpop.permute.xlu0 %184
    %186 = vrot.lane.b32.xlu0 %v23, 16
    %v187 = vpop.permute.xlu0 %186
    %188 = vrot.lane.b32.xlu0 %v27, 16
    %v189 = vpop.permute.xlu0 %188
    %190 = vrot.lane.b32.xlu0 %v31, 16
    %v191 = vpop.permute.xlu0 %190
    %192 = vrot.lane.b32.xlu0 %v35, 16
    %v193 = vpop.permute.xlu0 %192
    %194 = vrot.lane.b32.xlu0 %v39, 16
    %v195 = vpop.permute.xlu0 %194
    %196 = vrot.lane.b32.xlu0 %v24, 16
    %v197 = vpop.permute.xlu0 %196
    %198 = vrot.lane.b32.xlu0 %v28, 16
    %v199 = vpop.permute.xlu0 %198
    %200 = vrot.lane.b32.xlu0 %v32, 16
    %v201 = vpop.permute.xlu0 %200
    %202 = vrot.lane.b32.xlu0 %v36, 16
    %v203 = vpop.permute.xlu0 %202
    %204 = vrot.lane.b32.xlu0 %v40, 16
    %v205 = vpop.permute.xlu0 %204
    %vm206 = vcmp.lt.s32.totalorder %v82, 16
    %v207 = vsel %vm206, %v187, %v197
    %v208 = vsel %vm206, %v189, %v199
    %v209 = vsel %vm206, %v191, %v201
    %v210 = vsel %vm206, %v193, %v203
    %v211 = vsel %vm206, %v195, %v205
    %v212 = vsel %vm206, %v177, %v187
    %v213 = vsel %vm206, %v179, %v189
    %v214 = vsel %vm206, %v181, %v191
    %v215 = vsel %vm206, %v183, %v193
    %v216 = vsel %vm206, %v185, %v195
    %v217 = vsel %vm206, %v167, %v177
    %v218 = vsel %vm206, %v169, %v179
    %v219 = vsel %vm206, %v171, %v181
    %v220 = vsel %vm206, %v173, %v183
    %v221 = vsel %vm206, %v175, %v185
    %v222 = vsel %vm206, %v197, %v167
    %v223 = vsel %vm206, %v199, %v169
    %v224 = vsel %vm206, %v201, %v171
    %v225 = vsel %vm206, %v203, %v173
    %v226 = vsel %vm206, %v205, %v175
    %s227 = scalar_lea.vmem %s3, 4
    %v228 = vld [vmem:[%s227] sm:$0xf]
    %v230 = vlaneseq
    %v231 = vshrl.u32 %v230, 7
    %v232 = vsub.s32 0, %v231
    %v233 = vrot.slane %v228, %v232
    %v234 = vlaneseq
    %v235 = vshrl.u32 %v234, 7
    %v236 = vsub.s32 1, %v235
    %v237 = vrot.slane %v228, %v236
    %v238 = vlaneseq
    %v239 = vshrl.u32 %v238, 7
    %v240 = vsub.s32 2, %v239
    %v241 = vrot.slane %v228, %v240
    %v242 = vlaneseq
    %v243 = vshrl.u32 %v242, 7
    %v244 = vsub.s32 3, %v243
    %v245 = vrot.slane %v228, %v244
    %v250 = vmul.f32 %v222, %v233
    %v251 = vmul.f32 %v217, %v237
    %v252 = vmul.f32 %v212, %v241
    %v253 = vmul.f32 %v207, %v245
    %v254 = vmul.f32 %v223, %v233
    %v255 = vmul.f32 %v218, %v237
    %v256 = vmul.f32 %v213, %v241
    %v257 = vmul.f32 %v208, %v245
    %v258 = vmul.f32 %v224, %v233
    %v259 = vmul.f32 %v219, %v237
    %v260 = vmul.f32 %v214, %v241
    %v261 = vmul.f32 %v209, %v245
    %v262 = vmul.f32 %v225, %v233
    %v263 = vmul.f32 %v220, %v237
    %v264 = vmul.f32 %v215, %v241
    %v265 = vmul.f32 %v210, %v245
    %v266 = vmul.f32 %v226, %v233
    %v267 = vmul.f32 %v221, %v237
    %v268 = vmul.f32 %v216, %v241
    %v269 = vmul.f32 %v211, %v245
    %270 = vst [vmem:[#allocation2 + $0xa0] sm:$0xff] %v250
    %271 = vst [vmem:[#allocation2 + $0xa8] sm:$0xff] %v251
    %272 = vst [vmem:[#allocation2 + $0xb0] sm:$0xff] %v252
    %273 = vst [vmem:[#allocation2 + $0xb8] sm:$0xff] %v253
    %274 = vst [vmem:[#allocation2 + $0xc0] sm:$0xff] %v254
    %275 = vst [vmem:[#allocation2 + $0xc8] sm:$0xff] %v255
    %276 = vst [vmem:[#allocation2 + $0xd0] sm:$0xff] %v256
    %277 = vst [vmem:[#allocation2 + $0xd8] sm:$0xff] %v257
    %278 = vst [vmem:[#allocation2 + $0xe0] sm:$0xff] %v258
    %279 = vst [vmem:[#allocation2 + $0xe8] sm:$0xff] %v259
    %280 = vst [vmem:[#allocation2 + $0xf0] sm:$0xff] %v260
    %281 = vst [vmem:[#allocation2 + $0xf8] sm:$0xff] %v261
    %282 = vst [vmem:[#allocation2 + $0x100] sm:$0xff] %v262
    %283 = vst [vmem:[#allocation2 + $0x108] sm:$0xff] %v263
    %284 = vst [vmem:[#allocation2 + $0x110] sm:$0xff] %v264
    %285 = vst [vmem:[#allocation2 + $0x118] sm:$0xff] %v265
    %286 = vst [vmem:[#allocation2 + $0x120] sm:$0xff] %v266
    %287 = vst [vmem:[#allocation2 + $0x128] sm:$0xff] %v267
    %288 = vst [vmem:[#allocation2 + $0x130] sm:$0xff] %v268
    %289 = vst [vmem:[#allocation2 + $0x138] sm:$0xff] %v269
    %290 = vrot.lane.b32.xlu0 %v21, 15
    %v291 = vpop.permute.xlu0 %290
    %292 = vrot.lane.b32.xlu0 %v25, 15
    %v293 = vpop.permute.xlu0 %292
    %294 = vrot.lane.b32.xlu0 %v29, 15
    %v295 = vpop.permute.xlu0 %294
    %296 = vrot.lane.b32.xlu0 %v33, 15
    %v297 = vpop.permute.xlu0 %296
    %298 = vrot.lane.b32.xlu0 %v37, 15
    %v299 = vpop.permute.xlu0 %298
    %300 = vrot.lane.b32.xlu0 %v22, 15
    %v301 = vpop.permute.xlu0 %300
    %302 = vrot.lane.b32.xlu0 %v26, 15
    %v303 = vpop.permute.xlu0 %302
    %304 = vrot.lane.b32.xlu0 %v30, 15
    %v305 = vpop.permute.xlu0 %304
    %306 = vrot.lane.b32.xlu0 %v34, 15
    %v307 = vpop.permute.xlu0 %306
    %308 = vrot.lane.b32.xlu0 %v38, 15
    %v309 = vpop.permute.xlu0 %308
    %310 = vrot.lane.b32.xlu0 %v23, 15
    %v311 = vpop.permute.xlu0 %310
    %312 = vrot.lane.b32.xlu0 %v27, 15
    %v313 = vpop.permute.xlu0 %312
    %314 = vrot.lane.b32.xlu0 %v31, 15
    %v315 = vpop.permute.xlu0 %314
    %316 = vrot.lane.b32.xlu0 %v35, 15
    %v317 = vpop.permute.xlu0 %316
    %318 = vrot.lane.b32.xlu0 %v39, 15
    %v319 = vpop.permute.xlu0 %318
    %320 = vrot.lane.b32.xlu0 %v24, 15
    %v321 = vpop.permute.xlu0 %320
    %322 = vrot.lane.b32.xlu0 %v28, 15
    %v323 = vpop.permute.xlu0 %322
    %324 = vrot.lane.b32.xlu0 %v32, 15
    %v325 = vpop.permute.xlu0 %324
    %326 = vrot.lane.b32.xlu0 %v36, 15
    %v327 = vpop.permute.xlu0 %326
    %328 = vrot.lane.b32.xlu0 %v40, 15
    %v329 = vpop.permute.xlu0 %328
    %vm330 = vcmp.lt.s32.totalorder %v82, 15
    %v331 = vsel %vm330, %v311, %v321
    %v332 = vsel %vm330, %v313, %v323
    %v333 = vsel %vm330, %v315, %v325
    %v334 = vsel %vm330, %v317, %v327
    %v335 = vsel %vm330, %v319, %v329
    %v336 = vsel %vm330, %v301, %v311
    %v337 = vsel %vm330, %v303, %v313
    %v338 = vsel %vm330, %v305, %v315
    %v339 = vsel %vm330, %v307, %v317
    %v340 = vsel %vm330, %v309, %v319
    %v341 = vsel %vm330, %v291, %v301
    %v342 = vsel %vm330, %v293, %v303
    %v343 = vsel %vm330, %v295, %v305
    %v344 = vsel %vm330, %v297, %v307
    %v345 = vsel %vm330, %v299, %v309
    %v346 = vsel %vm330, %v321, %v291
    %v347 = vsel %vm330, %v323, %v293
    %v348 = vsel %vm330, %v325, %v295
    %v349 = vsel %vm330, %v327, %v297
    %v350 = vsel %vm330, %v329, %v299
    %s351 = scalar_lea.vmem %s3, 8
    %v352 = vld [vmem:[%s351] sm:$0xf]
    %v354 = vlaneseq
    %v355 = vshrl.u32 %v354, 7
    %v356 = vsub.s32 0, %v355
    %v357 = vrot.slane %v352, %v356
    %v358 = vlaneseq
    %v359 = vshrl.u32 %v358, 7
    %v360 = vsub.s32 1, %v359
    %v361 = vrot.slane %v352, %v360
    %v362 = vlaneseq
    %v363 = vshrl.u32 %v362, 7
    %v364 = vsub.s32 2, %v363
    %v365 = vrot.slane %v352, %v364
    %v366 = vlaneseq
    %v367 = vshrl.u32 %v366, 7
    %v368 = vsub.s32 3, %v367
    %v369 = vrot.slane %v352, %v368
    %v374 = vmul.f32 %v346, %v357
    %v375 = vmul.f32 %v341, %v361
    %v376 = vmul.f32 %v336, %v365
    %v377 = vmul.f32 %v331, %v369
    %v378 = vmul.f32 %v347, %v357
    %v379 = vmul.f32 %v342, %v361
    %v380 = vmul.f32 %v337, %v365
    %v381 = vmul.f32 %v332, %v369
    %v382 = vmul.f32 %v348, %v357
    %v383 = vmul.f32 %v343, %v361
    %v384 = vmul.f32 %v338, %v365
    %v385 = vmul.f32 %v333, %v369
    %v386 = vmul.f32 %v349, %v357
    %v387 = vmul.f32 %v344, %v361
    %v388 = vmul.f32 %v339, %v365
    %v389 = vmul.f32 %v334, %v369
    %v390 = vmul.f32 %v350, %v357
    %v391 = vmul.f32 %v345, %v361
    %v392 = vmul.f32 %v340, %v365
    %v393 = vmul.f32 %v335, %v369
    %394 = vst [vmem:[#allocation2 + $0x140] sm:$0xff] %v374
    %395 = vst [vmem:[#allocation2 + $0x148] sm:$0xff] %v375
    %396 = vst [vmem:[#allocation2 + $0x150] sm:$0xff] %v376
    %397 = vst [vmem:[#allocation2 + $0x158] sm:$0xff] %v377
    %398 = vst [vmem:[#allocation2 + $0x160] sm:$0xff] %v378
    %399 = vst [vmem:[#allocation2 + $0x168] sm:$0xff] %v379
    %400 = vst [vmem:[#allocation2 + $0x170] sm:$0xff] %v380
    %401 = vst [vmem:[#allocation2 + $0x178] sm:$0xff] %v381
    %402 = vst [vmem:[#allocation2 + $0x180] sm:$0xff] %v382
    %403 = vst [vmem:[#allocation2 + $0x188] sm:$0xff] %v383
    %404 = vst [vmem:[#allocation2 + $0x190] sm:$0xff] %v384
    %405 = vst [vmem:[#allocation2 + $0x198] sm:$0xff] %v385
    %406 = vst [vmem:[#allocation2 + $0x1a0] sm:$0xff] %v386
    %407 = vst [vmem:[#allocation2 + $0x1a8] sm:$0xff] %v387
    %408 = vst [vmem:[#allocation2 + $0x1b0] sm:$0xff] %v388
    %409 = vst [vmem:[#allocation2 + $0x1b8] sm:$0xff] %v389
    %410 = vst [vmem:[#allocation2 + $0x1c0] sm:$0xff] %v390
    %411 = vst [vmem:[#allocation2 + $0x1c8] sm:$0xff] %v391
    %412 = vst [vmem:[#allocation2 + $0x1d0] sm:$0xff] %v392
    %413 = vst [vmem:[#allocation2 + $0x1d8] sm:$0xff] %v393
    %414 = vrot.lane.b32.xlu0 %v21, 1
    %v415 = vpop.permute.xlu0 %414
    %416 = vrot.lane.b32.xlu0 %v25, 1
    %v417 = vpop.permute.xlu0 %416
    %418 = vrot.lane.b32.xlu0 %v29, 1
    %v419 = vpop.permute.xlu0 %418
    %420 = vrot.lane.b32.xlu0 %v33, 1
    %v421 = vpop.permute.xlu0 %420
    %422 = vrot.lane.b32.xlu0 %v37, 1
    %v423 = vpop.permute.xlu0 %422
    %424 = vrot.lane.b32.xlu0 %v22, 1
    %v425 = vpop.permute.xlu0 %424
    %426 = vrot.lane.b32.xlu0 %v26, 1
    %v427 = vpop.permute.xlu0 %426
    %428 = vrot.lane.b32.xlu0 %v30, 1
    %v429 = vpop.permute.xlu0 %428
    %430 = vrot.lane.b32.xlu0 %v34, 1
    %v431 = vpop.permute.xlu0 %430
    %432 = vrot.lane.b32.xlu0 %v38, 1
    %v433 = vpop.permute.xlu0 %432
    %434 = vrot.lane.b32.xlu0 %v23, 1
    %v435 = vpop.permute.xlu0 %434
    %436 = vrot.lane.b32.xlu0 %v27, 1
    %v437 = vpop.permute.xlu0 %436
    %438 = vrot.lane.b32.xlu0 %v31, 1
    %v439 = vpop.permute.xlu0 %438
    %440 = vrot.lane.b32.xlu0 %v35, 1
    %v441 = vpop.permute.xlu0 %440
    %442 = vrot.lane.b32.xlu0 %v39, 1
    %v443 = vpop.permute.xlu0 %442
    %444 = vrot.lane.b32.xlu0 %v24, 1
    %v445 = vpop.permute.xlu0 %444
    %446 = vrot.lane.b32.xlu0 %v28, 1
    %v447 = vpop.permute.xlu0 %446
    %448 = vrot.lane.b32.xlu0 %v32, 1
    %v449 = vpop.permute.xlu0 %448
    %450 = vrot.lane.b32.xlu0 %v36, 1
    %v451 = vpop.permute.xlu0 %450
    %452 = vrot.lane.b32.xlu0 %v40, 1
    %v453 = vpop.permute.xlu0 %452
    %vm454 = vcmp.lt.s32.totalorder %v82, 1
    %v455 = vsel %vm454, %v435, %v445
    %v456 = vsel %vm454, %v437, %v447
    %v457 = vsel %vm454, %v439, %v449
    %v458 = vsel %vm454, %v441, %v451
    %v459 = vsel %vm454, %v443, %v453
    %v460 = vsel %vm454, %v425, %v435
    %v461 = vsel %vm454, %v427, %v437
    %v462 = vsel %vm454, %v429, %v439
    %v463 = vsel %vm454, %v431, %v441
    %v464 = vsel %vm454, %v433, %v443
    %v465 = vsel %vm454, %v415, %v425
    %v466 = vsel %vm454, %v417, %v427
    %v467 = vsel %vm454, %v419, %v429
    %v468 = vsel %vm454, %v421, %v431
    %v469 = vsel %vm454, %v423, %v433
    %v470 = vsel %vm454, %v445, %v415
    %v471 = vsel %vm454, %v447, %v417
    %v472 = vsel %vm454, %v449, %v419
    %v473 = vsel %vm454, %v451, %v421
    %v474 = vsel %vm454, %v453, %v423
    %s475 = scalar_lea.vmem %s3, 12
    %v476 = vld [vmem:[%s475] sm:$0xf]
    %v478 = vlaneseq
    %v479 = vshrl.u32 %v478, 7
    %v480 = vsub.s32 0, %v479
    %v481 = vrot.slane %v476, %v480
    %v482 = vlaneseq
    %v483 = vshrl.u32 %v482, 7
    %v484 = vsub.s32 1, %v483
    %v485 = vrot.slane %v476, %v484
    %v486 = vlaneseq
    %v487 = vshrl.u32 %v486, 7
    %v488 = vsub.s32 2, %v487
    %v489 = vrot.slane %v476, %v488
    %v490 = vlaneseq
    %v491 = vshrl.u32 %v490, 7
    %v492 = vsub.s32 3, %v491
    %v493 = vrot.slane %v476, %v492
    %v498 = vmul.f32 %v470, %v481
    %v499 = vmul.f32 %v465, %v485
    %v500 = vmul.f32 %v460, %v489
    %v501 = vmul.f32 %v455, %v493
    %v502 = vmul.f32 %v471, %v481
    %v503 = vmul.f32 %v466, %v485
    %v504 = vmul.f32 %v461, %v489
    %v505 = vmul.f32 %v456, %v493
    %v506 = vmul.f32 %v472, %v481
    %v507 = vmul.f32 %v467, %v485
    %v508 = vmul.f32 %v462, %v489
    %v509 = vmul.f32 %v457, %v493
    %v510 = vmul.f32 %v473, %v481
    %v511 = vmul.f32 %v468, %v485
    %v512 = vmul.f32 %v463, %v489
    %v513 = vmul.f32 %v458, %v493
    %v514 = vmul.f32 %v474, %v481
    %v515 = vmul.f32 %v469, %v485
    %v516 = vmul.f32 %v464, %v489
    %v517 = vmul.f32 %v459, %v493
    %518 = vst [vmem:[#allocation2 + $0x1e0] sm:$0xff] %v498
    %519 = vst [vmem:[#allocation2 + $0x1e8] sm:$0xff] %v499
    %520 = vst [vmem:[#allocation2 + $0x1f0] sm:$0xff] %v500
    %521 = vst [vmem:[#allocation2 + $0x1f8] sm:$0xff] %v501
    %522 = vst [vmem:[#allocation2 + $0x200] sm:$0xff] %v502
    %523 = vst [vmem:[#allocation2 + $0x208] sm:$0xff] %v503
    %524 = vst [vmem:[#allocation2 + $0x210] sm:$0xff] %v504
    %525 = vst [vmem:[#allocation2 + $0x218] sm:$0xff] %v505
    %526 = vst [vmem:[#allocation2 + $0x220] sm:$0xff] %v506
    %527 = vst [vmem:[#allocation2 + $0x228] sm:$0xff] %v507
    %528 = vst [vmem:[#allocation2 + $0x230] sm:$0xff] %v508
    %529 = vst [vmem:[#allocation2 + $0x238] sm:$0xff] %v509
    %530 = vst [vmem:[#allocation2 + $0x240] sm:$0xff] %v510
    %531 = vst [vmem:[#allocation2 + $0x248] sm:$0xff] %v511
    %532 = vst [vmem:[#allocation2 + $0x250] sm:$0xff] %v512
    %533 = vst [vmem:[#allocation2 + $0x258] sm:$0xff] %v513
    %534 = vst [vmem:[#allocation2 + $0x260] sm:$0xff] %v514
    %535 = vst [vmem:[#allocation2 + $0x268] sm:$0xff] %v515
    %536 = vst [vmem:[#allocation2 + $0x270] sm:$0xff] %v516
    %537 = vst [vmem:[#allocation2 + $0x278] sm:$0xff] %v517
    %538 = vst [vmem:[#allocation2 + $0x280] sm:$0xff] %v21
    %539 = vst [vmem:[#allocation2 + $0x288] sm:$0xff] %v22
    %540 = vst [vmem:[#allocation2 + $0x290] sm:$0xff] %v23
    %541 = vst [vmem:[#allocation2 + $0x298] sm:$0xff] %v24
    %542 = vst [vmem:[#allocation2 + $0x2a0] sm:$0xff] %v25
    %543 = vst [vmem:[#allocation2 + $0x2a8] sm:$0xff] %v26
    %544 = vst [vmem:[#allocation2 + $0x2b0] sm:$0xff] %v27
    %545 = vst [vmem:[#allocation2 + $0x2b8] sm:$0xff] %v28
    %546 = vst [vmem:[#allocation2 + $0x2c0] sm:$0xff] %v29
    %547 = vst [vmem:[#allocation2 + $0x2c8] sm:$0xff] %v30
    %548 = vst [vmem:[#allocation2 + $0x2d0] sm:$0xff] %v31
    %549 = vst [vmem:[#allocation2 + $0x2d8] sm:$0xff] %v32
    %550 = vst [vmem:[#allocation2 + $0x2e0] sm:$0xff] %v33
    %551 = vst [vmem:[#allocation2 + $0x2e8] sm:$0xff] %v34
    %552 = vst [vmem:[#allocation2 + $0x2f0] sm:$0xff] %v35
    %553 = vst [vmem:[#allocation2 + $0x2f8] sm:$0xff] %v36
    %554 = vst [vmem:[#allocation2 + $0x300] sm:$0xff] %v37
    %555 = vst [vmem:[#allocation2 + $0x308] sm:$0xff] %v38
    %556 = vst [vmem:[#allocation2 + $0x310] sm:$0xff] %v39
    %557 = vst [vmem:[#allocation2 + $0x318] sm:$0xff] %v40
    %558 = vrot.lane.b32.xlu0 %v21, 127
    %v559 = vpop.permute.xlu0 %558
    %560 = vrot.lane.b32.xlu0 %v25, 127
    %v561 = vpop.permute.xlu0 %560
    %562 = vrot.lane.b32.xlu0 %v29, 127
    %v563 = vpop.permute.xlu0 %562
    %564 = vrot.lane.b32.xlu0 %v33, 127
    %v565 = vpop.permute.xlu0 %564
    %566 = vrot.lane.b32.xlu0 %v37, 127
    %v567 = vpop.permute.xlu0 %566
    %568 = vrot.lane.b32.xlu0 %v22, 127
    %v569 = vpop.permute.xlu0 %568
    %570 = vrot.lane.b32.xlu0 %v26, 127
    %v571 = vpop.permute.xlu0 %570
    %572 = vrot.lane.b32.xlu0 %v30, 127
    %v573 = vpop.permute.xlu0 %572
    %574 = vrot.lane.b32.xlu0 %v34, 127
    %v575 = vpop.permute.xlu0 %574
    %576 = vrot.lane.b32.xlu0 %v38, 127
    %v577 = vpop.permute.xlu0 %576
    %578 = vrot.lane.b32.xlu0 %v23, 127
    %v579 = vpop.permute.xlu0 %578
    %580 = vrot.lane.b32.xlu0 %v27, 127
    %v581 = vpop.permute.xlu0 %580
    %582 = vrot.lane.b32.xlu0 %v31, 127
    %v583 = vpop.permute.xlu0 %582
    %584 = vrot.lane.b32.xlu0 %v35, 127
    %v585 = vpop.permute.xlu0 %584
    %586 = vrot.lane.b32.xlu0 %v39, 127
    %v587 = vpop.permute.xlu0 %586
    %588 = vrot.lane.b32.xlu0 %v24, 127
    %v589 = vpop.permute.xlu0 %588
    %590 = vrot.lane.b32.xlu0 %v28, 127
    %v591 = vpop.permute.xlu0 %590
    %592 = vrot.lane.b32.xlu0 %v32, 127
    %v593 = vpop.permute.xlu0 %592
    %594 = vrot.lane.b32.xlu0 %v36, 127
    %v595 = vpop.permute.xlu0 %594
    %596 = vrot.lane.b32.xlu0 %v40, 127
    %v597 = vpop.permute.xlu0 %596
    %vm598 = vcmp.lt.s32.totalorder %v82, 127
    %v599 = vsel %vm598, %v579, %v589
    %v600 = vsel %vm598, %v581, %v591
    %v601 = vsel %vm598, %v583, %v593
    %v602 = vsel %vm598, %v585, %v595
    %v603 = vsel %vm598, %v587, %v597
    %v604 = vsel %vm598, %v569, %v579
    %v605 = vsel %vm598, %v571, %v581
    %v606 = vsel %vm598, %v573, %v583
    %v607 = vsel %vm598, %v575, %v585
    %v608 = vsel %vm598, %v577, %v587
    %v609 = vsel %vm598, %v559, %v569
    %v610 = vsel %vm598, %v561, %v571
    %v611 = vsel %vm598, %v563, %v573
    %v612 = vsel %vm598, %v565, %v575
    %v613 = vsel %vm598, %v567, %v577
    %v614 = vsel %vm598, %v589, %v559
    %v615 = vsel %vm598, %v591, %v561
    %v616 = vsel %vm598, %v593, %v563
    %v617 = vsel %vm598, %v595, %v565
    %v618 = vsel %vm598, %v597, %v567
    %s619 = scalar_lea.vmem %s3, 20
    %v620 = vld [vmem:[%s619] sm:$0xf]
    %v622 = vlaneseq
    %v623 = vshrl.u32 %v622, 7
    %v624 = vsub.s32 0, %v623
    %v625 = vrot.slane %v620, %v624
    %v626 = vlaneseq
    %v627 = vshrl.u32 %v626, 7
    %v628 = vsub.s32 1, %v627
    %v629 = vrot.slane %v620, %v628
    %v630 = vlaneseq
    %v631 = vshrl.u32 %v630, 7
    %v632 = vsub.s32 2, %v631
    %v633 = vrot.slane %v620, %v632
    %v634 = vlaneseq
    %v635 = vshrl.u32 %v634, 7
    %v636 = vsub.s32 3, %v635
    %v637 = vrot.slane %v620, %v636
    %v642 = vmul.f32 %v609, %v625
    %v643 = vmul.f32 %v604, %v629
    %v644 = vmul.f32 %v599, %v633
    %v645 = vmul.f32 %v614, %v637
    %v646 = vmul.f32 %v610, %v625
    %v647 = vmul.f32 %v605, %v629
    %v648 = vmul.f32 %v600, %v633
    %v649 = vmul.f32 %v615, %v637
    %v650 = vmul.f32 %v611, %v625
    %v651 = vmul.f32 %v606, %v629
    %v652 = vmul.f32 %v601, %v633
    %v653 = vmul.f32 %v616, %v637
    %v654 = vmul.f32 %v612, %v625
    %v655 = vmul.f32 %v607, %v629
    %v656 = vmul.f32 %v602, %v633
    %v657 = vmul.f32 %v617, %v637
    %v658 = vmul.f32 %v613, %v625
    %v659 = vmul.f32 %v608, %v629
    %v660 = vmul.f32 %v603, %v633
    %v661 = vmul.f32 %v618, %v637
    %662 = vst [vmem:[#allocation2 + $0x320] sm:$0xff] %v642
    %663 = vst [vmem:[#allocation2 + $0x328] sm:$0xff] %v643
    %664 = vst [vmem:[#allocation2 + $0x330] sm:$0xff] %v644
    %665 = vst [vmem:[#allocation2 + $0x338] sm:$0xff] %v645
    %666 = vst [vmem:[#allocation2 + $0x340] sm:$0xff] %v646
    %667 = vst [vmem:[#allocation2 + $0x348] sm:$0xff] %v647
    %668 = vst [vmem:[#allocation2 + $0x350] sm:$0xff] %v648
    %669 = vst [vmem:[#allocation2 + $0x358] sm:$0xff] %v649
    %670 = vst [vmem:[#allocation2 + $0x360] sm:$0xff] %v650
    %671 = vst [vmem:[#allocation2 + $0x368] sm:$0xff] %v651
    %672 = vst [vmem:[#allocation2 + $0x370] sm:$0xff] %v652
    %673 = vst [vmem:[#allocation2 + $0x378] sm:$0xff] %v653
    %674 = vst [vmem:[#allocation2 + $0x380] sm:$0xff] %v654
    %675 = vst [vmem:[#allocation2 + $0x388] sm:$0xff] %v655
    %676 = vst [vmem:[#allocation2 + $0x390] sm:$0xff] %v656
    %677 = vst [vmem:[#allocation2 + $0x398] sm:$0xff] %v657
    %678 = vst [vmem:[#allocation2 + $0x3a0] sm:$0xff] %v658
    %679 = vst [vmem:[#allocation2 + $0x3a8] sm:$0xff] %v659
    %680 = vst [vmem:[#allocation2 + $0x3b0] sm:$0xff] %v660
    %681 = vst [vmem:[#allocation2 + $0x3b8] sm:$0xff] %v661
    %682 = vrot.lane.b32.xlu0 %v21, 113
    %v683 = vpop.permute.xlu0 %682
    %684 = vrot.lane.b32.xlu0 %v25, 113
    %v685 = vpop.permute.xlu0 %684
    %686 = vrot.lane.b32.xlu0 %v29, 113
    %v687 = vpop.permute.xlu0 %686
    %688 = vrot.lane.b32.xlu0 %v33, 113
    %v689 = vpop.permute.xlu0 %688
    %690 = vrot.lane.b32.xlu0 %v37, 113
    %v691 = vpop.permute.xlu0 %690
    %692 = vrot.lane.b32.xlu0 %v22, 113
    %v693 = vpop.permute.xlu0 %692
    %694 = vrot.lane.b32.xlu0 %v26, 113
    %v695 = vpop.permute.xlu0 %694
    %696 = vrot.lane.b32.xlu0 %v30, 113
    %v697 = vpop.permute.xlu0 %696
    %698 = vrot.lane.b32.xlu0 %v34, 113
    %v699 = vpop.permute.xlu0 %698
    %700 = vrot.lane.b32.xlu0 %v38, 113
    %v701 = vpop.permute.xlu0 %700
    %702 = vrot.lane.b32.xlu0 %v23, 113
    %v703 = vpop.permute.xlu0 %702
    %704 = vrot.lane.b32.xlu0 %v27, 113
    %v705 = vpop.permute.xlu0 %704
    %706 = vrot.lane.b32.xlu0 %v31, 113
    %v707 = vpop.permute.xlu0 %706
    %708 = vrot.lane.b32.xlu0 %v35, 113
    %v709 = vpop.permute.xlu0 %708
    %710 = vrot.lane.b32.xlu0 %v39, 113
    %v711 = vpop.permute.xlu0 %710
    %712 = vrot.lane.b32.xlu0 %v24, 113
    %v713 = vpop.permute.xlu0 %712
    %714 = vrot.lane.b32.xlu0 %v28, 113
    %v715 = vpop.permute.xlu0 %714
    %716 = vrot.lane.b32.xlu0 %v32, 113
    %v717 = vpop.permute.xlu0 %716
    %718 = vrot.lane.b32.xlu0 %v36, 113
    %v719 = vpop.permute.xlu0 %718
    %720 = vrot.lane.b32.xlu0 %v40, 113
    %v721 = vpop.permute.xlu0 %720
    %vm722 = vcmp.lt.s32.totalorder %v82, 113
    %v723 = vsel %vm722, %v703, %v713
    %v724 = vsel %vm722, %v705, %v715
    %v725 = vsel %vm722, %v707, %v717
    %v726 = vsel %vm722, %v709, %v719
    %v727 = vsel %vm722, %v711, %v721
    %v728 = vsel %vm722, %v693, %v703
    %v729 = vsel %vm722, %v695, %v705
    %v730 = vsel %vm722, %v697, %v707
    %v731 = vsel %vm722, %v699, %v709
    %v732 = vsel %vm722, %v701, %v711
    %v733 = vsel %vm722, %v683, %v693
    %v734 = vsel %vm722, %v685, %v695
    %v735 = vsel %vm722, %v687, %v697
    %v736 = vsel %vm722, %v689, %v699
    %v737 = vsel %vm722, %v691, %v701
    %v738 = vsel %vm722, %v713, %v683
    %v739 = vsel %vm722, %v715, %v685
    %v740 = vsel %vm722, %v717, %v687
    %v741 = vsel %vm722, %v719, %v689
    %v742 = vsel %vm722, %v721, %v691
    %s743 = scalar_lea.vmem %s3, 24
    %v744 = vld [vmem:[%s743] sm:$0xf]
    %v746 = vlaneseq
    %v747 = vshrl.u32 %v746, 7
    %v748 = vsub.s32 0, %v747
    %v749 = vrot.slane %v744, %v748
    %v750 = vlaneseq
    %v751 = vshrl.u32 %v750, 7
    %v752 = vsub.s32 1, %v751
    %v753 = vrot.slane %v744, %v752
    %v754 = vlaneseq
    %v755 = vshrl.u32 %v754, 7
    %v756 = vsub.s32 2, %v755
    %v757 = vrot.slane %v744, %v756
    %v758 = vlaneseq
    %v759 = vshrl.u32 %v758, 7
    %v760 = vsub.s32 3, %v759
    %v761 = vrot.slane %v744, %v760
    %v766 = vmul.f32 %v733, %v749
    %v767 = vmul.f32 %v728, %v753
    %v768 = vmul.f32 %v723, %v757
    %v769 = vmul.f32 %v738, %v761
    %v770 = vmul.f32 %v734, %v749
    %v771 = vmul.f32 %v729, %v753
    %v772 = vmul.f32 %v724, %v757
    %v773 = vmul.f32 %v739, %v761
    %v774 = vmul.f32 %v735, %v749
    %v775 = vmul.f32 %v730, %v753
    %v776 = vmul.f32 %v725, %v757
    %v777 = vmul.f32 %v740, %v761
    %v778 = vmul.f32 %v736, %v749
    %v779 = vmul.f32 %v731, %v753
    %v780 = vmul.f32 %v726, %v757
    %v781 = vmul.f32 %v741, %v761
    %v782 = vmul.f32 %v737, %v749
    %v783 = vmul.f32 %v732, %v753
    %v784 = vmul.f32 %v727, %v757
    %v785 = vmul.f32 %v742, %v761
    %786 = vst [vmem:[#allocation2 + $0x3c0] sm:$0xff] %v766
    %787 = vst [vmem:[#allocation2 + $0x3c8] sm:$0xff] %v767
    %788 = vst [vmem:[#allocation2 + $0x3d0] sm:$0xff] %v768
    %789 = vst [vmem:[#allocation2 + $0x3d8] sm:$0xff] %v769
    %790 = vst [vmem:[#allocation2 + $0x3e0] sm:$0xff] %v770
    %791 = vst [vmem:[#allocation2 + $0x3e8] sm:$0xff] %v771
    %792 = vst [vmem:[#allocation2 + $0x3f0] sm:$0xff] %v772
    %793 = vst [vmem:[#allocation2 + $0x3f8] sm:$0xff] %v773
    %794 = vst [vmem:[#allocation2 + $0x400] sm:$0xff] %v774
    %795 = vst [vmem:[#allocation2 + $0x408] sm:$0xff] %v775
    %796 = vst [vmem:[#allocation2 + $0x410] sm:$0xff] %v776
    %797 = vst [vmem:[#allocation2 + $0x418] sm:$0xff] %v777
    %798 = vst [vmem:[#allocation2 + $0x420] sm:$0xff] %v778
    %799 = vst [vmem:[#allocation2 + $0x428] sm:$0xff] %v779
    %800 = vst [vmem:[#allocation2 + $0x430] sm:$0xff] %v780
    %801 = vst [vmem:[#allocation2 + $0x438] sm:$0xff] %v781
    %802 = vst [vmem:[#allocation2 + $0x440] sm:$0xff] %v782
    %803 = vst [vmem:[#allocation2 + $0x448] sm:$0xff] %v783
    %804 = vst [vmem:[#allocation2 + $0x450] sm:$0xff] %v784
    %805 = vst [vmem:[#allocation2 + $0x458] sm:$0xff] %v785
    %806 = vrot.lane.b32.xlu0 %v21, 112
    %v807 = vpop.permute.xlu0 %806
    %808 = vrot.lane.b32.xlu0 %v25, 112
    %v809 = vpop.permute.xlu0 %808
    %810 = vrot.lane.b32.xlu0 %v29, 112
    %v811 = vpop.permute.xlu0 %810
    %812 = vrot.lane.b32.xlu0 %v33, 112
    %v813 = vpop.permute.xlu0 %812
    %814 = vrot.lane.b32.xlu0 %v37, 112
    %v815 = vpop.permute.xlu0 %814
    %816 = vrot.lane.b32.xlu0 %v22, 112
    %v817 = vpop.permute.xlu0 %816
    %818 = vrot.lane.b32.xlu0 %v26, 112
    %v819 = vpop.permute.xlu0 %818
    %820 = vrot.lane.b32.xlu0 %v30, 112
    %v821 = vpop.permute.xlu0 %820
    %822 = vrot.lane.b32.xlu0 %v34, 112
    %v823 = vpop.permute.xlu0 %822
    %824 = vrot.lane.b32.xlu0 %v38, 112
    %v825 = vpop.permute.xlu0 %824
    %826 = vrot.lane.b32.xlu0 %v23, 112
    %v827 = vpop.permute.xlu0 %826
    %828 = vrot.lane.b32.xlu0 %v27, 112
    %v829 = vpop.permute.xlu0 %828
    %830 = vrot.lane.b32.xlu0 %v31, 112
    %v831 = vpop.permute.xlu0 %830
    %832 = vrot.lane.b32.xlu0 %v35, 112
    %v833 = vpop.permute.xlu0 %832
    %834 = vrot.lane.b32.xlu0 %v39, 112
    %v835 = vpop.permute.xlu0 %834
    %836 = vrot.lane.b32.xlu0 %v24, 112
    %v837 = vpop.permute.xlu0 %836
    %838 = vrot.lane.b32.xlu0 %v28, 112
    %v839 = vpop.permute.xlu0 %838
    %840 = vrot.lane.b32.xlu0 %v32, 112
    %v841 = vpop.permute.xlu0 %840
    %842 = vrot.lane.b32.xlu0 %v36, 112
    %v843 = vpop.permute.xlu0 %842
    %844 = vrot.lane.b32.xlu0 %v40, 112
    %v845 = vpop.permute.xlu0 %844
    %vm846 = vcmp.lt.s32.totalorder %v82, 112
    %v847 = vsel %vm846, %v827, %v837
    %v848 = vsel %vm846, %v829, %v839
    %v849 = vsel %vm846, %v831, %v841
    %v850 = vsel %vm846, %v833, %v843
    %v851 = vsel %vm846, %v835, %v845
    %v852 = vsel %vm846, %v817, %v827
    %v853 = vsel %vm846, %v819, %v829
    %v854 = vsel %vm846, %v821, %v831
    %v855 = vsel %vm846, %v823, %v833
    %v856 = vsel %vm846, %v825, %v835
    %v857 = vsel %vm846, %v807, %v817
    %v858 = vsel %vm846, %v809, %v819
    %v859 = vsel %vm846, %v811, %v821
    %v860 = vsel %vm846, %v813, %v823
    %v861 = vsel %vm846, %v815, %v825
    %v862 = vsel %vm846, %v837, %v807
    %v863 = vsel %vm846, %v839, %v809
    %v864 = vsel %vm846, %v841, %v811
    %v865 = vsel %vm846, %v843, %v813
    %v866 = vsel %vm846, %v845, %v815
    %s867 = scalar_lea.vmem %s3, 28
    %v868 = vld [vmem:[%s867] sm:$0xf]
    %v870 = vlaneseq
    %v871 = vshrl.u32 %v870, 7
    %v872 = vsub.s32 0, %v871
    %v873 = vrot.slane %v868, %v872
    %v874 = vlaneseq
    %v875 = vshrl.u32 %v874, 7
    %v876 = vsub.s32 1, %v875
    %v877 = vrot.slane %v868, %v876
    %v878 = vlaneseq
    %v879 = vshrl.u32 %v878, 7
    %v880 = vsub.s32 2, %v879
    %v881 = vrot.slane %v868, %v880
    %v882 = vlaneseq
    %v883 = vshrl.u32 %v882, 7
    %v884 = vsub.s32 3, %v883
    %v885 = vrot.slane %v868, %v884
    %v890 = vmul.f32 %v857, %v873
    %v891 = vmul.f32 %v852, %v877
    %v892 = vmul.f32 %v847, %v881
    %v893 = vmul.f32 %v862, %v885
    %v894 = vmul.f32 %v858, %v873
    %v895 = vmul.f32 %v853, %v877
    %v896 = vmul.f32 %v848, %v881
    %v897 = vmul.f32 %v863, %v885
    %v898 = vmul.f32 %v859, %v873
    %v899 = vmul.f32 %v854, %v877
    %v900 = vmul.f32 %v849, %v881
    %v901 = vmul.f32 %v864, %v885
    %v902 = vmul.f32 %v860, %v873
    %v903 = vmul.f32 %v855, %v877
    %v904 = vmul.f32 %v850, %v881
    %v905 = vmul.f32 %v865, %v885
    %v906 = vmul.f32 %v861, %v873
    %v907 = vmul.f32 %v856, %v877
    %v908 = vmul.f32 %v851, %v881
    %v909 = vmul.f32 %v866, %v885
    %910 = vst [vmem:[#allocation2 + $0x460] sm:$0xff] %v890
    %911 = vst [vmem:[#allocation2 + $0x468] sm:$0xff] %v891
    %912 = vst [vmem:[#allocation2 + $0x470] sm:$0xff] %v892
    %913 = vst [vmem:[#allocation2 + $0x478] sm:$0xff] %v893
    %914 = vst [vmem:[#allocation2 + $0x480] sm:$0xff] %v894
    %915 = vst [vmem:[#allocation2 + $0x488] sm:$0xff] %v895
    %916 = vst [vmem:[#allocation2 + $0x490] sm:$0xff] %v896
    %917 = vst [vmem:[#allocation2 + $0x498] sm:$0xff] %v897
    %918 = vst [vmem:[#allocation2 + $0x4a0] sm:$0xff] %v898
    %919 = vst [vmem:[#allocation2 + $0x4a8] sm:$0xff] %v899
    %920 = vst [vmem:[#allocation2 + $0x4b0] sm:$0xff] %v900
    %921 = vst [vmem:[#allocation2 + $0x4b8] sm:$0xff] %v901
    %922 = vst [vmem:[#allocation2 + $0x4c0] sm:$0xff] %v902
    %923 = vst [vmem:[#allocation2 + $0x4c8] sm:$0xff] %v903
    %924 = vst [vmem:[#allocation2 + $0x4d0] sm:$0xff] %v904
    %925 = vst [vmem:[#allocation2 + $0x4d8] sm:$0xff] %v905
    %926 = vst [vmem:[#allocation2 + $0x4e0] sm:$0xff] %v906
    %927 = vst [vmem:[#allocation2 + $0x4e8] sm:$0xff] %v907
    %928 = vst [vmem:[#allocation2 + $0x4f0] sm:$0xff] %v908
    %929 = vst [vmem:[#allocation2 + $0x4f8] sm:$0xff] %v909
    %930 = vrot.lane.b32.xlu0 %v21, 111
    %v931 = vpop.permute.xlu0 %930
    %932 = vrot.lane.b32.xlu0 %v25, 111
    %v933 = vpop.permute.xlu0 %932
    %934 = vrot.lane.b32.xlu0 %v29, 111
    %v935 = vpop.permute.xlu0 %934
    %936 = vrot.lane.b32.xlu0 %v33, 111
    %v937 = vpop.permute.xlu0 %936
    %938 = vrot.lane.b32.xlu0 %v37, 111
    %v939 = vpop.permute.xlu0 %938
    %940 = vrot.lane.b32.xlu0 %v22, 111
    %v941 = vpop.permute.xlu0 %940
    %942 = vrot.lane.b32.xlu0 %v26, 111
    %v943 = vpop.permute.xlu0 %942
    %944 = vrot.lane.b32.xlu0 %v30, 111
    %v945 = vpop.permute.xlu0 %944
    %946 = vrot.lane.b32.xlu0 %v34, 111
    %v947 = vpop.permute.xlu0 %946
    %948 = vrot.lane.b32.xlu0 %v38, 111
    %v949 = vpop.permute.xlu0 %948
    %950 = vrot.lane.b32.xlu0 %v23, 111
    %v951 = vpop.permute.xlu0 %950
    %952 = vrot.lane.b32.xlu0 %v27, 111
    %v953 = vpop.permute.xlu0 %952
    %954 = vrot.lane.b32.xlu0 %v31, 111
    %v955 = vpop.permute.xlu0 %954
    %956 = vrot.lane.b32.xlu0 %v35, 111
    %v957 = vpop.permute.xlu0 %956
    %958 = vrot.lane.b32.xlu0 %v39, 111
    %v959 = vpop.permute.xlu0 %958
    %960 = vrot.lane.b32.xlu0 %v24, 111
    %v961 = vpop.permute.xlu0 %960
    %962 = vrot.lane.b32.xlu0 %v28, 111
    %v963 = vpop.permute.xlu0 %962
    %964 = vrot.lane.b32.xlu0 %v32, 111
    %v965 = vpop.permute.xlu0 %964
    %966 = vrot.lane.b32.xlu0 %v36, 111
    %v967 = vpop.permute.xlu0 %966
    %968 = vrot.lane.b32.xlu0 %v40, 111
    %v969 = vpop.permute.xlu0 %968
    %vm970 = vcmp.lt.s32.totalorder %v82, 111
    %v971 = vsel %vm970, %v951, %v961
    %v972 = vsel %vm970, %v953, %v963
    %v973 = vsel %vm970, %v955, %v965
    %v974 = vsel %vm970, %v957, %v967
    %v975 = vsel %vm970, %v959, %v969
    %v976 = vsel %vm970, %v941, %v951
    %v977 = vsel %vm970, %v943, %v953
    %v978 = vsel %vm970, %v945, %v955
    %v979 = vsel %vm970, %v947, %v957
    %v980 = vsel %vm970, %v949, %v959
    %v981 = vsel %vm970, %v931, %v941
    %v982 = vsel %vm970, %v933, %v943
    %v983 = vsel %vm970, %v935, %v945
    %v984 = vsel %vm970, %v937, %v947
    %v985 = vsel %vm970, %v939, %v949
    %v986 = vsel %vm970, %v961, %v931
    %v987 = vsel %vm970, %v963, %v933
    %v988 = vsel %vm970, %v965, %v935
    %v989 = vsel %vm970, %v967, %v937
    %v990 = vsel %vm970, %v969, %v939
    %s991 = scalar_lea.vmem %s3, 32
    %v992 = vld [vmem:[%s991] sm:$0xf]
    %v994 = vlaneseq
    %v995 = vshrl.u32 %v994, 7
    %v996 = vsub.s32 0, %v995
    %v997 = vrot.slane %v992, %v996
    %v998 = vlaneseq
    %v999 = vshrl.u32 %v998, 7
    %v1000 = vsub.s32 1, %v999
    %v1001 = vrot.slane %v992, %v1000
    %v1002 = vlaneseq
    %v1003 = vshrl.u32 %v1002, 7
    %v1004 = vsub.s32 2, %v1003
    %v1005 = vrot.slane %v992, %v1004
    %v1006 = vlaneseq
    %v1007 = vshrl.u32 %v1006, 7
    %v1008 = vsub.s32 3, %v1007
    %v1009 = vrot.slane %v992, %v1008
    %v1014 = vmul.f32 %v981, %v997
    %v1015 = vmul.f32 %v976, %v1001
    %v1016 = vmul.f32 %v971, %v1005
    %v1017 = vmul.f32 %v986, %v1009
    %v1018 = vmul.f32 %v982, %v997
    %v1019 = vmul.f32 %v977, %v1001
    %v1020 = vmul.f32 %v972, %v1005
    %v1021 = vmul.f32 %v987, %v1009
    %v1022 = vmul.f32 %v983, %v997
    %v1023 = vmul.f32 %v978, %v1001
    %v1024 = vmul.f32 %v973, %v1005
    %v1025 = vmul.f32 %v988, %v1009
    %v1026 = vmul.f32 %v984, %v997
    %v1027 = vmul.f32 %v979, %v1001
    %v1028 = vmul.f32 %v974, %v1005
    %v1029 = vmul.f32 %v989, %v1009
    %v1030 = vmul.f32 %v985, %v997
    %v1031 = vmul.f32 %v980, %v1001
    %v1032 = vmul.f32 %v975, %v1005
    %v1033 = vmul.f32 %v990, %v1009
    %1034 = vst [vmem:[#allocation2 + $0x500] sm:$0xff] %v1014
    %1035 = vst [vmem:[#allocation2 + $0x508] sm:$0xff] %v1015
    %1036 = vst [vmem:[#allocation2 + $0x510] sm:$0xff] %v1016
    %1037 = vst [vmem:[#allocation2 + $0x518] sm:$0xff] %v1017
    %1038 = vst [vmem:[#allocation2 + $0x520] sm:$0xff] %v1018
    %1039 = vst [vmem:[#allocation2 + $0x528] sm:$0xff] %v1019
    %1040 = vst [vmem:[#allocation2 + $0x530] sm:$0xff] %v1020
    %1041 = vst [vmem:[#allocation2 + $0x538] sm:$0xff] %v1021
    %1042 = vst [vmem:[#allocation2 + $0x540] sm:$0xff] %v1022
    %1043 = vst [vmem:[#allocation2 + $0x548] sm:$0xff] %v1023
    %1044 = vst [vmem:[#allocation2 + $0x550] sm:$0xff] %v1024
    %1045 = vst [vmem:[#allocation2 + $0x558] sm:$0xff] %v1025
    %1046 = vst [vmem:[#allocation2 + $0x560] sm:$0xff] %v1026
    %1047 = vst [vmem:[#allocation2 + $0x568] sm:$0xff] %v1027
    %1048 = vst [vmem:[#allocation2 + $0x570] sm:$0xff] %v1028
    %1049 = vst [vmem:[#allocation2 + $0x578] sm:$0xff] %v1029
    %1050 = vst [vmem:[#allocation2 + $0x580] sm:$0xff] %v1030
    %1051 = vst [vmem:[#allocation2 + $0x588] sm:$0xff] %v1031
    %1052 = vst [vmem:[#allocation2 + $0x590] sm:$0xff] %v1032
    %1053 = vst [vmem:[#allocation2 + $0x598] sm:$0xff] %v1033
    %v1054 = vlaneseq
    %v1055 = vshrl.u32 %v1054, 7
    %vm1056 = vcmp.eq.s32.totalorder %v1055, 0
    %v1057 = vsel %vm1056, 1, 0
    %v1058 = vcvt.s32.f32 %v1057
    %1059 = vst [vmem:[#allocation2 + $0x5a0] sm:$0xff] %v1058
    %1060 = vst [vmem:[#allocation2 + $0x5a8] sm:$0xff] %v1058
    %1061 = vst [vmem:[#allocation2 + $0x5b0] sm:$0xff] %v1058
    %1062 = vst [vmem:[#allocation2 + $0x5b8] sm:$0xff] %v1058
    %v1063 = vld [vmem:[%s2] sm:$0xff]
    %v1064 = vld [vmem:[%s2 + $0x8] sm:$0xff]
    %v1065 = vld [vmem:[%s2 + $0x10] sm:$0xff]
    %v1066 = vld [vmem:[%s2 + $0x18] sm:$0xff]
    %v1067 = vld [vmem:[%s2 + $0x20] sm:$0xff]
    %v1068 = vld [vmem:[%s2 + $0x28] sm:$0xff]
    %v1069 = vld [vmem:[%s2 + $0x30] sm:$0xff]
    %v1070 = vld [vmem:[%s2 + $0x38] sm:$0xff]
    %v1071 = vld [vmem:[%s2 + $0x40] sm:$0xff]
    %v1072 = vld [vmem:[%s2 + $0x48] sm:$0xff]
    %v1073 = vld [vmem:[%s2 + $0x50] sm:$0xff]
    %v1074 = vld [vmem:[%s2 + $0x58] sm:$0xff]
    %v1075 = vld [vmem:[%s2 + $0x60] sm:$0xff]
    %v1076 = vld [vmem:[%s2 + $0x68] sm:$0xff]
    %v1077 = vld [vmem:[%s2 + $0x70] sm:$0xff]
    %v1078 = vld [vmem:[%s2 + $0x78] sm:$0xff]
    %v1079 = vld [vmem:[%s2 + $0x80] sm:$0xff]
    %v1080 = vld [vmem:[%s2 + $0x88] sm:$0xff]
    %v1081 = vld [vmem:[%s2 + $0x90] sm:$0xff]
    %v1082 = vld [vmem:[%s2 + $0x98] sm:$0xff]
    %v1083 = vld [vmem:[%s2 + $0xa0] sm:$0xff]
    %v1084 = vld [vmem:[%s2 + $0xa8] sm:$0xff]
    %v1085 = vld [vmem:[%s2 + $0xb0] sm:$0xff]
    %v1086 = vld [vmem:[%s2 + $0xb8] sm:$0xff]
    %v1087 = vld [vmem:[%s2 + $0xc0] sm:$0xff]
    %v1088 = vld [vmem:[%s2 + $0xc8] sm:$0xff]
    %v1089 = vld [vmem:[%s2 + $0xd0] sm:$0xff]
    %v1090 = vld [vmem:[%s2 + $0xd8] sm:$0xff]
    %v1091 = vld [vmem:[%s2 + $0xe0] sm:$0xff]
    %v1092 = vld [vmem:[%s2 + $0xe8] sm:$0xff]
    %v1093 = vld [vmem:[%s2 + $0xf0] sm:$0xff]
    %v1094 = vld [vmem:[%s2 + $0xf8] sm:$0xff]
    %v1095 = vld [vmem:[%s2 + $0x100] sm:$0xff]
    %v1096 = vld [vmem:[%s2 + $0x108] sm:$0xff]
    %v1097 = vld [vmem:[%s2 + $0x110] sm:$0xff]
    %v1098 = vld [vmem:[%s2 + $0x118] sm:$0xff]
    %v1099 = vld [vmem:[%s2 + $0x120] sm:$0xff]
    %v1100 = vld [vmem:[%s2 + $0x128] sm:$0xff]
    %v1101 = vld [vmem:[%s2 + $0x130] sm:$0xff]
    %v1102 = vld [vmem:[%s2 + $0x138] sm:$0xff]
    %v1103 = vld [vmem:[%s2 + $0x140] sm:$0xff]
    %v1104 = vld [vmem:[%s2 + $0x148] sm:$0xff]
    %v1105 = vld [vmem:[%s2 + $0x150] sm:$0xff]
    %v1106 = vld [vmem:[%s2 + $0x158] sm:$0xff]
    %v1107 = vld [vmem:[%s2 + $0x160] sm:$0xff]
    %v1108 = vld [vmem:[%s2 + $0x168] sm:$0xff]
    %v1109 = vld [vmem:[%s2 + $0x170] sm:$0xff]
    %v1110 = vld [vmem:[%s2 + $0x178] sm:$0xff]
    %v1111 = vld [vmem:[#allocation2] sm:$0xff]
    %v1112 = vld [vmem:[#allocation2 + $0x8] sm:$0xff]
    %v1113 = vld [vmem:[#allocation2 + $0x10] sm:$0xff]
    %v1114 = vld [vmem:[#allocation2 + $0x18] sm:$0xff]
    %v1115 = vld [vmem:[#allocation2 + $0x20] sm:$0xff]
    %v1116 = vld [vmem:[#allocation2 + $0x28] sm:$0xff]
    %v1117 = vld [vmem:[#allocation2 + $0x30] sm:$0xff]
    %v1118 = vld [vmem:[#allocation2 + $0x38] sm:$0xff]
    %v1119 = vld [vmem:[#allocation2 + $0x40] sm:$0xff]
    %v1120 = vld [vmem:[#allocation2 + $0x48] sm:$0xff]
    %v1121 = vld [vmem:[#allocation2 + $0x50] sm:$0xff]
    %v1122 = vld [vmem:[#allocation2 + $0x58] sm:$0xff]
    %v1123 = vld [vmem:[#allocation2 + $0x60] sm:$0xff]
    %v1124 = vld [vmem:[#allocation2 + $0x68] sm:$0xff]
    %v1125 = vld [vmem:[#allocation2 + $0x70] sm:$0xff]
    %v1126 = vld [vmem:[#allocation2 + $0x78] sm:$0xff]
    %v1127 = vld [vmem:[#allocation2 + $0x80] sm:$0xff]
    %v1128 = vld [vmem:[#allocation2 + $0x88] sm:$0xff]
    %v1129 = vld [vmem:[#allocation2 + $0x90] sm:$0xff]
    %v1130 = vld [vmem:[#allocation2 + $0x98] sm:$0xff]
    %v1131 = vld [vmem:[#allocation2 + $0xa0] sm:$0xff]
    %v1132 = vld [vmem:[#allocation2 + $0xa8] sm:$0xff]
    %v1133 = vld [vmem:[#allocation2 + $0xb0] sm:$0xff]
    %v1134 = vld [vmem:[#allocation2 + $0xb8] sm:$0xff]
    %v1135 = vld [vmem:[#allocation2 + $0xc0] sm:$0xff]
    %v1136 = vld [vmem:[#allocation2 + $0xc8] sm:$0xff]
    %v1137 = vld [vmem:[#allocation2 + $0xd0] sm:$0xff]
    %v1138 = vld [vmem:[#allocation2 + $0xd8] sm:$0xff]
    %v1139 = vld [vmem:[#allocation2 + $0xe0] sm:$0xff]
    %v1140 = vld [vmem:[#allocation2 + $0xe8] sm:$0xff]
    %v1141 = vld [vmem:[#allocation2 + $0xf0] sm:$0xff]
    %v1142 = vld [vmem:[#allocation2 + $0xf8] sm:$0xff]
    %v1143 = vld [vmem:[#allocation2 + $0x100] sm:$0xff]
    %v1144 = vld [vmem:[#allocation2 + $0x108] sm:$0xff]
    %v1145 = vld [vmem:[#allocation2 + $0x110] sm:$0xff]
    %v1146 = vld [vmem:[#allocation2 + $0x118] sm:$0xff]
    %v1147 = vld [vmem:[#allocation2 + $0x120] sm:$0xff]
    %v1148 = vld [vmem:[#allocation2 + $0x128] sm:$0xff]
    %v1149 = vld [vmem:[#allocation2 + $0x130] sm:$0xff]
    %v1150 = vld [vmem:[#allocation2 + $0x138] sm:$0xff]
    %v1151 = vld [vmem:[#allocation2 + $0x140] sm:$0xff]
    %v1152 = vld [vmem:[#allocation2 + $0x148] sm:$0xff]
    %v1153 = vld [vmem:[#allocation2 + $0x150] sm:$0xff]
    %v1154 = vld [vmem:[#allocation2 + $0x158] sm:$0xff]
    %v1155 = vld [vmem:[#allocation2 + $0x160] sm:$0xff]
    %v1156 = vld [vmem:[#allocation2 + $0x168] sm:$0xff]
    %v1157 = vld [vmem:[#allocation2 + $0x170] sm:$0xff]
    %v1158 = vld [vmem:[#allocation2 + $0x178] sm:$0xff]
    %v1159 = vld [vmem:[#allocation2 + $0x180] sm:$0xff]
    %v1160 = vld [vmem:[#allocation2 + $0x188] sm:$0xff]
    %v1161 = vld [vmem:[#allocation2 + $0x190] sm:$0xff]
    %v1162 = vld [vmem:[#allocation2 + $0x198] sm:$0xff]
    %v1163 = vld [vmem:[#allocation2 + $0x1a0] sm:$0xff]
    %v1164 = vld [vmem:[#allocation2 + $0x1a8] sm:$0xff]
    %v1165 = vld [vmem:[#allocation2 + $0x1b0] sm:$0xff]
    %v1166 = vld [vmem:[#allocation2 + $0x1b8] sm:$0xff]
    %v1167 = vld [vmem:[#allocation2 + $0x1c0] sm:$0xff]
    %v1168 = vld [vmem:[#allocation2 + $0x1c8] sm:$0xff]
    %v1169 = vld [vmem:[#allocation2 + $0x1d0] sm:$0xff]
    %v1170 = vld [vmem:[#allocation2 + $0x1d8] sm:$0xff]
    %v1171 = vld [vmem:[#allocation2 + $0x1e0] sm:$0xff]
    %v1172 = vld [vmem:[#allocation2 + $0x1e8] sm:$0xff]
    %v1173 = vld [vmem:[#allocation2 + $0x1f0] sm:$0xff]
    %v1174 = vld [vmem:[#allocation2 + $0x1f8] sm:$0xff]
    %v1175 = vld [vmem:[#allocation2 + $0x200] sm:$0xff]
    %v1176 = vld [vmem:[#allocation2 + $0x208] sm:$0xff]
    %v1177 = vld [vmem:[#allocation2 + $0x210] sm:$0xff]
    %v1178 = vld [vmem:[#allocation2 + $0x218] sm:$0xff]
    %v1179 = vld [vmem:[#allocation2 + $0x220] sm:$0xff]
    %v1180 = vld [vmem:[#allocation2 + $0x228] sm:$0xff]
    %v1181 = vld [vmem:[#allocation2 + $0x230] sm:$0xff]
    %v1182 = vld [vmem:[#allocation2 + $0x238] sm:$0xff]
    %v1183 = vld [vmem:[#allocation2 + $0x240] sm:$0xff]
    %v1184 = vld [vmem:[#allocation2 + $0x248] sm:$0xff]
    %v1185 = vld [vmem:[#allocation2 + $0x250] sm:$0xff]
    %v1186 = vld [vmem:[#allocation2 + $0x258] sm:$0xff]
    %v1187 = vld [vmem:[#allocation2 + $0x260] sm:$0xff]
    %v1188 = vld [vmem:[#allocation2 + $0x268] sm:$0xff]
    %v1189 = vld [vmem:[#allocation2 + $0x270] sm:$0xff]
    %v1190 = vld [vmem:[#allocation2 + $0x278] sm:$0xff]
    %v1191 = vld [vmem:[#allocation2 + $0x280] sm:$0xff]
    %v1192 = vld [vmem:[#allocation2 + $0x288] sm:$0xff]
    %v1193 = vld [vmem:[#allocation2 + $0x290] sm:$0xff]
    %v1194 = vld [vmem:[#allocation2 + $0x298] sm:$0xff]
    %v1195 = vld [vmem:[#allocation2 + $0x2a0] sm:$0xff]
    %v1196 = vld [vmem:[#allocation2 + $0x2a8] sm:$0xff]
    %v1197 = vld [vmem:[#allocation2 + $0x2b0] sm:$0xff]
    %v1198 = vld [vmem:[#allocation2 + $0x2b8] sm:$0xff]
    %v1199 = vld [vmem:[#allocation2 + $0x2c0] sm:$0xff]
    %v1200 = vld [vmem:[#allocation2 + $0x2c8] sm:$0xff]
    %v1201 = vld [vmem:[#allocation2 + $0x2d0] sm:$0xff]
    %v1202 = vld [vmem:[#allocation2 + $0x2d8] sm:$0xff]
    %v1203 = vld [vmem:[#allocation2 + $0x2e0] sm:$0xff]
    %v1204 = vld [vmem:[#allocation2 + $0x2e8] sm:$0xff]
    %v1205 = vld [vmem:[#allocation2 + $0x2f0] sm:$0xff]
    %v1206 = vld [vmem:[#allocation2 + $0x2f8] sm:$0xff]
    %v1207 = vld [vmem:[#allocation2 + $0x300] sm:$0xff]
    %v1208 = vld [vmem:[#allocation2 + $0x308] sm:$0xff]
    %v1209 = vld [vmem:[#allocation2 + $0x310] sm:$0xff]
    %v1210 = vld [vmem:[#allocation2 + $0x318] sm:$0xff]
    %v1211 = vld [vmem:[#allocation2 + $0x320] sm:$0xff]
    %v1212 = vld [vmem:[#allocation2 + $0x328] sm:$0xff]
    %v1213 = vld [vmem:[#allocation2 + $0x330] sm:$0xff]
    %v1214 = vld [vmem:[#allocation2 + $0x338] sm:$0xff]
    %v1215 = vld [vmem:[#allocation2 + $0x340] sm:$0xff]
    %v1216 = vld [vmem:[#allocation2 + $0x348] sm:$0xff]
    %v1217 = vld [vmem:[#allocation2 + $0x350] sm:$0xff]
    %v1218 = vld [vmem:[#allocation2 + $0x358] sm:$0xff]
    %v1219 = vld [vmem:[#allocation2 + $0x360] sm:$0xff]
    %v1220 = vld [vmem:[#allocation2 + $0x368] sm:$0xff]
    %v1221 = vld [vmem:[#allocation2 + $0x370] sm:$0xff]
    %v1222 = vld [vmem:[#allocation2 + $0x378] sm:$0xff]
    %v1223 = vld [vmem:[#allocation2 + $0x380] sm:$0xff]
    %v1224 = vld [vmem:[#allocation2 + $0x388] sm:$0xff]
    %v1225 = vld [vmem:[#allocation2 + $0x390] sm:$0xff]
    %v1226 = vld [vmem:[#allocation2 + $0x398] sm:$0xff]
    %v1227 = vld [vmem:[#allocation2 + $0x3a0] sm:$0xff]
    %v1228 = vld [vmem:[#allocation2 + $0x3a8] sm:$0xff]
    %v1229 = vld [vmem:[#allocation2 + $0x3b0] sm:$0xff]
    %v1230 = vld [vmem:[#allocation2 + $0x3b8] sm:$0xff]
    %v1231 = vld [vmem:[#allocation2 + $0x3c0] sm:$0xff]
    %v1232 = vld [vmem:[#allocation2 + $0x3c8] sm:$0xff]
    %v1233 = vld [vmem:[#allocation2 + $0x3d0] sm:$0xff]
    %v1234 = vld [vmem:[#allocation2 + $0x3d8] sm:$0xff]
    %v1235 = vld [vmem:[#allocation2 + $0x3e0] sm:$0xff]
    %v1236 = vld [vmem:[#allocation2 + $0x3e8] sm:$0xff]
    %v1237 = vld [vmem:[#allocation2 + $0x3f0] sm:$0xff]
    %v1238 = vld [vmem:[#allocation2 + $0x3f8] sm:$0xff]
    %v1239 = vld [vmem:[#allocation2 + $0x400] sm:$0xff]
    %v1240 = vld [vmem:[#allocation2 + $0x408] sm:$0xff]
    %v1241 = vld [vmem:[#allocation2 + $0x410] sm:$0xff]
    %v1242 = vld [vmem:[#allocation2 + $0x418] sm:$0xff]
    %v1243 = vld [vmem:[#allocation2 + $0x420] sm:$0xff]
    %v1244 = vld [vmem:[#allocation2 + $0x428] sm:$0xff]
    %v1245 = vld [vmem:[#allocation2 + $0x430] sm:$0xff]
    %v1246 = vld [vmem:[#allocation2 + $0x438] sm:$0xff]
    %v1247 = vld [vmem:[#allocation2 + $0x440] sm:$0xff]
    %v1248 = vld [vmem:[#allocation2 + $0x448] sm:$0xff]
    %v1249 = vld [vmem:[#allocation2 + $0x450] sm:$0xff]
    %v1250 = vld [vmem:[#allocation2 + $0x458] sm:$0xff]
    %v1251 = vld [vmem:[#allocation2 + $0x460] sm:$0xff]
    %v1252 = vld [vmem:[#allocation2 + $0x468] sm:$0xff]
    %v1253 = vld [vmem:[#allocation2 + $0x470] sm:$0xff]
    %v1254 = vld [vmem:[#allocation2 + $0x478] sm:$0xff]
    %v1255 = vld [vmem:[#allocation2 + $0x480] sm:$0xff]
    %v1256 = vld [vmem:[#allocation2 + $0x488] sm:$0xff]
    %v1257 = vld [vmem:[#allocation2 + $0x490] sm:$0xff]
    %v1258 = vld [vmem:[#allocation2 + $0x498] sm:$0xff]
    %v1259 = vld [vmem:[#allocation2 + $0x4a0] sm:$0xff]
    %v1260 = vld [vmem:[#allocation2 + $0x4a8] sm:$0xff]
    %v1261 = vld [vmem:[#allocation2 + $0x4b0] sm:$0xff]
    %v1262 = vld [vmem:[#allocation2 + $0x4b8] sm:$0xff]
    %v1263 = vld [vmem:[#allocation2 + $0x4c0] sm:$0xff]
    %v1264 = vld [vmem:[#allocation2 + $0x4c8] sm:$0xff]
    %v1265 = vld [vmem:[#allocation2 + $0x4d0] sm:$0xff]
    %v1266 = vld [vmem:[#allocation2 + $0x4d8] sm:$0xff]
    %v1267 = vld [vmem:[#allocation2 + $0x4e0] sm:$0xff]
    %v1268 = vld [vmem:[#allocation2 + $0x4e8] sm:$0xff]
    %v1269 = vld [vmem:[#allocation2 + $0x4f0] sm:$0xff]
    %v1270 = vld [vmem:[#allocation2 + $0x4f8] sm:$0xff]
    %v1271 = vld [vmem:[#allocation2 + $0x500] sm:$0xff]
    %v1272 = vld [vmem:[#allocation2 + $0x508] sm:$0xff]
    %v1273 = vld [vmem:[#allocation2 + $0x510] sm:$0xff]
    %v1274 = vld [vmem:[#allocation2 + $0x518] sm:$0xff]
    %v1275 = vld [vmem:[#allocation2 + $0x520] sm:$0xff]
    %v1276 = vld [vmem:[#allocation2 + $0x528] sm:$0xff]
    %v1277 = vld [vmem:[#allocation2 + $0x530] sm:$0xff]
    %v1278 = vld [vmem:[#allocation2 + $0x538] sm:$0xff]
    %v1279 = vld [vmem:[#allocation2 + $0x540] sm:$0xff]
    %v1280 = vld [vmem:[#allocation2 + $0x548] sm:$0xff]
    %v1281 = vld [vmem:[#allocation2 + $0x550] sm:$0xff]
    %v1282 = vld [vmem:[#allocation2 + $0x558] sm:$0xff]
    %v1283 = vld [vmem:[#allocation2 + $0x560] sm:$0xff]
    %v1284 = vld [vmem:[#allocation2 + $0x568] sm:$0xff]
    %v1285 = vld [vmem:[#allocation2 + $0x570] sm:$0xff]
    %v1286 = vld [vmem:[#allocation2 + $0x578] sm:$0xff]
    %v1287 = vld [vmem:[#allocation2 + $0x580] sm:$0xff]
    %v1288 = vld [vmem:[#allocation2 + $0x588] sm:$0xff]
    %v1289 = vld [vmem:[#allocation2 + $0x590] sm:$0xff]
    %v1290 = vld [vmem:[#allocation2 + $0x598] sm:$0xff]
    %v1291 = vld [vmem:[#allocation2 + $0x5a0] sm:$0xff]
    %v1292 = vld [vmem:[#allocation2 + $0x5a8] sm:$0xff]
    %v1293 = vld [vmem:[#allocation2 + $0x5b0] sm:$0xff]
    %v1294 = vld [vmem:[#allocation2 + $0x5b8] sm:$0xff]
    %vm1295 = vcmask 916480
    %v1297 = vsel %vm1295, %v1065, 0
    %v1300 = vsel %vm1295, %v1068, 0
    %v1303 = vsel %vm1295, %v1071, 0
    %v1306 = vsel %vm1295, %v1074, 0
    %v1309 = vsel %vm1295, %v1077, 0
    %v1312 = vsel %vm1295, %v1080, 0
    %v1315 = vsel %vm1295, %v1083, 0
    %v1318 = vsel %vm1295, %v1086, 0
    %v1321 = vsel %vm1295, %v1089, 0
    %v1324 = vsel %vm1295, %v1092, 0
    %v1327 = vsel %vm1295, %v1095, 0
    %v1330 = vsel %vm1295, %v1098, 0
    %v1333 = vsel %vm1295, %v1101, 0
    %v1336 = vsel %vm1295, %v1104, 0
    %v1339 = vsel %vm1295, %v1107, 0
    %v1342 = vsel %vm1295, %v1110, 0
    %v1344 = vand.u32 %v1172, 4294901760
    %1345 = vmatprep.subr.mxu0 %v1344
    %v1346 = vand.u32 %v1171, 4294901760
    %1347 = vmatpush1.msra.mxu0 %v1346
    %v1348 = vand.u32 %v1168, 4294901760
    %1349 = vmatprep.subr.mxu0 %v1348
    %v1350 = vand.u32 %v1167, 4294901760
    %1351 = vmatpush1.msra.mxu0 %v1350
    %v1352 = vand.u32 %v1164, 4294901760
    %1353 = vmatprep.subr.mxu0 %v1352
    %v1354 = vand.u32 %v1163, 4294901760
    %1355 = vmatpush1.msra.mxu0 %v1354
    %v1356 = vand.u32 %v1160, 4294901760
    %1357 = vmatprep.subr.mxu0 %v1356
    %v1358 = vand.u32 %v1159, 4294901760
    %1359 = vmatpush1.msra.mxu0 %v1358
    %v1360 = vand.u32 %v1156, 4294901760
    %1361 = vmatprep.subr.mxu0 %v1360
    %v1362 = vand.u32 %v1155, 4294901760
    %1363 = vmatpush1.msra.mxu0 %v1362
    %v1364 = vand.u32 %v1152, 4294901760
    %1365 = vmatprep.subr.mxu0 %v1364
    %v1366 = vand.u32 %v1151, 4294901760
    %1367 = vmatpush1.msra.mxu0 %v1366
    %v1368 = vand.u32 %v1148, 4294901760
    %1369 = vmatprep.subr.mxu0 %v1368
    %v1370 = vand.u32 %v1147, 4294901760
    %1371 = vmatpush1.msra.mxu0 %v1370
    %v1372 = vand.u32 %v1144, 4294901760
    %1373 = vmatprep.subr.mxu0 %v1372
    %v1374 = vand.u32 %v1143, 4294901760
    %1375 = vmatpush1.msra.mxu0 %v1374
    %v1376 = vand.u32 %v1140, 4294901760
    %1377 = vmatprep.subr.mxu0 %v1376
    %v1378 = vand.u32 %v1139, 4294901760
    %1379 = vmatpush1.msra.mxu0 %v1378
    %v1380 = vand.u32 %v1136, 4294901760
    %1381 = vmatprep.subr.mxu0 %v1380
    %v1382 = vand.u32 %v1135, 4294901760
    %1383 = vmatpush1.msra.mxu0 %v1382
    %v1384 = vand.u32 %v1132, 4294901760
    %1385 = vmatprep.subr.mxu0 %v1384
    %v1386 = vand.u32 %v1131, 4294901760
    %1387 = vmatpush1.msra.mxu0 %v1386
    %v1388 = vand.u32 %v1128, 4294901760
    %1389 = vmatprep.subr.mxu0 %v1388
    %v1390 = vand.u32 %v1127, 4294901760
    %1391 = vmatpush1.msra.mxu0 %v1390
    %v1392 = vand.u32 %v1124, 4294901760
    %1393 = vmatprep.subr.mxu0 %v1392
    %v1394 = vand.u32 %v1123, 4294901760
    %1395 = vmatpush1.msra.mxu0 %v1394
    %v1396 = vand.u32 %v1120, 4294901760
    %1397 = vmatprep.subr.mxu0 %v1396
    %v1398 = vand.u32 %v1119, 4294901760
    %1399 = vmatpush1.msra.mxu0 %v1398
    %v1400 = vand.u32 %v1116, 4294901760
    %1401 = vmatprep.subr.mxu0 %v1400
    %v1402 = vand.u32 %v1115, 4294901760
    %1403 = vmatpush1.msra.mxu0 %v1402
    %v1404 = vand.u32 %v1112, 4294901760
    %1405 = vmatprep.subr.mxu0 %v1404
    %v1406 = vand.u32 %v1111, 4294901760
    %1407 = vmatpush1.msra.mxu0 %v1406
    %v1408 = vand.u32 %v1236, 4294901760
    %1409 = vmatprep.subr.mxu0 %v1408
    %v1410 = vand.u32 %v1235, 4294901760
    %1411 = vmatpush2.msra.mxu0 %v1410
    %v1412 = vand.u32 %v1232, 4294901760
    %1413 = vmatprep.subr.mxu0 %v1412
    %v1414 = vand.u32 %v1231, 4294901760
    %1415 = vmatpush2.msra.mxu0 %v1414
    %v1416 = vand.u32 %v1228, 4294901760
    %1417 = vmatprep.subr.mxu0 %v1416
    %v1418 = vand.u32 %v1227, 4294901760
    %1419 = vmatpush2.msra.mxu0 %v1418
    %v1420 = vand.u32 %v1224, 4294901760
    %1421 = vmatprep.subr.mxu0 %v1420
    %v1422 = vand.u32 %v1223, 4294901760
    %1423 = vmatpush2.msra.mxu0 %v1422
    %v1424 = vand.u32 %v1220, 4294901760
    %1425 = vmatprep.subr.mxu0 %v1424
    %v1426 = vand.u32 %v1219, 4294901760
    %1427 = vmatpush2.msra.mxu0 %v1426
    %v1428 = vand.u32 %v1216, 4294901760
    %1429 = vmatprep.subr.mxu0 %v1428
    %v1430 = vand.u32 %v1215, 4294901760
    %1431 = vmatpush2.msra.mxu0 %v1430
    %v1432 = vand.u32 %v1212, 4294901760
    %1433 = vmatprep.subr.mxu0 %v1432
    %v1434 = vand.u32 %v1211, 4294901760
    %1435 = vmatpush2.msra.mxu0 %v1434
    %v1436 = vand.u32 %v1208, 4294901760
    %1437 = vmatprep.subr.mxu0 %v1436
    %v1438 = vand.u32 %v1207, 4294901760
    %1439 = vmatpush2.msra.mxu0 %v1438
    %v1440 = vand.u32 %v1204, 4294901760
    %1441 = vmatprep.subr.mxu0 %v1440
    %v1442 = vand.u32 %v1203, 4294901760
    %1443 = vmatpush2.msra.mxu0 %v1442
    %v1444 = vand.u32 %v1200, 4294901760
    %1445 = vmatprep.subr.mxu0 %v1444
    %v1446 = vand.u32 %v1199, 4294901760
    %1447 = vmatpush2.msra.mxu0 %v1446
    %v1448 = vand.u32 %v1196, 4294901760
    %1449 = vmatprep.subr.mxu0 %v1448
    %v1450 = vand.u32 %v1195, 4294901760
    %1451 = vmatpush2.msra.mxu0 %v1450
    %v1452 = vand.u32 %v1192, 4294901760
    %1453 = vmatprep.subr.mxu0 %v1452
    %v1454 = vand.u32 %v1191, 4294901760
    %1455 = vmatpush2.msra.mxu0 %v1454
    %v1456 = vand.u32 %v1188, 4294901760
    %1457 = vmatprep.subr.mxu0 %v1456
    %v1458 = vand.u32 %v1187, 4294901760
    %1459 = vmatpush2.msra.mxu0 %v1458
    %v1460 = vand.u32 %v1184, 4294901760
    %1461 = vmatprep.subr.mxu0 %v1460
    %v1462 = vand.u32 %v1183, 4294901760
    %1463 = vmatpush2.msra.mxu0 %v1462
    %v1464 = vand.u32 %v1180, 4294901760
    %1465 = vmatprep.subr.mxu0 %v1464
    %v1466 = vand.u32 %v1179, 4294901760
    %1467 = vmatpush2.msra.mxu0 %v1466
    %v1468 = vand.u32 %v1176, 4294901760
    %1469 = vmatprep.subr.mxu0 %v1468
    %v1470 = vand.u32 %v1175, 4294901760
    %1471 = vmatpush2.msra.mxu0 %v1470
    %v1472 = vand.u32 %v1064, 4294901760
    %v1473 = vsub.f32 %v1064, %v1472
    %v1474 = vand.u32 %v1473, 4294901760
    %v1475 = vsub.f32 %v1473, %v1474
    %v1476 = vand.u32 %v1475, 4294901760
    %1477 = vmatprep.mubr.f32.mxu0 %v1476
    %v1478 = vand.u32 %v1063, 4294901760
    %v1479 = vsub.f32 %v1063, %v1478
    %v1480 = vand.u32 %v1479, 4294901760
    %v1481 = vsub.f32 %v1479, %v1480
    %v1482 = vand.u32 %v1481, 4294901760
    %1483 = vmatmul.mubr.f32.gmra.mxu0 %v1482
    %v1484 = vpop.f32.mrf.mxu0
    %v1485 = vadd.f32 0.0, %v1484
    %v1486 = vpop.f32.mrf.mxu0
    %v1487 = vadd.f32 0.0, %v1486
    %v1488 = vand.u32 %v1067, 4294901760
    %v1489 = vsub.f32 %v1067, %v1488
    %v1490 = vand.u32 %v1489, 4294901760
    %v1491 = vsub.f32 %v1489, %v1490
    %v1492 = vand.u32 %v1491, 4294901760
    %1493 = vmatprep.mubr.f32.mxu0 %v1492
    %v1494 = vand.u32 %v1066, 4294901760
    %v1495 = vsub.f32 %v1066, %v1494
    %v1496 = vand.u32 %v1495, 4294901760
    %v1497 = vsub.f32 %v1495, %v1496
    %v1498 = vand.u32 %v1497, 4294901760
    %1499 = vmatmul.mubr.f32.gmra.mxu0 %v1498
    %v1500 = vpop.f32.mrf.mxu0
    %v1501 = vadd.f32 0.0, %v1500
    %v1502 = vpop.f32.mrf.mxu0
    %v1503 = vadd.f32 0.0, %v1502
    %v1504 = vand.u32 %v1070, 4294901760
    %v1505 = vsub.f32 %v1070, %v1504
    %v1506 = vand.u32 %v1505, 4294901760
    %v1507 = vsub.f32 %v1505, %v1506
    %v1508 = vand.u32 %v1507, 4294901760
    %1509 = vmatprep.mubr.f32.mxu0 %v1508
    %v1510 = vand.u32 %v1069, 4294901760
    %v1511 = vsub.f32 %v1069, %v1510
    %v1512 = vand.u32 %v1511, 4294901760
    %v1513 = vsub.f32 %v1511, %v1512
    %v1514 = vand.u32 %v1513, 4294901760
    %1515 = vmatmul.mubr.f32.gmra.mxu0 %v1514
    %v1516 = vpop.f32.mrf.mxu0
    %v1517 = vadd.f32 0.0, %v1516
    %v1518 = vpop.f32.mrf.mxu0
    %v1519 = vadd.f32 0.0, %v1518
    %v1520 = vand.u32 %v1073, 4294901760
    %v1521 = vsub.f32 %v1073, %v1520
    %v1522 = vand.u32 %v1521, 4294901760
    %v1523 = vsub.f32 %v1521, %v1522
    %v1524 = vand.u32 %v1523, 4294901760
    %1525 = vmatprep.mubr.f32.mxu0 %v1524
    %v1526 = vand.u32 %v1072, 4294901760
    %v1527 = vsub.f32 %v1072, %v1526
    %v1528 = vand.u32 %v1527, 4294901760
    %v1529 = vsub.f32 %v1527, %v1528
    %v1530 = vand.u32 %v1529, 4294901760
    %1531 = vmatmul.mubr.f32.gmra.mxu0 %v1530
    %v1532 = vpop.f32.mrf.mxu0
    %v1533 = vadd.f32 0.0, %v1532
    %v1534 = vpop.f32.mrf.mxu0
    %v1535 = vadd.f32 0.0, %v1534
    %v1536 = vand.u32 %v1076, 4294901760
    %v1537 = vsub.f32 %v1076, %v1536
    %v1538 = vand.u32 %v1537, 4294901760
    %v1539 = vsub.f32 %v1537, %v1538
    %v1540 = vand.u32 %v1539, 4294901760
    %1541 = vmatprep.mubr.f32.mxu0 %v1540
    %v1542 = vand.u32 %v1075, 4294901760
    %v1543 = vsub.f32 %v1075, %v1542
    %v1544 = vand.u32 %v1543, 4294901760
    %v1545 = vsub.f32 %v1543, %v1544
    %v1546 = vand.u32 %v1545, 4294901760
    %1547 = vmatmul.mubr.f32.gmra.mxu0 %v1546
    %v1548 = vpop.f32.mrf.mxu0
    %v1549 = vadd.f32 0.0, %v1548
    %v1550 = vpop.f32.mrf.mxu0
    %v1551 = vadd.f32 0.0, %v1550
    %v1552 = vand.u32 %v1079, 4294901760
    %v1553 = vsub.f32 %v1079, %v1552
    %v1554 = vand.u32 %v1553, 4294901760
    %v1555 = vsub.f32 %v1553, %v1554
    %v1556 = vand.u32 %v1555, 4294901760
    %1557 = vmatprep.mubr.f32.mxu0 %v1556
    %v1558 = vand.u32 %v1078, 4294901760
    %v1559 = vsub.f32 %v1078, %v1558
    %v1560 = vand.u32 %v1559, 4294901760
    %v1561 = vsub.f32 %v1559, %v1560
    %v1562 = vand.u32 %v1561, 4294901760
    %1563 = vmatmul.mubr.f32.gmra.mxu0 %v1562
    %v1564 = vpop.f32.mrf.mxu0
    %v1565 = vadd.f32 0.0, %v1564
    %v1566 = vpop.f32.mrf.mxu0
    %v1567 = vadd.f32 0.0, %v1566
    %v1568 = vand.u32 %v1082, 4294901760
    %v1569 = vsub.f32 %v1082, %v1568
    %v1570 = vand.u32 %v1569, 4294901760
    %v1571 = vsub.f32 %v1569, %v1570
    %v1572 = vand.u32 %v1571, 4294901760
    %1573 = vmatprep.mubr.f32.mxu0 %v1572
    %v1574 = vand.u32 %v1081, 4294901760
    %v1575 = vsub.f32 %v1081, %v1574
    %v1576 = vand.u32 %v1575, 4294901760
    %v1577 = vsub.f32 %v1575, %v1576
    %v1578 = vand.u32 %v1577, 4294901760
    %1579 = vmatmul.mubr.f32.gmra.mxu0 %v1578
    %v1580 = vpop.f32.mrf.mxu0
    %v1581 = vadd.f32 0.0, %v1580
    %v1582 = vpop.f32.mrf.mxu0
    %v1583 = vadd.f32 0.0, %v1582
    %v1584 = vand.u32 %v1085, 4294901760
    %v1585 = vsub.f32 %v1085, %v1584
    %v1586 = vand.u32 %v1585, 4294901760
    %v1587 = vsub.f32 %v1585, %v1586
    %v1588 = vand.u32 %v1587, 4294901760
    %1589 = vmatprep.mubr.f32.mxu0 %v1588
    %v1590 = vand.u32 %v1084, 4294901760
    %v1591 = vsub.f32 %v1084, %v1590
    %v1592 = vand.u32 %v1591, 4294901760
    %v1593 = vsub.f32 %v1591, %v1592
    %v1594 = vand.u32 %v1593, 4294901760
    %1595 = vmatmul.mubr.f32.gmra.mxu0 %v1594
    %v1596 = vpop.f32.mrf.mxu0
    %v1597 = vadd.f32 0.0, %v1596
    %v1598 = vpop.f32.mrf.mxu0
    %v1599 = vadd.f32 0.0, %v1598
    %v1600 = vand.u32 %v1088, 4294901760
    %v1601 = vsub.f32 %v1088, %v1600
    %v1602 = vand.u32 %v1601, 4294901760
    %v1603 = vsub.f32 %v1601, %v1602
    %v1604 = vand.u32 %v1603, 4294901760
    %1605 = vmatprep.mubr.f32.mxu0 %v1604
    %v1606 = vand.u32 %v1087, 4294901760
    %v1607 = vsub.f32 %v1087, %v1606
    %v1608 = vand.u32 %v1607, 4294901760
    %v1609 = vsub.f32 %v1607, %v1608
    %v1610 = vand.u32 %v1609, 4294901760
    %1611 = vmatmul.mubr.f32.gmra.mxu0 %v1610
    %v1612 = vpop.f32.mrf.mxu0
    %v1613 = vadd.f32 0.0, %v1612
    %v1614 = vpop.f32.mrf.mxu0
    %v1615 = vadd.f32 0.0, %v1614
    %v1616 = vand.u32 %v1091, 4294901760
    %v1617 = vsub.f32 %v1091, %v1616
    %v1618 = vand.u32 %v1617, 4294901760
    %v1619 = vsub.f32 %v1617, %v1618
    %v1620 = vand.u32 %v1619, 4294901760
    %1621 = vmatprep.mubr.f32.mxu0 %v1620
    %v1622 = vand.u32 %v1090, 4294901760
    %v1623 = vsub.f32 %v1090, %v1622
    %v1624 = vand.u32 %v1623, 4294901760
    %v1625 = vsub.f32 %v1623, %v1624
    %v1626 = vand.u32 %v1625, 4294901760
    %1627 = vmatmul.mubr.f32.gmra.mxu0 %v1626
    %v1628 = vpop.f32.mrf.mxu0
    %v1629 = vadd.f32 0.0, %v1628
    %v1630 = vpop.f32.mrf.mxu0
    %v1631 = vadd.f32 0.0, %v1630
    %v1632 = vand.u32 %v1094, 4294901760
    %v1633 = vsub.f32 %v1094, %v1632
    %v1634 = vand.u32 %v1633, 4294901760
    %v1635 = vsub.f32 %v1633, %v1634
    %v1636 = vand.u32 %v1635, 4294901760
    %1637 = vmatprep.mubr.f32.mxu0 %v1636
    %v1638 = vand.u32 %v1093, 4294901760
    %v1639 = vsub.f32 %v1093, %v1638
    %v1640 = vand.u32 %v1639, 4294901760
    %v1641 = vsub.f32 %v1639, %v1640
    %v1642 = vand.u32 %v1641, 4294901760
    %1643 = vmatmul.mubr.f32.gmra.mxu0 %v1642
    %v1644 = vpop.f32.mrf.mxu0
    %v1645 = vadd.f32 0.0, %v1644
    %v1646 = vpop.f32.mrf.mxu0
    %v1647 = vadd.f32 0.0, %v1646
    %v1648 = vand.u32 %v1097, 4294901760
    %v1649 = vsub.f32 %v1097, %v1648
    %v1650 = vand.u32 %v1649, 4294901760
    %v1651 = vsub.f32 %v1649, %v1650
    %v1652 = vand.u32 %v1651, 4294901760
    %1653 = vmatprep.mubr.f32.mxu0 %v1652
    %v1654 = vand.u32 %v1096, 4294901760
    %v1655 = vsub.f32 %v1096, %v1654
    %v1656 = vand.u32 %v1655, 4294901760
    %v1657 = vsub.f32 %v1655, %v1656
    %v1658 = vand.u32 %v1657, 4294901760
    %1659 = vmatmul.mubr.f32.gmra.mxu0 %v1658
    %v1660 = vpop.f32.mrf.mxu0
    %v1661 = vadd.f32 0.0, %v1660
    %v1662 = vpop.f32.mrf.mxu0
    %v1663 = vadd.f32 0.0, %v1662
    %v1664 = vand.u32 %v1100, 4294901760
    %v1665 = vsub.f32 %v1100, %v1664
    %v1666 = vand.u32 %v1665, 4294901760
    %v1667 = vsub.f32 %v1665, %v1666
    %v1668 = vand.u32 %v1667, 4294901760
    %1669 = vmatprep.mubr.f32.mxu0 %v1668
    %v1670 = vand.u32 %v1099, 4294901760
    %v1671 = vsub.f32 %v1099, %v1670
    %v1672 = vand.u32 %v1671, 4294901760
    %v1673 = vsub.f32 %v1671, %v1672
    %v1674 = vand.u32 %v1673, 4294901760
    %1675 = vmatmul.mubr.f32.gmra.mxu0 %v1674
    %v1676 = vpop.f32.mrf.mxu0
    %v1677 = vadd.f32 0.0, %v1676
    %v1678 = vpop.f32.mrf.mxu0
    %v1679 = vadd.f32 0.0, %v1678
    %v1680 = vand.u32 %v1103, 4294901760
    %v1681 = vsub.f32 %v1103, %v1680
    %v1682 = vand.u32 %v1681, 4294901760
    %v1683 = vsub.f32 %v1681, %v1682
    %v1684 = vand.u32 %v1683, 4294901760
    %1685 = vmatprep.mubr.f32.mxu0 %v1684
    %v1686 = vand.u32 %v1102, 4294901760
    %v1687 = vsub.f32 %v1102, %v1686
    %v1688 = vand.u32 %v1687, 4294901760
    %v1689 = vsub.f32 %v1687, %v1688
    %v1690 = vand.u32 %v1689, 4294901760
    %1691 = vmatmul.mubr.f32.gmra.mxu0 %v1690
    %v1692 = vpop.f32.mrf.mxu0
    %v1693 = vadd.f32 0.0, %v1692
    %v1694 = vpop.f32.mrf.mxu0
    %v1695 = vadd.f32 0.0, %v1694
    %v1696 = vand.u32 %v1106, 4294901760
    %v1697 = vsub.f32 %v1106, %v1696
    %v1698 = vand.u32 %v1697, 4294901760
    %v1699 = vsub.f32 %v1697, %v1698
    %v1700 = vand.u32 %v1699, 4294901760
    %1701 = vmatprep.mubr.f32.mxu0 %v1700
    %v1702 = vand.u32 %v1105, 4294901760
    %v1703 = vsub.f32 %v1105, %v1702
    %v1704 = vand.u32 %v1703, 4294901760
    %v1705 = vsub.f32 %v1703, %v1704
    %v1706 = vand.u32 %v1705, 4294901760
    %1707 = vmatmul.mubr.f32.gmra.mxu0 %v1706
    %v1708 = vpop.f32.mrf.mxu0
    %v1709 = vadd.f32 0.0, %v1708
    %v1710 = vpop.f32.mrf.mxu0
    %v1711 = vadd.f32 0.0, %v1710
    %v1712 = vand.u32 %v1109, 4294901760
    %v1713 = vsub.f32 %v1109, %v1712
    %v1714 = vand.u32 %v1713, 4294901760
    %v1715 = vsub.f32 %v1713, %v1714
    %v1716 = vand.u32 %v1715, 4294901760
    %1717 = vmatprep.mubr.f32.mxu0 %v1716
    %v1718 = vand.u32 %v1108, 4294901760
    %v1719 = vsub.f32 %v1108, %v1718
    %v1720 = vand.u32 %v1719, 4294901760
    %v1721 = vsub.f32 %v1719, %v1720
    %v1722 = vand.u32 %v1721, 4294901760
    %1723 = vmatmul.mubr.f32.gmra.mxu0 %v1722
    %v1724 = vpop.f32.mrf.mxu0
    %v1725 = vadd.f32 0.0, %v1724
    %v1726 = vpop.f32.mrf.mxu0
    %v1727 = vadd.f32 0.0, %v1726
    %1728 = vdwg.mxu0
    %v1729 = vand.u32 %v1172, 4294901760
    %v1730 = vsub.f32 %v1172, %v1729
    %v1731 = vand.u32 %v1730, 4294901760
    %v1732 = vsub.f32 %v1730, %v1731
    %v1733 = vand.u32 %v1732, 4294901760
    %1734 = vmatprep.subr.mxu0 %v1733
    %v1735 = vand.u32 %v1171, 4294901760
    %v1736 = vsub.f32 %v1171, %v1735
    %v1737 = vand.u32 %v1736, 4294901760
    %v1738 = vsub.f32 %v1736, %v1737
    %v1739 = vand.u32 %v1738, 4294901760
    %1740 = vmatpush1.msra.mxu0 %v1739
    %v1741 = vand.u32 %v1168, 4294901760
    %v1742 = vsub.f32 %v1168, %v1741
    %v1743 = vand.u32 %v1742, 4294901760
    %v1744 = vsub.f32 %v1742, %v1743
    %v1745 = vand.u32 %v1744, 4294901760
    %1746 = vmatprep.subr.mxu0 %v1745
    %v1747 = vand.u32 %v1167, 4294901760
    %v1748 = vsub.f32 %v1167, %v1747
    %v1749 = vand.u32 %v1748, 4294901760
    %v1750 = vsub.f32 %v1748, %v1749
    %v1751 = vand.u32 %v1750, 4294901760
    %1752 = vmatpush1.msra.mxu0 %v1751
    %v1753 = vand.u32 %v1164, 4294901760
    %v1754 = vsub.f32 %v1164, %v1753
    %v1755 = vand.u32 %v1754, 4294901760
    %v1756 = vsub.f32 %v1754, %v1755
    %v1757 = vand.u32 %v1756, 4294901760
    %1758 = vmatprep.subr.mxu0 %v1757
    %v1759 = vand.u32 %v1163, 4294901760
    %v1760 = vsub.f32 %v1163, %v1759
    %v1761 = vand.u32 %v1760, 4294901760
    %v1762 = vsub.f32 %v1760, %v1761
    %v1763 = vand.u32 %v1762, 4294901760
    %1764 = vmatpush1.msra.mxu0 %v1763
    %v1765 = vand.u32 %v1160, 4294901760
    %v1766 = vsub.f32 %v1160, %v1765
    %v1767 = vand.u32 %v1766, 4294901760
    %v1768 = vsub.f32 %v1766, %v1767
    %v1769 = vand.u32 %v1768, 4294901760
    %1770 = vmatprep.subr.mxu0 %v1769
    %v1771 = vand.u32 %v1159, 4294901760
    %v1772 = vsub.f32 %v1159, %v1771
    %v1773 = vand.u32 %v1772, 4294901760
    %v1774 = vsub.f32 %v1772, %v1773
    %v1775 = vand.u32 %v1774, 4294901760
    %1776 = vmatpush1.msra.mxu0 %v1775
    %v1777 = vand.u32 %v1156, 4294901760
    %v1778 = vsub.f32 %v1156, %v1777
    %v1779 = vand.u32 %v1778, 4294901760
    %v1780 = vsub.f32 %v1778, %v1779
    %v1781 = vand.u32 %v1780, 4294901760
    %1782 = vmatprep.subr.mxu0 %v1781
    %v1783 = vand.u32 %v1155, 4294901760
    %v1784 = vsub.f32 %v1155, %v1783
    %v1785 = vand.u32 %v1784, 4294901760
    %v1786 = vsub.f32 %v1784, %v1785
    %v1787 = vand.u32 %v1786, 4294901760
    %1788 = vmatpush1.msra.mxu0 %v1787
    %v1789 = vand.u32 %v1152, 4294901760
    %v1790 = vsub.f32 %v1152, %v1789
    %v1791 = vand.u32 %v1790, 4294901760
    %v1792 = vsub.f32 %v1790, %v1791
    %v1793 = vand.u32 %v1792, 4294901760
    %1794 = vmatprep.subr.mxu0 %v1793
    %v1795 = vand.u32 %v1151, 4294901760
    %v1796 = vsub.f32 %v1151, %v1795
    %v1797 = vand.u32 %v1796, 4294901760
    %v1798 = vsub.f32 %v1796, %v1797
    %v1799 = vand.u32 %v1798, 4294901760
    %1800 = vmatpush1.msra.mxu0 %v1799
    %v1801 = vand.u32 %v1148, 4294901760
    %v1802 = vsub.f32 %v1148, %v1801
    %v1803 = vand.u32 %v1802, 4294901760
    %v1804 = vsub.f32 %v1802, %v1803
    %v1805 = vand.u32 %v1804, 4294901760
    %1806 = vmatprep.subr.mxu0 %v1805
    %v1807 = vand.u32 %v1147, 4294901760
    %v1808 = vsub.f32 %v1147, %v1807
    %v1809 = vand.u32 %v1808, 4294901760
    %v1810 = vsub.f32 %v1808, %v1809
    %v1811 = vand.u32 %v1810, 4294901760
    %1812 = vmatpush1.msra.mxu0 %v1811
    %v1813 = vand.u32 %v1144, 4294901760
    %v1814 = vsub.f32 %v1144, %v1813
    %v1815 = vand.u32 %v1814, 4294901760
    %v1816 = vsub.f32 %v1814, %v1815
    %v1817 = vand.u32 %v1816, 4294901760
    %1818 = vmatprep.subr.mxu0 %v1817
    %v1819 = vand.u32 %v1143, 4294901760
    %v1820 = vsub.f32 %v1143, %v1819
    %v1821 = vand.u32 %v1820, 4294901760
    %v1822 = vsub.f32 %v1820, %v1821
    %v1823 = vand.u32 %v1822, 4294901760
    %1824 = vmatpush1.msra.mxu0 %v1823
    %v1825 = vand.u32 %v1140, 4294901760
    %v1826 = vsub.f32 %v1140, %v1825
    %v1827 = vand.u32 %v1826, 4294901760
    %v1828 = vsub.f32 %v1826, %v1827
    %v1829 = vand.u32 %v1828, 4294901760
    %1830 = vmatprep.subr.mxu0 %v1829
    %v1831 = vand.u32 %v1139, 4294901760
    %v1832 = vsub.f32 %v1139, %v1831
    %v1833 = vand.u32 %v1832, 4294901760
    %v1834 = vsub.f32 %v1832, %v1833
    %v1835 = vand.u32 %v1834, 4294901760
    %1836 = vmatpush1.msra.mxu0 %v1835
    %v1837 = vand.u32 %v1136, 4294901760
    %v1838 = vsub.f32 %v1136, %v1837
    %v1839 = vand.u32 %v1838, 4294901760
    %v1840 = vsub.f32 %v1838, %v1839
    %v1841 = vand.u32 %v1840, 4294901760
    %1842 = vmatprep.subr.mxu0 %v1841
    %v1843 = vand.u32 %v1135, 4294901760
    %v1844 = vsub.f32 %v1135, %v1843
    %v1845 = vand.u32 %v1844, 4294901760
    %v1846 = vsub.f32 %v1844, %v1845
    %v1847 = vand.u32 %v1846, 4294901760
    %1848 = vmatpush1.msra.mxu0 %v1847
    %v1849 = vand.u32 %v1132, 4294901760
    %v1850 = vsub.f32 %v1132, %v1849
    %v1851 = vand.u32 %v1850, 4294901760
    %v1852 = vsub.f32 %v1850, %v1851
    %v1853 = vand.u32 %v1852, 4294901760
    %1854 = vmatprep.subr.mxu0 %v1853
    %v1855 = vand.u32 %v1131, 4294901760
    %v1856 = vsub.f32 %v1131, %v1855
    %v1857 = vand.u32 %v1856, 4294901760
    %v1858 = vsub.f32 %v1856, %v1857
    %v1859 = vand.u32 %v1858, 4294901760
    %1860 = vmatpush1.msra.mxu0 %v1859
    %v1861 = vand.u32 %v1128, 4294901760
    %v1862 = vsub.f32 %v1128, %v1861
    %v1863 = vand.u32 %v1862, 4294901760
    %v1864 = vsub.f32 %v1862, %v1863
    %v1865 = vand.u32 %v1864, 4294901760
    %1866 = vmatprep.subr.mxu0 %v1865
    %v1867 = vand.u32 %v1127, 4294901760
    %v1868 = vsub.f32 %v1127, %v1867
    %v1869 = vand.u32 %v1868, 4294901760
    %v1870 = vsub.f32 %v1868, %v1869
    %v1871 = vand.u32 %v1870, 4294901760
    %1872 = vmatpush1.msra.mxu0 %v1871
    %v1873 = vand.u32 %v1124, 4294901760
    %v1874 = vsub.f32 %v1124, %v1873
    %v1875 = vand.u32 %v1874, 4294901760
    %v1876 = vsub.f32 %v1874, %v1875
    %v1877 = vand.u32 %v1876, 4294901760
    %1878 = vmatprep.subr.mxu0 %v1877
    %v1879 = vand.u32 %v1123, 4294901760
    %v1880 = vsub.f32 %v1123, %v1879
    %v1881 = vand.u32 %v1880, 4294901760
    %v1882 = vsub.f32 %v1880, %v1881
    %v1883 = vand.u32 %v1882, 4294901760
    %1884 = vmatpush1.msra.mxu0 %v1883
    %v1885 = vand.u32 %v1120, 4294901760
    %v1886 = vsub.f32 %v1120, %v1885
    %v1887 = vand.u32 %v1886, 4294901760
    %v1888 = vsub.f32 %v1886, %v1887
    %v1889 = vand.u32 %v1888, 4294901760
    %1890 = vmatprep.subr.mxu0 %v1889
    %v1891 = vand.u32 %v1119, 4294901760
    %v1892 = vsub.f32 %v1119, %v1891
    %v1893 = vand.u32 %v1892, 4294901760
    %v1894 = vsub.f32 %v1892, %v1893
    %v1895 = vand.u32 %v1894, 4294901760
    %1896 = vmatpush1.msra.mxu0 %v1895
    %v1897 = vand.u32 %v1116, 4294901760
    %v1898 = vsub.f32 %v1116, %v1897
    %v1899 = vand.u32 %v1898, 4294901760
    %v1900 = vsub.f32 %v1898, %v1899
    %v1901 = vand.u32 %v1900, 4294901760
    %1902 = vmatprep.subr.mxu0 %v1901
    %v1903 = vand.u32 %v1115, 4294901760
    %v1904 = vsub.f32 %v1115, %v1903
    %v1905 = vand.u32 %v1904, 4294901760
    %v1906 = vsub.f32 %v1904, %v1905
    %v1907 = vand.u32 %v1906, 4294901760
    %1908 = vmatpush1.msra.mxu0 %v1907
    %v1909 = vand.u32 %v1112, 4294901760
    %v1910 = vsub.f32 %v1112, %v1909
    %v1911 = vand.u32 %v1910, 4294901760
    %v1912 = vsub.f32 %v1910, %v1911
    %v1913 = vand.u32 %v1912, 4294901760
    %1914 = vmatprep.subr.mxu0 %v1913
    %v1915 = vand.u32 %v1111, 4294901760
    %v1916 = vsub.f32 %v1111, %v1915
    %v1917 = vand.u32 %v1916, 4294901760
    %v1918 = vsub.f32 %v1916, %v1917
    %v1919 = vand.u32 %v1918, 4294901760
    %1920 = vmatpush1.msra.mxu0 %v1919
    %v1921 = vand.u32 %v1236, 4294901760
    %v1922 = vsub.f32 %v1236, %v1921
    %v1923 = vand.u32 %v1922, 4294901760
    %v1924 = vsub.f32 %v1922, %v1923
    %v1925 = vand.u32 %v1924, 4294901760
    %1926 = vmatprep.subr.mxu0 %v1925
    %v1927 = vand.u32 %v1235, 4294901760
    %v1928 = vsub.f32 %v1235, %v1927
    %v1929 = vand.u32 %v1928, 4294901760
    %v1930 = vsub.f32 %v1928, %v1929
    %v1931 = vand.u32 %v1930, 4294901760
    %1932 = vmatpush2.msra.mxu0 %v1931
    %v1933 = vand.u32 %v1232, 4294901760
    %v1934 = vsub.f32 %v1232, %v1933
    %v1935 = vand.u32 %v1934, 4294901760
    %v1936 = vsub.f32 %v1934, %v1935
    %v1937 = vand.u32 %v1936, 4294901760
    %1938 = vmatprep.subr.mxu0 %v1937
    %v1939 = vand.u32 %v1231, 4294901760
    %v1940 = vsub.f32 %v1231, %v1939
    %v1941 = vand.u32 %v1940, 4294901760
    %v1942 = vsub.f32 %v1940, %v1941
    %v1943 = vand.u32 %v1942, 4294901760
    %1944 = vmatpush2.msra.mxu0 %v1943
    %v1945 = vand.u32 %v1228, 4294901760
    %v1946 = vsub.f32 %v1228, %v1945
    %v1947 = vand.u32 %v1946, 4294901760
    %v1948 = vsub.f32 %v1946, %v1947
    %v1949 = vand.u32 %v1948, 4294901760
    %1950 = vmatprep.subr.mxu0 %v1949
    %v1951 = vand.u32 %v1227, 4294901760
    %v1952 = vsub.f32 %v1227, %v1951
    %v1953 = vand.u32 %v1952, 4294901760
    %v1954 = vsub.f32 %v1952, %v1953
    %v1955 = vand.u32 %v1954, 4294901760
    %1956 = vmatpush2.msra.mxu0 %v1955
    %v1957 = vand.u32 %v1224, 4294901760
    %v1958 = vsub.f32 %v1224, %v1957
    %v1959 = vand.u32 %v1958, 4294901760
    %v1960 = vsub.f32 %v1958, %v1959
    %v1961 = vand.u32 %v1960, 4294901760
    %1962 = vmatprep.subr.mxu0 %v1961
    %v1963 = vand.u32 %v1223, 4294901760
    %v1964 = vsub.f32 %v1223, %v1963
    %v1965 = vand.u32 %v1964, 4294901760
    %v1966 = vsub.f32 %v1964, %v1965
    %v1967 = vand.u32 %v1966, 4294901760
    %1968 = vmatpush2.msra.mxu0 %v1967
    %v1969 = vand.u32 %v1220, 4294901760
    %v1970 = vsub.f32 %v1220, %v1969
    %v1971 = vand.u32 %v1970, 4294901760
    %v1972 = vsub.f32 %v1970, %v1971
    %v1973 = vand.u32 %v1972, 4294901760
    %1974 = vmatprep.subr.mxu0 %v1973
    %v1975 = vand.u32 %v1219, 4294901760
    %v1976 = vsub.f32 %v1219, %v1975
    %v1977 = vand.u32 %v1976, 4294901760
    %v1978 = vsub.f32 %v1976, %v1977
    %v1979 = vand.u32 %v1978, 4294901760
    %1980 = vmatpush2.msra.mxu0 %v1979
    %v1981 = vand.u32 %v1216, 4294901760
    %v1982 = vsub.f32 %v1216, %v1981
    %v1983 = vand.u32 %v1982, 4294901760
    %v1984 = vsub.f32 %v1982, %v1983
    %v1985 = vand.u32 %v1984, 4294901760
    %1986 = vmatprep.subr.mxu0 %v1985
    %v1987 = vand.u32 %v1215, 4294901760
    %v1988 = vsub.f32 %v1215, %v1987
    %v1989 = vand.u32 %v1988, 4294901760
    %v1990 = vsub.f32 %v1988, %v1989
    %v1991 = vand.u32 %v1990, 4294901760
    %1992 = vmatpush2.msra.mxu0 %v1991
    %v1993 = vand.u32 %v1212, 4294901760
    %v1994 = vsub.f32 %v1212, %v1993
    %v1995 = vand.u32 %v1994, 4294901760
    %v1996 = vsub.f32 %v1994, %v1995
    %v1997 = vand.u32 %v1996, 4294901760
    %1998 = vmatprep.subr.mxu0 %v1997
    %v1999 = vand.u32 %v1211, 4294901760
    %v2000 = vsub.f32 %v1211, %v1999
    %v2001 = vand.u32 %v2000, 4294901760
    %v2002 = vsub.f32 %v2000, %v2001
    %v2003 = vand.u32 %v2002, 4294901760
    %2004 = vmatpush2.msra.mxu0 %v2003
    %v2005 = vand.u32 %v1208, 4294901760
    %v2006 = vsub.f32 %v1208, %v2005
    %v2007 = vand.u32 %v2006, 4294901760
    %v2008 = vsub.f32 %v2006, %v2007
    %v2009 = vand.u32 %v2008, 4294901760
    %2010 = vmatprep.subr.mxu0 %v2009
    %v2011 = vand.u32 %v1207, 4294901760
    %v2012 = vsub.f32 %v1207, %v2011
    %v2013 = vand.u32 %v2012, 4294901760
    %v2014 = vsub.f32 %v2012, %v2013
    %v2015 = vand.u32 %v2014, 4294901760
    %2016 = vmatpush2.msra.mxu0 %v2015
    %v2017 = vand.u32 %v1204, 4294901760
    %v2018 = vsub.f32 %v1204, %v2017
    %v2019 = vand.u32 %v2018, 4294901760
    %v2020 = vsub.f32 %v2018, %v2019
    %v2021 = vand.u32 %v2020, 4294901760
    %2022 = vmatprep.subr.mxu0 %v2021
    %v2023 = vand.u32 %v1203, 4294901760
    %v2024 = vsub.f32 %v1203, %v2023
    %v2025 = vand.u32 %v2024, 4294901760
    %v2026 = vsub.f32 %v2024, %v2025
    %v2027 = vand.u32 %v2026, 4294901760
    %2028 = vmatpush2.msra.mxu0 %v2027
    %v2029 = vand.u32 %v1200, 4294901760
    %v2030 = vsub.f32 %v1200, %v2029
    %v2031 = vand.u32 %v2030, 4294901760
    %v2032 = vsub.f32 %v2030, %v2031
    %v2033 = vand.u32 %v2032, 4294901760
    %2034 = vmatprep.subr.mxu0 %v2033
    %v2035 = vand.u32 %v1199, 4294901760
    %v2036 = vsub.f32 %v1199, %v2035
    %v2037 = vand.u32 %v2036, 4294901760
    %v2038 = vsub.f32 %v2036, %v2037
    %v2039 = vand.u32 %v2038, 4294901760
    %2040 = vmatpush2.msra.mxu0 %v2039
    %v2041 = vand.u32 %v1196, 4294901760
    %v2042 = vsub.f32 %v1196, %v2041
    %v2043 = vand.u32 %v2042, 4294901760
    %v2044 = vsub.f32 %v2042, %v2043
    %v2045 = vand.u32 %v2044, 4294901760
    %2046 = vmatprep.subr.mxu0 %v2045
    %v2047 = vand.u32 %v1195, 4294901760
    %v2048 = vsub.f32 %v1195, %v2047
    %v2049 = vand.u32 %v2048, 4294901760
    %v2050 = vsub.f32 %v2048, %v2049
    %v2051 = vand.u32 %v2050, 4294901760
    %2052 = vmatpush2.msra.mxu0 %v2051
    %v2053 = vand.u32 %v1192, 4294901760
    %v2054 = vsub.f32 %v1192, %v2053
    %v2055 = vand.u32 %v2054, 4294901760
    %v2056 = vsub.f32 %v2054, %v2055
    %v2057 = vand.u32 %v2056, 4294901760
    %2058 = vmatprep.subr.mxu0 %v2057
    %v2059 = vand.u32 %v1191, 4294901760
    %v2060 = vsub.f32 %v1191, %v2059
    %v2061 = vand.u32 %v2060, 4294901760
    %v2062 = vsub.f32 %v2060, %v2061
    %v2063 = vand.u32 %v2062, 4294901760
    %2064 = vmatpush2.msra.mxu0 %v2063
    %v2065 = vand.u32 %v1188, 4294901760
    %v2066 = vsub.f32 %v1188, %v2065
    %v2067 = vand.u32 %v2066, 4294901760
    %v2068 = vsub.f32 %v2066, %v2067
    %v2069 = vand.u32 %v2068, 4294901760
    %2070 = vmatprep.subr.mxu0 %v2069
    %v2071 = vand.u32 %v1187, 4294901760
    %v2072 = vsub.f32 %v1187, %v2071
    %v2073 = vand.u32 %v2072, 4294901760
    %v2074 = vsub.f32 %v2072, %v2073
    %v2075 = vand.u32 %v2074, 4294901760
    %2076 = vmatpush2.msra.mxu0 %v2075
    %v2077 = vand.u32 %v1184, 4294901760
    %v2078 = vsub.f32 %v1184, %v2077
    %v2079 = vand.u32 %v2078, 4294901760
    %v2080 = vsub.f32 %v2078, %v2079
    %v2081 = vand.u32 %v2080, 4294901760
    %2082 = vmatprep.subr.mxu0 %v2081
    %v2083 = vand.u32 %v1183, 4294901760
    %v2084 = vsub.f32 %v1183, %v2083
    %v2085 = vand.u32 %v2084, 4294901760
    %v2086 = vsub.f32 %v2084, %v2085
    %v2087 = vand.u32 %v2086, 4294901760
    %2088 = vmatpush2.msra.mxu0 %v2087
    %v2089 = vand.u32 %v1180, 4294901760
    %v2090 = vsub.f32 %v1180, %v2089
    %v2091 = vand.u32 %v2090, 4294901760
    %v2092 = vsub.f32 %v2090, %v2091
    %v2093 = vand.u32 %v2092, 4294901760
    %2094 = vmatprep.subr.mxu0 %v2093
    %v2095 = vand.u32 %v1179, 4294901760
    %v2096 = vsub.f32 %v1179, %v2095
    %v2097 = vand.u32 %v2096, 4294901760
    %v2098 = vsub.f32 %v2096, %v2097
    %v2099 = vand.u32 %v2098, 4294901760
    %2100 = vmatpush2.msra.mxu0 %v2099
    %v2101 = vand.u32 %v1176, 4294901760
    %v2102 = vsub.f32 %v1176, %v2101
    %v2103 = vand.u32 %v2102, 4294901760
    %v2104 = vsub.f32 %v2102, %v2103
    %v2105 = vand.u32 %v2104, 4294901760
    %2106 = vmatprep.subr.mxu0 %v2105
    %v2107 = vand.u32 %v1175, 4294901760
    %v2108 = vsub.f32 %v1175, %v2107
    %v2109 = vand.u32 %v2108, 4294901760
    %v2110 = vsub.f32 %v2108, %v2109
    %v2111 = vand.u32 %v2110, 4294901760
    %2112 = vmatpush2.msra.mxu0 %v2111
    %v2113 = vand.u32 %v1064, 4294901760
    %2114 = vmatprep.mubr.f32.mxu0 %v2113
    %v2115 = vand.u32 %v1063, 4294901760
    %2116 = vmatmul.mubr.f32.gmra.mxu0 %v2115
    %v2117 = vpop.f32.mrf.mxu0
    %v2118 = vadd.f32 %v1485, %v2117
    %v2119 = vpop.f32.mrf.mxu0
    %v2120 = vadd.f32 %v1487, %v2119
    %v2121 = vand.u32 %v1067, 4294901760
    %2122 = vmatprep.mubr.f32.mxu0 %v2121
    %v2123 = vand.u32 %v1066, 4294901760
    %2124 = vmatmul.mubr.f32.gmra.mxu0 %v2123
    %v2125 = vpop.f32.mrf.mxu0
    %v2126 = vadd.f32 %v1501, %v2125
    %v2127 = vpop.f32.mrf.mxu0
    %v2128 = vadd.f32 %v1503, %v2127
    %v2129 = vand.u32 %v1070, 4294901760
    %2130 = vmatprep.mubr.f32.mxu0 %v2129
    %v2131 = vand.u32 %v1069, 4294901760
    %2132 = vmatmul.mubr.f32.gmra.mxu0 %v2131
    %v2133 = vpop.f32.mrf.mxu0
    %v2134 = vadd.f32 %v1517, %v2133
    %v2135 = vpop.f32.mrf.mxu0
    %v2136 = vadd.f32 %v1519, %v2135
    %v2137 = vand.u32 %v1073, 4294901760
    %2138 = vmatprep.mubr.f32.mxu0 %v2137
    %v2139 = vand.u32 %v1072, 4294901760
    %2140 = vmatmul.mubr.f32.gmra.mxu0 %v2139
    %v2141 = vpop.f32.mrf.mxu0
    %v2142 = vadd.f32 %v1533, %v2141
    %v2143 = vpop.f32.mrf.mxu0
    %v2144 = vadd.f32 %v1535, %v2143
    %v2145 = vand.u32 %v1076, 4294901760
    %2146 = vmatprep.mubr.f32.mxu0 %v2145
    %v2147 = vand.u32 %v1075, 4294901760
    %2148 = vmatmul.mubr.f32.gmra.mxu0 %v2147
    %v2149 = vpop.f32.mrf.mxu0
    %v2150 = vadd.f32 %v1549, %v2149
    %v2151 = vpop.f32.mrf.mxu0
    %v2152 = vadd.f32 %v1551, %v2151
    %v2153 = vand.u32 %v1079, 4294901760
    %2154 = vmatprep.mubr.f32.mxu0 %v2153
    %v2155 = vand.u32 %v1078, 4294901760
    %2156 = vmatmul.mubr.f32.gmra.mxu0 %v2155
    %v2157 = vpop.f32.mrf.mxu0
    %v2158 = vadd.f32 %v1565, %v2157
    %v2159 = vpop.f32.mrf.mxu0
    %v2160 = vadd.f32 %v1567, %v2159
    %v2161 = vand.u32 %v1082, 4294901760
    %2162 = vmatprep.mubr.f32.mxu0 %v2161
    %v2163 = vand.u32 %v1081, 4294901760
    %2164 = vmatmul.mubr.f32.gmra.mxu0 %v2163
    %v2165 = vpop.f32.mrf.mxu0
    %v2166 = vadd.f32 %v1581, %v2165
    %v2167 = vpop.f32.mrf.mxu0
    %v2168 = vadd.f32 %v1583, %v2167
    %v2169 = vand.u32 %v1085, 4294901760
    %2170 = vmatprep.mubr.f32.mxu0 %v2169
    %v2171 = vand.u32 %v1084, 4294901760
    %2172 = vmatmul.mubr.f32.gmra.mxu0 %v2171
    %v2173 = vpop.f32.mrf.mxu0
    %v2174 = vadd.f32 %v1597, %v2173
    %v2175 = vpop.f32.mrf.mxu0
    %v2176 = vadd.f32 %v1599, %v2175
    %v2177 = vand.u32 %v1088, 4294901760
    %2178 = vmatprep.mubr.f32.mxu0 %v2177
    %v2179 = vand.u32 %v1087, 4294901760
    %2180 = vmatmul.mubr.f32.gmra.mxu0 %v2179
    %v2181 = vpop.f32.mrf.mxu0
    %v2182 = vadd.f32 %v1613, %v2181
    %v2183 = vpop.f32.mrf.mxu0
    %v2184 = vadd.f32 %v1615, %v2183
    %v2185 = vand.u32 %v1091, 4294901760
    %2186 = vmatprep.mubr.f32.mxu0 %v2185
    %v2187 = vand.u32 %v1090, 4294901760
    %2188 = vmatmul.mubr.f32.gmra.mxu0 %v2187
    %v2189 = vpop.f32.mrf.mxu0
    %v2190 = vadd.f32 %v1629, %v2189
    %v2191 = vpop.f32.mrf.mxu0
    %v2192 = vadd.f32 %v1631, %v2191
    %v2193 = vand.u32 %v1094, 4294901760
    %2194 = vmatprep.mubr.f32.mxu0 %v2193
    %v2195 = vand.u32 %v1093, 4294901760
    %2196 = vmatmul.mubr.f32.gmra.mxu0 %v2195
    %v2197 = vpop.f32.mrf.mxu0
    %v2198 = vadd.f32 %v1645, %v2197
    %v2199 = vpop.f32.mrf.mxu0
    %v2200 = vadd.f32 %v1647, %v2199
    %v2201 = vand.u32 %v1097, 4294901760
    %2202 = vmatprep.mubr.f32.mxu0 %v2201
    %v2203 = vand.u32 %v1096, 4294901760
    %2204 = vmatmul.mubr.f32.gmra.mxu0 %v2203
    %v2205 = vpop.f32.mrf.mxu0
    %v2206 = vadd.f32 %v1661, %v2205
    %v2207 = vpop.f32.mrf.mxu0
    %v2208 = vadd.f32 %v1663, %v2207
    %v2209 = vand.u32 %v1100, 4294901760
    %2210 = vmatprep.mubr.f32.mxu0 %v2209
    %v2211 = vand.u32 %v1099, 4294901760
    %2212 = vmatmul.mubr.f32.gmra.mxu0 %v2211
    %v2213 = vpop.f32.mrf.mxu0
    %v2214 = vadd.f32 %v1677, %v2213
    %v2215 = vpop.f32.mrf.mxu0
    %v2216 = vadd.f32 %v1679, %v2215
    %v2217 = vand.u32 %v1103, 4294901760
    %2218 = vmatprep.mubr.f32.mxu0 %v2217
    %v2219 = vand.u32 %v1102, 4294901760
    %2220 = vmatmul.mubr.f32.gmra.mxu0 %v2219
    %v2221 = vpop.f32.mrf.mxu0
    %v2222 = vadd.f32 %v1693, %v2221
    %v2223 = vpop.f32.mrf.mxu0
    %v2224 = vadd.f32 %v1695, %v2223
    %v2225 = vand.u32 %v1106, 4294901760
    %2226 = vmatprep.mubr.f32.mxu0 %v2225
    %v2227 = vand.u32 %v1105, 4294901760
    %2228 = vmatmul.mubr.f32.gmra.mxu0 %v2227
    %v2229 = vpop.f32.mrf.mxu0
    %v2230 = vadd.f32 %v1709, %v2229
    %v2231 = vpop.f32.mrf.mxu0
    %v2232 = vadd.f32 %v1711, %v2231
    %v2233 = vand.u32 %v1109, 4294901760
    %2234 = vmatprep.mubr.f32.mxu0 %v2233
    %v2235 = vand.u32 %v1108, 4294901760
    %2236 = vmatmul.mubr.f32.gmra.mxu0 %v2235
    %v2237 = vpop.f32.mrf.mxu0
    %v2238 = vadd.f32 %v1725, %v2237
    %v2239 = vpop.f32.mrf.mxu0
    %v2240 = vadd.f32 %v1727, %v2239
    %2241 = vdwg.mxu0
    %v2242 = vand.u32 %v1172, 4294901760
    %v2243 = vsub.f32 %v1172, %v2242
    %2244 = vmatprep.subr.mxu0 %v2243
    %v2245 = vand.u32 %v1171, 4294901760
    %v2246 = vsub.f32 %v1171, %v2245
    %2247 = vmatpush1.msra.mxu0 %v2246
    %v2248 = vand.u32 %v1168, 4294901760
    %v2249 = vsub.f32 %v1168, %v2248
    %2250 = vmatprep.subr.mxu0 %v2249
    %v2251 = vand.u32 %v1167, 4294901760
    %v2252 = vsub.f32 %v1167, %v2251
    %2253 = vmatpush1.msra.mxu0 %v2252
    %v2254 = vand.u32 %v1164, 4294901760
    %v2255 = vsub.f32 %v1164, %v2254
    %2256 = vmatprep.subr.mxu0 %v2255
    %v2257 = vand.u32 %v1163, 4294901760
    %v2258 = vsub.f32 %v1163, %v2257
    %2259 = vmatpush1.msra.mxu0 %v2258
    %v2260 = vand.u32 %v1160, 4294901760
    %v2261 = vsub.f32 %v1160, %v2260
    %2262 = vmatprep.subr.mxu0 %v2261
    %v2263 = vand.u32 %v1159, 4294901760
    %v2264 = vsub.f32 %v1159, %v2263
    %2265 = vmatpush1.msra.mxu0 %v2264
    %v2266 = vand.u32 %v1156, 4294901760
    %v2267 = vsub.f32 %v1156, %v2266
    %2268 = vmatprep.subr.mxu0 %v2267
    %v2269 = vand.u32 %v1155, 4294901760
    %v2270 = vsub.f32 %v1155, %v2269
    %2271 = vmatpush1.msra.mxu0 %v2270
    %v2272 = vand.u32 %v1152, 4294901760
    %v2273 = vsub.f32 %v1152, %v2272
    %2274 = vmatprep.subr.mxu0 %v2273
    %v2275 = vand.u32 %v1151, 4294901760
    %v2276 = vsub.f32 %v1151, %v2275
    %2277 = vmatpush1.msra.mxu0 %v2276
    %v2278 = vand.u32 %v1148, 4294901760
    %v2279 = vsub.f32 %v1148, %v2278
    %2280 = vmatprep.subr.mxu0 %v2279
    %v2281 = vand.u32 %v1147, 4294901760
    %v2282 = vsub.f32 %v1147, %v2281
    %2283 = vmatpush1.msra.mxu0 %v2282
    %v2284 = vand.u32 %v1144, 4294901760
    %v2285 = vsub.f32 %v1144, %v2284
    %2286 = vmatprep.subr.mxu0 %v2285
    %v2287 = vand.u32 %v1143, 4294901760
    %v2288 = vsub.f32 %v1143, %v2287
    %2289 = vmatpush1.msra.mxu0 %v2288
    %v2290 = vand.u32 %v1140, 4294901760
    %v2291 = vsub.f32 %v1140, %v2290
    %2292 = vmatprep.subr.mxu0 %v2291
    %v2293 = vand.u32 %v1139, 4294901760
    %v2294 = vsub.f32 %v1139, %v2293
    %2295 = vmatpush1.msra.mxu0 %v2294
    %v2296 = vand.u32 %v1136, 4294901760
    %v2297 = vsub.f32 %v1136, %v2296
    %2298 = vmatprep.subr.mxu0 %v2297
    %v2299 = vand.u32 %v1135, 4294901760
    %v2300 = vsub.f32 %v1135, %v2299
    %2301 = vmatpush1.msra.mxu0 %v2300
    %v2302 = vand.u32 %v1132, 4294901760
    %v2303 = vsub.f32 %v1132, %v2302
    %2304 = vmatprep.subr.mxu0 %v2303
    %v2305 = vand.u32 %v1131, 4294901760
    %v2306 = vsub.f32 %v1131, %v2305
    %2307 = vmatpush1.msra.mxu0 %v2306
    %v2308 = vand.u32 %v1128, 4294901760
    %v2309 = vsub.f32 %v1128, %v2308
    %2310 = vmatprep.subr.mxu0 %v2309
    %v2311 = vand.u32 %v1127, 4294901760
    %v2312 = vsub.f32 %v1127, %v2311
    %2313 = vmatpush1.msra.mxu0 %v2312
    %v2314 = vand.u32 %v1124, 4294901760
    %v2315 = vsub.f32 %v1124, %v2314
    %2316 = vmatprep.subr.mxu0 %v2315
    %v2317 = vand.u32 %v1123, 4294901760
    %v2318 = vsub.f32 %v1123, %v2317
    %2319 = vmatpush1.msra.mxu0 %v2318
    %v2320 = vand.u32 %v1120, 4294901760
    %v2321 = vsub.f32 %v1120, %v2320
    %2322 = vmatprep.subr.mxu0 %v2321
    %v2323 = vand.u32 %v1119, 4294901760
    %v2324 = vsub.f32 %v1119, %v2323
    %2325 = vmatpush1.msra.mxu0 %v2324
    %v2326 = vand.u32 %v1116, 4294901760
    %v2327 = vsub.f32 %v1116, %v2326
    %2328 = vmatprep.subr.mxu0 %v2327
    %v2329 = vand.u32 %v1115, 4294901760
    %v2330 = vsub.f32 %v1115, %v2329
    %2331 = vmatpush1.msra.mxu0 %v2330
    %v2332 = vand.u32 %v1112, 4294901760
    %v2333 = vsub.f32 %v1112, %v2332
    %2334 = vmatprep.subr.mxu0 %v2333
    %v2335 = vand.u32 %v1111, 4294901760
    %v2336 = vsub.f32 %v1111, %v2335
    %2337 = vmatpush1.msra.mxu0 %v2336
    %v2338 = vand.u32 %v1236, 4294901760
    %v2339 = vsub.f32 %v1236, %v2338
    %2340 = vmatprep.subr.mxu0 %v2339
    %v2341 = vand.u32 %v1235, 4294901760
    %v2342 = vsub.f32 %v1235, %v2341
    %2343 = vmatpush2.msra.mxu0 %v2342
    %v2344 = vand.u32 %v1232, 4294901760
    %v2345 = vsub.f32 %v1232, %v2344
    %2346 = vmatprep.subr.mxu0 %v2345
    %v2347 = vand.u32 %v1231, 4294901760
    %v2348 = vsub.f32 %v1231, %v2347
    %2349 = vmatpush2.msra.mxu0 %v2348
    %v2350 = vand.u32 %v1228, 4294901760
    %v2351 = vsub.f32 %v1228, %v2350
    %2352 = vmatprep.subr.mxu0 %v2351
    %v2353 = vand.u32 %v1227, 4294901760
    %v2354 = vsub.f32 %v1227, %v2353
    %2355 = vmatpush2.msra.mxu0 %v2354
    %v2356 = vand.u32 %v1224, 4294901760
    %v2357 = vsub.f32 %v1224, %v2356
    %2358 = vmatprep.subr.mxu0 %v2357
    %v2359 = vand.u32 %v1223, 4294901760
    %v2360 = vsub.f32 %v1223, %v2359
    %2361 = vmatpush2.msra.mxu0 %v2360
    %v2362 = vand.u32 %v1220, 4294901760
    %v2363 = vsub.f32 %v1220, %v2362
    %2364 = vmatprep.subr.mxu0 %v2363
    %v2365 = vand.u32 %v1219, 4294901760
    %v2366 = vsub.f32 %v1219, %v2365
    %2367 = vmatpush2.msra.mxu0 %v2366
    %v2368 = vand.u32 %v1216, 4294901760
    %v2369 = vsub.f32 %v1216, %v2368
    %2370 = vmatprep.subr.mxu0 %v2369
    %v2371 = vand.u32 %v1215, 4294901760
    %v2372 = vsub.f32 %v1215, %v2371
    %2373 = vmatpush2.msra.mxu0 %v2372
    %v2374 = vand.u32 %v1212, 4294901760
    %v2375 = vsub.f32 %v1212, %v2374
    %2376 = vmatprep.subr.mxu0 %v2375
    %v2377 = vand.u32 %v1211, 4294901760
    %v2378 = vsub.f32 %v1211, %v2377
    %2379 = vmatpush2.msra.mxu0 %v2378
    %v2380 = vand.u32 %v1208, 4294901760
    %v2381 = vsub.f32 %v1208, %v2380
    %2382 = vmatprep.subr.mxu0 %v2381
    %v2383 = vand.u32 %v1207, 4294901760
    %v2384 = vsub.f32 %v1207, %v2383
    %2385 = vmatpush2.msra.mxu0 %v2384
    %v2386 = vand.u32 %v1204, 4294901760
    %v2387 = vsub.f32 %v1204, %v2386
    %2388 = vmatprep.subr.mxu0 %v2387
    %v2389 = vand.u32 %v1203, 4294901760
    %v2390 = vsub.f32 %v1203, %v2389
    %2391 = vmatpush2.msra.mxu0 %v2390
    %v2392 = vand.u32 %v1200, 4294901760
    %v2393 = vsub.f32 %v1200, %v2392
    %2394 = vmatprep.subr.mxu0 %v2393
    %v2395 = vand.u32 %v1199, 4294901760
    %v2396 = vsub.f32 %v1199, %v2395
    %2397 = vmatpush2.msra.mxu0 %v2396
    %v2398 = vand.u32 %v1196, 4294901760
    %v2399 = vsub.f32 %v1196, %v2398
    %2400 = vmatprep.subr.mxu0 %v2399
    %v2401 = vand.u32 %v1195, 4294901760
    %v2402 = vsub.f32 %v1195, %v2401
    %2403 = vmatpush2.msra.mxu0 %v2402
    %v2404 = vand.u32 %v1192, 4294901760
    %v2405 = vsub.f32 %v1192, %v2404
    %2406 = vmatprep.subr.mxu0 %v2405
    %v2407 = vand.u32 %v1191, 4294901760
    %v2408 = vsub.f32 %v1191, %v2407
    %2409 = vmatpush2.msra.mxu0 %v2408
    %v2410 = vand.u32 %v1188, 4294901760
    %v2411 = vsub.f32 %v1188, %v2410
    %2412 = vmatprep.subr.mxu0 %v2411
    %v2413 = vand.u32 %v1187, 4294901760
    %v2414 = vsub.f32 %v1187, %v2413
    %2415 = vmatpush2.msra.mxu0 %v2414
    %v2416 = vand.u32 %v1184, 4294901760
    %v2417 = vsub.f32 %v1184, %v2416
    %2418 = vmatprep.subr.mxu0 %v2417
    %v2419 = vand.u32 %v1183, 4294901760
    %v2420 = vsub.f32 %v1183, %v2419
    %2421 = vmatpush2.msra.mxu0 %v2420
    %v2422 = vand.u32 %v1180, 4294901760
    %v2423 = vsub.f32 %v1180, %v2422
    %2424 = vmatprep.subr.mxu0 %v2423
    %v2425 = vand.u32 %v1179, 4294901760
    %v2426 = vsub.f32 %v1179, %v2425
    %2427 = vmatpush2.msra.mxu0 %v2426
    %v2428 = vand.u32 %v1176, 4294901760
    %v2429 = vsub.f32 %v1176, %v2428
    %2430 = vmatprep.subr.mxu0 %v2429
    %v2431 = vand.u32 %v1175, 4294901760
    %v2432 = vsub.f32 %v1175, %v2431
    %2433 = vmatpush2.msra.mxu0 %v2432
    %v2434 = vand.u32 %v1064, 4294901760
    %v2435 = vsub.f32 %v1064, %v2434
    %2436 = vmatprep.mubr.f32.mxu0 %v2435
    %v2437 = vand.u32 %v1063, 4294901760
    %v2438 = vsub.f32 %v1063, %v2437
    %2439 = vmatmul.mubr.f32.gmra.mxu0 %v2438
    %v2440 = vpop.f32.mrf.mxu0
    %v2441 = vadd.f32 %v2118, %v2440
    %v2442 = vpop.f32.mrf.mxu0
    %v2443 = vadd.f32 %v2120, %v2442
    %v2444 = vand.u32 %v1067, 4294901760
    %v2445 = vsub.f32 %v1067, %v2444
    %2446 = vmatprep.mubr.f32.mxu0 %v2445
    %v2447 = vand.u32 %v1066, 4294901760
    %v2448 = vsub.f32 %v1066, %v2447
    %2449 = vmatmul.mubr.f32.gmra.mxu0 %v2448
    %v2450 = vpop.f32.mrf.mxu0
    %v2451 = vadd.f32 %v2126, %v2450
    %v2452 = vpop.f32.mrf.mxu0
    %v2453 = vadd.f32 %v2128, %v2452
    %v2454 = vand.u32 %v1070, 4294901760
    %v2455 = vsub.f32 %v1070, %v2454
    %2456 = vmatprep.mubr.f32.mxu0 %v2455
    %v2457 = vand.u32 %v1069, 4294901760
    %v2458 = vsub.f32 %v1069, %v2457
    %2459 = vmatmul.mubr.f32.gmra.mxu0 %v2458
    %v2460 = vpop.f32.mrf.mxu0
    %v2461 = vadd.f32 %v2134, %v2460
    %v2462 = vpop.f32.mrf.mxu0
    %v2463 = vadd.f32 %v2136, %v2462
    %v2464 = vand.u32 %v1073, 4294901760
    %v2465 = vsub.f32 %v1073, %v2464
    %2466 = vmatprep.mubr.f32.mxu0 %v2465
    %v2467 = vand.u32 %v1072, 4294901760
    %v2468 = vsub.f32 %v1072, %v2467
    %2469 = vmatmul.mubr.f32.gmra.mxu0 %v2468
    %v2470 = vpop.f32.mrf.mxu0
    %v2471 = vadd.f32 %v2142, %v2470
    %v2472 = vpop.f32.mrf.mxu0
    %v2473 = vadd.f32 %v2144, %v2472
    %v2474 = vand.u32 %v1076, 4294901760
    %v2475 = vsub.f32 %v1076, %v2474
    %2476 = vmatprep.mubr.f32.mxu0 %v2475
    %v2477 = vand.u32 %v1075, 4294901760
    %v2478 = vsub.f32 %v1075, %v2477
    %2479 = vmatmul.mubr.f32.gmra.mxu0 %v2478
    %v2480 = vpop.f32.mrf.mxu0
    %v2481 = vadd.f32 %v2150, %v2480
    %v2482 = vpop.f32.mrf.mxu0
    %v2483 = vadd.f32 %v2152, %v2482
    %v2484 = vand.u32 %v1079, 4294901760
    %v2485 = vsub.f32 %v1079, %v2484
    %2486 = vmatprep.mubr.f32.mxu0 %v2485
    %v2487 = vand.u32 %v1078, 4294901760
    %v2488 = vsub.f32 %v1078, %v2487
    %2489 = vmatmul.mubr.f32.gmra.mxu0 %v2488
    %v2490 = vpop.f32.mrf.mxu0
    %v2491 = vadd.f32 %v2158, %v2490
    %v2492 = vpop.f32.mrf.mxu0
    %v2493 = vadd.f32 %v2160, %v2492
    %v2494 = vand.u32 %v1082, 4294901760
    %v2495 = vsub.f32 %v1082, %v2494
    %2496 = vmatprep.mubr.f32.mxu0 %v2495
    %v2497 = vand.u32 %v1081, 4294901760
    %v2498 = vsub.f32 %v1081, %v2497
    %2499 = vmatmul.mubr.f32.gmra.mxu0 %v2498
    %v2500 = vpop.f32.mrf.mxu0
    %v2501 = vadd.f32 %v2166, %v2500
    %v2502 = vpop.f32.mrf.mxu0
    %v2503 = vadd.f32 %v2168, %v2502
    %v2504 = vand.u32 %v1085, 4294901760
    %v2505 = vsub.f32 %v1085, %v2504
    %2506 = vmatprep.mubr.f32.mxu0 %v2505
    %v2507 = vand.u32 %v1084, 4294901760
    %v2508 = vsub.f32 %v1084, %v2507
    %2509 = vmatmul.mubr.f32.gmra.mxu0 %v2508
    %v2510 = vpop.f32.mrf.mxu0
    %v2511 = vadd.f32 %v2174, %v2510
    %v2512 = vpop.f32.mrf.mxu0
    %v2513 = vadd.f32 %v2176, %v2512
    %v2514 = vand.u32 %v1088, 4294901760
    %v2515 = vsub.f32 %v1088, %v2514
    %2516 = vmatprep.mubr.f32.mxu0 %v2515
    %v2517 = vand.u32 %v1087, 4294901760
    %v2518 = vsub.f32 %v1087, %v2517
    %2519 = vmatmul.mubr.f32.gmra.mxu0 %v2518
    %v2520 = vpop.f32.mrf.mxu0
    %v2521 = vadd.f32 %v2182, %v2520
    %v2522 = vpop.f32.mrf.mxu0
    %v2523 = vadd.f32 %v2184, %v2522
    %v2524 = vand.u32 %v1091, 4294901760
    %v2525 = vsub.f32 %v1091, %v2524
    %2526 = vmatprep.mubr.f32.mxu0 %v2525
    %v2527 = vand.u32 %v1090, 4294901760
    %v2528 = vsub.f32 %v1090, %v2527
    %2529 = vmatmul.mubr.f32.gmra.mxu0 %v2528
    %v2530 = vpop.f32.mrf.mxu0
    %v2531 = vadd.f32 %v2190, %v2530
    %v2532 = vpop.f32.mrf.mxu0
    %v2533 = vadd.f32 %v2192, %v2532
    %v2534 = vand.u32 %v1094, 4294901760
    %v2535 = vsub.f32 %v1094, %v2534
    %2536 = vmatprep.mubr.f32.mxu0 %v2535
    %v2537 = vand.u32 %v1093, 4294901760
    %v2538 = vsub.f32 %v1093, %v2537
    %2539 = vmatmul.mubr.f32.gmra.mxu0 %v2538
    %v2540 = vpop.f32.mrf.mxu0
    %v2541 = vadd.f32 %v2198, %v2540
    %v2542 = vpop.f32.mrf.mxu0
    %v2543 = vadd.f32 %v2200, %v2542
    %v2544 = vand.u32 %v1097, 4294901760
    %v2545 = vsub.f32 %v1097, %v2544
    %2546 = vmatprep.mubr.f32.mxu0 %v2545
    %v2547 = vand.u32 %v1096, 4294901760
    %v2548 = vsub.f32 %v1096, %v2547
    %2549 = vmatmul.mubr.f32.gmra.mxu0 %v2548
    %v2550 = vpop.f32.mrf.mxu0
    %v2551 = vadd.f32 %v2206, %v2550
    %v2552 = vpop.f32.mrf.mxu0
    %v2553 = vadd.f32 %v2208, %v2552
    %v2554 = vand.u32 %v1100, 4294901760
    %v2555 = vsub.f32 %v1100, %v2554
    %2556 = vmatprep.mubr.f32.mxu0 %v2555
    %v2557 = vand.u32 %v1099, 4294901760
    %v2558 = vsub.f32 %v1099, %v2557
    %2559 = vmatmul.mubr.f32.gmra.mxu0 %v2558
    %v2560 = vpop.f32.mrf.mxu0
    %v2561 = vadd.f32 %v2214, %v2560
    %v2562 = vpop.f32.mrf.mxu0
    %v2563 = vadd.f32 %v2216, %v2562
    %v2564 = vand.u32 %v1103, 4294901760
    %v2565 = vsub.f32 %v1103, %v2564
    %2566 = vmatprep.mubr.f32.mxu0 %v2565
    %v2567 = vand.u32 %v1102, 4294901760
    %v2568 = vsub.f32 %v1102, %v2567
    %2569 = vmatmul.mubr.f32.gmra.mxu0 %v2568
    %v2570 = vpop.f32.mrf.mxu0
    %v2571 = vadd.f32 %v2222, %v2570
    %v2572 = vpop.f32.mrf.mxu0
    %v2573 = vadd.f32 %v2224, %v2572
    %v2574 = vand.u32 %v1106, 4294901760
    %v2575 = vsub.f32 %v1106, %v2574
    %2576 = vmatprep.mubr.f32.mxu0 %v2575
    %v2577 = vand.u32 %v1105, 4294901760
    %v2578 = vsub.f32 %v1105, %v2577
    %2579 = vmatmul.mubr.f32.gmra.mxu0 %v2578
    %v2580 = vpop.f32.mrf.mxu0
    %v2581 = vadd.f32 %v2230, %v2580
    %v2582 = vpop.f32.mrf.mxu0
    %v2583 = vadd.f32 %v2232, %v2582
    %v2584 = vand.u32 %v1109, 4294901760
    %v2585 = vsub.f32 %v1109, %v2584
    %2586 = vmatprep.mubr.f32.mxu0 %v2585
    %v2587 = vand.u32 %v1108, 4294901760
    %v2588 = vsub.f32 %v1108, %v2587
    %2589 = vmatmul.mubr.f32.gmra.mxu0 %v2588
    %v2590 = vpop.f32.mrf.mxu0
    %v2591 = vadd.f32 %v2238, %v2590
    %v2592 = vpop.f32.mrf.mxu0
    %v2593 = vadd.f32 %v2240, %v2592
    %2594 = vdwg.mxu0
    %v2595 = vand.u32 %v1172, 4294901760
    %2596 = vmatprep.subr.mxu0 %v2595
    %v2597 = vand.u32 %v1171, 4294901760
    %2598 = vmatpush1.msra.mxu0 %v2597
    %v2599 = vand.u32 %v1168, 4294901760
    %2600 = vmatprep.subr.mxu0 %v2599
    %v2601 = vand.u32 %v1167, 4294901760
    %2602 = vmatpush1.msra.mxu0 %v2601
    %v2603 = vand.u32 %v1164, 4294901760
    %2604 = vmatprep.subr.mxu0 %v2603
    %v2605 = vand.u32 %v1163, 4294901760
    %2606 = vmatpush1.msra.mxu0 %v2605
    %v2607 = vand.u32 %v1160, 4294901760
    %2608 = vmatprep.subr.mxu0 %v2607
    %v2609 = vand.u32 %v1159, 4294901760
    %2610 = vmatpush1.msra.mxu0 %v2609
    %v2611 = vand.u32 %v1156, 4294901760
    %2612 = vmatprep.subr.mxu0 %v2611
    %v2613 = vand.u32 %v1155, 4294901760
    %2614 = vmatpush1.msra.mxu0 %v2613
    %v2615 = vand.u32 %v1152, 4294901760
    %2616 = vmatprep.subr.mxu0 %v2615
    %v2617 = vand.u32 %v1151, 4294901760
    %2618 = vmatpush1.msra.mxu0 %v2617
    %v2619 = vand.u32 %v1148, 4294901760
    %2620 = vmatprep.subr.mxu0 %v2619
    %v2621 = vand.u32 %v1147, 4294901760
    %2622 = vmatpush1.msra.mxu0 %v2621
    %v2623 = vand.u32 %v1144, 4294901760
    %2624 = vmatprep.subr.mxu0 %v2623
    %v2625 = vand.u32 %v1143, 4294901760
    %2626 = vmatpush1.msra.mxu0 %v2625
    %v2627 = vand.u32 %v1140, 4294901760
    %2628 = vmatprep.subr.mxu0 %v2627
    %v2629 = vand.u32 %v1139, 4294901760
    %2630 = vmatpush1.msra.mxu0 %v2629
    %v2631 = vand.u32 %v1136, 4294901760
    %2632 = vmatprep.subr.mxu0 %v2631
    %v2633 = vand.u32 %v1135, 4294901760
    %2634 = vmatpush1.msra.mxu0 %v2633
    %v2635 = vand.u32 %v1132, 4294901760
    %2636 = vmatprep.subr.mxu0 %v2635
    %v2637 = vand.u32 %v1131, 4294901760
    %2638 = vmatpush1.msra.mxu0 %v2637
    %v2639 = vand.u32 %v1128, 4294901760
    %2640 = vmatprep.subr.mxu0 %v2639
    %v2641 = vand.u32 %v1127, 4294901760
    %2642 = vmatpush1.msra.mxu0 %v2641
    %v2643 = vand.u32 %v1124, 4294901760
    %2644 = vmatprep.subr.mxu0 %v2643
    %v2645 = vand.u32 %v1123, 4294901760
    %2646 = vmatpush1.msra.mxu0 %v2645
    %v2647 = vand.u32 %v1120, 4294901760
    %2648 = vmatprep.subr.mxu0 %v2647
    %v2649 = vand.u32 %v1119, 4294901760
    %2650 = vmatpush1.msra.mxu0 %v2649
    %v2651 = vand.u32 %v1116, 4294901760
    %2652 = vmatprep.subr.mxu0 %v2651
    %v2653 = vand.u32 %v1115, 4294901760
    %2654 = vmatpush1.msra.mxu0 %v2653
    %v2655 = vand.u32 %v1112, 4294901760
    %2656 = vmatprep.subr.mxu0 %v2655
    %v2657 = vand.u32 %v1111, 4294901760
    %2658 = vmatpush1.msra.mxu0 %v2657
    %v2659 = vand.u32 %v1236, 4294901760
    %2660 = vmatprep.subr.mxu0 %v2659
    %v2661 = vand.u32 %v1235, 4294901760
    %2662 = vmatpush2.msra.mxu0 %v2661
    %v2663 = vand.u32 %v1232, 4294901760
    %2664 = vmatprep.subr.mxu0 %v2663
    %v2665 = vand.u32 %v1231, 4294901760
    %2666 = vmatpush2.msra.mxu0 %v2665
    %v2667 = vand.u32 %v1228, 4294901760
    %2668 = vmatprep.subr.mxu0 %v2667
    %v2669 = vand.u32 %v1227, 4294901760
    %2670 = vmatpush2.msra.mxu0 %v2669
    %v2671 = vand.u32 %v1224, 4294901760
    %2672 = vmatprep.subr.mxu0 %v2671
    %v2673 = vand.u32 %v1223, 4294901760
    %2674 = vmatpush2.msra.mxu0 %v2673
    %v2675 = vand.u32 %v1220, 4294901760
    %2676 = vmatprep.subr.mxu0 %v2675
    %v2677 = vand.u32 %v1219, 4294901760
    %2678 = vmatpush2.msra.mxu0 %v2677
    %v2679 = vand.u32 %v1216, 4294901760
    %2680 = vmatprep.subr.mxu0 %v2679
    %v2681 = vand.u32 %v1215, 4294901760
    %2682 = vmatpush2.msra.mxu0 %v2681
    %v2683 = vand.u32 %v1212, 4294901760
    %2684 = vmatprep.subr.mxu0 %v2683
    %v2685 = vand.u32 %v1211, 4294901760
    %2686 = vmatpush2.msra.mxu0 %v2685
    %v2687 = vand.u32 %v1208, 4294901760
    %2688 = vmatprep.subr.mxu0 %v2687
    %v2689 = vand.u32 %v1207, 4294901760
    %2690 = vmatpush2.msra.mxu0 %v2689
    %v2691 = vand.u32 %v1204, 4294901760
    %2692 = vmatprep.subr.mxu0 %v2691
    %v2693 = vand.u32 %v1203, 4294901760
    %2694 = vmatpush2.msra.mxu0 %v2693
    %v2695 = vand.u32 %v1200, 4294901760
    %2696 = vmatprep.subr.mxu0 %v2695
    %v2697 = vand.u32 %v1199, 4294901760
    %2698 = vmatpush2.msra.mxu0 %v2697
    %v2699 = vand.u32 %v1196, 4294901760
    %2700 = vmatprep.subr.mxu0 %v2699
    %v2701 = vand.u32 %v1195, 4294901760
    %2702 = vmatpush2.msra.mxu0 %v2701
    %v2703 = vand.u32 %v1192, 4294901760
    %2704 = vmatprep.subr.mxu0 %v2703
    %v2705 = vand.u32 %v1191, 4294901760
    %2706 = vmatpush2.msra.mxu0 %v2705
    %v2707 = vand.u32 %v1188, 4294901760
    %2708 = vmatprep.subr.mxu0 %v2707
    %v2709 = vand.u32 %v1187, 4294901760
    %2710 = vmatpush2.msra.mxu0 %v2709
    %v2711 = vand.u32 %v1184, 4294901760
    %2712 = vmatprep.subr.mxu0 %v2711
    %v2713 = vand.u32 %v1183, 4294901760
    %2714 = vmatpush2.msra.mxu0 %v2713
    %v2715 = vand.u32 %v1180, 4294901760
    %2716 = vmatprep.subr.mxu0 %v2715
    %v2717 = vand.u32 %v1179, 4294901760
    %2718 = vmatpush2.msra.mxu0 %v2717
    %v2719 = vand.u32 %v1176, 4294901760
    %2720 = vmatprep.subr.mxu0 %v2719
    %v2721 = vand.u32 %v1175, 4294901760
    %2722 = vmatpush2.msra.mxu0 %v2721
    %v2723 = vand.u32 %v1064, 4294901760
    %v2724 = vsub.f32 %v1064, %v2723
    %v2725 = vand.u32 %v2724, 4294901760
    %2726 = vmatprep.mubr.f32.mxu0 %v2725
    %v2727 = vand.u32 %v1063, 4294901760
    %v2728 = vsub.f32 %v1063, %v2727
    %v2729 = vand.u32 %v2728, 4294901760
    %2730 = vmatmul.mubr.f32.gmra.mxu0 %v2729
    %v2731 = vpop.f32.mrf.mxu0
    %v2732 = vadd.f32 %v2441, %v2731
    %v2733 = vpop.f32.mrf.mxu0
    %v2734 = vadd.f32 %v2443, %v2733
    %v2735 = vand.u32 %v1067, 4294901760
    %v2736 = vsub.f32 %v1067, %v2735
    %v2737 = vand.u32 %v2736, 4294901760
    %2738 = vmatprep.mubr.f32.mxu0 %v2737
    %v2739 = vand.u32 %v1066, 4294901760
    %v2740 = vsub.f32 %v1066, %v2739
    %v2741 = vand.u32 %v2740, 4294901760
    %2742 = vmatmul.mubr.f32.gmra.mxu0 %v2741
    %v2743 = vpop.f32.mrf.mxu0
    %v2744 = vadd.f32 %v2451, %v2743
    %v2745 = vpop.f32.mrf.mxu0
    %v2746 = vadd.f32 %v2453, %v2745
    %v2747 = vand.u32 %v1070, 4294901760
    %v2748 = vsub.f32 %v1070, %v2747
    %v2749 = vand.u32 %v2748, 4294901760
    %2750 = vmatprep.mubr.f32.mxu0 %v2749
    %v2751 = vand.u32 %v1069, 4294901760
    %v2752 = vsub.f32 %v1069, %v2751
    %v2753 = vand.u32 %v2752, 4294901760
    %2754 = vmatmul.mubr.f32.gmra.mxu0 %v2753
    %v2755 = vpop.f32.mrf.mxu0
    %v2756 = vadd.f32 %v2461, %v2755
    %v2757 = vpop.f32.mrf.mxu0
    %v2758 = vadd.f32 %v2463, %v2757
    %v2759 = vand.u32 %v1073, 4294901760
    %v2760 = vsub.f32 %v1073, %v2759
    %v2761 = vand.u32 %v2760, 4294901760
    %2762 = vmatprep.mubr.f32.mxu0 %v2761
    %v2763 = vand.u32 %v1072, 4294901760
    %v2764 = vsub.f32 %v1072, %v2763
    %v2765 = vand.u32 %v2764, 4294901760
    %2766 = vmatmul.mubr.f32.gmra.mxu0 %v2765
    %v2767 = vpop.f32.mrf.mxu0
    %v2768 = vadd.f32 %v2471, %v2767
    %v2769 = vpop.f32.mrf.mxu0
    %v2770 = vadd.f32 %v2473, %v2769
    %v2771 = vand.u32 %v1076, 4294901760
    %v2772 = vsub.f32 %v1076, %v2771
    %v2773 = vand.u32 %v2772, 4294901760
    %2774 = vmatprep.mubr.f32.mxu0 %v2773
    %v2775 = vand.u32 %v1075, 4294901760
    %v2776 = vsub.f32 %v1075, %v2775
    %v2777 = vand.u32 %v2776, 4294901760
    %2778 = vmatmul.mubr.f32.gmra.mxu0 %v2777
    %v2779 = vpop.f32.mrf.mxu0
    %v2780 = vadd.f32 %v2481, %v2779
    %v2781 = vpop.f32.mrf.mxu0
    %v2782 = vadd.f32 %v2483, %v2781
    %v2783 = vand.u32 %v1079, 4294901760
    %v2784 = vsub.f32 %v1079, %v2783
    %v2785 = vand.u32 %v2784, 4294901760
    %2786 = vmatprep.mubr.f32.mxu0 %v2785
    %v2787 = vand.u32 %v1078, 4294901760
    %v2788 = vsub.f32 %v1078, %v2787
    %v2789 = vand.u32 %v2788, 4294901760
    %2790 = vmatmul.mubr.f32.gmra.mxu0 %v2789
    %v2791 = vpop.f32.mrf.mxu0
    %v2792 = vadd.f32 %v2491, %v2791
    %v2793 = vpop.f32.mrf.mxu0
    %v2794 = vadd.f32 %v2493, %v2793
    %v2795 = vand.u32 %v1082, 4294901760
    %v2796 = vsub.f32 %v1082, %v2795
    %v2797 = vand.u32 %v2796, 4294901760
    %2798 = vmatprep.mubr.f32.mxu0 %v2797
    %v2799 = vand.u32 %v1081, 4294901760
    %v2800 = vsub.f32 %v1081, %v2799
    %v2801 = vand.u32 %v2800, 4294901760
    %2802 = vmatmul.mubr.f32.gmra.mxu0 %v2801
    %v2803 = vpop.f32.mrf.mxu0
    %v2804 = vadd.f32 %v2501, %v2803
    %v2805 = vpop.f32.mrf.mxu0
    %v2806 = vadd.f32 %v2503, %v2805
    %v2807 = vand.u32 %v1085, 4294901760
    %v2808 = vsub.f32 %v1085, %v2807
    %v2809 = vand.u32 %v2808, 4294901760
    %2810 = vmatprep.mubr.f32.mxu0 %v2809
    %v2811 = vand.u32 %v1084, 4294901760
    %v2812 = vsub.f32 %v1084, %v2811
    %v2813 = vand.u32 %v2812, 4294901760
    %2814 = vmatmul.mubr.f32.gmra.mxu0 %v2813
    %v2815 = vpop.f32.mrf.mxu0
    %v2816 = vadd.f32 %v2511, %v2815
    %v2817 = vpop.f32.mrf.mxu0
    %v2818 = vadd.f32 %v2513, %v2817
    %v2819 = vand.u32 %v1088, 4294901760
    %v2820 = vsub.f32 %v1088, %v2819
    %v2821 = vand.u32 %v2820, 4294901760
    %2822 = vmatprep.mubr.f32.mxu0 %v2821
    %v2823 = vand.u32 %v1087, 4294901760
    %v2824 = vsub.f32 %v1087, %v2823
    %v2825 = vand.u32 %v2824, 4294901760
    %2826 = vmatmul.mubr.f32.gmra.mxu0 %v2825
    %v2827 = vpop.f32.mrf.mxu0
    %v2828 = vadd.f32 %v2521, %v2827
    %v2829 = vpop.f32.mrf.mxu0
    %v2830 = vadd.f32 %v2523, %v2829
    %v2831 = vand.u32 %v1091, 4294901760
    %v2832 = vsub.f32 %v1091, %v2831
    %v2833 = vand.u32 %v2832, 4294901760
    %2834 = vmatprep.mubr.f32.mxu0 %v2833
    %v2835 = vand.u32 %v1090, 4294901760
    %v2836 = vsub.f32 %v1090, %v2835
    %v2837 = vand.u32 %v2836, 4294901760
    %2838 = vmatmul.mubr.f32.gmra.mxu0 %v2837
    %v2839 = vpop.f32.mrf.mxu0
    %v2840 = vadd.f32 %v2531, %v2839
    %v2841 = vpop.f32.mrf.mxu0
    %v2842 = vadd.f32 %v2533, %v2841
    %v2843 = vand.u32 %v1094, 4294901760
    %v2844 = vsub.f32 %v1094, %v2843
    %v2845 = vand.u32 %v2844, 4294901760
    %2846 = vmatprep.mubr.f32.mxu0 %v2845
    %v2847 = vand.u32 %v1093, 4294901760
    %v2848 = vsub.f32 %v1093, %v2847
    %v2849 = vand.u32 %v2848, 4294901760
    %2850 = vmatmul.mubr.f32.gmra.mxu0 %v2849
    %v2851 = vpop.f32.mrf.mxu0
    %v2852 = vadd.f32 %v2541, %v2851
    %v2853 = vpop.f32.mrf.mxu0
    %v2854 = vadd.f32 %v2543, %v2853
    %v2855 = vand.u32 %v1097, 4294901760
    %v2856 = vsub.f32 %v1097, %v2855
    %v2857 = vand.u32 %v2856, 4294901760
    %2858 = vmatprep.mubr.f32.mxu0 %v2857
    %v2859 = vand.u32 %v1096, 4294901760
    %v2860 = vsub.f32 %v1096, %v2859
    %v2861 = vand.u32 %v2860, 4294901760
    %2862 = vmatmul.mubr.f32.gmra.mxu0 %v2861
    %v2863 = vpop.f32.mrf.mxu0
    %v2864 = vadd.f32 %v2551, %v2863
    %v2865 = vpop.f32.mrf.mxu0
    %v2866 = vadd.f32 %v2553, %v2865
    %v2867 = vand.u32 %v1100, 4294901760
    %v2868 = vsub.f32 %v1100, %v2867
    %v2869 = vand.u32 %v2868, 4294901760
    %2870 = vmatprep.mubr.f32.mxu0 %v2869
    %v2871 = vand.u32 %v1099, 4294901760
    %v2872 = vsub.f32 %v1099, %v2871
    %v2873 = vand.u32 %v2872, 4294901760
    %2874 = vmatmul.mubr.f32.gmra.mxu0 %v2873
    %v2875 = vpop.f32.mrf.mxu0
    %v2876 = vadd.f32 %v2561, %v2875
    %v2877 = vpop.f32.mrf.mxu0
    %v2878 = vadd.f32 %v2563, %v2877
    %v2879 = vand.u32 %v1103, 4294901760
    %v2880 = vsub.f32 %v1103, %v2879
    %v2881 = vand.u32 %v2880, 4294901760
    %2882 = vmatprep.mubr.f32.mxu0 %v2881
    %v2883 = vand.u32 %v1102, 4294901760
    %v2884 = vsub.f32 %v1102, %v2883
    %v2885 = vand.u32 %v2884, 4294901760
    %2886 = vmatmul.mubr.f32.gmra.mxu0 %v2885
    %v2887 = vpop.f32.mrf.mxu0
    %v2888 = vadd.f32 %v2571, %v2887
    %v2889 = vpop.f32.mrf.mxu0
    %v2890 = vadd.f32 %v2573, %v2889
    %v2891 = vand.u32 %v1106, 4294901760
    %v2892 = vsub.f32 %v1106, %v2891
    %v2893 = vand.u32 %v2892, 4294901760
    %2894 = vmatprep.mubr.f32.mxu0 %v2893
    %v2895 = vand.u32 %v1105, 4294901760
    %v2896 = vsub.f32 %v1105, %v2895
    %v2897 = vand.u32 %v2896, 4294901760
    %2898 = vmatmul.mubr.f32.gmra.mxu0 %v2897
    %v2899 = vpop.f32.mrf.mxu0
    %v2900 = vadd.f32 %v2581, %v2899
    %v2901 = vpop.f32.mrf.mxu0
    %v2902 = vadd.f32 %v2583, %v2901
    %v2903 = vand.u32 %v1109, 4294901760
    %v2904 = vsub.f32 %v1109, %v2903
    %v2905 = vand.u32 %v2904, 4294901760
    %2906 = vmatprep.mubr.f32.mxu0 %v2905
    %v2907 = vand.u32 %v1108, 4294901760
    %v2908 = vsub.f32 %v1108, %v2907
    %v2909 = vand.u32 %v2908, 4294901760
    %2910 = vmatmul.mubr.f32.gmra.mxu0 %v2909
    %v2911 = vpop.f32.mrf.mxu0
    %v2912 = vadd.f32 %v2591, %v2911
    %v2913 = vpop.f32.mrf.mxu0
    %v2914 = vadd.f32 %v2593, %v2913
    %2915 = vdwg.mxu0
    %v2916 = vand.u32 %v1172, 4294901760
    %v2917 = vsub.f32 %v1172, %v2916
    %v2918 = vand.u32 %v2917, 4294901760
    %2919 = vmatprep.subr.mxu0 %v2918
    %v2920 = vand.u32 %v1171, 4294901760
    %v2921 = vsub.f32 %v1171, %v2920
    %v2922 = vand.u32 %v2921, 4294901760
    %2923 = vmatpush1.msra.mxu0 %v2922
    %v2924 = vand.u32 %v1168, 4294901760
    %v2925 = vsub.f32 %v1168, %v2924
    %v2926 = vand.u32 %v2925, 4294901760
    %2927 = vmatprep.subr.mxu0 %v2926
    %v2928 = vand.u32 %v1167, 4294901760
    %v2929 = vsub.f32 %v1167, %v2928
    %v2930 = vand.u32 %v2929, 4294901760
    %2931 = vmatpush1.msra.mxu0 %v2930
    %v2932 = vand.u32 %v1164, 4294901760
    %v2933 = vsub.f32 %v1164, %v2932
    %v2934 = vand.u32 %v2933, 4294901760
    %2935 = vmatprep.subr.mxu0 %v2934
    %v2936 = vand.u32 %v1163, 4294901760
    %v2937 = vsub.f32 %v1163, %v2936
    %v2938 = vand.u32 %v2937, 4294901760
    %2939 = vmatpush1.msra.mxu0 %v2938
    %v2940 = vand.u32 %v1160, 4294901760
    %v2941 = vsub.f32 %v1160, %v2940
    %v2942 = vand.u32 %v2941, 4294901760
    %2943 = vmatprep.subr.mxu0 %v2942
    %v2944 = vand.u32 %v1159, 4294901760
    %v2945 = vsub.f32 %v1159, %v2944
    %v2946 = vand.u32 %v2945, 4294901760
    %2947 = vmatpush1.msra.mxu0 %v2946
    %v2948 = vand.u32 %v1156, 4294901760
    %v2949 = vsub.f32 %v1156, %v2948
    %v2950 = vand.u32 %v2949, 4294901760
    %2951 = vmatprep.subr.mxu0 %v2950
    %v2952 = vand.u32 %v1155, 4294901760
    %v2953 = vsub.f32 %v1155, %v2952
    %v2954 = vand.u32 %v2953, 4294901760
    %2955 = vmatpush1.msra.mxu0 %v2954
    %v2956 = vand.u32 %v1152, 4294901760
    %v2957 = vsub.f32 %v1152, %v2956
    %v2958 = vand.u32 %v2957, 4294901760
    %2959 = vmatprep.subr.mxu0 %v2958
    %v2960 = vand.u32 %v1151, 4294901760
    %v2961 = vsub.f32 %v1151, %v2960
    %v2962 = vand.u32 %v2961, 4294901760
    %2963 = vmatpush1.msra.mxu0 %v2962
    %v2964 = vand.u32 %v1148, 4294901760
    %v2965 = vsub.f32 %v1148, %v2964
    %v2966 = vand.u32 %v2965, 4294901760
    %2967 = vmatprep.subr.mxu0 %v2966
    %v2968 = vand.u32 %v1147, 4294901760
    %v2969 = vsub.f32 %v1147, %v2968
    %v2970 = vand.u32 %v2969, 4294901760
    %2971 = vmatpush1.msra.mxu0 %v2970
    %v2972 = vand.u32 %v1144, 4294901760
    %v2973 = vsub.f32 %v1144, %v2972
    %v2974 = vand.u32 %v2973, 4294901760
    %2975 = vmatprep.subr.mxu0 %v2974
    %v2976 = vand.u32 %v1143, 4294901760
    %v2977 = vsub.f32 %v1143, %v2976
    %v2978 = vand.u32 %v2977, 4294901760
    %2979 = vmatpush1.msra.mxu0 %v2978
    %v2980 = vand.u32 %v1140, 4294901760
    %v2981 = vsub.f32 %v1140, %v2980
    %v2982 = vand.u32 %v2981, 4294901760
    %2983 = vmatprep.subr.mxu0 %v2982
    %v2984 = vand.u32 %v1139, 4294901760
    %v2985 = vsub.f32 %v1139, %v2984
    %v2986 = vand.u32 %v2985, 4294901760
    %2987 = vmatpush1.msra.mxu0 %v2986
    %v2988 = vand.u32 %v1136, 4294901760
    %v2989 = vsub.f32 %v1136, %v2988
    %v2990 = vand.u32 %v2989, 4294901760
    %2991 = vmatprep.subr.mxu0 %v2990
    %v2992 = vand.u32 %v1135, 4294901760
    %v2993 = vsub.f32 %v1135, %v2992
    %v2994 = vand.u32 %v2993, 4294901760
    %2995 = vmatpush1.msra.mxu0 %v2994
    %v2996 = vand.u32 %v1132, 4294901760
    %v2997 = vsub.f32 %v1132, %v2996
    %v2998 = vand.u32 %v2997, 4294901760
    %2999 = vmatprep.subr.mxu0 %v2998
    %v3000 = vand.u32 %v1131, 4294901760
    %v3001 = vsub.f32 %v1131, %v3000
    %v3002 = vand.u32 %v3001, 4294901760
    %3003 = vmatpush1.msra.mxu0 %v3002
    %v3004 = vand.u32 %v1128, 4294901760
    %v3005 = vsub.f32 %v1128, %v3004
    %v3006 = vand.u32 %v3005, 4294901760
    %3007 = vmatprep.subr.mxu0 %v3006
    %v3008 = vand.u32 %v1127, 4294901760
    %v3009 = vsub.f32 %v1127, %v3008
    %v3010 = vand.u32 %v3009, 4294901760
    %3011 = vmatpush1.msra.mxu0 %v3010
    %v3012 = vand.u32 %v1124, 4294901760
    %v3013 = vsub.f32 %v1124, %v3012
    %v3014 = vand.u32 %v3013, 4294901760
    %3015 = vmatprep.subr.mxu0 %v3014
    %v3016 = vand.u32 %v1123, 4294901760
    %v3017 = vsub.f32 %v1123, %v3016
    %v3018 = vand.u32 %v3017, 4294901760
    %3019 = vmatpush1.msra.mxu0 %v3018
    %v3020 = vand.u32 %v1120, 4294901760
    %v3021 = vsub.f32 %v1120, %v3020
    %v3022 = vand.u32 %v3021, 4294901760
    %3023 = vmatprep.subr.mxu0 %v3022
    %v3024 = vand.u32 %v1119, 4294901760
    %v3025 = vsub.f32 %v1119, %v3024
    %v3026 = vand.u32 %v3025, 4294901760
    %3027 = vmatpush1.msra.mxu0 %v3026
    %v3028 = vand.u32 %v1116, 4294901760
    %v3029 = vsub.f32 %v1116, %v3028
    %v3030 = vand.u32 %v3029, 4294901760
    %3031 = vmatprep.subr.mxu0 %v3030
    %v3032 = vand.u32 %v1115, 4294901760
    %v3033 = vsub.f32 %v1115, %v3032
    %v3034 = vand.u32 %v3033, 4294901760
    %3035 = vmatpush1.msra.mxu0 %v3034
    %v3036 = vand.u32 %v1112, 4294901760
    %v3037 = vsub.f32 %v1112, %v3036
    %v3038 = vand.u32 %v3037, 4294901760
    %3039 = vmatprep.subr.mxu0 %v3038
    %v3040 = vand.u32 %v1111, 4294901760
    %v3041 = vsub.f32 %v1111, %v3040
    %v3042 = vand.u32 %v3041, 4294901760
    %3043 = vmatpush1.msra.mxu0 %v3042
    %v3044 = vand.u32 %v1236, 4294901760
    %v3045 = vsub.f32 %v1236, %v3044
    %v3046 = vand.u32 %v3045, 4294901760
    %3047 = vmatprep.subr.mxu0 %v3046
    %v3048 = vand.u32 %v1235, 4294901760
    %v3049 = vsub.f32 %v1235, %v3048
    %v3050 = vand.u32 %v3049, 4294901760
    %3051 = vmatpush2.msra.mxu0 %v3050
    %v3052 = vand.u32 %v1232, 4294901760
    %v3053 = vsub.f32 %v1232, %v3052
    %v3054 = vand.u32 %v3053, 4294901760
    %3055 = vmatprep.subr.mxu0 %v3054
    %v3056 = vand.u32 %v1231, 4294901760
    %v3057 = vsub.f32 %v1231, %v3056
    %v3058 = vand.u32 %v3057, 4294901760
    %3059 = vmatpush2.msra.mxu0 %v3058
    %v3060 = vand.u32 %v1228, 4294901760
    %v3061 = vsub.f32 %v1228, %v3060
    %v3062 = vand.u32 %v3061, 4294901760
    %3063 = vmatprep.subr.mxu0 %v3062
    %v3064 = vand.u32 %v1227, 4294901760
    %v3065 = vsub.f32 %v1227, %v3064
    %v3066 = vand.u32 %v3065, 4294901760
    %3067 = vmatpush2.msra.mxu0 %v3066
    %v3068 = vand.u32 %v1224, 4294901760
    %v3069 = vsub.f32 %v1224, %v3068
    %v3070 = vand.u32 %v3069, 4294901760
    %3071 = vmatprep.subr.mxu0 %v3070
    %v3072 = vand.u32 %v1223, 4294901760
    %v3073 = vsub.f32 %v1223, %v3072
    %v3074 = vand.u32 %v3073, 4294901760
    %3075 = vmatpush2.msra.mxu0 %v3074
    %v3076 = vand.u32 %v1220, 4294901760
    %v3077 = vsub.f32 %v1220, %v3076
    %v3078 = vand.u32 %v3077, 4294901760
    %3079 = vmatprep.subr.mxu0 %v3078
    %v3080 = vand.u32 %v1219, 4294901760
    %v3081 = vsub.f32 %v1219, %v3080
    %v3082 = vand.u32 %v3081, 4294901760
    %3083 = vmatpush2.msra.mxu0 %v3082
    %v3084 = vand.u32 %v1216, 4294901760
    %v3085 = vsub.f32 %v1216, %v3084
    %v3086 = vand.u32 %v3085, 4294901760
    %3087 = vmatprep.subr.mxu0 %v3086
    %v3088 = vand.u32 %v1215, 4294901760
    %v3089 = vsub.f32 %v1215, %v3088
    %v3090 = vand.u32 %v3089, 4294901760
    %3091 = vmatpush2.msra.mxu0 %v3090
    %v3092 = vand.u32 %v1212, 4294901760
    %v3093 = vsub.f32 %v1212, %v3092
    %v3094 = vand.u32 %v3093, 4294901760
    %3095 = vmatprep.subr.mxu0 %v3094
    %v3096 = vand.u32 %v1211, 4294901760
    %v3097 = vsub.f32 %v1211, %v3096
    %v3098 = vand.u32 %v3097, 4294901760
    %3099 = vmatpush2.msra.mxu0 %v3098
    %v3100 = vand.u32 %v1208, 4294901760
    %v3101 = vsub.f32 %v1208, %v3100
    %v3102 = vand.u32 %v3101, 4294901760
    %3103 = vmatprep.subr.mxu0 %v3102
    %v3104 = vand.u32 %v1207, 4294901760
    %v3105 = vsub.f32 %v1207, %v3104
    %v3106 = vand.u32 %v3105, 4294901760
    %3107 = vmatpush2.msra.mxu0 %v3106
    %v3108 = vand.u32 %v1204, 4294901760
    %v3109 = vsub.f32 %v1204, %v3108
    %v3110 = vand.u32 %v3109, 4294901760
    %3111 = vmatprep.subr.mxu0 %v3110
    %v3112 = vand.u32 %v1203, 4294901760
    %v3113 = vsub.f32 %v1203, %v3112
    %v3114 = vand.u32 %v3113, 4294901760
    %3115 = vmatpush2.msra.mxu0 %v3114
    %v3116 = vand.u32 %v1200, 4294901760
    %v3117 = vsub.f32 %v1200, %v3116
    %v3118 = vand.u32 %v3117, 4294901760
    %3119 = vmatprep.subr.mxu0 %v3118
    %v3120 = vand.u32 %v1199, 4294901760
    %v3121 = vsub.f32 %v1199, %v3120
    %v3122 = vand.u32 %v3121, 4294901760
    %3123 = vmatpush2.msra.mxu0 %v3122
    %v3124 = vand.u32 %v1196, 4294901760
    %v3125 = vsub.f32 %v1196, %v3124
    %v3126 = vand.u32 %v3125, 4294901760
    %3127 = vmatprep.subr.mxu0 %v3126
    %v3128 = vand.u32 %v1195, 4294901760
    %v3129 = vsub.f32 %v1195, %v3128
    %v3130 = vand.u32 %v3129, 4294901760
    %3131 = vmatpush2.msra.mxu0 %v3130
    %v3132 = vand.u32 %v1192, 4294901760
    %v3133 = vsub.f32 %v1192, %v3132
    %v3134 = vand.u32 %v3133, 4294901760
    %3135 = vmatprep.subr.mxu0 %v3134
    %v3136 = vand.u32 %v1191, 4294901760
    %v3137 = vsub.f32 %v1191, %v3136
    %v3138 = vand.u32 %v3137, 4294901760
    %3139 = vmatpush2.msra.mxu0 %v3138
    %v3140 = vand.u32 %v1188, 4294901760
    %v3141 = vsub.f32 %v1188, %v3140
    %v3142 = vand.u32 %v3141, 4294901760
    %3143 = vmatprep.subr.mxu0 %v3142
    %v3144 = vand.u32 %v1187, 4294901760
    %v3145 = vsub.f32 %v1187, %v3144
    %v3146 = vand.u32 %v3145, 4294901760
    %3147 = vmatpush2.msra.mxu0 %v3146
    %v3148 = vand.u32 %v1184, 4294901760
    %v3149 = vsub.f32 %v1184, %v3148
    %v3150 = vand.u32 %v3149, 4294901760
    %3151 = vmatprep.subr.mxu0 %v3150
    %v3152 = vand.u32 %v1183, 4294901760
    %v3153 = vsub.f32 %v1183, %v3152
    %v3154 = vand.u32 %v3153, 4294901760
    %3155 = vmatpush2.msra.mxu0 %v3154
    %v3156 = vand.u32 %v1180, 4294901760
    %v3157 = vsub.f32 %v1180, %v3156
    %v3158 = vand.u32 %v3157, 4294901760
    %3159 = vmatprep.subr.mxu0 %v3158
    %v3160 = vand.u32 %v1179, 4294901760
    %v3161 = vsub.f32 %v1179, %v3160
    %v3162 = vand.u32 %v3161, 4294901760
    %3163 = vmatpush2.msra.mxu0 %v3162
    %v3164 = vand.u32 %v1176, 4294901760
    %v3165 = vsub.f32 %v1176, %v3164
    %v3166 = vand.u32 %v3165, 4294901760
    %3167 = vmatprep.subr.mxu0 %v3166
    %v3168 = vand.u32 %v1175, 4294901760
    %v3169 = vsub.f32 %v1175, %v3168
    %v3170 = vand.u32 %v3169, 4294901760
    %3171 = vmatpush2.msra.mxu0 %v3170
    %v3172 = vand.u32 %v1064, 4294901760
    %3173 = vmatprep.mubr.f32.mxu0 %v3172
    %v3174 = vand.u32 %v1063, 4294901760
    %3175 = vmatmul.mubr.f32.gmra.mxu0 %v3174
    %v3176 = vpop.f32.mrf.mxu0
    %v3177 = vadd.f32 %v2732, %v3176
    %v3178 = vpop.f32.mrf.mxu0
    %v3179 = vadd.f32 %v2734, %v3178
    %v3180 = vand.u32 %v1067, 4294901760
    %3181 = vmatprep.mubr.f32.mxu0 %v3180
    %v3182 = vand.u32 %v1066, 4294901760
    %3183 = vmatmul.mubr.f32.gmra.mxu0 %v3182
    %v3184 = vpop.f32.mrf.mxu0
    %v3185 = vadd.f32 %v2744, %v3184
    %v3186 = vpop.f32.mrf.mxu0
    %v3187 = vadd.f32 %v2746, %v3186
    %v3188 = vand.u32 %v1070, 4294901760
    %3189 = vmatprep.mubr.f32.mxu0 %v3188
    %v3190 = vand.u32 %v1069, 4294901760
    %3191 = vmatmul.mubr.f32.gmra.mxu0 %v3190
    %v3192 = vpop.f32.mrf.mxu0
    %v3193 = vadd.f32 %v2756, %v3192
    %v3194 = vpop.f32.mrf.mxu0
    %v3195 = vadd.f32 %v2758, %v3194
    %v3196 = vand.u32 %v1073, 4294901760
    %3197 = vmatprep.mubr.f32.mxu0 %v3196
    %v3198 = vand.u32 %v1072, 4294901760
    %3199 = vmatmul.mubr.f32.gmra.mxu0 %v3198
    %v3200 = vpop.f32.mrf.mxu0
    %v3201 = vadd.f32 %v2768, %v3200
    %v3202 = vpop.f32.mrf.mxu0
    %v3203 = vadd.f32 %v2770, %v3202
    %v3204 = vand.u32 %v1076, 4294901760
    %3205 = vmatprep.mubr.f32.mxu0 %v3204
    %v3206 = vand.u32 %v1075, 4294901760
    %3207 = vmatmul.mubr.f32.gmra.mxu0 %v3206
    %v3208 = vpop.f32.mrf.mxu0
    %v3209 = vadd.f32 %v2780, %v3208
    %v3210 = vpop.f32.mrf.mxu0
    %v3211 = vadd.f32 %v2782, %v3210
    %v3212 = vand.u32 %v1079, 4294901760
    %3213 = vmatprep.mubr.f32.mxu0 %v3212
    %v3214 = vand.u32 %v1078, 4294901760
    %3215 = vmatmul.mubr.f32.gmra.mxu0 %v3214
    %v3216 = vpop.f32.mrf.mxu0
    %v3217 = vadd.f32 %v2792, %v3216
    %v3218 = vpop.f32.mrf.mxu0
    %v3219 = vadd.f32 %v2794, %v3218
    %v3220 = vand.u32 %v1082, 4294901760
    %3221 = vmatprep.mubr.f32.mxu0 %v3220
    %v3222 = vand.u32 %v1081, 4294901760
    %3223 = vmatmul.mubr.f32.gmra.mxu0 %v3222
    %v3224 = vpop.f32.mrf.mxu0
    %v3225 = vadd.f32 %v2804, %v3224
    %v3226 = vpop.f32.mrf.mxu0
    %v3227 = vadd.f32 %v2806, %v3226
    %v3228 = vand.u32 %v1085, 4294901760
    %3229 = vmatprep.mubr.f32.mxu0 %v3228
    %v3230 = vand.u32 %v1084, 4294901760
    %3231 = vmatmul.mubr.f32.gmra.mxu0 %v3230
    %v3232 = vpop.f32.mrf.mxu0
    %v3233 = vadd.f32 %v2816, %v3232
    %v3234 = vpop.f32.mrf.mxu0
    %v3235 = vadd.f32 %v2818, %v3234
    %v3236 = vand.u32 %v1088, 4294901760
    %3237 = vmatprep.mubr.f32.mxu0 %v3236
    %v3238 = vand.u32 %v1087, 4294901760
    %3239 = vmatmul.mubr.f32.gmra.mxu0 %v3238
    %v3240 = vpop.f32.mrf.mxu0
    %v3241 = vadd.f32 %v2828, %v3240
    %v3242 = vpop.f32.mrf.mxu0
    %v3243 = vadd.f32 %v2830, %v3242
    %v3244 = vand.u32 %v1091, 4294901760
    %3245 = vmatprep.mubr.f32.mxu0 %v3244
    %v3246 = vand.u32 %v1090, 4294901760
    %3247 = vmatmul.mubr.f32.gmra.mxu0 %v3246
    %v3248 = vpop.f32.mrf.mxu0
    %v3249 = vadd.f32 %v2840, %v3248
    %v3250 = vpop.f32.mrf.mxu0
    %v3251 = vadd.f32 %v2842, %v3250
    %v3252 = vand.u32 %v1094, 4294901760
    %3253 = vmatprep.mubr.f32.mxu0 %v3252
    %v3254 = vand.u32 %v1093, 4294901760
    %3255 = vmatmul.mubr.f32.gmra.mxu0 %v3254
    %v3256 = vpop.f32.mrf.mxu0
    %v3257 = vadd.f32 %v2852, %v3256
    %v3258 = vpop.f32.mrf.mxu0
    %v3259 = vadd.f32 %v2854, %v3258
    %v3260 = vand.u32 %v1097, 4294901760
    %3261 = vmatprep.mubr.f32.mxu0 %v3260
    %v3262 = vand.u32 %v1096, 4294901760
    %3263 = vmatmul.mubr.f32.gmra.mxu0 %v3262
    %v3264 = vpop.f32.mrf.mxu0
    %v3265 = vadd.f32 %v2864, %v3264
    %v3266 = vpop.f32.mrf.mxu0
    %v3267 = vadd.f32 %v2866, %v3266
    %v3268 = vand.u32 %v1100, 4294901760
    %3269 = vmatprep.mubr.f32.mxu0 %v3268
    %v3270 = vand.u32 %v1099, 4294901760
    %3271 = vmatmul.mubr.f32.gmra.mxu0 %v3270
    %v3272 = vpop.f32.mrf.mxu0
    %v3273 = vadd.f32 %v2876, %v3272
    %v3274 = vpop.f32.mrf.mxu0
    %v3275 = vadd.f32 %v2878, %v3274
    %v3276 = vand.u32 %v1103, 4294901760
    %3277 = vmatprep.mubr.f32.mxu0 %v3276
    %v3278 = vand.u32 %v1102, 4294901760
    %3279 = vmatmul.mubr.f32.gmra.mxu0 %v3278
    %v3280 = vpop.f32.mrf.mxu0
    %v3281 = vadd.f32 %v2888, %v3280
    %v3282 = vpop.f32.mrf.mxu0
    %v3283 = vadd.f32 %v2890, %v3282
    %v3284 = vand.u32 %v1106, 4294901760
    %3285 = vmatprep.mubr.f32.mxu0 %v3284
    %v3286 = vand.u32 %v1105, 4294901760
    %3287 = vmatmul.mubr.f32.gmra.mxu0 %v3286
    %v3288 = vpop.f32.mrf.mxu0
    %v3289 = vadd.f32 %v2900, %v3288
    %v3290 = vpop.f32.mrf.mxu0
    %v3291 = vadd.f32 %v2902, %v3290
    %v3292 = vand.u32 %v1109, 4294901760
    %3293 = vmatprep.mubr.f32.mxu0 %v3292
    %v3294 = vand.u32 %v1108, 4294901760
    %3295 = vmatmul.mubr.f32.gmra.mxu0 %v3294
    %v3296 = vpop.f32.mrf.mxu0
    %v3297 = vadd.f32 %v2912, %v3296
    %v3298 = vpop.f32.mrf.mxu0
    %v3299 = vadd.f32 %v2914, %v3298
    %3300 = vdwg.mxu0
    %v3301 = vand.u32 %v1172, 4294901760
    %3302 = vmatprep.subr.mxu0 %v3301
    %v3303 = vand.u32 %v1171, 4294901760
    %3304 = vmatpush1.msra.mxu0 %v3303
    %v3305 = vand.u32 %v1168, 4294901760
    %3306 = vmatprep.subr.mxu0 %v3305
    %v3307 = vand.u32 %v1167, 4294901760
    %3308 = vmatpush1.msra.mxu0 %v3307
    %v3309 = vand.u32 %v1164, 4294901760
    %3310 = vmatprep.subr.mxu0 %v3309
    %v3311 = vand.u32 %v1163, 4294901760
    %3312 = vmatpush1.msra.mxu0 %v3311
    %v3313 = vand.u32 %v1160, 4294901760
    %3314 = vmatprep.subr.mxu0 %v3313
    %v3315 = vand.u32 %v1159, 4294901760
    %3316 = vmatpush1.msra.mxu0 %v3315
    %v3317 = vand.u32 %v1156, 4294901760
    %3318 = vmatprep.subr.mxu0 %v3317
    %v3319 = vand.u32 %v1155, 4294901760
    %3320 = vmatpush1.msra.mxu0 %v3319
    %v3321 = vand.u32 %v1152, 4294901760
    %3322 = vmatprep.subr.mxu0 %v3321
    %v3323 = vand.u32 %v1151, 4294901760
    %3324 = vmatpush1.msra.mxu0 %v3323
    %v3325 = vand.u32 %v1148, 4294901760
    %3326 = vmatprep.subr.mxu0 %v3325
    %v3327 = vand.u32 %v1147, 4294901760
    %3328 = vmatpush1.msra.mxu0 %v3327
    %v3329 = vand.u32 %v1144, 4294901760
    %3330 = vmatprep.subr.mxu0 %v3329
    %v3331 = vand.u32 %v1143, 4294901760
    %3332 = vmatpush1.msra.mxu0 %v3331
    %v3333 = vand.u32 %v1140, 4294901760
    %3334 = vmatprep.subr.mxu0 %v3333
    %v3335 = vand.u32 %v1139, 4294901760
    %3336 = vmatpush1.msra.mxu0 %v3335
    %v3337 = vand.u32 %v1136, 4294901760
    %3338 = vmatprep.subr.mxu0 %v3337
    %v3339 = vand.u32 %v1135, 4294901760
    %3340 = vmatpush1.msra.mxu0 %v3339
    %v3341 = vand.u32 %v1132, 4294901760
    %3342 = vmatprep.subr.mxu0 %v3341
    %v3343 = vand.u32 %v1131, 4294901760
    %3344 = vmatpush1.msra.mxu0 %v3343
    %v3345 = vand.u32 %v1128, 4294901760
    %3346 = vmatprep.subr.mxu0 %v3345
    %v3347 = vand.u32 %v1127, 4294901760
    %3348 = vmatpush1.msra.mxu0 %v3347
    %v3349 = vand.u32 %v1124, 4294901760
    %3350 = vmatprep.subr.mxu0 %v3349
    %v3351 = vand.u32 %v1123, 4294901760
    %3352 = vmatpush1.msra.mxu0 %v3351
    %v3353 = vand.u32 %v1120, 4294901760
    %3354 = vmatprep.subr.mxu0 %v3353
    %v3355 = vand.u32 %v1119, 4294901760
    %3356 = vmatpush1.msra.mxu0 %v3355
    %v3357 = vand.u32 %v1116, 4294901760
    %3358 = vmatprep.subr.mxu0 %v3357
    %v3359 = vand.u32 %v1115, 4294901760
    %3360 = vmatpush1.msra.mxu0 %v3359
    %v3361 = vand.u32 %v1112, 4294901760
    %3362 = vmatprep.subr.mxu0 %v3361
    %v3363 = vand.u32 %v1111, 4294901760
    %3364 = vmatpush1.msra.mxu0 %v3363
    %v3365 = vand.u32 %v1236, 4294901760
    %3366 = vmatprep.subr.mxu0 %v3365
    %v3367 = vand.u32 %v1235, 4294901760
    %3368 = vmatpush2.msra.mxu0 %v3367
    %v3369 = vand.u32 %v1232, 4294901760
    %3370 = vmatprep.subr.mxu0 %v3369
    %v3371 = vand.u32 %v1231, 4294901760
    %3372 = vmatpush2.msra.mxu0 %v3371
    %v3373 = vand.u32 %v1228, 4294901760
    %3374 = vmatprep.subr.mxu0 %v3373
    %v3375 = vand.u32 %v1227, 4294901760
    %3376 = vmatpush2.msra.mxu0 %v3375
    %v3377 = vand.u32 %v1224, 4294901760
    %3378 = vmatprep.subr.mxu0 %v3377
    %v3379 = vand.u32 %v1223, 4294901760
    %3380 = vmatpush2.msra.mxu0 %v3379
    %v3381 = vand.u32 %v1220, 4294901760
    %3382 = vmatprep.subr.mxu0 %v3381
    %v3383 = vand.u32 %v1219, 4294901760
    %3384 = vmatpush2.msra.mxu0 %v3383
    %v3385 = vand.u32 %v1216, 4294901760
    %3386 = vmatprep.subr.mxu0 %v3385
    %v3387 = vand.u32 %v1215, 4294901760
    %3388 = vmatpush2.msra.mxu0 %v3387
    %v3389 = vand.u32 %v1212, 4294901760
    %3390 = vmatprep.subr.mxu0 %v3389
    %v3391 = vand.u32 %v1211, 4294901760
    %3392 = vmatpush2.msra.mxu0 %v3391
    %v3393 = vand.u32 %v1208, 4294901760
    %3394 = vmatprep.subr.mxu0 %v3393
    %v3395 = vand.u32 %v1207, 4294901760
    %3396 = vmatpush2.msra.mxu0 %v3395
    %v3397 = vand.u32 %v1204, 4294901760
    %3398 = vmatprep.subr.mxu0 %v3397
    %v3399 = vand.u32 %v1203, 4294901760
    %3400 = vmatpush2.msra.mxu0 %v3399
    %v3401 = vand.u32 %v1200, 4294901760
    %3402 = vmatprep.subr.mxu0 %v3401
    %v3403 = vand.u32 %v1199, 4294901760
    %3404 = vmatpush2.msra.mxu0 %v3403
    %v3405 = vand.u32 %v1196, 4294901760
    %3406 = vmatprep.subr.mxu0 %v3405
    %v3407 = vand.u32 %v1195, 4294901760
    %3408 = vmatpush2.msra.mxu0 %v3407
    %v3409 = vand.u32 %v1192, 4294901760
    %3410 = vmatprep.subr.mxu0 %v3409
    %v3411 = vand.u32 %v1191, 4294901760
    %3412 = vmatpush2.msra.mxu0 %v3411
    %v3413 = vand.u32 %v1188, 4294901760
    %3414 = vmatprep.subr.mxu0 %v3413
    %v3415 = vand.u32 %v1187, 4294901760
    %3416 = vmatpush2.msra.mxu0 %v3415
    %v3417 = vand.u32 %v1184, 4294901760
    %3418 = vmatprep.subr.mxu0 %v3417
    %v3419 = vand.u32 %v1183, 4294901760
    %3420 = vmatpush2.msra.mxu0 %v3419
    %v3421 = vand.u32 %v1180, 4294901760
    %3422 = vmatprep.subr.mxu0 %v3421
    %v3423 = vand.u32 %v1179, 4294901760
    %3424 = vmatpush2.msra.mxu0 %v3423
    %v3425 = vand.u32 %v1176, 4294901760
    %3426 = vmatprep.subr.mxu0 %v3425
    %v3427 = vand.u32 %v1175, 4294901760
    %3428 = vmatpush2.msra.mxu0 %v3427
    %v3429 = vand.u32 %v1064, 4294901760
    %3430 = vmatprep.mubr.f32.mxu0 %v3429
    %v3431 = vand.u32 %v1063, 4294901760
    %3432 = vmatmul.mubr.f32.gmra.mxu0 %v3431
    %v3433 = vpop.f32.mrf.mxu0
    %v3434 = vadd.f32 %v3177, %v3433
    %v3435 = vpop.f32.mrf.mxu0
    %v3436 = vadd.f32 %v3179, %v3435
    %v3437 = vand.u32 %v1067, 4294901760
    %3438 = vmatprep.mubr.f32.mxu0 %v3437
    %v3439 = vand.u32 %v1066, 4294901760
    %3440 = vmatmul.mubr.f32.gmra.mxu0 %v3439
    %v3441 = vpop.f32.mrf.mxu0
    %v3442 = vadd.f32 %v3185, %v3441
    %v3443 = vpop.f32.mrf.mxu0
    %v3444 = vadd.f32 %v3187, %v3443
    %v3445 = vand.u32 %v1070, 4294901760
    %3446 = vmatprep.mubr.f32.mxu0 %v3445
    %v3447 = vand.u32 %v1069, 4294901760
    %3448 = vmatmul.mubr.f32.gmra.mxu0 %v3447
    %v3449 = vpop.f32.mrf.mxu0
    %v3450 = vadd.f32 %v3193, %v3449
    %v3451 = vpop.f32.mrf.mxu0
    %v3452 = vadd.f32 %v3195, %v3451
    %v3453 = vand.u32 %v1073, 4294901760
    %3454 = vmatprep.mubr.f32.mxu0 %v3453
    %v3455 = vand.u32 %v1072, 4294901760
    %3456 = vmatmul.mubr.f32.gmra.mxu0 %v3455
    %v3457 = vpop.f32.mrf.mxu0
    %v3458 = vadd.f32 %v3201, %v3457
    %v3459 = vpop.f32.mrf.mxu0
    %v3460 = vadd.f32 %v3203, %v3459
    %v3461 = vand.u32 %v1076, 4294901760
    %3462 = vmatprep.mubr.f32.mxu0 %v3461
    %v3463 = vand.u32 %v1075, 4294901760
    %3464 = vmatmul.mubr.f32.gmra.mxu0 %v3463
    %v3465 = vpop.f32.mrf.mxu0
    %v3466 = vadd.f32 %v3209, %v3465
    %v3467 = vpop.f32.mrf.mxu0
    %v3468 = vadd.f32 %v3211, %v3467
    %v3469 = vand.u32 %v1079, 4294901760
    %3470 = vmatprep.mubr.f32.mxu0 %v3469
    %v3471 = vand.u32 %v1078, 4294901760
    %3472 = vmatmul.mubr.f32.gmra.mxu0 %v3471
    %v3473 = vpop.f32.mrf.mxu0
    %v3474 = vadd.f32 %v3217, %v3473
    %v3475 = vpop.f32.mrf.mxu0
    %v3476 = vadd.f32 %v3219, %v3475
    %v3477 = vand.u32 %v1082, 4294901760
    %3478 = vmatprep.mubr.f32.mxu0 %v3477
    %v3479 = vand.u32 %v1081, 4294901760
    %3480 = vmatmul.mubr.f32.gmra.mxu0 %v3479
    %v3481 = vpop.f32.mrf.mxu0
    %v3482 = vadd.f32 %v3225, %v3481
    %v3483 = vpop.f32.mrf.mxu0
    %v3484 = vadd.f32 %v3227, %v3483
    %v3485 = vand.u32 %v1085, 4294901760
    %3486 = vmatprep.mubr.f32.mxu0 %v3485
    %v3487 = vand.u32 %v1084, 4294901760
    %3488 = vmatmul.mubr.f32.gmra.mxu0 %v3487
    %v3489 = vpop.f32.mrf.mxu0
    %v3490 = vadd.f32 %v3233, %v3489
    %v3491 = vpop.f32.mrf.mxu0
    %v3492 = vadd.f32 %v3235, %v3491
    %v3493 = vand.u32 %v1088, 4294901760
    %3494 = vmatprep.mubr.f32.mxu0 %v3493
    %v3495 = vand.u32 %v1087, 4294901760
    %3496 = vmatmul.mubr.f32.gmra.mxu0 %v3495
    %v3497 = vpop.f32.mrf.mxu0
    %v3498 = vadd.f32 %v3241, %v3497
    %v3499 = vpop.f32.mrf.mxu0
    %v3500 = vadd.f32 %v3243, %v3499
    %v3501 = vand.u32 %v1091, 4294901760
    %3502 = vmatprep.mubr.f32.mxu0 %v3501
    %v3503 = vand.u32 %v1090, 4294901760
    %3504 = vmatmul.mubr.f32.gmra.mxu0 %v3503
    %v3505 = vpop.f32.mrf.mxu0
    %v3506 = vadd.f32 %v3249, %v3505
    %v3507 = vpop.f32.mrf.mxu0
    %v3508 = vadd.f32 %v3251, %v3507
    %v3509 = vand.u32 %v1094, 4294901760
    %3510 = vmatprep.mubr.f32.mxu0 %v3509
    %v3511 = vand.u32 %v1093, 4294901760
    %3512 = vmatmul.mubr.f32.gmra.mxu0 %v3511
    %v3513 = vpop.f32.mrf.mxu0
    %v3514 = vadd.f32 %v3257, %v3513
    %v3515 = vpop.f32.mrf.mxu0
    %v3516 = vadd.f32 %v3259, %v3515
    %v3517 = vand.u32 %v1097, 4294901760
    %3518 = vmatprep.mubr.f32.mxu0 %v3517
    %v3519 = vand.u32 %v1096, 4294901760
    %3520 = vmatmul.mubr.f32.gmra.mxu0 %v3519
    %v3521 = vpop.f32.mrf.mxu0
    %v3522 = vadd.f32 %v3265, %v3521
    %v3523 = vpop.f32.mrf.mxu0
    %v3524 = vadd.f32 %v3267, %v3523
    %v3525 = vand.u32 %v1100, 4294901760
    %3526 = vmatprep.mubr.f32.mxu0 %v3525
    %v3527 = vand.u32 %v1099, 4294901760
    %3528 = vmatmul.mubr.f32.gmra.mxu0 %v3527
    %v3529 = vpop.f32.mrf.mxu0
    %v3530 = vadd.f32 %v3273, %v3529
    %v3531 = vpop.f32.mrf.mxu0
    %v3532 = vadd.f32 %v3275, %v3531
    %v3533 = vand.u32 %v1103, 4294901760
    %3534 = vmatprep.mubr.f32.mxu0 %v3533
    %v3535 = vand.u32 %v1102, 4294901760
    %3536 = vmatmul.mubr.f32.gmra.mxu0 %v3535
    %v3537 = vpop.f32.mrf.mxu0
    %v3538 = vadd.f32 %v3281, %v3537
    %v3539 = vpop.f32.mrf.mxu0
    %v3540 = vadd.f32 %v3283, %v3539
    %v3541 = vand.u32 %v1106, 4294901760
    %3542 = vmatprep.mubr.f32.mxu0 %v3541
    %v3543 = vand.u32 %v1105, 4294901760
    %3544 = vmatmul.mubr.f32.gmra.mxu0 %v3543
    %v3545 = vpop.f32.mrf.mxu0
    %v3546 = vadd.f32 %v3289, %v3545
    %v3547 = vpop.f32.mrf.mxu0
    %v3548 = vadd.f32 %v3291, %v3547
    %v3549 = vand.u32 %v1109, 4294901760
    %3550 = vmatprep.mubr.f32.mxu0 %v3549
    %v3551 = vand.u32 %v1108, 4294901760
    %3552 = vmatmul.mubr.f32.gmra.mxu0 %v3551
    %v3553 = vpop.f32.mrf.mxu0
    %v3554 = vadd.f32 %v3297, %v3553
    %v3555 = vpop.f32.mrf.mxu0
    %v3556 = vadd.f32 %v3299, %v3555
    %3557 = vdwg.mxu0
    %3558 = vmatprep.subr.mxu0 0.0
    %3559 = vmatpush1.msra.mxu0 0.0
    %3560 = vmatprep.subr.mxu0 0.0
    %3561 = vmatpush1.msra.mxu0 0.0
    %v3562 = vand.u32 %v1292, 4294901760
    %3563 = vmatprep.subr.mxu0 %v3562
    %v3564 = vand.u32 %v1291, 4294901760
    %3565 = vmatpush1.msra.mxu0 %v3564
    %v3566 = vand.u32 %v1288, 4294901760
    %3567 = vmatprep.subr.mxu0 %v3566
    %v3568 = vand.u32 %v1287, 4294901760
    %3569 = vmatpush1.msra.mxu0 %v3568
    %v3570 = vand.u32 %v1284, 4294901760
    %3571 = vmatprep.subr.mxu0 %v3570
    %v3572 = vand.u32 %v1283, 4294901760
    %3573 = vmatpush1.msra.mxu0 %v3572
    %v3574 = vand.u32 %v1280, 4294901760
    %3575 = vmatprep.subr.mxu0 %v3574
    %v3576 = vand.u32 %v1279, 4294901760
    %3577 = vmatpush1.msra.mxu0 %v3576
    %v3578 = vand.u32 %v1276, 4294901760
    %3579 = vmatprep.subr.mxu0 %v3578
    %v3580 = vand.u32 %v1275, 4294901760
    %3581 = vmatpush1.msra.mxu0 %v3580
    %v3582 = vand.u32 %v1272, 4294901760
    %3583 = vmatprep.subr.mxu0 %v3582
    %v3584 = vand.u32 %v1271, 4294901760
    %3585 = vmatpush1.msra.mxu0 %v3584
    %v3586 = vand.u32 %v1268, 4294901760
    %3587 = vmatprep.subr.mxu0 %v3586
    %v3588 = vand.u32 %v1267, 4294901760
    %3589 = vmatpush1.msra.mxu0 %v3588
    %v3590 = vand.u32 %v1264, 4294901760
    %3591 = vmatprep.subr.mxu0 %v3590
    %v3592 = vand.u32 %v1263, 4294901760
    %3593 = vmatpush1.msra.mxu0 %v3592
    %v3594 = vand.u32 %v1260, 4294901760
    %3595 = vmatprep.subr.mxu0 %v3594
    %v3596 = vand.u32 %v1259, 4294901760
    %3597 = vmatpush1.msra.mxu0 %v3596
    %v3598 = vand.u32 %v1256, 4294901760
    %3599 = vmatprep.subr.mxu0 %v3598
    %v3600 = vand.u32 %v1255, 4294901760
    %3601 = vmatpush1.msra.mxu0 %v3600
    %v3602 = vand.u32 %v1252, 4294901760
    %3603 = vmatprep.subr.mxu0 %v3602
    %v3604 = vand.u32 %v1251, 4294901760
    %3605 = vmatpush1.msra.mxu0 %v3604
    %v3606 = vand.u32 %v1248, 4294901760
    %3607 = vmatprep.subr.mxu0 %v3606
    %v3608 = vand.u32 %v1247, 4294901760
    %3609 = vmatpush1.msra.mxu0 %v3608
    %v3610 = vand.u32 %v1244, 4294901760
    %3611 = vmatprep.subr.mxu0 %v3610
    %v3612 = vand.u32 %v1243, 4294901760
    %3613 = vmatpush1.msra.mxu0 %v3612
    %v3614 = vand.u32 %v1240, 4294901760
    %3615 = vmatprep.subr.mxu0 %v3614
    %v3616 = vand.u32 %v1239, 4294901760
    %3617 = vmatpush1.msra.mxu0 %v3616
    %3618 = vmatprep.subr.mxu0 0.0
    %3619 = vmatpush2.msra.mxu0 0.0
    %3620 = vmatprep.subr.mxu0 0.0
    %3621 = vmatpush2.msra.mxu0 0.0
    %3622 = vmatprep.subr.mxu0 0.0
    %3623 = vmatpush2.msra.mxu0 0.0
    %3624 = vmatprep.subr.mxu0 0.0
    %3625 = vmatpush2.msra.mxu0 0.0
    %3626 = vmatprep.subr.mxu0 0.0
    %3627 = vmatpush2.msra.mxu0 0.0
    %3628 = vmatprep.subr.mxu0 0.0
    %3629 = vmatpush2.msra.mxu0 0.0
    %3630 = vmatprep.subr.mxu0 0.0
    %3631 = vmatpush2.msra.mxu0 0.0
    %3632 = vmatprep.subr.mxu0 0.0
    %3633 = vmatpush2.msra.mxu0 0.0
    %3634 = vmatprep.subr.mxu0 0.0
    %3635 = vmatpush2.msra.mxu0 0.0
    %3636 = vmatprep.subr.mxu0 0.0
    %3637 = vmatpush2.msra.mxu0 0.0
    %3638 = vmatprep.subr.mxu0 0.0
    %3639 = vmatpush2.msra.mxu0 0.0
    %3640 = vmatprep.subr.mxu0 0.0
    %3641 = vmatpush2.msra.mxu0 0.0
    %3642 = vmatprep.subr.mxu0 0.0
    %3643 = vmatpush2.msra.mxu0 0.0
    %3644 = vmatprep.subr.mxu0 0.0
    %3645 = vmatpush2.msra.mxu0 0.0
    %3646 = vmatprep.subr.mxu0 0.0
    %3647 = vmatpush2.msra.mxu0 0.0
    %3648 = vmatprep.subr.mxu0 0.0
    %3649 = vmatpush2.msra.mxu0 0.0
    %3650 = vmatprep.mubr.f32.mxu0 0.0
    %v3651 = vand.u32 %v1297, 4294901760
    %v3652 = vsub.f32 %v1297, %v3651
    %v3653 = vand.u32 %v3652, 4294901760
    %v3654 = vsub.f32 %v3652, %v3653
    %v3655 = vand.u32 %v3654, 4294901760
    %3656 = vmatmul.mubr.f32.gmra.mxu0 %v3655
    %v3657 = vpop.f32.mrf.mxu0
    %v3658 = vadd.f32 %v3434, %v3657
    %v3659 = vpop.f32.mrf.mxu0
    %v3660 = vadd.f32 %v3436, %v3659
    %3661 = vmatprep.mubr.f32.mxu0 0.0
    %v3662 = vand.u32 %v1300, 4294901760
    %v3663 = vsub.f32 %v1300, %v3662
    %v3664 = vand.u32 %v3663, 4294901760
    %v3665 = vsub.f32 %v3663, %v3664
    %v3666 = vand.u32 %v3665, 4294901760
    %3667 = vmatmul.mubr.f32.gmra.mxu0 %v3666
    %v3668 = vpop.f32.mrf.mxu0
    %v3669 = vadd.f32 %v3442, %v3668
    %v3670 = vpop.f32.mrf.mxu0
    %v3671 = vadd.f32 %v3444, %v3670
    %3672 = vmatprep.mubr.f32.mxu0 0.0
    %v3673 = vand.u32 %v1303, 4294901760
    %v3674 = vsub.f32 %v1303, %v3673
    %v3675 = vand.u32 %v3674, 4294901760
    %v3676 = vsub.f32 %v3674, %v3675
    %v3677 = vand.u32 %v3676, 4294901760
    %3678 = vmatmul.mubr.f32.gmra.mxu0 %v3677
    %v3679 = vpop.f32.mrf.mxu0
    %v3680 = vadd.f32 %v3450, %v3679
    %v3681 = vpop.f32.mrf.mxu0
    %v3682 = vadd.f32 %v3452, %v3681
    %3683 = vmatprep.mubr.f32.mxu0 0.0
    %v3684 = vand.u32 %v1306, 4294901760
    %v3685 = vsub.f32 %v1306, %v3684
    %v3686 = vand.u32 %v3685, 4294901760
    %v3687 = vsub.f32 %v3685, %v3686
    %v3688 = vand.u32 %v3687, 4294901760
    %3689 = vmatmul.mubr.f32.gmra.mxu0 %v3688
    %v3690 = vpop.f32.mrf.mxu0
    %v3691 = vadd.f32 %v3458, %v3690
    %v3692 = vpop.f32.mrf.mxu0
    %v3693 = vadd.f32 %v3460, %v3692
    %3694 = vmatprep.mubr.f32.mxu0 0.0
    %v3695 = vand.u32 %v1309, 4294901760
    %v3696 = vsub.f32 %v1309, %v3695
    %v3697 = vand.u32 %v3696, 4294901760
    %v3698 = vsub.f32 %v3696, %v3697
    %v3699 = vand.u32 %v3698, 4294901760
    %3700 = vmatmul.mubr.f32.gmra.mxu0 %v3699
    %v3701 = vpop.f32.mrf.mxu0
    %v3702 = vadd.f32 %v3466, %v3701
    %v3703 = vpop.f32.mrf.mxu0
    %v3704 = vadd.f32 %v3468, %v3703
    %3705 = vmatprep.mubr.f32.mxu0 0.0
    %v3706 = vand.u32 %v1312, 4294901760
    %v3707 = vsub.f32 %v1312, %v3706
    %v3708 = vand.u32 %v3707, 4294901760
    %v3709 = vsub.f32 %v3707, %v3708
    %v3710 = vand.u32 %v3709, 4294901760
    %3711 = vmatmul.mubr.f32.gmra.mxu0 %v3710
    %v3712 = vpop.f32.mrf.mxu0
    %v3713 = vadd.f32 %v3474, %v3712
    %v3714 = vpop.f32.mrf.mxu0
    %v3715 = vadd.f32 %v3476, %v3714
    %3716 = vmatprep.mubr.f32.mxu0 0.0
    %v3717 = vand.u32 %v1315, 4294901760
    %v3718 = vsub.f32 %v1315, %v3717
    %v3719 = vand.u32 %v3718, 4294901760
    %v3720 = vsub.f32 %v3718, %v3719
    %v3721 = vand.u32 %v3720, 4294901760
    %3722 = vmatmul.mubr.f32.gmra.mxu0 %v3721
    %v3723 = vpop.f32.mrf.mxu0
    %v3724 = vadd.f32 %v3482, %v3723
    %v3725 = vpop.f32.mrf.mxu0
    %v3726 = vadd.f32 %v3484, %v3725
    %3727 = vmatprep.mubr.f32.mxu0 0.0
    %v3728 = vand.u32 %v1318, 4294901760
    %v3729 = vsub.f32 %v1318, %v3728
    %v3730 = vand.u32 %v3729, 4294901760
    %v3731 = vsub.f32 %v3729, %v3730
    %v3732 = vand.u32 %v3731, 4294901760
    %3733 = vmatmul.mubr.f32.gmra.mxu0 %v3732
    %v3734 = vpop.f32.mrf.mxu0
    %v3735 = vadd.f32 %v3490, %v3734
    %v3736 = vpop.f32.mrf.mxu0
    %v3737 = vadd.f32 %v3492, %v3736
    %3738 = vmatprep.mubr.f32.mxu0 0.0
    %v3739 = vand.u32 %v1321, 4294901760
    %v3740 = vsub.f32 %v1321, %v3739
    %v3741 = vand.u32 %v3740, 4294901760
    %v3742 = vsub.f32 %v3740, %v3741
    %v3743 = vand.u32 %v3742, 4294901760
    %3744 = vmatmul.mubr.f32.gmra.mxu0 %v3743
    %v3745 = vpop.f32.mrf.mxu0
    %v3746 = vadd.f32 %v3498, %v3745
    %v3747 = vpop.f32.mrf.mxu0
    %v3748 = vadd.f32 %v3500, %v3747
    %3749 = vmatprep.mubr.f32.mxu0 0.0
    %v3750 = vand.u32 %v1324, 4294901760
    %v3751 = vsub.f32 %v1324, %v3750
    %v3752 = vand.u32 %v3751, 4294901760
    %v3753 = vsub.f32 %v3751, %v3752
    %v3754 = vand.u32 %v3753, 4294901760
    %3755 = vmatmul.mubr.f32.gmra.mxu0 %v3754
    %v3756 = vpop.f32.mrf.mxu0
    %v3757 = vadd.f32 %v3506, %v3756
    %v3758 = vpop.f32.mrf.mxu0
    %v3759 = vadd.f32 %v3508, %v3758
    %3760 = vmatprep.mubr.f32.mxu0 0.0
    %v3761 = vand.u32 %v1327, 4294901760
    %v3762 = vsub.f32 %v1327, %v3761
    %v3763 = vand.u32 %v3762, 4294901760
    %v3764 = vsub.f32 %v3762, %v3763
    %v3765 = vand.u32 %v3764, 4294901760
    %3766 = vmatmul.mubr.f32.gmra.mxu0 %v3765
    %v3767 = vpop.f32.mrf.mxu0
    %v3768 = vadd.f32 %v3514, %v3767
    %v3769 = vpop.f32.mrf.mxu0
    %v3770 = vadd.f32 %v3516, %v3769
    %3771 = vmatprep.mubr.f32.mxu0 0.0
    %v3772 = vand.u32 %v1330, 4294901760
    %v3773 = vsub.f32 %v1330, %v3772
    %v3774 = vand.u32 %v3773, 4294901760
    %v3775 = vsub.f32 %v3773, %v3774
    %v3776 = vand.u32 %v3775, 4294901760
    %3777 = vmatmul.mubr.f32.gmra.mxu0 %v3776
    %v3778 = vpop.f32.mrf.mxu0
    %v3779 = vadd.f32 %v3522, %v3778
    %v3780 = vpop.f32.mrf.mxu0
    %v3781 = vadd.f32 %v3524, %v3780
    %3782 = vmatprep.mubr.f32.mxu0 0.0
    %v3783 = vand.u32 %v1333, 4294901760
    %v3784 = vsub.f32 %v1333, %v3783
    %v3785 = vand.u32 %v3784, 4294901760
    %v3786 = vsub.f32 %v3784, %v3785
    %v3787 = vand.u32 %v3786, 4294901760
    %3788 = vmatmul.mubr.f32.gmra.mxu0 %v3787
    %v3789 = vpop.f32.mrf.mxu0
    %v3790 = vadd.f32 %v3530, %v3789
    %v3791 = vpop.f32.mrf.mxu0
    %v3792 = vadd.f32 %v3532, %v3791
    %3793 = vmatprep.mubr.f32.mxu0 0.0
    %v3794 = vand.u32 %v1336, 4294901760
    %v3795 = vsub.f32 %v1336, %v3794
    %v3796 = vand.u32 %v3795, 4294901760
    %v3797 = vsub.f32 %v3795, %v3796
    %v3798 = vand.u32 %v3797, 4294901760
    %3799 = vmatmul.mubr.f32.gmra.mxu0 %v3798
    %v3800 = vpop.f32.mrf.mxu0
    %v3801 = vadd.f32 %v3538, %v3800
    %v3802 = vpop.f32.mrf.mxu0
    %v3803 = vadd.f32 %v3540, %v3802
    %3804 = vmatprep.mubr.f32.mxu0 0.0
    %v3805 = vand.u32 %v1339, 4294901760
    %v3806 = vsub.f32 %v1339, %v3805
    %v3807 = vand.u32 %v3806, 4294901760
    %v3808 = vsub.f32 %v3806, %v3807
    %v3809 = vand.u32 %v3808, 4294901760
    %3810 = vmatmul.mubr.f32.gmra.mxu0 %v3809
    %v3811 = vpop.f32.mrf.mxu0
    %v3812 = vadd.f32 %v3546, %v3811
    %v3813 = vpop.f32.mrf.mxu0
    %v3814 = vadd.f32 %v3548, %v3813
    %3815 = vmatprep.mubr.f32.mxu0 0.0
    %v3816 = vand.u32 %v1342, 4294901760
    %v3817 = vsub.f32 %v1342, %v3816
    %v3818 = vand.u32 %v3817, 4294901760
    %v3819 = vsub.f32 %v3817, %v3818
    %v3820 = vand.u32 %v3819, 4294901760
    %3821 = vmatmul.mubr.f32.gmra.mxu0 %v3820
    %v3822 = vpop.f32.mrf.mxu0
    %v3823 = vadd.f32 %v3554, %v3822
    %v3824 = vpop.f32.mrf.mxu0
    %v3825 = vadd.f32 %v3556, %v3824
    %3826 = vdwg.mxu0
    %3827 = vmatprep.subr.mxu0 0.0
    %3828 = vmatpush1.msra.mxu0 0.0
    %3829 = vmatprep.subr.mxu0 0.0
    %3830 = vmatpush1.msra.mxu0 0.0
    %v3831 = vand.u32 %v1292, 4294901760
    %v3832 = vsub.f32 %v1292, %v3831
    %v3833 = vand.u32 %v3832, 4294901760
    %v3834 = vsub.f32 %v3832, %v3833
    %v3835 = vand.u32 %v3834, 4294901760
    %3836 = vmatprep.subr.mxu0 %v3835
    %v3837 = vand.u32 %v1291, 4294901760
    %v3838 = vsub.f32 %v1291, %v3837
    %v3839 = vand.u32 %v3838, 4294901760
    %v3840 = vsub.f32 %v3838, %v3839
    %v3841 = vand.u32 %v3840, 4294901760
    %3842 = vmatpush1.msra.mxu0 %v3841
    %v3843 = vand.u32 %v1288, 4294901760
    %v3844 = vsub.f32 %v1288, %v3843
    %v3845 = vand.u32 %v3844, 4294901760
    %v3846 = vsub.f32 %v3844, %v3845
    %v3847 = vand.u32 %v3846, 4294901760
    %3848 = vmatprep.subr.mxu0 %v3847
    %v3849 = vand.u32 %v1287, 4294901760
    %v3850 = vsub.f32 %v1287, %v3849
    %v3851 = vand.u32 %v3850, 4294901760
    %v3852 = vsub.f32 %v3850, %v3851
    %v3853 = vand.u32 %v3852, 4294901760
    %3854 = vmatpush1.msra.mxu0 %v3853
    %v3855 = vand.u32 %v1284, 4294901760
    %v3856 = vsub.f32 %v1284, %v3855
    %v3857 = vand.u32 %v3856, 4294901760
    %v3858 = vsub.f32 %v3856, %v3857
    %v3859 = vand.u32 %v3858, 4294901760
    %3860 = vmatprep.subr.mxu0 %v3859
    %v3861 = vand.u32 %v1283, 4294901760
    %v3862 = vsub.f32 %v1283, %v3861
    %v3863 = vand.u32 %v3862, 4294901760
    %v3864 = vsub.f32 %v3862, %v3863
    %v3865 = vand.u32 %v3864, 4294901760
    %3866 = vmatpush1.msra.mxu0 %v3865
    %v3867 = vand.u32 %v1280, 4294901760
    %v3868 = vsub.f32 %v1280, %v3867
    %v3869 = vand.u32 %v3868, 4294901760
    %v3870 = vsub.f32 %v3868, %v3869
    %v3871 = vand.u32 %v3870, 4294901760
    %3872 = vmatprep.subr.mxu0 %v3871
    %v3873 = vand.u32 %v1279, 4294901760
    %v3874 = vsub.f32 %v1279, %v3873
    %v3875 = vand.u32 %v3874, 4294901760
    %v3876 = vsub.f32 %v3874, %v3875
    %v3877 = vand.u32 %v3876, 4294901760
    %3878 = vmatpush1.msra.mxu0 %v3877
    %v3879 = vand.u32 %v1276, 4294901760
    %v3880 = vsub.f32 %v1276, %v3879
    %v3881 = vand.u32 %v3880, 4294901760
    %v3882 = vsub.f32 %v3880, %v3881
    %v3883 = vand.u32 %v3882, 4294901760
    %3884 = vmatprep.subr.mxu0 %v3883
    %v3885 = vand.u32 %v1275, 4294901760
    %v3886 = vsub.f32 %v1275, %v3885
    %v3887 = vand.u32 %v3886, 4294901760
    %v3888 = vsub.f32 %v3886, %v3887
    %v3889 = vand.u32 %v3888, 4294901760
    %3890 = vmatpush1.msra.mxu0 %v3889
    %v3891 = vand.u32 %v1272, 4294901760
    %v3892 = vsub.f32 %v1272, %v3891
    %v3893 = vand.u32 %v3892, 4294901760
    %v3894 = vsub.f32 %v3892, %v3893
    %v3895 = vand.u32 %v3894, 4294901760
    %3896 = vmatprep.subr.mxu0 %v3895
    %v3897 = vand.u32 %v1271, 4294901760
    %v3898 = vsub.f32 %v1271, %v3897
    %v3899 = vand.u32 %v3898, 4294901760
    %v3900 = vsub.f32 %v3898, %v3899
    %v3901 = vand.u32 %v3900, 4294901760
    %3902 = vmatpush1.msra.mxu0 %v3901
    %v3903 = vand.u32 %v1268, 4294901760
    %v3904 = vsub.f32 %v1268, %v3903
    %v3905 = vand.u32 %v3904, 4294901760
    %v3906 = vsub.f32 %v3904, %v3905
    %v3907 = vand.u32 %v3906, 4294901760
    %3908 = vmatprep.subr.mxu0 %v3907
    %v3909 = vand.u32 %v1267, 4294901760
    %v3910 = vsub.f32 %v1267, %v3909
    %v3911 = vand.u32 %v3910, 4294901760
    %v3912 = vsub.f32 %v3910, %v3911
    %v3913 = vand.u32 %v3912, 4294901760
    %3914 = vmatpush1.msra.mxu0 %v3913
    %v3915 = vand.u32 %v1264, 4294901760
    %v3916 = vsub.f32 %v1264, %v3915
    %v3917 = vand.u32 %v3916, 4294901760
    %v3918 = vsub.f32 %v3916, %v3917
    %v3919 = vand.u32 %v3918, 4294901760
    %3920 = vmatprep.subr.mxu0 %v3919
    %v3921 = vand.u32 %v1263, 4294901760
    %v3922 = vsub.f32 %v1263, %v3921
    %v3923 = vand.u32 %v3922, 4294901760
    %v3924 = vsub.f32 %v3922, %v3923
    %v3925 = vand.u32 %v3924, 4294901760
    %3926 = vmatpush1.msra.mxu0 %v3925
    %v3927 = vand.u32 %v1260, 4294901760
    %v3928 = vsub.f32 %v1260, %v3927
    %v3929 = vand.u32 %v3928, 4294901760
    %v3930 = vsub.f32 %v3928, %v3929
    %v3931 = vand.u32 %v3930, 4294901760
    %3932 = vmatprep.subr.mxu0 %v3931
    %v3933 = vand.u32 %v1259, 4294901760
    %v3934 = vsub.f32 %v1259, %v3933
    %v3935 = vand.u32 %v3934, 4294901760
    %v3936 = vsub.f32 %v3934, %v3935
    %v3937 = vand.u32 %v3936, 4294901760
    %3938 = vmatpush1.msra.mxu0 %v3937
    %v3939 = vand.u32 %v1256, 4294901760
    %v3940 = vsub.f32 %v1256, %v3939
    %v3941 = vand.u32 %v3940, 4294901760
    %v3942 = vsub.f32 %v3940, %v3941
    %v3943 = vand.u32 %v3942, 4294901760
    %3944 = vmatprep.subr.mxu0 %v3943
    %v3945 = vand.u32 %v1255, 4294901760
    %v3946 = vsub.f32 %v1255, %v3945
    %v3947 = vand.u32 %v3946, 4294901760
    %v3948 = vsub.f32 %v3946, %v3947
    %v3949 = vand.u32 %v3948, 4294901760
    %3950 = vmatpush1.msra.mxu0 %v3949
    %v3951 = vand.u32 %v1252, 4294901760
    %v3952 = vsub.f32 %v1252, %v3951
    %v3953 = vand.u32 %v3952, 4294901760
    %v3954 = vsub.f32 %v3952, %v3953
    %v3955 = vand.u32 %v3954, 4294901760
    %3956 = vmatprep.subr.mxu0 %v3955
    %v3957 = vand.u32 %v1251, 4294901760
    %v3958 = vsub.f32 %v1251, %v3957
    %v3959 = vand.u32 %v3958, 4294901760
    %v3960 = vsub.f32 %v3958, %v3959
    %v3961 = vand.u32 %v3960, 4294901760
    %3962 = vmatpush1.msra.mxu0 %v3961
    %v3963 = vand.u32 %v1248, 4294901760
    %v3964 = vsub.f32 %v1248, %v3963
    %v3965 = vand.u32 %v3964, 4294901760
    %v3966 = vsub.f32 %v3964, %v3965
    %v3967 = vand.u32 %v3966, 4294901760
    %3968 = vmatprep.subr.mxu0 %v3967
    %v3969 = vand.u32 %v1247, 4294901760
    %v3970 = vsub.f32 %v1247, %v3969
    %v3971 = vand.u32 %v3970, 4294901760
    %v3972 = vsub.f32 %v3970, %v3971
    %v3973 = vand.u32 %v3972, 4294901760
    %3974 = vmatpush1.msra.mxu0 %v3973
    %v3975 = vand.u32 %v1244, 4294901760
    %v3976 = vsub.f32 %v1244, %v3975
    %v3977 = vand.u32 %v3976, 4294901760
    %v3978 = vsub.f32 %v3976, %v3977
    %v3979 = vand.u32 %v3978, 4294901760
    %3980 = vmatprep.subr.mxu0 %v3979
    %v3981 = vand.u32 %v1243, 4294901760
    %v3982 = vsub.f32 %v1243, %v3981
    %v3983 = vand.u32 %v3982, 4294901760
    %v3984 = vsub.f32 %v3982, %v3983
    %v3985 = vand.u32 %v3984, 4294901760
    %3986 = vmatpush1.msra.mxu0 %v3985
    %v3987 = vand.u32 %v1240, 4294901760
    %v3988 = vsub.f32 %v1240, %v3987
    %v3989 = vand.u32 %v3988, 4294901760
    %v3990 = vsub.f32 %v3988, %v3989
    %v3991 = vand.u32 %v3990, 4294901760
    %3992 = vmatprep.subr.mxu0 %v3991
    %v3993 = vand.u32 %v1239, 4294901760
    %v3994 = vsub.f32 %v1239, %v3993
    %v3995 = vand.u32 %v3994, 4294901760
    %v3996 = vsub.f32 %v3994, %v3995
    %v3997 = vand.u32 %v3996, 4294901760
    %3998 = vmatpush1.msra.mxu0 %v3997
    %3999 = vmatprep.subr.mxu0 0.0
    %4000 = vmatpush2.msra.mxu0 0.0
    %4001 = vmatprep.subr.mxu0 0.0
    %4002 = vmatpush2.msra.mxu0 0.0
    %4003 = vmatprep.subr.mxu0 0.0
    %4004 = vmatpush2.msra.mxu0 0.0
    %4005 = vmatprep.subr.mxu0 0.0
    %4006 = vmatpush2.msra.mxu0 0.0
    %4007 = vmatprep.subr.mxu0 0.0
    %4008 = vmatpush2.msra.mxu0 0.0
    %4009 = vmatprep.subr.mxu0 0.0
    %4010 = vmatpush2.msra.mxu0 0.0
    %4011 = vmatprep.subr.mxu0 0.0
    %4012 = vmatpush2.msra.mxu0 0.0
    %4013 = vmatprep.subr.mxu0 0.0
    %4014 = vmatpush2.msra.mxu0 0.0
    %4015 = vmatprep.subr.mxu0 0.0
    %4016 = vmatpush2.msra.mxu0 0.0
    %4017 = vmatprep.subr.mxu0 0.0
    %4018 = vmatpush2.msra.mxu0 0.0
    %4019 = vmatprep.subr.mxu0 0.0
    %4020 = vmatpush2.msra.mxu0 0.0
    %4021 = vmatprep.subr.mxu0 0.0
    %4022 = vmatpush2.msra.mxu0 0.0
    %4023 = vmatprep.subr.mxu0 0.0
    %4024 = vmatpush2.msra.mxu0 0.0
    %4025 = vmatprep.subr.mxu0 0.0
    %4026 = vmatpush2.msra.mxu0 0.0
    %4027 = vmatprep.subr.mxu0 0.0
    %4028 = vmatpush2.msra.mxu0 0.0
    %4029 = vmatprep.subr.mxu0 0.0
    %4030 = vmatpush2.msra.mxu0 0.0
    %4031 = vmatprep.mubr.f32.mxu0 0.0
    %v4032 = vand.u32 %v1297, 4294901760
    %4033 = vmatmul.mubr.f32.gmra.mxu0 %v4032
    %v4034 = vpop.f32.mrf.mxu0
    %v4035 = vadd.f32 %v3658, %v4034
    %v4036 = vpop.f32.mrf.mxu0
    %v4037 = vadd.f32 %v3660, %v4036
    %4038 = vmatprep.mubr.f32.mxu0 0.0
    %v4039 = vand.u32 %v1300, 4294901760
    %4040 = vmatmul.mubr.f32.gmra.mxu0 %v4039
    %v4041 = vpop.f32.mrf.mxu0
    %v4042 = vadd.f32 %v3669, %v4041
    %v4043 = vpop.f32.mrf.mxu0
    %v4044 = vadd.f32 %v3671, %v4043
    %4045 = vmatprep.mubr.f32.mxu0 0.0
    %v4046 = vand.u32 %v1303, 4294901760
    %4047 = vmatmul.mubr.f32.gmra.mxu0 %v4046
    %v4048 = vpop.f32.mrf.mxu0
    %v4049 = vadd.f32 %v3680, %v4048
    %v4050 = vpop.f32.mrf.mxu0
    %v4051 = vadd.f32 %v3682, %v4050
    %4052 = vmatprep.mubr.f32.mxu0 0.0
    %v4053 = vand.u32 %v1306, 4294901760
    %4054 = vmatmul.mubr.f32.gmra.mxu0 %v4053
    %v4055 = vpop.f32.mrf.mxu0
    %v4056 = vadd.f32 %v3691, %v4055
    %v4057 = vpop.f32.mrf.mxu0
    %v4058 = vadd.f32 %v3693, %v4057
    %4059 = vmatprep.mubr.f32.mxu0 0.0
    %v4060 = vand.u32 %v1309, 4294901760
    %4061 = vmatmul.mubr.f32.gmra.mxu0 %v4060
    %v4062 = vpop.f32.mrf.mxu0
    %v4063 = vadd.f32 %v3702, %v4062
    %v4064 = vpop.f32.mrf.mxu0
    %v4065 = vadd.f32 %v3704, %v4064
    %4066 = vmatprep.mubr.f32.mxu0 0.0
    %v4067 = vand.u32 %v1312, 4294901760
    %4068 = vmatmul.mubr.f32.gmra.mxu0 %v4067
    %v4069 = vpop.f32.mrf.mxu0
    %v4070 = vadd.f32 %v3713, %v4069
    %v4071 = vpop.f32.mrf.mxu0
    %v4072 = vadd.f32 %v3715, %v4071
    %4073 = vmatprep.mubr.f32.mxu0 0.0
    %v4074 = vand.u32 %v1315, 4294901760
    %4075 = vmatmul.mubr.f32.gmra.mxu0 %v4074
    %v4076 = vpop.f32.mrf.mxu0
    %v4077 = vadd.f32 %v3724, %v4076
    %v4078 = vpop.f32.mrf.mxu0
    %v4079 = vadd.f32 %v3726, %v4078
    %4080 = vmatprep.mubr.f32.mxu0 0.0
    %v4081 = vand.u32 %v1318, 4294901760
    %4082 = vmatmul.mubr.f32.gmra.mxu0 %v4081
    %v4083 = vpop.f32.mrf.mxu0
    %v4084 = vadd.f32 %v3735, %v4083
    %v4085 = vpop.f32.mrf.mxu0
    %v4086 = vadd.f32 %v3737, %v4085
    %4087 = vmatprep.mubr.f32.mxu0 0.0
    %v4088 = vand.u32 %v1321, 4294901760
    %4089 = vmatmul.mubr.f32.gmra.mxu0 %v4088
    %v4090 = vpop.f32.mrf.mxu0
    %v4091 = vadd.f32 %v3746, %v4090
    %v4092 = vpop.f32.mrf.mxu0
    %v4093 = vadd.f32 %v3748, %v4092
    %4094 = vmatprep.mubr.f32.mxu0 0.0
    %v4095 = vand.u32 %v1324, 4294901760
    %4096 = vmatmul.mubr.f32.gmra.mxu0 %v4095
    %v4097 = vpop.f32.mrf.mxu0
    %v4098 = vadd.f32 %v3757, %v4097
    %v4099 = vpop.f32.mrf.mxu0
    %v4100 = vadd.f32 %v3759, %v4099
    %4101 = vmatprep.mubr.f32.mxu0 0.0
    %v4102 = vand.u32 %v1327, 4294901760
    %4103 = vmatmul.mubr.f32.gmra.mxu0 %v4102
    %v4104 = vpop.f32.mrf.mxu0
    %v4105 = vadd.f32 %v3768, %v4104
    %v4106 = vpop.f32.mrf.mxu0
    %v4107 = vadd.f32 %v3770, %v4106
    %4108 = vmatprep.mubr.f32.mxu0 0.0
    %v4109 = vand.u32 %v1330, 4294901760
    %4110 = vmatmul.mubr.f32.gmra.mxu0 %v4109
    %v4111 = vpop.f32.mrf.mxu0
    %v4112 = vadd.f32 %v3779, %v4111
    %v4113 = vpop.f32.mrf.mxu0
    %v4114 = vadd.f32 %v3781, %v4113
    %4115 = vmatprep.mubr.f32.mxu0 0.0
    %v4116 = vand.u32 %v1333, 4294901760
    %4117 = vmatmul.mubr.f32.gmra.mxu0 %v4116
    %v4118 = vpop.f32.mrf.mxu0
    %v4119 = vadd.f32 %v3790, %v4118
    %v4120 = vpop.f32.mrf.mxu0
    %v4121 = vadd.f32 %v3792, %v4120
    %4122 = vmatprep.mubr.f32.mxu0 0.0
    %v4123 = vand.u32 %v1336, 4294901760
    %4124 = vmatmul.mubr.f32.gmra.mxu0 %v4123
    %v4125 = vpop.f32.mrf.mxu0
    %v4126 = vadd.f32 %v3801, %v4125
    %v4127 = vpop.f32.mrf.mxu0
    %v4128 = vadd.f32 %v3803, %v4127
    %4129 = vmatprep.mubr.f32.mxu0 0.0
    %v4130 = vand.u32 %v1339, 4294901760
    %4131 = vmatmul.mubr.f32.gmra.mxu0 %v4130
    %v4132 = vpop.f32.mrf.mxu0
    %v4133 = vadd.f32 %v3812, %v4132
    %v4134 = vpop.f32.mrf.mxu0
    %v4135 = vadd.f32 %v3814, %v4134
    %4136 = vmatprep.mubr.f32.mxu0 0.0
    %v4137 = vand.u32 %v1342, 4294901760
    %4138 = vmatmul.mubr.f32.gmra.mxu0 %v4137
    %v4139 = vpop.f32.mrf.mxu0
    %v4140 = vadd.f32 %v3823, %v4139
    %v4141 = vpop.f32.mrf.mxu0
    %v4142 = vadd.f32 %v3825, %v4141
    %4143 = vdwg.mxu0
    %4144 = vmatprep.subr.mxu0 0.0
    %4145 = vmatpush1.msra.mxu0 0.0
    %4146 = vmatprep.subr.mxu0 0.0
    %4147 = vmatpush1.msra.mxu0 0.0
    %v4148 = vand.u32 %v1292, 4294901760
    %v4149 = vsub.f32 %v1292, %v4148
    %4150 = vmatprep.subr.mxu0 %v4149
    %v4151 = vand.u32 %v1291, 4294901760
    %v4152 = vsub.f32 %v1291, %v4151
    %4153 = vmatpush1.msra.mxu0 %v4152
    %v4154 = vand.u32 %v1288, 4294901760
    %v4155 = vsub.f32 %v1288, %v4154
    %4156 = vmatprep.subr.mxu0 %v4155
    %v4157 = vand.u32 %v1287, 4294901760
    %v4158 = vsub.f32 %v1287, %v4157
    %4159 = vmatpush1.msra.mxu0 %v4158
    %v4160 = vand.u32 %v1284, 4294901760
    %v4161 = vsub.f32 %v1284, %v4160
    %4162 = vmatprep.subr.mxu0 %v4161
    %v4163 = vand.u32 %v1283, 4294901760
    %v4164 = vsub.f32 %v1283, %v4163
    %4165 = vmatpush1.msra.mxu0 %v4164
    %v4166 = vand.u32 %v1280, 4294901760
    %v4167 = vsub.f32 %v1280, %v4166
    %4168 = vmatprep.subr.mxu0 %v4167
    %v4169 = vand.u32 %v1279, 4294901760
    %v4170 = vsub.f32 %v1279, %v4169
    %4171 = vmatpush1.msra.mxu0 %v4170
    %v4172 = vand.u32 %v1276, 4294901760
    %v4173 = vsub.f32 %v1276, %v4172
    %4174 = vmatprep.subr.mxu0 %v4173
    %v4175 = vand.u32 %v1275, 4294901760
    %v4176 = vsub.f32 %v1275, %v4175
    %4177 = vmatpush1.msra.mxu0 %v4176
    %v4178 = vand.u32 %v1272, 4294901760
    %v4179 = vsub.f32 %v1272, %v4178
    %4180 = vmatprep.subr.mxu0 %v4179
    %v4181 = vand.u32 %v1271, 4294901760
    %v4182 = vsub.f32 %v1271, %v4181
    %4183 = vmatpush1.msra.mxu0 %v4182
    %v4184 = vand.u32 %v1268, 4294901760
    %v4185 = vsub.f32 %v1268, %v4184
    %4186 = vmatprep.subr.mxu0 %v4185
    %v4187 = vand.u32 %v1267, 4294901760
    %v4188 = vsub.f32 %v1267, %v4187
    %4189 = vmatpush1.msra.mxu0 %v4188
    %v4190 = vand.u32 %v1264, 4294901760
    %v4191 = vsub.f32 %v1264, %v4190
    %4192 = vmatprep.subr.mxu0 %v4191
    %v4193 = vand.u32 %v1263, 4294901760
    %v4194 = vsub.f32 %v1263, %v4193
    %4195 = vmatpush1.msra.mxu0 %v4194
    %v4196 = vand.u32 %v1260, 4294901760
    %v4197 = vsub.f32 %v1260, %v4196
    %4198 = vmatprep.subr.mxu0 %v4197
    %v4199 = vand.u32 %v1259, 4294901760
    %v4200 = vsub.f32 %v1259, %v4199
    %4201 = vmatpush1.msra.mxu0 %v4200
    %v4202 = vand.u32 %v1256, 4294901760
    %v4203 = vsub.f32 %v1256, %v4202
    %4204 = vmatprep.subr.mxu0 %v4203
    %v4205 = vand.u32 %v1255, 4294901760
    %v4206 = vsub.f32 %v1255, %v4205
    %4207 = vmatpush1.msra.mxu0 %v4206
    %v4208 = vand.u32 %v1252, 4294901760
    %v4209 = vsub.f32 %v1252, %v4208
    %4210 = vmatprep.subr.mxu0 %v4209
    %v4211 = vand.u32 %v1251, 4294901760
    %v4212 = vsub.f32 %v1251, %v4211
    %4213 = vmatpush1.msra.mxu0 %v4212
    %v4214 = vand.u32 %v1248, 4294901760
    %v4215 = vsub.f32 %v1248, %v4214
    %4216 = vmatprep.subr.mxu0 %v4215
    %v4217 = vand.u32 %v1247, 4294901760
    %v4218 = vsub.f32 %v1247, %v4217
    %4219 = vmatpush1.msra.mxu0 %v4218
    %v4220 = vand.u32 %v1244, 4294901760
    %v4221 = vsub.f32 %v1244, %v4220
    %4222 = vmatprep.subr.mxu0 %v4221
    %v4223 = vand.u32 %v1243, 4294901760
    %v4224 = vsub.f32 %v1243, %v4223
    %4225 = vmatpush1.msra.mxu0 %v4224
    %v4226 = vand.u32 %v1240, 4294901760
    %v4227 = vsub.f32 %v1240, %v4226
    %4228 = vmatprep.subr.mxu0 %v4227
    %v4229 = vand.u32 %v1239, 4294901760
    %v4230 = vsub.f32 %v1239, %v4229
    %4231 = vmatpush1.msra.mxu0 %v4230
    %4232 = vmatprep.subr.mxu0 0.0
    %4233 = vmatpush2.msra.mxu0 0.0
    %4234 = vmatprep.subr.mxu0 0.0
    %4235 = vmatpush2.msra.mxu0 0.0
    %4236 = vmatprep.subr.mxu0 0.0
    %4237 = vmatpush2.msra.mxu0 0.0
    %4238 = vmatprep.subr.mxu0 0.0
    %4239 = vmatpush2.msra.mxu0 0.0
    %4240 = vmatprep.subr.mxu0 0.0
    %4241 = vmatpush2.msra.mxu0 0.0
    %4242 = vmatprep.subr.mxu0 0.0
    %4243 = vmatpush2.msra.mxu0 0.0
    %4244 = vmatprep.subr.mxu0 0.0
    %4245 = vmatpush2.msra.mxu0 0.0
    %4246 = vmatprep.subr.mxu0 0.0
    %4247 = vmatpush2.msra.mxu0 0.0
    %4248 = vmatprep.subr.mxu0 0.0
    %4249 = vmatpush2.msra.mxu0 0.0
    %4250 = vmatprep.subr.mxu0 0.0
    %4251 = vmatpush2.msra.mxu0 0.0
    %4252 = vmatprep.subr.mxu0 0.0
    %4253 = vmatpush2.msra.mxu0 0.0
    %4254 = vmatprep.subr.mxu0 0.0
    %4255 = vmatpush2.msra.mxu0 0.0
    %4256 = vmatprep.subr.mxu0 0.0
    %4257 = vmatpush2.msra.mxu0 0.0
    %4258 = vmatprep.subr.mxu0 0.0
    %4259 = vmatpush2.msra.mxu0 0.0
    %4260 = vmatprep.subr.mxu0 0.0
    %4261 = vmatpush2.msra.mxu0 0.0
    %4262 = vmatprep.subr.mxu0 0.0
    %4263 = vmatpush2.msra.mxu0 0.0
    %4264 = vmatprep.mubr.f32.mxu0 0.0
    %v4265 = vand.u32 %v1297, 4294901760
    %v4266 = vsub.f32 %v1297, %v4265
    %4267 = vmatmul.mubr.f32.gmra.mxu0 %v4266
    %v4268 = vpop.f32.mrf.mxu0
    %v4269 = vadd.f32 %v4035, %v4268
    %v4270 = vpop.f32.mrf.mxu0
    %v4271 = vadd.f32 %v4037, %v4270
    %4272 = vmatprep.mubr.f32.mxu0 0.0
    %v4273 = vand.u32 %v1300, 4294901760
    %v4274 = vsub.f32 %v1300, %v4273
    %4275 = vmatmul.mubr.f32.gmra.mxu0 %v4274
    %v4276 = vpop.f32.mrf.mxu0
    %v4277 = vadd.f32 %v4042, %v4276
    %v4278 = vpop.f32.mrf.mxu0
    %v4279 = vadd.f32 %v4044, %v4278
    %4280 = vmatprep.mubr.f32.mxu0 0.0
    %v4281 = vand.u32 %v1303, 4294901760
    %v4282 = vsub.f32 %v1303, %v4281
    %4283 = vmatmul.mubr.f32.gmra.mxu0 %v4282
    %v4284 = vpop.f32.mrf.mxu0
    %v4285 = vadd.f32 %v4049, %v4284
    %v4286 = vpop.f32.mrf.mxu0
    %v4287 = vadd.f32 %v4051, %v4286
    %4288 = vmatprep.mubr.f32.mxu0 0.0
    %v4289 = vand.u32 %v1306, 4294901760
    %v4290 = vsub.f32 %v1306, %v4289
    %4291 = vmatmul.mubr.f32.gmra.mxu0 %v4290
    %v4292 = vpop.f32.mrf.mxu0
    %v4293 = vadd.f32 %v4056, %v4292
    %v4294 = vpop.f32.mrf.mxu0
    %v4295 = vadd.f32 %v4058, %v4294
    %4296 = vmatprep.mubr.f32.mxu0 0.0
    %v4297 = vand.u32 %v1309, 4294901760
    %v4298 = vsub.f32 %v1309, %v4297
    %4299 = vmatmul.mubr.f32.gmra.mxu0 %v4298
    %v4300 = vpop.f32.mrf.mxu0
    %v4301 = vadd.f32 %v4063, %v4300
    %v4302 = vpop.f32.mrf.mxu0
    %v4303 = vadd.f32 %v4065, %v4302
    %4304 = vmatprep.mubr.f32.mxu0 0.0
    %v4305 = vand.u32 %v1312, 4294901760
    %v4306 = vsub.f32 %v1312, %v4305
    %4307 = vmatmul.mubr.f32.gmra.mxu0 %v4306
    %v4308 = vpop.f32.mrf.mxu0
    %v4309 = vadd.f32 %v4070, %v4308
    %v4310 = vpop.f32.mrf.mxu0
    %v4311 = vadd.f32 %v4072, %v4310
    %4312 = vmatprep.mubr.f32.mxu0 0.0
    %v4313 = vand.u32 %v1315, 4294901760
    %v4314 = vsub.f32 %v1315, %v4313
    %4315 = vmatmul.mubr.f32.gmra.mxu0 %v4314
    %v4316 = vpop.f32.mrf.mxu0
    %v4317 = vadd.f32 %v4077, %v4316
    %v4318 = vpop.f32.mrf.mxu0
    %v4319 = vadd.f32 %v4079, %v4318
    %4320 = vmatprep.mubr.f32.mxu0 0.0
    %v4321 = vand.u32 %v1318, 4294901760
    %v4322 = vsub.f32 %v1318, %v4321
    %4323 = vmatmul.mubr.f32.gmra.mxu0 %v4322
    %v4324 = vpop.f32.mrf.mxu0
    %v4325 = vadd.f32 %v4084, %v4324
    %v4326 = vpop.f32.mrf.mxu0
    %v4327 = vadd.f32 %v4086, %v4326
    %4328 = vmatprep.mubr.f32.mxu0 0.0
    %v4329 = vand.u32 %v1321, 4294901760
    %v4330 = vsub.f32 %v1321, %v4329
    %4331 = vmatmul.mubr.f32.gmra.mxu0 %v4330
    %v4332 = vpop.f32.mrf.mxu0
    %v4333 = vadd.f32 %v4091, %v4332
    %v4334 = vpop.f32.mrf.mxu0
    %v4335 = vadd.f32 %v4093, %v4334
    %4336 = vmatprep.mubr.f32.mxu0 0.0
    %v4337 = vand.u32 %v1324, 4294901760
    %v4338 = vsub.f32 %v1324, %v4337
    %4339 = vmatmul.mubr.f32.gmra.mxu0 %v4338
    %v4340 = vpop.f32.mrf.mxu0
    %v4341 = vadd.f32 %v4098, %v4340
    %v4342 = vpop.f32.mrf.mxu0
    %v4343 = vadd.f32 %v4100, %v4342
    %4344 = vmatprep.mubr.f32.mxu0 0.0
    %v4345 = vand.u32 %v1327, 4294901760
    %v4346 = vsub.f32 %v1327, %v4345
    %4347 = vmatmul.mubr.f32.gmra.mxu0 %v4346
    %v4348 = vpop.f32.mrf.mxu0
    %v4349 = vadd.f32 %v4105, %v4348
    %v4350 = vpop.f32.mrf.mxu0
    %v4351 = vadd.f32 %v4107, %v4350
    %4352 = vmatprep.mubr.f32.mxu0 0.0
    %v4353 = vand.u32 %v1330, 4294901760
    %v4354 = vsub.f32 %v1330, %v4353
    %4355 = vmatmul.mubr.f32.gmra.mxu0 %v4354
    %v4356 = vpop.f32.mrf.mxu0
    %v4357 = vadd.f32 %v4112, %v4356
    %v4358 = vpop.f32.mrf.mxu0
    %v4359 = vadd.f32 %v4114, %v4358
    %4360 = vmatprep.mubr.f32.mxu0 0.0
    %v4361 = vand.u32 %v1333, 4294901760
    %v4362 = vsub.f32 %v1333, %v4361
    %4363 = vmatmul.mubr.f32.gmra.mxu0 %v4362
    %v4364 = vpop.f32.mrf.mxu0
    %v4365 = vadd.f32 %v4119, %v4364
    %v4366 = vpop.f32.mrf.mxu0
    %v4367 = vadd.f32 %v4121, %v4366
    %4368 = vmatprep.mubr.f32.mxu0 0.0
    %v4369 = vand.u32 %v1336, 4294901760
    %v4370 = vsub.f32 %v1336, %v4369
    %4371 = vmatmul.mubr.f32.gmra.mxu0 %v4370
    %v4372 = vpop.f32.mrf.mxu0
    %v4373 = vadd.f32 %v4126, %v4372
    %v4374 = vpop.f32.mrf.mxu0
    %v4375 = vadd.f32 %v4128, %v4374
    %4376 = vmatprep.mubr.f32.mxu0 0.0
    %v4377 = vand.u32 %v1339, 4294901760
    %v4378 = vsub.f32 %v1339, %v4377
    %4379 = vmatmul.mubr.f32.gmra.mxu0 %v4378
    %v4380 = vpop.f32.mrf.mxu0
    %v4381 = vadd.f32 %v4133, %v4380
    %v4382 = vpop.f32.mrf.mxu0
    %v4383 = vadd.f32 %v4135, %v4382
    %4384 = vmatprep.mubr.f32.mxu0 0.0
    %v4385 = vand.u32 %v1342, 4294901760
    %v4386 = vsub.f32 %v1342, %v4385
    %4387 = vmatmul.mubr.f32.gmra.mxu0 %v4386
    %v4388 = vpop.f32.mrf.mxu0
    %v4389 = vadd.f32 %v4140, %v4388
    %v4390 = vpop.f32.mrf.mxu0
    %v4391 = vadd.f32 %v4142, %v4390
    %4392 = vdwg.mxu0
    %4393 = vmatprep.subr.mxu0 0.0
    %4394 = vmatpush1.msra.mxu0 0.0
    %4395 = vmatprep.subr.mxu0 0.0
    %4396 = vmatpush1.msra.mxu0 0.0
    %v4397 = vand.u32 %v1292, 4294901760
    %4398 = vmatprep.subr.mxu0 %v4397
    %v4399 = vand.u32 %v1291, 4294901760
    %4400 = vmatpush1.msra.mxu0 %v4399
    %v4401 = vand.u32 %v1288, 4294901760
    %4402 = vmatprep.subr.mxu0 %v4401
    %v4403 = vand.u32 %v1287, 4294901760
    %4404 = vmatpush1.msra.mxu0 %v4403
    %v4405 = vand.u32 %v1284, 4294901760
    %4406 = vmatprep.subr.mxu0 %v4405
    %v4407 = vand.u32 %v1283, 4294901760
    %4408 = vmatpush1.msra.mxu0 %v4407
    %v4409 = vand.u32 %v1280, 4294901760
    %4410 = vmatprep.subr.mxu0 %v4409
    %v4411 = vand.u32 %v1279, 4294901760
    %4412 = vmatpush1.msra.mxu0 %v4411
    %v4413 = vand.u32 %v1276, 4294901760
    %4414 = vmatprep.subr.mxu0 %v4413
    %v4415 = vand.u32 %v1275, 4294901760
    %4416 = vmatpush1.msra.mxu0 %v4415
    %v4417 = vand.u32 %v1272, 4294901760
    %4418 = vmatprep.subr.mxu0 %v4417
    %v4419 = vand.u32 %v1271, 4294901760
    %4420 = vmatpush1.msra.mxu0 %v4419
    %v4421 = vand.u32 %v1268, 4294901760
    %4422 = vmatprep.subr.mxu0 %v4421
    %v4423 = vand.u32 %v1267, 4294901760
    %4424 = vmatpush1.msra.mxu0 %v4423
    %v4425 = vand.u32 %v1264, 4294901760
    %4426 = vmatprep.subr.mxu0 %v4425
    %v4427 = vand.u32 %v1263, 4294901760
    %4428 = vmatpush1.msra.mxu0 %v4427
    %v4429 = vand.u32 %v1260, 4294901760
    %4430 = vmatprep.subr.mxu0 %v4429
    %v4431 = vand.u32 %v1259, 4294901760
    %4432 = vmatpush1.msra.mxu0 %v4431
    %v4433 = vand.u32 %v1256, 4294901760
    %4434 = vmatprep.subr.mxu0 %v4433
    %v4435 = vand.u32 %v1255, 4294901760
    %4436 = vmatpush1.msra.mxu0 %v4435
    %v4437 = vand.u32 %v1252, 4294901760
    %4438 = vmatprep.subr.mxu0 %v4437
    %v4439 = vand.u32 %v1251, 4294901760
    %4440 = vmatpush1.msra.mxu0 %v4439
    %v4441 = vand.u32 %v1248, 4294901760
    %4442 = vmatprep.subr.mxu0 %v4441
    %v4443 = vand.u32 %v1247, 4294901760
    %4444 = vmatpush1.msra.mxu0 %v4443
    %v4445 = vand.u32 %v1244, 4294901760
    %4446 = vmatprep.subr.mxu0 %v4445
    %v4447 = vand.u32 %v1243, 4294901760
    %4448 = vmatpush1.msra.mxu0 %v4447
    %v4449 = vand.u32 %v1240, 4294901760
    %4450 = vmatprep.subr.mxu0 %v4449
    %v4451 = vand.u32 %v1239, 4294901760
    %4452 = vmatpush1.msra.mxu0 %v4451
    %4453 = vmatprep.subr.mxu0 0.0
    %4454 = vmatpush2.msra.mxu0 0.0
    %4455 = vmatprep.subr.mxu0 0.0
    %4456 = vmatpush2.msra.mxu0 0.0
    %4457 = vmatprep.subr.mxu0 0.0
    %4458 = vmatpush2.msra.mxu0 0.0
    %4459 = vmatprep.subr.mxu0 0.0
    %4460 = vmatpush2.msra.mxu0 0.0
    %4461 = vmatprep.subr.mxu0 0.0
    %4462 = vmatpush2.msra.mxu0 0.0
    %4463 = vmatprep.subr.mxu0 0.0
    %4464 = vmatpush2.msra.mxu0 0.0
    %4465 = vmatprep.subr.mxu0 0.0
    %4466 = vmatpush2.msra.mxu0 0.0
    %4467 = vmatprep.subr.mxu0 0.0
    %4468 = vmatpush2.msra.mxu0 0.0
    %4469 = vmatprep.subr.mxu0 0.0
    %4470 = vmatpush2.msra.mxu0 0.0
    %4471 = vmatprep.subr.mxu0 0.0
    %4472 = vmatpush2.msra.mxu0 0.0
    %4473 = vmatprep.subr.mxu0 0.0
    %4474 = vmatpush2.msra.mxu0 0.0
    %4475 = vmatprep.subr.mxu0 0.0
    %4476 = vmatpush2.msra.mxu0 0.0
    %4477 = vmatprep.subr.mxu0 0.0
    %4478 = vmatpush2.msra.mxu0 0.0
    %4479 = vmatprep.subr.mxu0 0.0
    %4480 = vmatpush2.msra.mxu0 0.0
    %4481 = vmatprep.subr.mxu0 0.0
    %4482 = vmatpush2.msra.mxu0 0.0
    %4483 = vmatprep.subr.mxu0 0.0
    %4484 = vmatpush2.msra.mxu0 0.0
    %4485 = vmatprep.mubr.f32.mxu0 0.0
    %v4486 = vand.u32 %v1297, 4294901760
    %v4487 = vsub.f32 %v1297, %v4486
    %v4488 = vand.u32 %v4487, 4294901760
    %4489 = vmatmul.mubr.f32.gmra.mxu0 %v4488
    %v4490 = vpop.f32.mrf.mxu0
    %v4491 = vadd.f32 %v4269, %v4490
    %v4492 = vpop.f32.mrf.mxu0
    %v4493 = vadd.f32 %v4271, %v4492
    %4494 = vmatprep.mubr.f32.mxu0 0.0
    %v4495 = vand.u32 %v1300, 4294901760
    %v4496 = vsub.f32 %v1300, %v4495
    %v4497 = vand.u32 %v4496, 4294901760
    %4498 = vmatmul.mubr.f32.gmra.mxu0 %v4497
    %v4499 = vpop.f32.mrf.mxu0
    %v4500 = vadd.f32 %v4277, %v4499
    %v4501 = vpop.f32.mrf.mxu0
    %v4502 = vadd.f32 %v4279, %v4501
    %4503 = vmatprep.mubr.f32.mxu0 0.0
    %v4504 = vand.u32 %v1303, 4294901760
    %v4505 = vsub.f32 %v1303, %v4504
    %v4506 = vand.u32 %v4505, 4294901760
    %4507 = vmatmul.mubr.f32.gmra.mxu0 %v4506
    %v4508 = vpop.f32.mrf.mxu0
    %v4509 = vadd.f32 %v4285, %v4508
    %v4510 = vpop.f32.mrf.mxu0
    %v4511 = vadd.f32 %v4287, %v4510
    %4512 = vmatprep.mubr.f32.mxu0 0.0
    %v4513 = vand.u32 %v1306, 4294901760
    %v4514 = vsub.f32 %v1306, %v4513
    %v4515 = vand.u32 %v4514, 4294901760
    %4516 = vmatmul.mubr.f32.gmra.mxu0 %v4515
    %v4517 = vpop.f32.mrf.mxu0
    %v4518 = vadd.f32 %v4293, %v4517
    %v4519 = vpop.f32.mrf.mxu0
    %v4520 = vadd.f32 %v4295, %v4519
    %4521 = vmatprep.mubr.f32.mxu0 0.0
    %v4522 = vand.u32 %v1309, 4294901760
    %v4523 = vsub.f32 %v1309, %v4522
    %v4524 = vand.u32 %v4523, 4294901760
    %4525 = vmatmul.mubr.f32.gmra.mxu0 %v4524
    %v4526 = vpop.f32.mrf.mxu0
    %v4527 = vadd.f32 %v4301, %v4526
    %v4528 = vpop.f32.mrf.mxu0
    %v4529 = vadd.f32 %v4303, %v4528
    %4530 = vmatprep.mubr.f32.mxu0 0.0
    %v4531 = vand.u32 %v1312, 4294901760
    %v4532 = vsub.f32 %v1312, %v4531
    %v4533 = vand.u32 %v4532, 4294901760
    %4534 = vmatmul.mubr.f32.gmra.mxu0 %v4533
    %v4535 = vpop.f32.mrf.mxu0
    %v4536 = vadd.f32 %v4309, %v4535
    %v4537 = vpop.f32.mrf.mxu0
    %v4538 = vadd.f32 %v4311, %v4537
    %4539 = vmatprep.mubr.f32.mxu0 0.0
    %v4540 = vand.u32 %v1315, 4294901760
    %v4541 = vsub.f32 %v1315, %v4540
    %v4542 = vand.u32 %v4541, 4294901760
    %4543 = vmatmul.mubr.f32.gmra.mxu0 %v4542
    %v4544 = vpop.f32.mrf.mxu0
    %v4545 = vadd.f32 %v4317, %v4544
    %v4546 = vpop.f32.mrf.mxu0
    %v4547 = vadd.f32 %v4319, %v4546
    %4548 = vmatprep.mubr.f32.mxu0 0.0
    %v4549 = vand.u32 %v1318, 4294901760
    %v4550 = vsub.f32 %v1318, %v4549
    %v4551 = vand.u32 %v4550, 4294901760
    %4552 = vmatmul.mubr.f32.gmra.mxu0 %v4551
    %v4553 = vpop.f32.mrf.mxu0
    %v4554 = vadd.f32 %v4325, %v4553
    %v4555 = vpop.f32.mrf.mxu0
    %v4556 = vadd.f32 %v4327, %v4555
    %4557 = vmatprep.mubr.f32.mxu0 0.0
    %v4558 = vand.u32 %v1321, 4294901760
    %v4559 = vsub.f32 %v1321, %v4558
    %v4560 = vand.u32 %v4559, 4294901760
    %4561 = vmatmul.mubr.f32.gmra.mxu0 %v4560
    %v4562 = vpop.f32.mrf.mxu0
    %v4563 = vadd.f32 %v4333, %v4562
    %v4564 = vpop.f32.mrf.mxu0
    %v4565 = vadd.f32 %v4335, %v4564
    %4566 = vmatprep.mubr.f32.mxu0 0.0
    %v4567 = vand.u32 %v1324, 4294901760
    %v4568 = vsub.f32 %v1324, %v4567
    %v4569 = vand.u32 %v4568, 4294901760
    %4570 = vmatmul.mubr.f32.gmra.mxu0 %v4569
    %v4571 = vpop.f32.mrf.mxu0
    %v4572 = vadd.f32 %v4341, %v4571
    %v4573 = vpop.f32.mrf.mxu0
    %v4574 = vadd.f32 %v4343, %v4573
    %4575 = vmatprep.mubr.f32.mxu0 0.0
    %v4576 = vand.u32 %v1327, 4294901760
    %v4577 = vsub.f32 %v1327, %v4576
    %v4578 = vand.u32 %v4577, 4294901760
    %4579 = vmatmul.mubr.f32.gmra.mxu0 %v4578
    %v4580 = vpop.f32.mrf.mxu0
    %v4581 = vadd.f32 %v4349, %v4580
    %v4582 = vpop.f32.mrf.mxu0
    %v4583 = vadd.f32 %v4351, %v4582
    %4584 = vmatprep.mubr.f32.mxu0 0.0
    %v4585 = vand.u32 %v1330, 4294901760
    %v4586 = vsub.f32 %v1330, %v4585
    %v4587 = vand.u32 %v4586, 4294901760
    %4588 = vmatmul.mubr.f32.gmra.mxu0 %v4587
    %v4589 = vpop.f32.mrf.mxu0
    %v4590 = vadd.f32 %v4357, %v4589
    %v4591 = vpop.f32.mrf.mxu0
    %v4592 = vadd.f32 %v4359, %v4591
    %4593 = vmatprep.mubr.f32.mxu0 0.0
    %v4594 = vand.u32 %v1333, 4294901760
    %v4595 = vsub.f32 %v1333, %v4594
    %v4596 = vand.u32 %v4595, 4294901760
    %4597 = vmatmul.mubr.f32.gmra.mxu0 %v4596
    %v4598 = vpop.f32.mrf.mxu0
    %v4599 = vadd.f32 %v4365, %v4598
    %v4600 = vpop.f32.mrf.mxu0
    %v4601 = vadd.f32 %v4367, %v4600
    %4602 = vmatprep.mubr.f32.mxu0 0.0
    %v4603 = vand.u32 %v1336, 4294901760
    %v4604 = vsub.f32 %v1336, %v4603
    %v4605 = vand.u32 %v4604, 4294901760
    %4606 = vmatmul.mubr.f32.gmra.mxu0 %v4605
    %v4607 = vpop.f32.mrf.mxu0
    %v4608 = vadd.f32 %v4373, %v4607
    %v4609 = vpop.f32.mrf.mxu0
    %v4610 = vadd.f32 %v4375, %v4609
    %4611 = vmatprep.mubr.f32.mxu0 0.0
    %v4612 = vand.u32 %v1339, 4294901760
    %v4613 = vsub.f32 %v1339, %v4612
    %v4614 = vand.u32 %v4613, 4294901760
    %4615 = vmatmul.mubr.f32.gmra.mxu0 %v4614
    %v4616 = vpop.f32.mrf.mxu0
    %v4617 = vadd.f32 %v4381, %v4616
    %v4618 = vpop.f32.mrf.mxu0
    %v4619 = vadd.f32 %v4383, %v4618
    %4620 = vmatprep.mubr.f32.mxu0 0.0
    %v4621 = vand.u32 %v1342, 4294901760
    %v4622 = vsub.f32 %v1342, %v4621
    %v4623 = vand.u32 %v4622, 4294901760
    %4624 = vmatmul.mubr.f32.gmra.mxu0 %v4623
    %v4625 = vpop.f32.mrf.mxu0
    %v4626 = vadd.f32 %v4389, %v4625
    %v4627 = vpop.f32.mrf.mxu0
    %v4628 = vadd.f32 %v4391, %v4627
    %4629 = vdwg.mxu0
    %4630 = vmatprep.subr.mxu0 0.0
    %4631 = vmatpush1.msra.mxu0 0.0
    %4632 = vmatprep.subr.mxu0 0.0
    %4633 = vmatpush1.msra.mxu0 0.0
    %v4634 = vand.u32 %v1292, 4294901760
    %v4635 = vsub.f32 %v1292, %v4634
    %v4636 = vand.u32 %v4635, 4294901760
    %4637 = vmatprep.subr.mxu0 %v4636
    %v4638 = vand.u32 %v1291, 4294901760
    %v4639 = vsub.f32 %v1291, %v4638
    %v4640 = vand.u32 %v4639, 4294901760
    %4641 = vmatpush1.msra.mxu0 %v4640
    %v4642 = vand.u32 %v1288, 4294901760
    %v4643 = vsub.f32 %v1288, %v4642
    %v4644 = vand.u32 %v4643, 4294901760
    %4645 = vmatprep.subr.mxu0 %v4644
    %v4646 = vand.u32 %v1287, 4294901760
    %v4647 = vsub.f32 %v1287, %v4646
    %v4648 = vand.u32 %v4647, 4294901760
    %4649 = vmatpush1.msra.mxu0 %v4648
    %v4650 = vand.u32 %v1284, 4294901760
    %v4651 = vsub.f32 %v1284, %v4650
    %v4652 = vand.u32 %v4651, 4294901760
    %4653 = vmatprep.subr.mxu0 %v4652
    %v4654 = vand.u32 %v1283, 4294901760
    %v4655 = vsub.f32 %v1283, %v4654
    %v4656 = vand.u32 %v4655, 4294901760
    %4657 = vmatpush1.msra.mxu0 %v4656
    %v4658 = vand.u32 %v1280, 4294901760
    %v4659 = vsub.f32 %v1280, %v4658
    %v4660 = vand.u32 %v4659, 4294901760
    %4661 = vmatprep.subr.mxu0 %v4660
    %v4662 = vand.u32 %v1279, 4294901760
    %v4663 = vsub.f32 %v1279, %v4662
    %v4664 = vand.u32 %v4663, 4294901760
    %4665 = vmatpush1.msra.mxu0 %v4664
    %v4666 = vand.u32 %v1276, 4294901760
    %v4667 = vsub.f32 %v1276, %v4666
    %v4668 = vand.u32 %v4667, 4294901760
    %4669 = vmatprep.subr.mxu0 %v4668
    %v4670 = vand.u32 %v1275, 4294901760
    %v4671 = vsub.f32 %v1275, %v4670
    %v4672 = vand.u32 %v4671, 4294901760
    %4673 = vmatpush1.msra.mxu0 %v4672
    %v4674 = vand.u32 %v1272, 4294901760
    %v4675 = vsub.f32 %v1272, %v4674
    %v4676 = vand.u32 %v4675, 4294901760
    %4677 = vmatprep.subr.mxu0 %v4676
    %v4678 = vand.u32 %v1271, 4294901760
    %v4679 = vsub.f32 %v1271, %v4678
    %v4680 = vand.u32 %v4679, 4294901760
    %4681 = vmatpush1.msra.mxu0 %v4680
    %v4682 = vand.u32 %v1268, 4294901760
    %v4683 = vsub.f32 %v1268, %v4682
    %v4684 = vand.u32 %v4683, 4294901760
    %4685 = vmatprep.subr.mxu0 %v4684
    %v4686 = vand.u32 %v1267, 4294901760
    %v4687 = vsub.f32 %v1267, %v4686
    %v4688 = vand.u32 %v4687, 4294901760
    %4689 = vmatpush1.msra.mxu0 %v4688
    %v4690 = vand.u32 %v1264, 4294901760
    %v4691 = vsub.f32 %v1264, %v4690
    %v4692 = vand.u32 %v4691, 4294901760
    %4693 = vmatprep.subr.mxu0 %v4692
    %v4694 = vand.u32 %v1263, 4294901760
    %v4695 = vsub.f32 %v1263, %v4694
    %v4696 = vand.u32 %v4695, 4294901760
    %4697 = vmatpush1.msra.mxu0 %v4696
    %v4698 = vand.u32 %v1260, 4294901760
    %v4699 = vsub.f32 %v1260, %v4698
    %v4700 = vand.u32 %v4699, 4294901760
    %4701 = vmatprep.subr.mxu0 %v4700
    %v4702 = vand.u32 %v1259, 4294901760
    %v4703 = vsub.f32 %v1259, %v4702
    %v4704 = vand.u32 %v4703, 4294901760
    %4705 = vmatpush1.msra.mxu0 %v4704
    %v4706 = vand.u32 %v1256, 4294901760
    %v4707 = vsub.f32 %v1256, %v4706
    %v4708 = vand.u32 %v4707, 4294901760
    %4709 = vmatprep.subr.mxu0 %v4708
    %v4710 = vand.u32 %v1255, 4294901760
    %v4711 = vsub.f32 %v1255, %v4710
    %v4712 = vand.u32 %v4711, 4294901760
    %4713 = vmatpush1.msra.mxu0 %v4712
    %v4714 = vand.u32 %v1252, 4294901760
    %v4715 = vsub.f32 %v1252, %v4714
    %v4716 = vand.u32 %v4715, 4294901760
    %4717 = vmatprep.subr.mxu0 %v4716
    %v4718 = vand.u32 %v1251, 4294901760
    %v4719 = vsub.f32 %v1251, %v4718
    %v4720 = vand.u32 %v4719, 4294901760
    %4721 = vmatpush1.msra.mxu0 %v4720
    %v4722 = vand.u32 %v1248, 4294901760
    %v4723 = vsub.f32 %v1248, %v4722
    %v4724 = vand.u32 %v4723, 4294901760
    %4725 = vmatprep.subr.mxu0 %v4724
    %v4726 = vand.u32 %v1247, 4294901760
    %v4727 = vsub.f32 %v1247, %v4726
    %v4728 = vand.u32 %v4727, 4294901760
    %4729 = vmatpush1.msra.mxu0 %v4728
    %v4730 = vand.u32 %v1244, 4294901760
    %v4731 = vsub.f32 %v1244, %v4730
    %v4732 = vand.u32 %v4731, 4294901760
    %4733 = vmatprep.subr.mxu0 %v4732
    %v4734 = vand.u32 %v1243, 4294901760
    %v4735 = vsub.f32 %v1243, %v4734
    %v4736 = vand.u32 %v4735, 4294901760
    %4737 = vmatpush1.msra.mxu0 %v4736
    %v4738 = vand.u32 %v1240, 4294901760
    %v4739 = vsub.f32 %v1240, %v4738
    %v4740 = vand.u32 %v4739, 4294901760
    %4741 = vmatprep.subr.mxu0 %v4740
    %v4742 = vand.u32 %v1239, 4294901760
    %v4743 = vsub.f32 %v1239, %v4742
    %v4744 = vand.u32 %v4743, 4294901760
    %4745 = vmatpush1.msra.mxu0 %v4744
    %4746 = vmatprep.subr.mxu0 0.0
    %4747 = vmatpush2.msra.mxu0 0.0
    %4748 = vmatprep.subr.mxu0 0.0
    %4749 = vmatpush2.msra.mxu0 0.0
    %4750 = vmatprep.subr.mxu0 0.0
    %4751 = vmatpush2.msra.mxu0 0.0
    %4752 = vmatprep.subr.mxu0 0.0
    %4753 = vmatpush2.msra.mxu0 0.0
    %4754 = vmatprep.subr.mxu0 0.0
    %4755 = vmatpush2.msra.mxu0 0.0
    %4756 = vmatprep.subr.mxu0 0.0
    %4757 = vmatpush2.msra.mxu0 0.0
    %4758 = vmatprep.subr.mxu0 0.0
    %4759 = vmatpush2.msra.mxu0 0.0
    %4760 = vmatprep.subr.mxu0 0.0
    %4761 = vmatpush2.msra.mxu0 0.0
    %4762 = vmatprep.subr.mxu0 0.0
    %4763 = vmatpush2.msra.mxu0 0.0
    %4764 = vmatprep.subr.mxu0 0.0
    %4765 = vmatpush2.msra.mxu0 0.0
    %4766 = vmatprep.subr.mxu0 0.0
    %4767 = vmatpush2.msra.mxu0 0.0
    %4768 = vmatprep.subr.mxu0 0.0
    %4769 = vmatpush2.msra.mxu0 0.0
    %4770 = vmatprep.subr.mxu0 0.0
    %4771 = vmatpush2.msra.mxu0 0.0
    %4772 = vmatprep.subr.mxu0 0.0
    %4773 = vmatpush2.msra.mxu0 0.0
    %4774 = vmatprep.subr.mxu0 0.0
    %4775 = vmatpush2.msra.mxu0 0.0
    %4776 = vmatprep.subr.mxu0 0.0
    %4777 = vmatpush2.msra.mxu0 0.0
    %4778 = vmatprep.mubr.f32.mxu0 0.0
    %v4779 = vand.u32 %v1297, 4294901760
    %4780 = vmatmul.mubr.f32.gmra.mxu0 %v4779
    %v4781 = vpop.f32.mrf.mxu0
    %v4782 = vadd.f32 %v4491, %v4781
    %v4783 = vpop.f32.mrf.mxu0
    %v4784 = vadd.f32 %v4493, %v4783
    %4785 = vmatprep.mubr.f32.mxu0 0.0
    %v4786 = vand.u32 %v1300, 4294901760
    %4787 = vmatmul.mubr.f32.gmra.mxu0 %v4786
    %v4788 = vpop.f32.mrf.mxu0
    %v4789 = vadd.f32 %v4500, %v4788
    %v4790 = vpop.f32.mrf.mxu0
    %v4791 = vadd.f32 %v4502, %v4790
    %4792 = vmatprep.mubr.f32.mxu0 0.0
    %v4793 = vand.u32 %v1303, 4294901760
    %4794 = vmatmul.mubr.f32.gmra.mxu0 %v4793
    %v4795 = vpop.f32.mrf.mxu0
    %v4796 = vadd.f32 %v4509, %v4795
    %v4797 = vpop.f32.mrf.mxu0
    %v4798 = vadd.f32 %v4511, %v4797
    %4799 = vmatprep.mubr.f32.mxu0 0.0
    %v4800 = vand.u32 %v1306, 4294901760
    %4801 = vmatmul.mubr.f32.gmra.mxu0 %v4800
    %v4802 = vpop.f32.mrf.mxu0
    %v4803 = vadd.f32 %v4518, %v4802
    %v4804 = vpop.f32.mrf.mxu0
    %v4805 = vadd.f32 %v4520, %v4804
    %4806 = vmatprep.mubr.f32.mxu0 0.0
    %v4807 = vand.u32 %v1309, 4294901760
    %4808 = vmatmul.mubr.f32.gmra.mxu0 %v4807
    %v4809 = vpop.f32.mrf.mxu0
    %v4810 = vadd.f32 %v4527, %v4809
    %v4811 = vpop.f32.mrf.mxu0
    %v4812 = vadd.f32 %v4529, %v4811
    %4813 = vmatprep.mubr.f32.mxu0 0.0
    %v4814 = vand.u32 %v1312, 4294901760
    %4815 = vmatmul.mubr.f32.gmra.mxu0 %v4814
    %v4816 = vpop.f32.mrf.mxu0
    %v4817 = vadd.f32 %v4536, %v4816
    %v4818 = vpop.f32.mrf.mxu0
    %v4819 = vadd.f32 %v4538, %v4818
    %4820 = vmatprep.mubr.f32.mxu0 0.0
    %v4821 = vand.u32 %v1315, 4294901760
    %4822 = vmatmul.mubr.f32.gmra.mxu0 %v4821
    %v4823 = vpop.f32.mrf.mxu0
    %v4824 = vadd.f32 %v4545, %v4823
    %v4825 = vpop.f32.mrf.mxu0
    %v4826 = vadd.f32 %v4547, %v4825
    %4827 = vmatprep.mubr.f32.mxu0 0.0
    %v4828 = vand.u32 %v1318, 4294901760
    %4829 = vmatmul.mubr.f32.gmra.mxu0 %v4828
    %v4830 = vpop.f32.mrf.mxu0
    %v4831 = vadd.f32 %v4554, %v4830
    %v4832 = vpop.f32.mrf.mxu0
    %v4833 = vadd.f32 %v4556, %v4832
    %4834 = vmatprep.mubr.f32.mxu0 0.0
    %v4835 = vand.u32 %v1321, 4294901760
    %4836 = vmatmul.mubr.f32.gmra.mxu0 %v4835
    %v4837 = vpop.f32.mrf.mxu0
    %v4838 = vadd.f32 %v4563, %v4837
    %v4839 = vpop.f32.mrf.mxu0
    %v4840 = vadd.f32 %v4565, %v4839
    %4841 = vmatprep.mubr.f32.mxu0 0.0
    %v4842 = vand.u32 %v1324, 4294901760
    %4843 = vmatmul.mubr.f32.gmra.mxu0 %v4842
    %v4844 = vpop.f32.mrf.mxu0
    %v4845 = vadd.f32 %v4572, %v4844
    %v4846 = vpop.f32.mrf.mxu0
    %v4847 = vadd.f32 %v4574, %v4846
    %4848 = vmatprep.mubr.f32.mxu0 0.0
    %v4849 = vand.u32 %v1327, 4294901760
    %4850 = vmatmul.mubr.f32.gmra.mxu0 %v4849
    %v4851 = vpop.f32.mrf.mxu0
    %v4852 = vadd.f32 %v4581, %v4851
    %v4853 = vpop.f32.mrf.mxu0
    %v4854 = vadd.f32 %v4583, %v4853
    %4855 = vmatprep.mubr.f32.mxu0 0.0
    %v4856 = vand.u32 %v1330, 4294901760
    %4857 = vmatmul.mubr.f32.gmra.mxu0 %v4856
    %v4858 = vpop.f32.mrf.mxu0
    %v4859 = vadd.f32 %v4590, %v4858
    %v4860 = vpop.f32.mrf.mxu0
    %v4861 = vadd.f32 %v4592, %v4860
    %4862 = vmatprep.mubr.f32.mxu0 0.0
    %v4863 = vand.u32 %v1333, 4294901760
    %4864 = vmatmul.mubr.f32.gmra.mxu0 %v4863
    %v4865 = vpop.f32.mrf.mxu0
    %v4866 = vadd.f32 %v4599, %v4865
    %v4867 = vpop.f32.mrf.mxu0
    %v4868 = vadd.f32 %v4601, %v4867
    %4869 = vmatprep.mubr.f32.mxu0 0.0
    %v4870 = vand.u32 %v1336, 4294901760
    %4871 = vmatmul.mubr.f32.gmra.mxu0 %v4870
    %v4872 = vpop.f32.mrf.mxu0
    %v4873 = vadd.f32 %v4608, %v4872
    %v4874 = vpop.f32.mrf.mxu0
    %v4875 = vadd.f32 %v4610, %v4874
    %4876 = vmatprep.mubr.f32.mxu0 0.0
    %v4877 = vand.u32 %v1339, 4294901760
    %4878 = vmatmul.mubr.f32.gmra.mxu0 %v4877
    %v4879 = vpop.f32.mrf.mxu0
    %v4880 = vadd.f32 %v4617, %v4879
    %v4881 = vpop.f32.mrf.mxu0
    %v4882 = vadd.f32 %v4619, %v4881
    %4883 = vmatprep.mubr.f32.mxu0 0.0
    %v4884 = vand.u32 %v1342, 4294901760
    %4885 = vmatmul.mubr.f32.gmra.mxu0 %v4884
    %v4886 = vpop.f32.mrf.mxu0
    %v4887 = vadd.f32 %v4626, %v4886
    %v4888 = vpop.f32.mrf.mxu0
    %v4889 = vadd.f32 %v4628, %v4888
    %4890 = vdwg.mxu0
    %4891 = vmatprep.subr.mxu0 0.0
    %4892 = vmatpush1.msra.mxu0 0.0
    %4893 = vmatprep.subr.mxu0 0.0
    %4894 = vmatpush1.msra.mxu0 0.0
    %v4895 = vand.u32 %v1292, 4294901760
    %4896 = vmatprep.subr.mxu0 %v4895
    %v4897 = vand.u32 %v1291, 4294901760
    %4898 = vmatpush1.msra.mxu0 %v4897
    %v4899 = vand.u32 %v1288, 4294901760
    %4900 = vmatprep.subr.mxu0 %v4899
    %v4901 = vand.u32 %v1287, 4294901760
    %4902 = vmatpush1.msra.mxu0 %v4901
    %v4903 = vand.u32 %v1284, 4294901760
    %4904 = vmatprep.subr.mxu0 %v4903
    %v4905 = vand.u32 %v1283, 4294901760
    %4906 = vmatpush1.msra.mxu0 %v4905
    %v4907 = vand.u32 %v1280, 4294901760
    %4908 = vmatprep.subr.mxu0 %v4907
    %v4909 = vand.u32 %v1279, 4294901760
    %4910 = vmatpush1.msra.mxu0 %v4909
    %v4911 = vand.u32 %v1276, 4294901760
    %4912 = vmatprep.subr.mxu0 %v4911
    %v4913 = vand.u32 %v1275, 4294901760
    %4914 = vmatpush1.msra.mxu0 %v4913
    %v4915 = vand.u32 %v1272, 4294901760
    %4916 = vmatprep.subr.mxu0 %v4915
    %v4917 = vand.u32 %v1271, 4294901760
    %4918 = vmatpush1.msra.mxu0 %v4917
    %v4919 = vand.u32 %v1268, 4294901760
    %4920 = vmatprep.subr.mxu0 %v4919
    %v4921 = vand.u32 %v1267, 4294901760
    %4922 = vmatpush1.msra.mxu0 %v4921
    %v4923 = vand.u32 %v1264, 4294901760
    %4924 = vmatprep.subr.mxu0 %v4923
    %v4925 = vand.u32 %v1263, 4294901760
    %4926 = vmatpush1.msra.mxu0 %v4925
    %v4927 = vand.u32 %v1260, 4294901760
    %4928 = vmatprep.subr.mxu0 %v4927
    %v4929 = vand.u32 %v1259, 4294901760
    %4930 = vmatpush1.msra.mxu0 %v4929
    %v4931 = vand.u32 %v1256, 4294901760
    %4932 = vmatprep.subr.mxu0 %v4931
    %v4933 = vand.u32 %v1255, 4294901760
    %4934 = vmatpush1.msra.mxu0 %v4933
    %v4935 = vand.u32 %v1252, 4294901760
    %4936 = vmatprep.subr.mxu0 %v4935
    %v4937 = vand.u32 %v1251, 4294901760
    %4938 = vmatpush1.msra.mxu0 %v4937
    %v4939 = vand.u32 %v1248, 4294901760
    %4940 = vmatprep.subr.mxu0 %v4939
    %v4941 = vand.u32 %v1247, 4294901760
    %4942 = vmatpush1.msra.mxu0 %v4941
    %v4943 = vand.u32 %v1244, 4294901760
    %4944 = vmatprep.subr.mxu0 %v4943
    %v4945 = vand.u32 %v1243, 4294901760
    %4946 = vmatpush1.msra.mxu0 %v4945
    %v4947 = vand.u32 %v1240, 4294901760
    %4948 = vmatprep.subr.mxu0 %v4947
    %v4949 = vand.u32 %v1239, 4294901760
    %4950 = vmatpush1.msra.mxu0 %v4949
    %4951 = vmatprep.subr.mxu0 0.0
    %4952 = vmatpush2.msra.mxu0 0.0
    %4953 = vmatprep.subr.mxu0 0.0
    %4954 = vmatpush2.msra.mxu0 0.0
    %4955 = vmatprep.subr.mxu0 0.0
    %4956 = vmatpush2.msra.mxu0 0.0
    %4957 = vmatprep.subr.mxu0 0.0
    %4958 = vmatpush2.msra.mxu0 0.0
    %4959 = vmatprep.subr.mxu0 0.0
    %4960 = vmatpush2.msra.mxu0 0.0
    %4961 = vmatprep.subr.mxu0 0.0
    %4962 = vmatpush2.msra.mxu0 0.0
    %4963 = vmatprep.subr.mxu0 0.0
    %4964 = vmatpush2.msra.mxu0 0.0
    %4965 = vmatprep.subr.mxu0 0.0
    %4966 = vmatpush2.msra.mxu0 0.0
    %4967 = vmatprep.subr.mxu0 0.0
    %4968 = vmatpush2.msra.mxu0 0.0
    %4969 = vmatprep.subr.mxu0 0.0
    %4970 = vmatpush2.msra.mxu0 0.0
    %4971 = vmatprep.subr.mxu0 0.0
    %4972 = vmatpush2.msra.mxu0 0.0
    %4973 = vmatprep.subr.mxu0 0.0
    %4974 = vmatpush2.msra.mxu0 0.0
    %4975 = vmatprep.subr.mxu0 0.0
    %4976 = vmatpush2.msra.mxu0 0.0
    %4977 = vmatprep.subr.mxu0 0.0
    %4978 = vmatpush2.msra.mxu0 0.0
    %4979 = vmatprep.subr.mxu0 0.0
    %4980 = vmatpush2.msra.mxu0 0.0
    %4981 = vmatprep.subr.mxu0 0.0
    %4982 = vmatpush2.msra.mxu0 0.0
    %4983 = vmatprep.mubr.f32.mxu0 0.0
    %v4984 = vand.u32 %v1297, 4294901760
    %4985 = vmatmul.mubr.f32.gmra.mxu0 %v4984
    %v4986 = vpop.f32.mrf.mxu0
    %v4987 = vadd.f32 %v4782, %v4986
    %v4988 = vpop.f32.mrf.mxu0
    %v4989 = vadd.f32 %v4784, %v4988
    %4990 = vmatprep.mubr.f32.mxu0 0.0
    %v4991 = vand.u32 %v1300, 4294901760
    %4992 = vmatmul.mubr.f32.gmra.mxu0 %v4991
    %v4993 = vpop.f32.mrf.mxu0
    %v4994 = vadd.f32 %v4789, %v4993
    %v4995 = vpop.f32.mrf.mxu0
    %v4996 = vadd.f32 %v4791, %v4995
    %4997 = vmatprep.mubr.f32.mxu0 0.0
    %v4998 = vand.u32 %v1303, 4294901760
    %4999 = vmatmul.mubr.f32.gmra.mxu0 %v4998
    %v5000 = vpop.f32.mrf.mxu0
    %v5001 = vadd.f32 %v4796, %v5000
    %v5002 = vpop.f32.mrf.mxu0
    %v5003 = vadd.f32 %v4798, %v5002
    %5004 = vmatprep.mubr.f32.mxu0 0.0
    %v5005 = vand.u32 %v1306, 4294901760
    %5006 = vmatmul.mubr.f32.gmra.mxu0 %v5005
    %v5007 = vpop.f32.mrf.mxu0
    %v5008 = vadd.f32 %v4803, %v5007
    %v5009 = vpop.f32.mrf.mxu0
    %v5010 = vadd.f32 %v4805, %v5009
    %5011 = vmatprep.mubr.f32.mxu0 0.0
    %v5012 = vand.u32 %v1309, 4294901760
    %5013 = vmatmul.mubr.f32.gmra.mxu0 %v5012
    %v5014 = vpop.f32.mrf.mxu0
    %v5015 = vadd.f32 %v4810, %v5014
    %v5016 = vpop.f32.mrf.mxu0
    %v5017 = vadd.f32 %v4812, %v5016
    %5018 = vmatprep.mubr.f32.mxu0 0.0
    %v5019 = vand.u32 %v1312, 4294901760
    %5020 = vmatmul.mubr.f32.gmra.mxu0 %v5019
    %v5021 = vpop.f32.mrf.mxu0
    %v5022 = vadd.f32 %v4817, %v5021
    %v5023 = vpop.f32.mrf.mxu0
    %v5024 = vadd.f32 %v4819, %v5023
    %5025 = vmatprep.mubr.f32.mxu0 0.0
    %v5026 = vand.u32 %v1315, 4294901760
    %5027 = vmatmul.mubr.f32.gmra.mxu0 %v5026
    %v5028 = vpop.f32.mrf.mxu0
    %v5029 = vadd.f32 %v4824, %v5028
    %v5030 = vpop.f32.mrf.mxu0
    %v5031 = vadd.f32 %v4826, %v5030
    %5032 = vmatprep.mubr.f32.mxu0 0.0
    %v5033 = vand.u32 %v1318, 4294901760
    %5034 = vmatmul.mubr.f32.gmra.mxu0 %v5033
    %v5035 = vpop.f32.mrf.mxu0
    %v5036 = vadd.f32 %v4831, %v5035
    %v5037 = vpop.f32.mrf.mxu0
    %v5038 = vadd.f32 %v4833, %v5037
    %5039 = vmatprep.mubr.f32.mxu0 0.0
    %v5040 = vand.u32 %v1321, 4294901760
    %5041 = vmatmul.mubr.f32.gmra.mxu0 %v5040
    %v5042 = vpop.f32.mrf.mxu0
    %v5043 = vadd.f32 %v4838, %v5042
    %v5044 = vpop.f32.mrf.mxu0
    %v5045 = vadd.f32 %v4840, %v5044
    %5046 = vmatprep.mubr.f32.mxu0 0.0
    %v5047 = vand.u32 %v1324, 4294901760
    %5048 = vmatmul.mubr.f32.gmra.mxu0 %v5047
    %v5049 = vpop.f32.mrf.mxu0
    %v5050 = vadd.f32 %v4845, %v5049
    %v5051 = vpop.f32.mrf.mxu0
    %v5052 = vadd.f32 %v4847, %v5051
    %5053 = vmatprep.mubr.f32.mxu0 0.0
    %v5054 = vand.u32 %v1327, 4294901760
    %5055 = vmatmul.mubr.f32.gmra.mxu0 %v5054
    %v5056 = vpop.f32.mrf.mxu0
    %v5057 = vadd.f32 %v4852, %v5056
    %v5058 = vpop.f32.mrf.mxu0
    %v5059 = vadd.f32 %v4854, %v5058
    %5060 = vmatprep.mubr.f32.mxu0 0.0
    %v5061 = vand.u32 %v1330, 4294901760
    %5062 = vmatmul.mubr.f32.gmra.mxu0 %v5061
    %v5063 = vpop.f32.mrf.mxu0
    %v5064 = vadd.f32 %v4859, %v5063
    %v5065 = vpop.f32.mrf.mxu0
    %v5066 = vadd.f32 %v4861, %v5065
    %5067 = vmatprep.mubr.f32.mxu0 0.0
    %v5068 = vand.u32 %v1333, 4294901760
    %5069 = vmatmul.mubr.f32.gmra.mxu0 %v5068
    %v5070 = vpop.f32.mrf.mxu0
    %v5071 = vadd.f32 %v4866, %v5070
    %v5072 = vpop.f32.mrf.mxu0
    %v5073 = vadd.f32 %v4868, %v5072
    %5074 = vmatprep.mubr.f32.mxu0 0.0
    %v5075 = vand.u32 %v1336, 4294901760
    %5076 = vmatmul.mubr.f32.gmra.mxu0 %v5075
    %v5077 = vpop.f32.mrf.mxu0
    %v5078 = vadd.f32 %v4873, %v5077
    %v5079 = vpop.f32.mrf.mxu0
    %v5080 = vadd.f32 %v4875, %v5079
    %5081 = vmatprep.mubr.f32.mxu0 0.0
    %v5082 = vand.u32 %v1339, 4294901760
    %5083 = vmatmul.mubr.f32.gmra.mxu0 %v5082
    %v5084 = vpop.f32.mrf.mxu0
    %v5085 = vadd.f32 %v4880, %v5084
    %v5086 = vpop.f32.mrf.mxu0
    %v5087 = vadd.f32 %v4882, %v5086
    %5088 = vmatprep.mubr.f32.mxu0 0.0
    %v5089 = vand.u32 %v1342, 4294901760
    %5090 = vmatmul.mubr.f32.gmra.mxu0 %v5089
    %v5091 = vpop.f32.mrf.mxu0
    %v5092 = vadd.f32 %v4887, %v5091
    %v5093 = vpop.f32.mrf.mxu0
    %v5094 = vadd.f32 %v4889, %v5093
    %5095 = vdwg.mxu0
    %v5096 = vand.u32 %v1174, 4294901760
    %5097 = vmatprep.subr.mxu0 %v5096
    %v5098 = vand.u32 %v1173, 4294901760
    %5099 = vmatpush1.msra.mxu0 %v5098
    %v5100 = vand.u32 %v1170, 4294901760
    %5101 = vmatprep.subr.mxu0 %v5100
    %v5102 = vand.u32 %v1169, 4294901760
    %5103 = vmatpush1.msra.mxu0 %v5102
    %v5104 = vand.u32 %v1166, 4294901760
    %5105 = vmatprep.subr.mxu0 %v5104
    %v5106 = vand.u32 %v1165, 4294901760
    %5107 = vmatpush1.msra.mxu0 %v5106
    %v5108 = vand.u32 %v1162, 4294901760
    %5109 = vmatprep.subr.mxu0 %v5108
    %v5110 = vand.u32 %v1161, 4294901760
    %5111 = vmatpush1.msra.mxu0 %v5110
    %v5112 = vand.u32 %v1158, 4294901760
    %5113 = vmatprep.subr.mxu0 %v5112
    %v5114 = vand.u32 %v1157, 4294901760
    %5115 = vmatpush1.msra.mxu0 %v5114
    %v5116 = vand.u32 %v1154, 4294901760
    %5117 = vmatprep.subr.mxu0 %v5116
    %v5118 = vand.u32 %v1153, 4294901760
    %5119 = vmatpush1.msra.mxu0 %v5118
    %v5120 = vand.u32 %v1150, 4294901760
    %5121 = vmatprep.subr.mxu0 %v5120
    %v5122 = vand.u32 %v1149, 4294901760
    %5123 = vmatpush1.msra.mxu0 %v5122
    %v5124 = vand.u32 %v1146, 4294901760
    %5125 = vmatprep.subr.mxu0 %v5124
    %v5126 = vand.u32 %v1145, 4294901760
    %5127 = vmatpush1.msra.mxu0 %v5126
    %v5128 = vand.u32 %v1142, 4294901760
    %5129 = vmatprep.subr.mxu0 %v5128
    %v5130 = vand.u32 %v1141, 4294901760
    %5131 = vmatpush1.msra.mxu0 %v5130
    %v5132 = vand.u32 %v1138, 4294901760
    %5133 = vmatprep.subr.mxu0 %v5132
    %v5134 = vand.u32 %v1137, 4294901760
    %5135 = vmatpush1.msra.mxu0 %v5134
    %v5136 = vand.u32 %v1134, 4294901760
    %5137 = vmatprep.subr.mxu0 %v5136
    %v5138 = vand.u32 %v1133, 4294901760
    %5139 = vmatpush1.msra.mxu0 %v5138
    %v5140 = vand.u32 %v1130, 4294901760
    %5141 = vmatprep.subr.mxu0 %v5140
    %v5142 = vand.u32 %v1129, 4294901760
    %5143 = vmatpush1.msra.mxu0 %v5142
    %v5144 = vand.u32 %v1126, 4294901760
    %5145 = vmatprep.subr.mxu0 %v5144
    %v5146 = vand.u32 %v1125, 4294901760
    %5147 = vmatpush1.msra.mxu0 %v5146
    %v5148 = vand.u32 %v1122, 4294901760
    %5149 = vmatprep.subr.mxu0 %v5148
    %v5150 = vand.u32 %v1121, 4294901760
    %5151 = vmatpush1.msra.mxu0 %v5150
    %v5152 = vand.u32 %v1118, 4294901760
    %5153 = vmatprep.subr.mxu0 %v5152
    %v5154 = vand.u32 %v1117, 4294901760
    %5155 = vmatpush1.msra.mxu0 %v5154
    %v5156 = vand.u32 %v1114, 4294901760
    %5157 = vmatprep.subr.mxu0 %v5156
    %v5158 = vand.u32 %v1113, 4294901760
    %5159 = vmatpush1.msra.mxu0 %v5158
    %v5160 = vand.u32 %v1238, 4294901760
    %5161 = vmatprep.subr.mxu0 %v5160
    %v5162 = vand.u32 %v1237, 4294901760
    %5163 = vmatpush2.msra.mxu0 %v5162
    %v5164 = vand.u32 %v1234, 4294901760
    %5165 = vmatprep.subr.mxu0 %v5164
    %v5166 = vand.u32 %v1233, 4294901760
    %5167 = vmatpush2.msra.mxu0 %v5166
    %v5168 = vand.u32 %v1230, 4294901760
    %5169 = vmatprep.subr.mxu0 %v5168
    %v5170 = vand.u32 %v1229, 4294901760
    %5171 = vmatpush2.msra.mxu0 %v5170
    %v5172 = vand.u32 %v1226, 4294901760
    %5173 = vmatprep.subr.mxu0 %v5172
    %v5174 = vand.u32 %v1225, 4294901760
    %5175 = vmatpush2.msra.mxu0 %v5174
    %v5176 = vand.u32 %v1222, 4294901760
    %5177 = vmatprep.subr.mxu0 %v5176
    %v5178 = vand.u32 %v1221, 4294901760
    %5179 = vmatpush2.msra.mxu0 %v5178
    %v5180 = vand.u32 %v1218, 4294901760
    %5181 = vmatprep.subr.mxu0 %v5180
    %v5182 = vand.u32 %v1217, 4294901760
    %5183 = vmatpush2.msra.mxu0 %v5182
    %v5184 = vand.u32 %v1214, 4294901760
    %5185 = vmatprep.subr.mxu0 %v5184
    %v5186 = vand.u32 %v1213, 4294901760
    %5187 = vmatpush2.msra.mxu0 %v5186
    %v5188 = vand.u32 %v1210, 4294901760
    %5189 = vmatprep.subr.mxu0 %v5188
    %v5190 = vand.u32 %v1209, 4294901760
    %5191 = vmatpush2.msra.mxu0 %v5190
    %v5192 = vand.u32 %v1206, 4294901760
    %5193 = vmatprep.subr.mxu0 %v5192
    %v5194 = vand.u32 %v1205, 4294901760
    %5195 = vmatpush2.msra.mxu0 %v5194
    %v5196 = vand.u32 %v1202, 4294901760
    %5197 = vmatprep.subr.mxu0 %v5196
    %v5198 = vand.u32 %v1201, 4294901760
    %5199 = vmatpush2.msra.mxu0 %v5198
    %v5200 = vand.u32 %v1198, 4294901760
    %5201 = vmatprep.subr.mxu0 %v5200
    %v5202 = vand.u32 %v1197, 4294901760
    %5203 = vmatpush2.msra.mxu0 %v5202
    %v5204 = vand.u32 %v1194, 4294901760
    %5205 = vmatprep.subr.mxu0 %v5204
    %v5206 = vand.u32 %v1193, 4294901760
    %5207 = vmatpush2.msra.mxu0 %v5206
    %v5208 = vand.u32 %v1190, 4294901760
    %5209 = vmatprep.subr.mxu0 %v5208
    %v5210 = vand.u32 %v1189, 4294901760
    %5211 = vmatpush2.msra.mxu0 %v5210
    %v5212 = vand.u32 %v1186, 4294901760
    %5213 = vmatprep.subr.mxu0 %v5212
    %v5214 = vand.u32 %v1185, 4294901760
    %5215 = vmatpush2.msra.mxu0 %v5214
    %v5216 = vand.u32 %v1182, 4294901760
    %5217 = vmatprep.subr.mxu0 %v5216
    %v5218 = vand.u32 %v1181, 4294901760
    %5219 = vmatpush2.msra.mxu0 %v5218
    %v5220 = vand.u32 %v1178, 4294901760
    %5221 = vmatprep.subr.mxu0 %v5220
    %v5222 = vand.u32 %v1177, 4294901760
    %5223 = vmatpush2.msra.mxu0 %v5222
    %v5224 = vand.u32 %v1064, 4294901760
    %v5225 = vsub.f32 %v1064, %v5224
    %v5226 = vand.u32 %v5225, 4294901760
    %v5227 = vsub.f32 %v5225, %v5226
    %v5228 = vand.u32 %v5227, 4294901760
    %5229 = vmatprep.mubr.f32.mxu0 %v5228
    %v5230 = vand.u32 %v1063, 4294901760
    %v5231 = vsub.f32 %v1063, %v5230
    %v5232 = vand.u32 %v5231, 4294901760
    %v5233 = vsub.f32 %v5231, %v5232
    %v5234 = vand.u32 %v5233, 4294901760
    %5235 = vmatmul.mubr.f32.gmra.mxu0 %v5234
    %v5236 = vpop.f32.mrf.mxu0
    %v5237 = vadd.f32 0.0, %v5236
    %v5238 = vpop.f32.mrf.mxu0
    %v5239 = vadd.f32 0.0, %v5238
    %v5240 = vand.u32 %v1067, 4294901760
    %v5241 = vsub.f32 %v1067, %v5240
    %v5242 = vand.u32 %v5241, 4294901760
    %v5243 = vsub.f32 %v5241, %v5242
    %v5244 = vand.u32 %v5243, 4294901760
    %5245 = vmatprep.mubr.f32.mxu0 %v5244
    %v5246 = vand.u32 %v1066, 4294901760
    %v5247 = vsub.f32 %v1066, %v5246
    %v5248 = vand.u32 %v5247, 4294901760
    %v5249 = vsub.f32 %v5247, %v5248
    %v5250 = vand.u32 %v5249, 4294901760
    %5251 = vmatmul.mubr.f32.gmra.mxu0 %v5250
    %v5252 = vpop.f32.mrf.mxu0
    %v5253 = vadd.f32 0.0, %v5252
    %v5254 = vpop.f32.mrf.mxu0
    %v5255 = vadd.f32 0.0, %v5254
    %v5256 = vand.u32 %v1070, 4294901760
    %v5257 = vsub.f32 %v1070, %v5256
    %v5258 = vand.u32 %v5257, 4294901760
    %v5259 = vsub.f32 %v5257, %v5258
    %v5260 = vand.u32 %v5259, 4294901760
    %5261 = vmatprep.mubr.f32.mxu0 %v5260
    %v5262 = vand.u32 %v1069, 4294901760
    %v5263 = vsub.f32 %v1069, %v5262
    %v5264 = vand.u32 %v5263, 4294901760
    %v5265 = vsub.f32 %v5263, %v5264
    %v5266 = vand.u32 %v5265, 4294901760
    %5267 = vmatmul.mubr.f32.gmra.mxu0 %v5266
    %v5268 = vpop.f32.mrf.mxu0
    %v5269 = vadd.f32 0.0, %v5268
    %v5270 = vpop.f32.mrf.mxu0
    %v5271 = vadd.f32 0.0, %v5270
    %v5272 = vand.u32 %v1073, 4294901760
    %v5273 = vsub.f32 %v1073, %v5272
    %v5274 = vand.u32 %v5273, 4294901760
    %v5275 = vsub.f32 %v5273, %v5274
    %v5276 = vand.u32 %v5275, 4294901760
    %5277 = vmatprep.mubr.f32.mxu0 %v5276
    %v5278 = vand.u32 %v1072, 4294901760
    %v5279 = vsub.f32 %v1072, %v5278
    %v5280 = vand.u32 %v5279, 4294901760
    %v5281 = vsub.f32 %v5279, %v5280
    %v5282 = vand.u32 %v5281, 4294901760
    %5283 = vmatmul.mubr.f32.gmra.mxu0 %v5282
    %v5284 = vpop.f32.mrf.mxu0
    %v5285 = vadd.f32 0.0, %v5284
    %v5286 = vpop.f32.mrf.mxu0
    %v5287 = vadd.f32 0.0, %v5286
    %v5288 = vand.u32 %v1076, 4294901760
    %v5289 = vsub.f32 %v1076, %v5288
    %v5290 = vand.u32 %v5289, 4294901760
    %v5291 = vsub.f32 %v5289, %v5290
    %v5292 = vand.u32 %v5291, 4294901760
    %5293 = vmatprep.mubr.f32.mxu0 %v5292
    %v5294 = vand.u32 %v1075, 4294901760
    %v5295 = vsub.f32 %v1075, %v5294
    %v5296 = vand.u32 %v5295, 4294901760
    %v5297 = vsub.f32 %v5295, %v5296
    %v5298 = vand.u32 %v5297, 4294901760
    %5299 = vmatmul.mubr.f32.gmra.mxu0 %v5298
    %v5300 = vpop.f32.mrf.mxu0
    %v5301 = vadd.f32 0.0, %v5300
    %v5302 = vpop.f32.mrf.mxu0
    %v5303 = vadd.f32 0.0, %v5302
    %v5304 = vand.u32 %v1079, 4294901760
    %v5305 = vsub.f32 %v1079, %v5304
    %v5306 = vand.u32 %v5305, 4294901760
    %v5307 = vsub.f32 %v5305, %v5306
    %v5308 = vand.u32 %v5307, 4294901760
    %5309 = vmatprep.mubr.f32.mxu0 %v5308
    %v5310 = vand.u32 %v1078, 4294901760
    %v5311 = vsub.f32 %v1078, %v5310
    %v5312 = vand.u32 %v5311, 4294901760
    %v5313 = vsub.f32 %v5311, %v5312
    %v5314 = vand.u32 %v5313, 4294901760
    %5315 = vmatmul.mubr.f32.gmra.mxu0 %v5314
    %v5316 = vpop.f32.mrf.mxu0
    %v5317 = vadd.f32 0.0, %v5316
    %v5318 = vpop.f32.mrf.mxu0
    %v5319 = vadd.f32 0.0, %v5318
    %v5320 = vand.u32 %v1082, 4294901760
    %v5321 = vsub.f32 %v1082, %v5320
    %v5322 = vand.u32 %v5321, 4294901760
    %v5323 = vsub.f32 %v5321, %v5322
    %v5324 = vand.u32 %v5323, 4294901760
    %5325 = vmatprep.mubr.f32.mxu0 %v5324
    %v5326 = vand.u32 %v1081, 4294901760
    %v5327 = vsub.f32 %v1081, %v5326
    %v5328 = vand.u32 %v5327, 4294901760
    %v5329 = vsub.f32 %v5327, %v5328
    %v5330 = vand.u32 %v5329, 4294901760
    %5331 = vmatmul.mubr.f32.gmra.mxu0 %v5330
    %v5332 = vpop.f32.mrf.mxu0
    %v5333 = vadd.f32 0.0, %v5332
    %v5334 = vpop.f32.mrf.mxu0
    %v5335 = vadd.f32 0.0, %v5334
    %v5336 = vand.u32 %v1085, 4294901760
    %v5337 = vsub.f32 %v1085, %v5336
    %v5338 = vand.u32 %v5337, 4294901760
    %v5339 = vsub.f32 %v5337, %v5338
    %v5340 = vand.u32 %v5339, 4294901760
    %5341 = vmatprep.mubr.f32.mxu0 %v5340
    %v5342 = vand.u32 %v1084, 4294901760
    %v5343 = vsub.f32 %v1084, %v5342
    %v5344 = vand.u32 %v5343, 4294901760
    %v5345 = vsub.f32 %v5343, %v5344
    %v5346 = vand.u32 %v5345, 4294901760
    %5347 = vmatmul.mubr.f32.gmra.mxu0 %v5346
    %v5348 = vpop.f32.mrf.mxu0
    %v5349 = vadd.f32 0.0, %v5348
    %v5350 = vpop.f32.mrf.mxu0
    %v5351 = vadd.f32 0.0, %v5350
    %v5352 = vand.u32 %v1088, 4294901760
    %v5353 = vsub.f32 %v1088, %v5352
    %v5354 = vand.u32 %v5353, 4294901760
    %v5355 = vsub.f32 %v5353, %v5354
    %v5356 = vand.u32 %v5355, 4294901760
    %5357 = vmatprep.mubr.f32.mxu0 %v5356
    %v5358 = vand.u32 %v1087, 4294901760
    %v5359 = vsub.f32 %v1087, %v5358
    %v5360 = vand.u32 %v5359, 4294901760
    %v5361 = vsub.f32 %v5359, %v5360
    %v5362 = vand.u32 %v5361, 4294901760
    %5363 = vmatmul.mubr.f32.gmra.mxu0 %v5362
    %v5364 = vpop.f32.mrf.mxu0
    %v5365 = vadd.f32 0.0, %v5364
    %v5366 = vpop.f32.mrf.mxu0
    %v5367 = vadd.f32 0.0, %v5366
    %v5368 = vand.u32 %v1091, 4294901760
    %v5369 = vsub.f32 %v1091, %v5368
    %v5370 = vand.u32 %v5369, 4294901760
    %v5371 = vsub.f32 %v5369, %v5370
    %v5372 = vand.u32 %v5371, 4294901760
    %5373 = vmatprep.mubr.f32.mxu0 %v5372
    %v5374 = vand.u32 %v1090, 4294901760
    %v5375 = vsub.f32 %v1090, %v5374
    %v5376 = vand.u32 %v5375, 4294901760
    %v5377 = vsub.f32 %v5375, %v5376
    %v5378 = vand.u32 %v5377, 4294901760
    %5379 = vmatmul.mubr.f32.gmra.mxu0 %v5378
    %v5380 = vpop.f32.mrf.mxu0
    %v5381 = vadd.f32 0.0, %v5380
    %v5382 = vpop.f32.mrf.mxu0
    %v5383 = vadd.f32 0.0, %v5382
    %v5384 = vand.u32 %v1094, 4294901760
    %v5385 = vsub.f32 %v1094, %v5384
    %v5386 = vand.u32 %v5385, 4294901760
    %v5387 = vsub.f32 %v5385, %v5386
    %v5388 = vand.u32 %v5387, 4294901760
    %5389 = vmatprep.mubr.f32.mxu0 %v5388
    %v5390 = vand.u32 %v1093, 4294901760
    %v5391 = vsub.f32 %v1093, %v5390
    %v5392 = vand.u32 %v5391, 4294901760
    %v5393 = vsub.f32 %v5391, %v5392
    %v5394 = vand.u32 %v5393, 4294901760
    %5395 = vmatmul.mubr.f32.gmra.mxu0 %v5394
    %v5396 = vpop.f32.mrf.mxu0
    %v5397 = vadd.f32 0.0, %v5396
    %v5398 = vpop.f32.mrf.mxu0
    %v5399 = vadd.f32 0.0, %v5398
    %v5400 = vand.u32 %v1097, 4294901760
    %v5401 = vsub.f32 %v1097, %v5400
    %v5402 = vand.u32 %v5401, 4294901760
    %v5403 = vsub.f32 %v5401, %v5402
    %v5404 = vand.u32 %v5403, 4294901760
    %5405 = vmatprep.mubr.f32.mxu0 %v5404
    %v5406 = vand.u32 %v1096, 4294901760
    %v5407 = vsub.f32 %v1096, %v5406
    %v5408 = vand.u32 %v5407, 4294901760
    %v5409 = vsub.f32 %v5407, %v5408
    %v5410 = vand.u32 %v5409, 4294901760
    %5411 = vmatmul.mubr.f32.gmra.mxu0 %v5410
    %v5412 = vpop.f32.mrf.mxu0
    %v5413 = vadd.f32 0.0, %v5412
    %v5414 = vpop.f32.mrf.mxu0
    %v5415 = vadd.f32 0.0, %v5414
    %v5416 = vand.u32 %v1100, 4294901760
    %v5417 = vsub.f32 %v1100, %v5416
    %v5418 = vand.u32 %v5417, 4294901760
    %v5419 = vsub.f32 %v5417, %v5418
    %v5420 = vand.u32 %v5419, 4294901760
    %5421 = vmatprep.mubr.f32.mxu0 %v5420
    %v5422 = vand.u32 %v1099, 4294901760
    %v5423 = vsub.f32 %v1099, %v5422
    %v5424 = vand.u32 %v5423, 4294901760
    %v5425 = vsub.f32 %v5423, %v5424
    %v5426 = vand.u32 %v5425, 4294901760
    %5427 = vmatmul.mubr.f32.gmra.mxu0 %v5426
    %v5428 = vpop.f32.mrf.mxu0
    %v5429 = vadd.f32 0.0, %v5428
    %v5430 = vpop.f32.mrf.mxu0
    %v5431 = vadd.f32 0.0, %v5430
    %v5432 = vand.u32 %v1103, 4294901760
    %v5433 = vsub.f32 %v1103, %v5432
    %v5434 = vand.u32 %v5433, 4294901760
    %v5435 = vsub.f32 %v5433, %v5434
    %v5436 = vand.u32 %v5435, 4294901760
    %5437 = vmatprep.mubr.f32.mxu0 %v5436
    %v5438 = vand.u32 %v1102, 4294901760
    %v5439 = vsub.f32 %v1102, %v5438
    %v5440 = vand.u32 %v5439, 4294901760
    %v5441 = vsub.f32 %v5439, %v5440
    %v5442 = vand.u32 %v5441, 4294901760
    %5443 = vmatmul.mubr.f32.gmra.mxu0 %v5442
    %v5444 = vpop.f32.mrf.mxu0
    %v5445 = vadd.f32 0.0, %v5444
    %v5446 = vpop.f32.mrf.mxu0
    %v5447 = vadd.f32 0.0, %v5446
    %v5448 = vand.u32 %v1106, 4294901760
    %v5449 = vsub.f32 %v1106, %v5448
    %v5450 = vand.u32 %v5449, 4294901760
    %v5451 = vsub.f32 %v5449, %v5450
    %v5452 = vand.u32 %v5451, 4294901760
    %5453 = vmatprep.mubr.f32.mxu0 %v5452
    %v5454 = vand.u32 %v1105, 4294901760
    %v5455 = vsub.f32 %v1105, %v5454
    %v5456 = vand.u32 %v5455, 4294901760
    %v5457 = vsub.f32 %v5455, %v5456
    %v5458 = vand.u32 %v5457, 4294901760
    %5459 = vmatmul.mubr.f32.gmra.mxu0 %v5458
    %v5460 = vpop.f32.mrf.mxu0
    %v5461 = vadd.f32 0.0, %v5460
    %v5462 = vpop.f32.mrf.mxu0
    %v5463 = vadd.f32 0.0, %v5462
    %v5464 = vand.u32 %v1109, 4294901760
    %v5465 = vsub.f32 %v1109, %v5464
    %v5466 = vand.u32 %v5465, 4294901760
    %v5467 = vsub.f32 %v5465, %v5466
    %v5468 = vand.u32 %v5467, 4294901760
    %5469 = vmatprep.mubr.f32.mxu0 %v5468
    %v5470 = vand.u32 %v1108, 4294901760
    %v5471 = vsub.f32 %v1108, %v5470
    %v5472 = vand.u32 %v5471, 4294901760
    %v5473 = vsub.f32 %v5471, %v5472
    %v5474 = vand.u32 %v5473, 4294901760
    %5475 = vmatmul.mubr.f32.gmra.mxu0 %v5474
    %v5476 = vpop.f32.mrf.mxu0
    %v5477 = vadd.f32 0.0, %v5476
    %v5478 = vpop.f32.mrf.mxu0
    %v5479 = vadd.f32 0.0, %v5478
    %5480 = vdwg.mxu0
    %v5481 = vand.u32 %v1174, 4294901760
    %v5482 = vsub.f32 %v1174, %v5481
    %v5483 = vand.u32 %v5482, 4294901760
    %v5484 = vsub.f32 %v5482, %v5483
    %v5485 = vand.u32 %v5484, 4294901760
    %5486 = vmatprep.subr.mxu0 %v5485
    %v5487 = vand.u32 %v1173, 4294901760
    %v5488 = vsub.f32 %v1173, %v5487
    %v5489 = vand.u32 %v5488, 4294901760
    %v5490 = vsub.f32 %v5488, %v5489
    %v5491 = vand.u32 %v5490, 4294901760
    %5492 = vmatpush1.msra.mxu0 %v5491
    %v5493 = vand.u32 %v1170, 4294901760
    %v5494 = vsub.f32 %v1170, %v5493
    %v5495 = vand.u32 %v5494, 4294901760
    %v5496 = vsub.f32 %v5494, %v5495
    %v5497 = vand.u32 %v5496, 4294901760
    %5498 = vmatprep.subr.mxu0 %v5497
    %v5499 = vand.u32 %v1169, 4294901760
    %v5500 = vsub.f32 %v1169, %v5499
    %v5501 = vand.u32 %v5500, 4294901760
    %v5502 = vsub.f32 %v5500, %v5501
    %v5503 = vand.u32 %v5502, 4294901760
    %5504 = vmatpush1.msra.mxu0 %v5503
    %v5505 = vand.u32 %v1166, 4294901760
    %v5506 = vsub.f32 %v1166, %v5505
    %v5507 = vand.u32 %v5506, 4294901760
    %v5508 = vsub.f32 %v5506, %v5507
    %v5509 = vand.u32 %v5508, 4294901760
    %5510 = vmatprep.subr.mxu0 %v5509
    %v5511 = vand.u32 %v1165, 4294901760
    %v5512 = vsub.f32 %v1165, %v5511
    %v5513 = vand.u32 %v5512, 4294901760
    %v5514 = vsub.f32 %v5512, %v5513
    %v5515 = vand.u32 %v5514, 4294901760
    %5516 = vmatpush1.msra.mxu0 %v5515
    %v5517 = vand.u32 %v1162, 4294901760
    %v5518 = vsub.f32 %v1162, %v5517
    %v5519 = vand.u32 %v5518, 4294901760
    %v5520 = vsub.f32 %v5518, %v5519
    %v5521 = vand.u32 %v5520, 4294901760
    %5522 = vmatprep.subr.mxu0 %v5521
    %v5523 = vand.u32 %v1161, 4294901760
    %v5524 = vsub.f32 %v1161, %v5523
    %v5525 = vand.u32 %v5524, 4294901760
    %v5526 = vsub.f32 %v5524, %v5525
    %v5527 = vand.u32 %v5526, 4294901760
    %5528 = vmatpush1.msra.mxu0 %v5527
    %v5529 = vand.u32 %v1158, 4294901760
    %v5530 = vsub.f32 %v1158, %v5529
    %v5531 = vand.u32 %v5530, 4294901760
    %v5532 = vsub.f32 %v5530, %v5531
    %v5533 = vand.u32 %v5532, 4294901760
    %5534 = vmatprep.subr.mxu0 %v5533
    %v5535 = vand.u32 %v1157, 4294901760
    %v5536 = vsub.f32 %v1157, %v5535
    %v5537 = vand.u32 %v5536, 4294901760
    %v5538 = vsub.f32 %v5536, %v5537
    %v5539 = vand.u32 %v5538, 4294901760
    %5540 = vmatpush1.msra.mxu0 %v5539
    %v5541 = vand.u32 %v1154, 4294901760
    %v5542 = vsub.f32 %v1154, %v5541
    %v5543 = vand.u32 %v5542, 4294901760
    %v5544 = vsub.f32 %v5542, %v5543
    %v5545 = vand.u32 %v5544, 4294901760
    %5546 = vmatprep.subr.mxu0 %v5545
    %v5547 = vand.u32 %v1153, 4294901760
    %v5548 = vsub.f32 %v1153, %v5547
    %v5549 = vand.u32 %v5548, 4294901760
    %v5550 = vsub.f32 %v5548, %v5549
    %v5551 = vand.u32 %v5550, 4294901760
    %5552 = vmatpush1.msra.mxu0 %v5551
    %v5553 = vand.u32 %v1150, 4294901760
    %v5554 = vsub.f32 %v1150, %v5553
    %v5555 = vand.u32 %v5554, 4294901760
    %v5556 = vsub.f32 %v5554, %v5555
    %v5557 = vand.u32 %v5556, 4294901760
    %5558 = vmatprep.subr.mxu0 %v5557
    %v5559 = vand.u32 %v1149, 4294901760
    %v5560 = vsub.f32 %v1149, %v5559
    %v5561 = vand.u32 %v5560, 4294901760
    %v5562 = vsub.f32 %v5560, %v5561
    %v5563 = vand.u32 %v5562, 4294901760
    %5564 = vmatpush1.msra.mxu0 %v5563
    %v5565 = vand.u32 %v1146, 4294901760
    %v5566 = vsub.f32 %v1146, %v5565
    %v5567 = vand.u32 %v5566, 4294901760
    %v5568 = vsub.f32 %v5566, %v5567
    %v5569 = vand.u32 %v5568, 4294901760
    %5570 = vmatprep.subr.mxu0 %v5569
    %v5571 = vand.u32 %v1145, 4294901760
    %v5572 = vsub.f32 %v1145, %v5571
    %v5573 = vand.u32 %v5572, 4294901760
    %v5574 = vsub.f32 %v5572, %v5573
    %v5575 = vand.u32 %v5574, 4294901760
    %5576 = vmatpush1.msra.mxu0 %v5575
    %v5577 = vand.u32 %v1142, 4294901760
    %v5578 = vsub.f32 %v1142, %v5577
    %v5579 = vand.u32 %v5578, 4294901760
    %v5580 = vsub.f32 %v5578, %v5579
    %v5581 = vand.u32 %v5580, 4294901760
    %5582 = vmatprep.subr.mxu0 %v5581
    %v5583 = vand.u32 %v1141, 4294901760
    %v5584 = vsub.f32 %v1141, %v5583
    %v5585 = vand.u32 %v5584, 4294901760
    %v5586 = vsub.f32 %v5584, %v5585
    %v5587 = vand.u32 %v5586, 4294901760
    %5588 = vmatpush1.msra.mxu0 %v5587
    %v5589 = vand.u32 %v1138, 4294901760
    %v5590 = vsub.f32 %v1138, %v5589
    %v5591 = vand.u32 %v5590, 4294901760
    %v5592 = vsub.f32 %v5590, %v5591
    %v5593 = vand.u32 %v5592, 4294901760
    %5594 = vmatprep.subr.mxu0 %v5593
    %v5595 = vand.u32 %v1137, 4294901760
    %v5596 = vsub.f32 %v1137, %v5595
    %v5597 = vand.u32 %v5596, 4294901760
    %v5598 = vsub.f32 %v5596, %v5597
    %v5599 = vand.u32 %v5598, 4294901760
    %5600 = vmatpush1.msra.mxu0 %v5599
    %v5601 = vand.u32 %v1134, 4294901760
    %v5602 = vsub.f32 %v1134, %v5601
    %v5603 = vand.u32 %v5602, 4294901760
    %v5604 = vsub.f32 %v5602, %v5603
    %v5605 = vand.u32 %v5604, 4294901760
    %5606 = vmatprep.subr.mxu0 %v5605
    %v5607 = vand.u32 %v1133, 4294901760
    %v5608 = vsub.f32 %v1133, %v5607
    %v5609 = vand.u32 %v5608, 4294901760
    %v5610 = vsub.f32 %v5608, %v5609
    %v5611 = vand.u32 %v5610, 4294901760
    %5612 = vmatpush1.msra.mxu0 %v5611
    %v5613 = vand.u32 %v1130, 4294901760
    %v5614 = vsub.f32 %v1130, %v5613
    %v5615 = vand.u32 %v5614, 4294901760
    %v5616 = vsub.f32 %v5614, %v5615
    %v5617 = vand.u32 %v5616, 4294901760
    %5618 = vmatprep.subr.mxu0 %v5617
    %v5619 = vand.u32 %v1129, 4294901760
    %v5620 = vsub.f32 %v1129, %v5619
    %v5621 = vand.u32 %v5620, 4294901760
    %v5622 = vsub.f32 %v5620, %v5621
    %v5623 = vand.u32 %v5622, 4294901760
    %5624 = vmatpush1.msra.mxu0 %v5623
    %v5625 = vand.u32 %v1126, 4294901760
    %v5626 = vsub.f32 %v1126, %v5625
    %v5627 = vand.u32 %v5626, 4294901760
    %v5628 = vsub.f32 %v5626, %v5627
    %v5629 = vand.u32 %v5628, 4294901760
    %5630 = vmatprep.subr.mxu0 %v5629
    %v5631 = vand.u32 %v1125, 4294901760
    %v5632 = vsub.f32 %v1125, %v5631
    %v5633 = vand.u32 %v5632, 4294901760
    %v5634 = vsub.f32 %v5632, %v5633
    %v5635 = vand.u32 %v5634, 4294901760
    %5636 = vmatpush1.msra.mxu0 %v5635
    %v5637 = vand.u32 %v1122, 4294901760
    %v5638 = vsub.f32 %v1122, %v5637
    %v5639 = vand.u32 %v5638, 4294901760
    %v5640 = vsub.f32 %v5638, %v5639
    %v5641 = vand.u32 %v5640, 4294901760
    %5642 = vmatprep.subr.mxu0 %v5641
    %v5643 = vand.u32 %v1121, 4294901760
    %v5644 = vsub.f32 %v1121, %v5643
    %v5645 = vand.u32 %v5644, 4294901760
    %v5646 = vsub.f32 %v5644, %v5645
    %v5647 = vand.u32 %v5646, 4294901760
    %5648 = vmatpush1.msra.mxu0 %v5647
    %v5649 = vand.u32 %v1118, 4294901760
    %v5650 = vsub.f32 %v1118, %v5649
    %v5651 = vand.u32 %v5650, 4294901760
    %v5652 = vsub.f32 %v5650, %v5651
    %v5653 = vand.u32 %v5652, 4294901760
    %5654 = vmatprep.subr.mxu0 %v5653
    %v5655 = vand.u32 %v1117, 4294901760
    %v5656 = vsub.f32 %v1117, %v5655
    %v5657 = vand.u32 %v5656, 4294901760
    %v5658 = vsub.f32 %v5656, %v5657
    %v5659 = vand.u32 %v5658, 4294901760
    %5660 = vmatpush1.msra.mxu0 %v5659
    %v5661 = vand.u32 %v1114, 4294901760
    %v5662 = vsub.f32 %v1114, %v5661
    %v5663 = vand.u32 %v5662, 4294901760
    %v5664 = vsub.f32 %v5662, %v5663
    %v5665 = vand.u32 %v5664, 4294901760
    %5666 = vmatprep.subr.mxu0 %v5665
    %v5667 = vand.u32 %v1113, 4294901760
    %v5668 = vsub.f32 %v1113, %v5667
    %v5669 = vand.u32 %v5668, 4294901760
    %v5670 = vsub.f32 %v5668, %v5669
    %v5671 = vand.u32 %v5670, 4294901760
    %5672 = vmatpush1.msra.mxu0 %v5671
    %v5673 = vand.u32 %v1238, 4294901760
    %v5674 = vsub.f32 %v1238, %v5673
    %v5675 = vand.u32 %v5674, 4294901760
    %v5676 = vsub.f32 %v5674, %v5675
    %v5677 = vand.u32 %v5676, 4294901760
    %5678 = vmatprep.subr.mxu0 %v5677
    %v5679 = vand.u32 %v1237, 4294901760
    %v5680 = vsub.f32 %v1237, %v5679
    %v5681 = vand.u32 %v5680, 4294901760
    %v5682 = vsub.f32 %v5680, %v5681
    %v5683 = vand.u32 %v5682, 4294901760
    %5684 = vmatpush2.msra.mxu0 %v5683
    %v5685 = vand.u32 %v1234, 4294901760
    %v5686 = vsub.f32 %v1234, %v5685
    %v5687 = vand.u32 %v5686, 4294901760
    %v5688 = vsub.f32 %v5686, %v5687
    %v5689 = vand.u32 %v5688, 4294901760
    %5690 = vmatprep.subr.mxu0 %v5689
    %v5691 = vand.u32 %v1233, 4294901760
    %v5692 = vsub.f32 %v1233, %v5691
    %v5693 = vand.u32 %v5692, 4294901760
    %v5694 = vsub.f32 %v5692, %v5693
    %v5695 = vand.u32 %v5694, 4294901760
    %5696 = vmatpush2.msra.mxu0 %v5695
    %v5697 = vand.u32 %v1230, 4294901760
    %v5698 = vsub.f32 %v1230, %v5697
    %v5699 = vand.u32 %v5698, 4294901760
    %v5700 = vsub.f32 %v5698, %v5699
    %v5701 = vand.u32 %v5700, 4294901760
    %5702 = vmatprep.subr.mxu0 %v5701
    %v5703 = vand.u32 %v1229, 4294901760
    %v5704 = vsub.f32 %v1229, %v5703
    %v5705 = vand.u32 %v5704, 4294901760
    %v5706 = vsub.f32 %v5704, %v5705
    %v5707 = vand.u32 %v5706, 4294901760
    %5708 = vmatpush2.msra.mxu0 %v5707
    %v5709 = vand.u32 %v1226, 4294901760
    %v5710 = vsub.f32 %v1226, %v5709
    %v5711 = vand.u32 %v5710, 4294901760
    %v5712 = vsub.f32 %v5710, %v5711
    %v5713 = vand.u32 %v5712, 4294901760
    %5714 = vmatprep.subr.mxu0 %v5713
    %v5715 = vand.u32 %v1225, 4294901760
    %v5716 = vsub.f32 %v1225, %v5715
    %v5717 = vand.u32 %v5716, 4294901760
    %v5718 = vsub.f32 %v5716, %v5717
    %v5719 = vand.u32 %v5718, 4294901760
    %5720 = vmatpush2.msra.mxu0 %v5719
    %v5721 = vand.u32 %v1222, 4294901760
    %v5722 = vsub.f32 %v1222, %v5721
    %v5723 = vand.u32 %v5722, 4294901760
    %v5724 = vsub.f32 %v5722, %v5723
    %v5725 = vand.u32 %v5724, 4294901760
    %5726 = vmatprep.subr.mxu0 %v5725
    %v5727 = vand.u32 %v1221, 4294901760
    %v5728 = vsub.f32 %v1221, %v5727
    %v5729 = vand.u32 %v5728, 4294901760
    %v5730 = vsub.f32 %v5728, %v5729
    %v5731 = vand.u32 %v5730, 4294901760
    %5732 = vmatpush2.msra.mxu0 %v5731
    %v5733 = vand.u32 %v1218, 4294901760
    %v5734 = vsub.f32 %v1218, %v5733
    %v5735 = vand.u32 %v5734, 4294901760
    %v5736 = vsub.f32 %v5734, %v5735
    %v5737 = vand.u32 %v5736, 4294901760
    %5738 = vmatprep.subr.mxu0 %v5737
    %v5739 = vand.u32 %v1217, 4294901760
    %v5740 = vsub.f32 %v1217, %v5739
    %v5741 = vand.u32 %v5740, 4294901760
    %v5742 = vsub.f32 %v5740, %v5741
    %v5743 = vand.u32 %v5742, 4294901760
    %5744 = vmatpush2.msra.mxu0 %v5743
    %v5745 = vand.u32 %v1214, 4294901760
    %v5746 = vsub.f32 %v1214, %v5745
    %v5747 = vand.u32 %v5746, 4294901760
    %v5748 = vsub.f32 %v5746, %v5747
    %v5749 = vand.u32 %v5748, 4294901760
    %5750 = vmatprep.subr.mxu0 %v5749
    %v5751 = vand.u32 %v1213, 4294901760
    %v5752 = vsub.f32 %v1213, %v5751
    %v5753 = vand.u32 %v5752, 4294901760
    %v5754 = vsub.f32 %v5752, %v5753
    %v5755 = vand.u32 %v5754, 4294901760
    %5756 = vmatpush2.msra.mxu0 %v5755
    %v5757 = vand.u32 %v1210, 4294901760
    %v5758 = vsub.f32 %v1210, %v5757
    %v5759 = vand.u32 %v5758, 4294901760
    %v5760 = vsub.f32 %v5758, %v5759
    %v5761 = vand.u32 %v5760, 4294901760
    %5762 = vmatprep.subr.mxu0 %v5761
    %v5763 = vand.u32 %v1209, 4294901760
    %v5764 = vsub.f32 %v1209, %v5763
    %v5765 = vand.u32 %v5764, 4294901760
    %v5766 = vsub.f32 %v5764, %v5765
    %v5767 = vand.u32 %v5766, 4294901760
    %5768 = vmatpush2.msra.mxu0 %v5767
    %v5769 = vand.u32 %v1206, 4294901760
    %v5770 = vsub.f32 %v1206, %v5769
    %v5771 = vand.u32 %v5770, 4294901760
    %v5772 = vsub.f32 %v5770, %v5771
    %v5773 = vand.u32 %v5772, 4294901760
    %5774 = vmatprep.subr.mxu0 %v5773
    %v5775 = vand.u32 %v1205, 4294901760
    %v5776 = vsub.f32 %v1205, %v5775
    %v5777 = vand.u32 %v5776, 4294901760
    %v5778 = vsub.f32 %v5776, %v5777
    %v5779 = vand.u32 %v5778, 4294901760
    %5780 = vmatpush2.msra.mxu0 %v5779
    %v5781 = vand.u32 %v1202, 4294901760
    %v5782 = vsub.f32 %v1202, %v5781
    %v5783 = vand.u32 %v5782, 4294901760
    %v5784 = vsub.f32 %v5782, %v5783
    %v5785 = vand.u32 %v5784, 4294901760
    %5786 = vmatprep.subr.mxu0 %v5785
    %v5787 = vand.u32 %v1201, 4294901760
    %v5788 = vsub.f32 %v1201, %v5787
    %v5789 = vand.u32 %v5788, 4294901760
    %v5790 = vsub.f32 %v5788, %v5789
    %v5791 = vand.u32 %v5790, 4294901760
    %5792 = vmatpush2.msra.mxu0 %v5791
    %v5793 = vand.u32 %v1198, 4294901760
    %v5794 = vsub.f32 %v1198, %v5793
    %v5795 = vand.u32 %v5794, 4294901760
    %v5796 = vsub.f32 %v5794, %v5795
    %v5797 = vand.u32 %v5796, 4294901760
    %5798 = vmatprep.subr.mxu0 %v5797
    %v5799 = vand.u32 %v1197, 4294901760
    %v5800 = vsub.f32 %v1197, %v5799
    %v5801 = vand.u32 %v5800, 4294901760
    %v5802 = vsub.f32 %v5800, %v5801
    %v5803 = vand.u32 %v5802, 4294901760
    %5804 = vmatpush2.msra.mxu0 %v5803
    %v5805 = vand.u32 %v1194, 4294901760
    %v5806 = vsub.f32 %v1194, %v5805
    %v5807 = vand.u32 %v5806, 4294901760
    %v5808 = vsub.f32 %v5806, %v5807
    %v5809 = vand.u32 %v5808, 4294901760
    %5810 = vmatprep.subr.mxu0 %v5809
    %v5811 = vand.u32 %v1193, 4294901760
    %v5812 = vsub.f32 %v1193, %v5811
    %v5813 = vand.u32 %v5812, 4294901760
    %v5814 = vsub.f32 %v5812, %v5813
    %v5815 = vand.u32 %v5814, 4294901760
    %5816 = vmatpush2.msra.mxu0 %v5815
    %v5817 = vand.u32 %v1190, 4294901760
    %v5818 = vsub.f32 %v1190, %v5817
    %v5819 = vand.u32 %v5818, 4294901760
    %v5820 = vsub.f32 %v5818, %v5819
    %v5821 = vand.u32 %v5820, 4294901760
    %5822 = vmatprep.subr.mxu0 %v5821
    %v5823 = vand.u32 %v1189, 4294901760
    %v5824 = vsub.f32 %v1189, %v5823
    %v5825 = vand.u32 %v5824, 4294901760
    %v5826 = vsub.f32 %v5824, %v5825
    %v5827 = vand.u32 %v5826, 4294901760
    %5828 = vmatpush2.msra.mxu0 %v5827
    %v5829 = vand.u32 %v1186, 4294901760
    %v5830 = vsub.f32 %v1186, %v5829
    %v5831 = vand.u32 %v5830, 4294901760
    %v5832 = vsub.f32 %v5830, %v5831
    %v5833 = vand.u32 %v5832, 4294901760
    %5834 = vmatprep.subr.mxu0 %v5833
    %v5835 = vand.u32 %v1185, 4294901760
    %v5836 = vsub.f32 %v1185, %v5835
    %v5837 = vand.u32 %v5836, 4294901760
    %v5838 = vsub.f32 %v5836, %v5837
    %v5839 = vand.u32 %v5838, 4294901760
    %5840 = vmatpush2.msra.mxu0 %v5839
    %v5841 = vand.u32 %v1182, 4294901760
    %v5842 = vsub.f32 %v1182, %v5841
    %v5843 = vand.u32 %v5842, 4294901760
    %v5844 = vsub.f32 %v5842, %v5843
    %v5845 = vand.u32 %v5844, 4294901760
    %5846 = vmatprep.subr.mxu0 %v5845
    %v5847 = vand.u32 %v1181, 4294901760
    %v5848 = vsub.f32 %v1181, %v5847
    %v5849 = vand.u32 %v5848, 4294901760
    %v5850 = vsub.f32 %v5848, %v5849
    %v5851 = vand.u32 %v5850, 4294901760
    %5852 = vmatpush2.msra.mxu0 %v5851
    %v5853 = vand.u32 %v1178, 4294901760
    %v5854 = vsub.f32 %v1178, %v5853
    %v5855 = vand.u32 %v5854, 4294901760
    %v5856 = vsub.f32 %v5854, %v5855
    %v5857 = vand.u32 %v5856, 4294901760
    %5858 = vmatprep.subr.mxu0 %v5857
    %v5859 = vand.u32 %v1177, 4294901760
    %v5860 = vsub.f32 %v1177, %v5859
    %v5861 = vand.u32 %v5860, 4294901760
    %v5862 = vsub.f32 %v5860, %v5861
    %v5863 = vand.u32 %v5862, 4294901760
    %5864 = vmatpush2.msra.mxu0 %v5863
    %v5865 = vand.u32 %v1064, 4294901760
    %5866 = vmatprep.mubr.f32.mxu0 %v5865
    %v5867 = vand.u32 %v1063, 4294901760
    %5868 = vmatmul.mubr.f32.gmra.mxu0 %v5867
    %v5869 = vpop.f32.mrf.mxu0
    %v5870 = vadd.f32 %v5237, %v5869
    %v5871 = vpop.f32.mrf.mxu0
    %v5872 = vadd.f32 %v5239, %v5871
    %v5873 = vand.u32 %v1067, 4294901760
    %5874 = vmatprep.mubr.f32.mxu0 %v5873
    %v5875 = vand.u32 %v1066, 4294901760
    %5876 = vmatmul.mubr.f32.gmra.mxu0 %v5875
    %v5877 = vpop.f32.mrf.mxu0
    %v5878 = vadd.f32 %v5253, %v5877
    %v5879 = vpop.f32.mrf.mxu0
    %v5880 = vadd.f32 %v5255, %v5879
    %v5881 = vand.u32 %v1070, 4294901760
    %5882 = vmatprep.mubr.f32.mxu0 %v5881
    %v5883 = vand.u32 %v1069, 4294901760
    %5884 = vmatmul.mubr.f32.gmra.mxu0 %v5883
    %v5885 = vpop.f32.mrf.mxu0
    %v5886 = vadd.f32 %v5269, %v5885
    %v5887 = vpop.f32.mrf.mxu0
    %v5888 = vadd.f32 %v5271, %v5887
    %v5889 = vand.u32 %v1073, 4294901760
    %5890 = vmatprep.mubr.f32.mxu0 %v5889
    %v5891 = vand.u32 %v1072, 4294901760
    %5892 = vmatmul.mubr.f32.gmra.mxu0 %v5891
    %v5893 = vpop.f32.mrf.mxu0
    %v5894 = vadd.f32 %v5285, %v5893
    %v5895 = vpop.f32.mrf.mxu0
    %v5896 = vadd.f32 %v5287, %v5895
    %v5897 = vand.u32 %v1076, 4294901760
    %5898 = vmatprep.mubr.f32.mxu0 %v5897
    %v5899 = vand.u32 %v1075, 4294901760
    %5900 = vmatmul.mubr.f32.gmra.mxu0 %v5899
    %v5901 = vpop.f32.mrf.mxu0
    %v5902 = vadd.f32 %v5301, %v5901
    %v5903 = vpop.f32.mrf.mxu0
    %v5904 = vadd.f32 %v5303, %v5903
    %v5905 = vand.u32 %v1079, 4294901760
    %5906 = vmatprep.mubr.f32.mxu0 %v5905
    %v5907 = vand.u32 %v1078, 4294901760
    %5908 = vmatmul.mubr.f32.gmra.mxu0 %v5907
    %v5909 = vpop.f32.mrf.mxu0
    %v5910 = vadd.f32 %v5317, %v5909
    %v5911 = vpop.f32.mrf.mxu0
    %v5912 = vadd.f32 %v5319, %v5911
    %v5913 = vand.u32 %v1082, 4294901760
    %5914 = vmatprep.mubr.f32.mxu0 %v5913
    %v5915 = vand.u32 %v1081, 4294901760
    %5916 = vmatmul.mubr.f32.gmra.mxu0 %v5915
    %v5917 = vpop.f32.mrf.mxu0
    %v5918 = vadd.f32 %v5333, %v5917
    %v5919 = vpop.f32.mrf.mxu0
    %v5920 = vadd.f32 %v5335, %v5919
    %v5921 = vand.u32 %v1085, 4294901760
    %5922 = vmatprep.mubr.f32.mxu0 %v5921
    %v5923 = vand.u32 %v1084, 4294901760
    %5924 = vmatmul.mubr.f32.gmra.mxu0 %v5923
    %v5925 = vpop.f32.mrf.mxu0
    %v5926 = vadd.f32 %v5349, %v5925
    %v5927 = vpop.f32.mrf.mxu0
    %v5928 = vadd.f32 %v5351, %v5927
    %v5929 = vand.u32 %v1088, 4294901760
    %5930 = vmatprep.mubr.f32.mxu0 %v5929
    %v5931 = vand.u32 %v1087, 4294901760
    %5932 = vmatmul.mubr.f32.gmra.mxu0 %v5931
    %v5933 = vpop.f32.mrf.mxu0
    %v5934 = vadd.f32 %v5365, %v5933
    %v5935 = vpop.f32.mrf.mxu0
    %v5936 = vadd.f32 %v5367, %v5935
    %v5937 = vand.u32 %v1091, 4294901760
    %5938 = vmatprep.mubr.f32.mxu0 %v5937
    %v5939 = vand.u32 %v1090, 4294901760
    %5940 = vmatmul.mubr.f32.gmra.mxu0 %v5939
    %v5941 = vpop.f32.mrf.mxu0
    %v5942 = vadd.f32 %v5381, %v5941
    %v5943 = vpop.f32.mrf.mxu0
    %v5944 = vadd.f32 %v5383, %v5943
    %v5945 = vand.u32 %v1094, 4294901760
    %5946 = vmatprep.mubr.f32.mxu0 %v5945
    %v5947 = vand.u32 %v1093, 4294901760
    %5948 = vmatmul.mubr.f32.gmra.mxu0 %v5947
    %v5949 = vpop.f32.mrf.mxu0
    %v5950 = vadd.f32 %v5397, %v5949
    %v5951 = vpop.f32.mrf.mxu0
    %v5952 = vadd.f32 %v5399, %v5951
    %v5953 = vand.u32 %v1097, 4294901760
    %5954 = vmatprep.mubr.f32.mxu0 %v5953
    %v5955 = vand.u32 %v1096, 4294901760
    %5956 = vmatmul.mubr.f32.gmra.mxu0 %v5955
    %v5957 = vpop.f32.mrf.mxu0
    %v5958 = vadd.f32 %v5413, %v5957
    %v5959 = vpop.f32.mrf.mxu0
    %v5960 = vadd.f32 %v5415, %v5959
    %v5961 = vand.u32 %v1100, 4294901760
    %5962 = vmatprep.mubr.f32.mxu0 %v5961
    %v5963 = vand.u32 %v1099, 4294901760
    %5964 = vmatmul.mubr.f32.gmra.mxu0 %v5963
    %v5965 = vpop.f32.mrf.mxu0
    %v5966 = vadd.f32 %v5429, %v5965
    %v5967 = vpop.f32.mrf.mxu0
    %v5968 = vadd.f32 %v5431, %v5967
    %v5969 = vand.u32 %v1103, 4294901760
    %5970 = vmatprep.mubr.f32.mxu0 %v5969
    %v5971 = vand.u32 %v1102, 4294901760
    %5972 = vmatmul.mubr.f32.gmra.mxu0 %v5971
    %v5973 = vpop.f32.mrf.mxu0
    %v5974 = vadd.f32 %v5445, %v5973
    %v5975 = vpop.f32.mrf.mxu0
    %v5976 = vadd.f32 %v5447, %v5975
    %v5977 = vand.u32 %v1106, 4294901760
    %5978 = vmatprep.mubr.f32.mxu0 %v5977
    %v5979 = vand.u32 %v1105, 4294901760
    %5980 = vmatmul.mubr.f32.gmra.mxu0 %v5979
    %v5981 = vpop.f32.mrf.mxu0
    %v5982 = vadd.f32 %v5461, %v5981
    %v5983 = vpop.f32.mrf.mxu0
    %v5984 = vadd.f32 %v5463, %v5983
    %v5985 = vand.u32 %v1109, 4294901760
    %5986 = vmatprep.mubr.f32.mxu0 %v5985
    %v5987 = vand.u32 %v1108, 4294901760
    %5988 = vmatmul.mubr.f32.gmra.mxu0 %v5987
    %v5989 = vpop.f32.mrf.mxu0
    %v5990 = vadd.f32 %v5477, %v5989
    %v5991 = vpop.f32.mrf.mxu0
    %v5992 = vadd.f32 %v5479, %v5991
    %5993 = vdwg.mxu0
    %v5994 = vand.u32 %v1174, 4294901760
    %v5995 = vsub.f32 %v1174, %v5994
    %5996 = vmatprep.subr.mxu0 %v5995
    %v5997 = vand.u32 %v1173, 4294901760
    %v5998 = vsub.f32 %v1173, %v5997
    %5999 = vmatpush1.msra.mxu0 %v5998
    %v6000 = vand.u32 %v1170, 4294901760
    %v6001 = vsub.f32 %v1170, %v6000
    %6002 = vmatprep.subr.mxu0 %v6001
    %v6003 = vand.u32 %v1169, 4294901760
    %v6004 = vsub.f32 %v1169, %v6003
    %6005 = vmatpush1.msra.mxu0 %v6004
    %v6006 = vand.u32 %v1166, 4294901760
    %v6007 = vsub.f32 %v1166, %v6006
    %6008 = vmatprep.subr.mxu0 %v6007
    %v6009 = vand.u32 %v1165, 4294901760
    %v6010 = vsub.f32 %v1165, %v6009
    %6011 = vmatpush1.msra.mxu0 %v6010
    %v6012 = vand.u32 %v1162, 4294901760
    %v6013 = vsub.f32 %v1162, %v6012
    %6014 = vmatprep.subr.mxu0 %v6013
    %v6015 = vand.u32 %v1161, 4294901760
    %v6016 = vsub.f32 %v1161, %v6015
    %6017 = vmatpush1.msra.mxu0 %v6016
    %v6018 = vand.u32 %v1158, 4294901760
    %v6019 = vsub.f32 %v1158, %v6018
    %6020 = vmatprep.subr.mxu0 %v6019
    %v6021 = vand.u32 %v1157, 4294901760
    %v6022 = vsub.f32 %v1157, %v6021
    %6023 = vmatpush1.msra.mxu0 %v6022
    %v6024 = vand.u32 %v1154, 4294901760
    %v6025 = vsub.f32 %v1154, %v6024
    %6026 = vmatprep.subr.mxu0 %v6025
    %v6027 = vand.u32 %v1153, 4294901760
    %v6028 = vsub.f32 %v1153, %v6027
    %6029 = vmatpush1.msra.mxu0 %v6028
    %v6030 = vand.u32 %v1150, 4294901760
    %v6031 = vsub.f32 %v1150, %v6030
    %6032 = vmatprep.subr.mxu0 %v6031
    %v6033 = vand.u32 %v1149, 4294901760
    %v6034 = vsub.f32 %v1149, %v6033
    %6035 = vmatpush1.msra.mxu0 %v6034
    %v6036 = vand.u32 %v1146, 4294901760
    %v6037 = vsub.f32 %v1146, %v6036
    %6038 = vmatprep.subr.mxu0 %v6037
    %v6039 = vand.u32 %v1145, 4294901760
    %v6040 = vsub.f32 %v1145, %v6039
    %6041 = vmatpush1.msra.mxu0 %v6040
    %v6042 = vand.u32 %v1142, 4294901760
    %v6043 = vsub.f32 %v1142, %v6042
    %6044 = vmatprep.subr.mxu0 %v6043
    %v6045 = vand.u32 %v1141, 4294901760
    %v6046 = vsub.f32 %v1141, %v6045
    %6047 = vmatpush1.msra.mxu0 %v6046
    %v6048 = vand.u32 %v1138, 4294901760
    %v6049 = vsub.f32 %v1138, %v6048
    %6050 = vmatprep.subr.mxu0 %v6049
    %v6051 = vand.u32 %v1137, 4294901760
    %v6052 = vsub.f32 %v1137, %v6051
    %6053 = vmatpush1.msra.mxu0 %v6052
    %v6054 = vand.u32 %v1134, 4294901760
    %v6055 = vsub.f32 %v1134, %v6054
    %6056 = vmatprep.subr.mxu0 %v6055
    %v6057 = vand.u32 %v1133, 4294901760
    %v6058 = vsub.f32 %v1133, %v6057
    %6059 = vmatpush1.msra.mxu0 %v6058
    %v6060 = vand.u32 %v1130, 4294901760
    %v6061 = vsub.f32 %v1130, %v6060
    %6062 = vmatprep.subr.mxu0 %v6061
    %v6063 = vand.u32 %v1129, 4294901760
    %v6064 = vsub.f32 %v1129, %v6063
    %6065 = vmatpush1.msra.mxu0 %v6064
    %v6066 = vand.u32 %v1126, 4294901760
    %v6067 = vsub.f32 %v1126, %v6066
    %6068 = vmatprep.subr.mxu0 %v6067
    %v6069 = vand.u32 %v1125, 4294901760
    %v6070 = vsub.f32 %v1125, %v6069
    %6071 = vmatpush1.msra.mxu0 %v6070
    %v6072 = vand.u32 %v1122, 4294901760
    %v6073 = vsub.f32 %v1122, %v6072
    %6074 = vmatprep.subr.mxu0 %v6073
    %v6075 = vand.u32 %v1121, 4294901760
    %v6076 = vsub.f32 %v1121, %v6075
    %6077 = vmatpush1.msra.mxu0 %v6076
    %v6078 = vand.u32 %v1118, 4294901760
    %v6079 = vsub.f32 %v1118, %v6078
    %6080 = vmatprep.subr.mxu0 %v6079
    %v6081 = vand.u32 %v1117, 4294901760
    %v6082 = vsub.f32 %v1117, %v6081
    %6083 = vmatpush1.msra.mxu0 %v6082
    %v6084 = vand.u32 %v1114, 4294901760
    %v6085 = vsub.f32 %v1114, %v6084
    %6086 = vmatprep.subr.mxu0 %v6085
    %v6087 = vand.u32 %v1113, 4294901760
    %v6088 = vsub.f32 %v1113, %v6087
    %6089 = vmatpush1.msra.mxu0 %v6088
    %v6090 = vand.u32 %v1238, 4294901760
    %v6091 = vsub.f32 %v1238, %v6090
    %6092 = vmatprep.subr.mxu0 %v6091
    %v6093 = vand.u32 %v1237, 4294901760
    %v6094 = vsub.f32 %v1237, %v6093
    %6095 = vmatpush2.msra.mxu0 %v6094
    %v6096 = vand.u32 %v1234, 4294901760
    %v6097 = vsub.f32 %v1234, %v6096
    %6098 = vmatprep.subr.mxu0 %v6097
    %v6099 = vand.u32 %v1233, 4294901760
    %v6100 = vsub.f32 %v1233, %v6099
    %6101 = vmatpush2.msra.mxu0 %v6100
    %v6102 = vand.u32 %v1230, 4294901760
    %v6103 = vsub.f32 %v1230, %v6102
    %6104 = vmatprep.subr.mxu0 %v6103
    %v6105 = vand.u32 %v1229, 4294901760
    %v6106 = vsub.f32 %v1229, %v6105
    %6107 = vmatpush2.msra.mxu0 %v6106
    %v6108 = vand.u32 %v1226, 4294901760
    %v6109 = vsub.f32 %v1226, %v6108
    %6110 = vmatprep.subr.mxu0 %v6109
    %v6111 = vand.u32 %v1225, 4294901760
    %v6112 = vsub.f32 %v1225, %v6111
    %6113 = vmatpush2.msra.mxu0 %v6112
    %v6114 = vand.u32 %v1222, 4294901760
    %v6115 = vsub.f32 %v1222, %v6114
    %6116 = vmatprep.subr.mxu0 %v6115
    %v6117 = vand.u32 %v1221, 4294901760
    %v6118 = vsub.f32 %v1221, %v6117
    %6119 = vmatpush2.msra.mxu0 %v6118
    %v6120 = vand.u32 %v1218, 4294901760
    %v6121 = vsub.f32 %v1218, %v6120
    %6122 = vmatprep.subr.mxu0 %v6121
    %v6123 = vand.u32 %v1217, 4294901760
    %v6124 = vsub.f32 %v1217, %v6123
    %6125 = vmatpush2.msra.mxu0 %v6124
    %v6126 = vand.u32 %v1214, 4294901760
    %v6127 = vsub.f32 %v1214, %v6126
    %6128 = vmatprep.subr.mxu0 %v6127
    %v6129 = vand.u32 %v1213, 4294901760
    %v6130 = vsub.f32 %v1213, %v6129
    %6131 = vmatpush2.msra.mxu0 %v6130
    %v6132 = vand.u32 %v1210, 4294901760
    %v6133 = vsub.f32 %v1210, %v6132
    %6134 = vmatprep.subr.mxu0 %v6133
    %v6135 = vand.u32 %v1209, 4294901760
    %v6136 = vsub.f32 %v1209, %v6135
    %6137 = vmatpush2.msra.mxu0 %v6136
    %v6138 = vand.u32 %v1206, 4294901760
    %v6139 = vsub.f32 %v1206, %v6138
    %6140 = vmatprep.subr.mxu0 %v6139
    %v6141 = vand.u32 %v1205, 4294901760
    %v6142 = vsub.f32 %v1205, %v6141
    %6143 = vmatpush2.msra.mxu0 %v6142
    %v6144 = vand.u32 %v1202, 4294901760
    %v6145 = vsub.f32 %v1202, %v6144
    %6146 = vmatprep.subr.mxu0 %v6145
    %v6147 = vand.u32 %v1201, 4294901760
    %v6148 = vsub.f32 %v1201, %v6147
    %6149 = vmatpush2.msra.mxu0 %v6148
    %v6150 = vand.u32 %v1198, 4294901760
    %v6151 = vsub.f32 %v1198, %v6150
    %6152 = vmatprep.subr.mxu0 %v6151
    %v6153 = vand.u32 %v1197, 4294901760
    %v6154 = vsub.f32 %v1197, %v6153
    %6155 = vmatpush2.msra.mxu0 %v6154
    %v6156 = vand.u32 %v1194, 4294901760
    %v6157 = vsub.f32 %v1194, %v6156
    %6158 = vmatprep.subr.mxu0 %v6157
    %v6159 = vand.u32 %v1193, 4294901760
    %v6160 = vsub.f32 %v1193, %v6159
    %6161 = vmatpush2.msra.mxu0 %v6160
    %v6162 = vand.u32 %v1190, 4294901760
    %v6163 = vsub.f32 %v1190, %v6162
    %6164 = vmatprep.subr.mxu0 %v6163
    %v6165 = vand.u32 %v1189, 4294901760
    %v6166 = vsub.f32 %v1189, %v6165
    %6167 = vmatpush2.msra.mxu0 %v6166
    %v6168 = vand.u32 %v1186, 4294901760
    %v6169 = vsub.f32 %v1186, %v6168
    %6170 = vmatprep.subr.mxu0 %v6169
    %v6171 = vand.u32 %v1185, 4294901760
    %v6172 = vsub.f32 %v1185, %v6171
    %6173 = vmatpush2.msra.mxu0 %v6172
    %v6174 = vand.u32 %v1182, 4294901760
    %v6175 = vsub.f32 %v1182, %v6174
    %6176 = vmatprep.subr.mxu0 %v6175
    %v6177 = vand.u32 %v1181, 4294901760
    %v6178 = vsub.f32 %v1181, %v6177
    %6179 = vmatpush2.msra.mxu0 %v6178
    %v6180 = vand.u32 %v1178, 4294901760
    %v6181 = vsub.f32 %v1178, %v6180
    %6182 = vmatprep.subr.mxu0 %v6181
    %v6183 = vand.u32 %v1177, 4294901760
    %v6184 = vsub.f32 %v1177, %v6183
    %6185 = vmatpush2.msra.mxu0 %v6184
    %v6186 = vand.u32 %v1064, 4294901760
    %v6187 = vsub.f32 %v1064, %v6186
    %6188 = vmatprep.mubr.f32.mxu0 %v6187
    %v6189 = vand.u32 %v1063, 4294901760
    %v6190 = vsub.f32 %v1063, %v6189
    %6191 = vmatmul.mubr.f32.gmra.mxu0 %v6190
    %v6192 = vpop.f32.mrf.mxu0
    %v6193 = vadd.f32 %v5870, %v6192
    %v6194 = vpop.f32.mrf.mxu0
    %v6195 = vadd.f32 %v5872, %v6194
    %v6196 = vand.u32 %v1067, 4294901760
    %v6197 = vsub.f32 %v1067, %v6196
    %6198 = vmatprep.mubr.f32.mxu0 %v6197
    %v6199 = vand.u32 %v1066, 4294901760
    %v6200 = vsub.f32 %v1066, %v6199
    %6201 = vmatmul.mubr.f32.gmra.mxu0 %v6200
    %v6202 = vpop.f32.mrf.mxu0
    %v6203 = vadd.f32 %v5878, %v6202
    %v6204 = vpop.f32.mrf.mxu0
    %v6205 = vadd.f32 %v5880, %v6204
    %v6206 = vand.u32 %v1070, 4294901760
    %v6207 = vsub.f32 %v1070, %v6206
    %6208 = vmatprep.mubr.f32.mxu0 %v6207
    %v6209 = vand.u32 %v1069, 4294901760
    %v6210 = vsub.f32 %v1069, %v6209
    %6211 = vmatmul.mubr.f32.gmra.mxu0 %v6210
    %v6212 = vpop.f32.mrf.mxu0
    %v6213 = vadd.f32 %v5886, %v6212
    %v6214 = vpop.f32.mrf.mxu0
    %v6215 = vadd.f32 %v5888, %v6214
    %v6216 = vand.u32 %v1073, 4294901760
    %v6217 = vsub.f32 %v1073, %v6216
    %6218 = vmatprep.mubr.f32.mxu0 %v6217
    %v6219 = vand.u32 %v1072, 4294901760
    %v6220 = vsub.f32 %v1072, %v6219
    %6221 = vmatmul.mubr.f32.gmra.mxu0 %v6220
    %v6222 = vpop.f32.mrf.mxu0
    %v6223 = vadd.f32 %v5894, %v6222
    %v6224 = vpop.f32.mrf.mxu0
    %v6225 = vadd.f32 %v5896, %v6224
    %v6226 = vand.u32 %v1076, 4294901760
    %v6227 = vsub.f32 %v1076, %v6226
    %6228 = vmatprep.mubr.f32.mxu0 %v6227
    %v6229 = vand.u32 %v1075, 4294901760
    %v6230 = vsub.f32 %v1075, %v6229
    %6231 = vmatmul.mubr.f32.gmra.mxu0 %v6230
    %v6232 = vpop.f32.mrf.mxu0
    %v6233 = vadd.f32 %v5902, %v6232
    %v6234 = vpop.f32.mrf.mxu0
    %v6235 = vadd.f32 %v5904, %v6234
    %v6236 = vand.u32 %v1079, 4294901760
    %v6237 = vsub.f32 %v1079, %v6236
    %6238 = vmatprep.mubr.f32.mxu0 %v6237
    %v6239 = vand.u32 %v1078, 4294901760
    %v6240 = vsub.f32 %v1078, %v6239
    %6241 = vmatmul.mubr.f32.gmra.mxu0 %v6240
    %v6242 = vpop.f32.mrf.mxu0
    %v6243 = vadd.f32 %v5910, %v6242
    %v6244 = vpop.f32.mrf.mxu0
    %v6245 = vadd.f32 %v5912, %v6244
    %v6246 = vand.u32 %v1082, 4294901760
    %v6247 = vsub.f32 %v1082, %v6246
    %6248 = vmatprep.mubr.f32.mxu0 %v6247
    %v6249 = vand.u32 %v1081, 4294901760
    %v6250 = vsub.f32 %v1081, %v6249
    %6251 = vmatmul.mubr.f32.gmra.mxu0 %v6250
    %v6252 = vpop.f32.mrf.mxu0
    %v6253 = vadd.f32 %v5918, %v6252
    %v6254 = vpop.f32.mrf.mxu0
    %v6255 = vadd.f32 %v5920, %v6254
    %v6256 = vand.u32 %v1085, 4294901760
    %v6257 = vsub.f32 %v1085, %v6256
    %6258 = vmatprep.mubr.f32.mxu0 %v6257
    %v6259 = vand.u32 %v1084, 4294901760
    %v6260 = vsub.f32 %v1084, %v6259
    %6261 = vmatmul.mubr.f32.gmra.mxu0 %v6260
    %v6262 = vpop.f32.mrf.mxu0
    %v6263 = vadd.f32 %v5926, %v6262
    %v6264 = vpop.f32.mrf.mxu0
    %v6265 = vadd.f32 %v5928, %v6264
    %v6266 = vand.u32 %v1088, 4294901760
    %v6267 = vsub.f32 %v1088, %v6266
    %6268 = vmatprep.mubr.f32.mxu0 %v6267
    %v6269 = vand.u32 %v1087, 4294901760
    %v6270 = vsub.f32 %v1087, %v6269
    %6271 = vmatmul.mubr.f32.gmra.mxu0 %v6270
    %v6272 = vpop.f32.mrf.mxu0
    %v6273 = vadd.f32 %v5934, %v6272
    %v6274 = vpop.f32.mrf.mxu0
    %v6275 = vadd.f32 %v5936, %v6274
    %v6276 = vand.u32 %v1091, 4294901760
    %v6277 = vsub.f32 %v1091, %v6276
    %6278 = vmatprep.mubr.f32.mxu0 %v6277
    %v6279 = vand.u32 %v1090, 4294901760
    %v6280 = vsub.f32 %v1090, %v6279
    %6281 = vmatmul.mubr.f32.gmra.mxu0 %v6280
    %v6282 = vpop.f32.mrf.mxu0
    %v6283 = vadd.f32 %v5942, %v6282
    %v6284 = vpop.f32.mrf.mxu0
    %v6285 = vadd.f32 %v5944, %v6284
    %v6286 = vand.u32 %v1094, 4294901760
    %v6287 = vsub.f32 %v1094, %v6286
    %6288 = vmatprep.mubr.f32.mxu0 %v6287
    %v6289 = vand.u32 %v1093, 4294901760
    %v6290 = vsub.f32 %v1093, %v6289
    %6291 = vmatmul.mubr.f32.gmra.mxu0 %v6290
    %v6292 = vpop.f32.mrf.mxu0
    %v6293 = vadd.f32 %v5950, %v6292
    %v6294 = vpop.f32.mrf.mxu0
    %v6295 = vadd.f32 %v5952, %v6294
    %v6296 = vand.u32 %v1097, 4294901760
    %v6297 = vsub.f32 %v1097, %v6296
    %6298 = vmatprep.mubr.f32.mxu0 %v6297
    %v6299 = vand.u32 %v1096, 4294901760
    %v6300 = vsub.f32 %v1096, %v6299
    %6301 = vmatmul.mubr.f32.gmra.mxu0 %v6300
    %v6302 = vpop.f32.mrf.mxu0
    %v6303 = vadd.f32 %v5958, %v6302
    %v6304 = vpop.f32.mrf.mxu0
    %v6305 = vadd.f32 %v5960, %v6304
    %v6306 = vand.u32 %v1100, 4294901760
    %v6307 = vsub.f32 %v1100, %v6306
    %6308 = vmatprep.mubr.f32.mxu0 %v6307
    %v6309 = vand.u32 %v1099, 4294901760
    %v6310 = vsub.f32 %v1099, %v6309
    %6311 = vmatmul.mubr.f32.gmra.mxu0 %v6310
    %v6312 = vpop.f32.mrf.mxu0
    %v6313 = vadd.f32 %v5966, %v6312
    %v6314 = vpop.f32.mrf.mxu0
    %v6315 = vadd.f32 %v5968, %v6314
    %v6316 = vand.u32 %v1103, 4294901760
    %v6317 = vsub.f32 %v1103, %v6316
    %6318 = vmatprep.mubr.f32.mxu0 %v6317
    %v6319 = vand.u32 %v1102, 4294901760
    %v6320 = vsub.f32 %v1102, %v6319
    %6321 = vmatmul.mubr.f32.gmra.mxu0 %v6320
    %v6322 = vpop.f32.mrf.mxu0
    %v6323 = vadd.f32 %v5974, %v6322
    %v6324 = vpop.f32.mrf.mxu0
    %v6325 = vadd.f32 %v5976, %v6324
    %v6326 = vand.u32 %v1106, 4294901760
    %v6327 = vsub.f32 %v1106, %v6326
    %6328 = vmatprep.mubr.f32.mxu0 %v6327
    %v6329 = vand.u32 %v1105, 4294901760
    %v6330 = vsub.f32 %v1105, %v6329
    %6331 = vmatmul.mubr.f32.gmra.mxu0 %v6330
    %v6332 = vpop.f32.mrf.mxu0
    %v6333 = vadd.f32 %v5982, %v6332
    %v6334 = vpop.f32.mrf.mxu0
    %v6335 = vadd.f32 %v5984, %v6334
    %v6336 = vand.u32 %v1109, 4294901760
    %v6337 = vsub.f32 %v1109, %v6336
    %6338 = vmatprep.mubr.f32.mxu0 %v6337
    %v6339 = vand.u32 %v1108, 4294901760
    %v6340 = vsub.f32 %v1108, %v6339
    %6341 = vmatmul.mubr.f32.gmra.mxu0 %v6340
    %v6342 = vpop.f32.mrf.mxu0
    %v6343 = vadd.f32 %v5990, %v6342
    %v6344 = vpop.f32.mrf.mxu0
    %v6345 = vadd.f32 %v5992, %v6344
    %6346 = vdwg.mxu0
    %v6347 = vand.u32 %v1174, 4294901760
    %6348 = vmatprep.subr.mxu0 %v6347
    %v6349 = vand.u32 %v1173, 4294901760
    %6350 = vmatpush1.msra.mxu0 %v6349
    %v6351 = vand.u32 %v1170, 4294901760
    %6352 = vmatprep.subr.mxu0 %v6351
    %v6353 = vand.u32 %v1169, 4294901760
    %6354 = vmatpush1.msra.mxu0 %v6353
    %v6355 = vand.u32 %v1166, 4294901760
    %6356 = vmatprep.subr.mxu0 %v6355
    %v6357 = vand.u32 %v1165, 4294901760
    %6358 = vmatpush1.msra.mxu0 %v6357
    %v6359 = vand.u32 %v1162, 4294901760
    %6360 = vmatprep.subr.mxu0 %v6359
    %v6361 = vand.u32 %v1161, 4294901760
    %6362 = vmatpush1.msra.mxu0 %v6361
    %v6363 = vand.u32 %v1158, 4294901760
    %6364 = vmatprep.subr.mxu0 %v6363
    %v6365 = vand.u32 %v1157, 4294901760
    %6366 = vmatpush1.msra.mxu0 %v6365
    %v6367 = vand.u32 %v1154, 4294901760
    %6368 = vmatprep.subr.mxu0 %v6367
    %v6369 = vand.u32 %v1153, 4294901760
    %6370 = vmatpush1.msra.mxu0 %v6369
    %v6371 = vand.u32 %v1150, 4294901760
    %6372 = vmatprep.subr.mxu0 %v6371
    %v6373 = vand.u32 %v1149, 4294901760
    %6374 = vmatpush1.msra.mxu0 %v6373
    %v6375 = vand.u32 %v1146, 4294901760
    %6376 = vmatprep.subr.mxu0 %v6375
    %v6377 = vand.u32 %v1145, 4294901760
    %6378 = vmatpush1.msra.mxu0 %v6377
    %v6379 = vand.u32 %v1142, 4294901760
    %6380 = vmatprep.subr.mxu0 %v6379
    %v6381 = vand.u32 %v1141, 4294901760
    %6382 = vmatpush1.msra.mxu0 %v6381
    %v6383 = vand.u32 %v1138, 4294901760
    %6384 = vmatprep.subr.mxu0 %v6383
    %v6385 = vand.u32 %v1137, 4294901760
    %6386 = vmatpush1.msra.mxu0 %v6385
    %v6387 = vand.u32 %v1134, 4294901760
    %6388 = vmatprep.subr.mxu0 %v6387
    %v6389 = vand.u32 %v1133, 4294901760
    %6390 = vmatpush1.msra.mxu0 %v6389
    %v6391 = vand.u32 %v1130, 4294901760
    %6392 = vmatprep.subr.mxu0 %v6391
    %v6393 = vand.u32 %v1129, 4294901760
    %6394 = vmatpush1.msra.mxu0 %v6393
    %v6395 = vand.u32 %v1126, 4294901760
    %6396 = vmatprep.subr.mxu0 %v6395
    %v6397 = vand.u32 %v1125, 4294901760
    %6398 = vmatpush1.msra.mxu0 %v6397
    %v6399 = vand.u32 %v1122, 4294901760
    %6400 = vmatprep.subr.mxu0 %v6399
    %v6401 = vand.u32 %v1121, 4294901760
    %6402 = vmatpush1.msra.mxu0 %v6401
    %v6403 = vand.u32 %v1118, 4294901760
    %6404 = vmatprep.subr.mxu0 %v6403
    %v6405 = vand.u32 %v1117, 4294901760
    %6406 = vmatpush1.msra.mxu0 %v6405
    %v6407 = vand.u32 %v1114, 4294901760
    %6408 = vmatprep.subr.mxu0 %v6407
    %v6409 = vand.u32 %v1113, 4294901760
    %6410 = vmatpush1.msra.mxu0 %v6409
    %v6411 = vand.u32 %v1238, 4294901760
    %6412 = vmatprep.subr.mxu0 %v6411
    %v6413 = vand.u32 %v1237, 4294901760
    %6414 = vmatpush2.msra.mxu0 %v6413
    %v6415 = vand.u32 %v1234, 4294901760
    %6416 = vmatprep.subr.mxu0 %v6415
    %v6417 = vand.u32 %v1233, 4294901760
    %6418 = vmatpush2.msra.mxu0 %v6417
    %v6419 = vand.u32 %v1230, 4294901760
    %6420 = vmatprep.subr.mxu0 %v6419
    %v6421 = vand.u32 %v1229, 4294901760
    %6422 = vmatpush2.msra.mxu0 %v6421
    %v6423 = vand.u32 %v1226, 4294901760
    %6424 = vmatprep.subr.mxu0 %v6423
    %v6425 = vand.u32 %v1225, 4294901760
    %6426 = vmatpush2.msra.mxu0 %v6425
    %v6427 = vand.u32 %v1222, 4294901760
    %6428 = vmatprep.subr.mxu0 %v6427
    %v6429 = vand.u32 %v1221, 4294901760
    %6430 = vmatpush2.msra.mxu0 %v6429
    %v6431 = vand.u32 %v1218, 4294901760
    %6432 = vmatprep.subr.mxu0 %v6431
    %v6433 = vand.u32 %v1217, 4294901760
    %6434 = vmatpush2.msra.mxu0 %v6433
    %v6435 = vand.u32 %v1214, 4294901760
    %6436 = vmatprep.subr.mxu0 %v6435
    %v6437 = vand.u32 %v1213, 4294901760
    %6438 = vmatpush2.msra.mxu0 %v6437
    %v6439 = vand.u32 %v1210, 4294901760
    %6440 = vmatprep.subr.mxu0 %v6439
    %v6441 = vand.u32 %v1209, 4294901760
    %6442 = vmatpush2.msra.mxu0 %v6441
    %v6443 = vand.u32 %v1206, 4294901760
    %6444 = vmatprep.subr.mxu0 %v6443
    %v6445 = vand.u32 %v1205, 4294901760
    %6446 = vmatpush2.msra.mxu0 %v6445
    %v6447 = vand.u32 %v1202, 4294901760
    %6448 = vmatprep.subr.mxu0 %v6447
    %v6449 = vand.u32 %v1201, 4294901760
    %6450 = vmatpush2.msra.mxu0 %v6449
    %v6451 = vand.u32 %v1198, 4294901760
    %6452 = vmatprep.subr.mxu0 %v6451
    %v6453 = vand.u32 %v1197, 4294901760
    %6454 = vmatpush2.msra.mxu0 %v6453
    %v6455 = vand.u32 %v1194, 4294901760
    %6456 = vmatprep.subr.mxu0 %v6455
    %v6457 = vand.u32 %v1193, 4294901760
    %6458 = vmatpush2.msra.mxu0 %v6457
    %v6459 = vand.u32 %v1190, 4294901760
    %6460 = vmatprep.subr.mxu0 %v6459
    %v6461 = vand.u32 %v1189, 4294901760
    %6462 = vmatpush2.msra.mxu0 %v6461
    %v6463 = vand.u32 %v1186, 4294901760
    %6464 = vmatprep.subr.mxu0 %v6463
    %v6465 = vand.u32 %v1185, 4294901760
    %6466 = vmatpush2.msra.mxu0 %v6465
    %v6467 = vand.u32 %v1182, 4294901760
    %6468 = vmatprep.subr.mxu0 %v6467
    %v6469 = vand.u32 %v1181, 4294901760
    %6470 = vmatpush2.msra.mxu0 %v6469
    %v6471 = vand.u32 %v1178, 4294901760
    %6472 = vmatprep.subr.mxu0 %v6471
    %v6473 = vand.u32 %v1177, 4294901760
    %6474 = vmatpush2.msra.mxu0 %v6473
    %v6475 = vand.u32 %v1064, 4294901760
    %v6476 = vsub.f32 %v1064, %v6475
    %v6477 = vand.u32 %v6476, 4294901760
    %6478 = vmatprep.mubr.f32.mxu0 %v6477
    %v6479 = vand.u32 %v1063, 4294901760
    %v6480 = vsub.f32 %v1063, %v6479
    %v6481 = vand.u32 %v6480, 4294901760
    %6482 = vmatmul.mubr.f32.gmra.mxu0 %v6481
    %v6483 = vpop.f32.mrf.mxu0
    %v6484 = vadd.f32 %v6193, %v6483
    %v6485 = vpop.f32.mrf.mxu0
    %v6486 = vadd.f32 %v6195, %v6485
    %v6487 = vand.u32 %v1067, 4294901760
    %v6488 = vsub.f32 %v1067, %v6487
    %v6489 = vand.u32 %v6488, 4294901760
    %6490 = vmatprep.mubr.f32.mxu0 %v6489
    %v6491 = vand.u32 %v1066, 4294901760
    %v6492 = vsub.f32 %v1066, %v6491
    %v6493 = vand.u32 %v6492, 4294901760
    %6494 = vmatmul.mubr.f32.gmra.mxu0 %v6493
    %v6495 = vpop.f32.mrf.mxu0
    %v6496 = vadd.f32 %v6203, %v6495
    %v6497 = vpop.f32.mrf.mxu0
    %v6498 = vadd.f32 %v6205, %v6497
    %v6499 = vand.u32 %v1070, 4294901760
    %v6500 = vsub.f32 %v1070, %v6499
    %v6501 = vand.u32 %v6500, 4294901760
    %6502 = vmatprep.mubr.f32.mxu0 %v6501
    %v6503 = vand.u32 %v1069, 4294901760
    %v6504 = vsub.f32 %v1069, %v6503
    %v6505 = vand.u32 %v6504, 4294901760
    %6506 = vmatmul.mubr.f32.gmra.mxu0 %v6505
    %v6507 = vpop.f32.mrf.mxu0
    %v6508 = vadd.f32 %v6213, %v6507
    %v6509 = vpop.f32.mrf.mxu0
    %v6510 = vadd.f32 %v6215, %v6509
    %v6511 = vand.u32 %v1073, 4294901760
    %v6512 = vsub.f32 %v1073, %v6511
    %v6513 = vand.u32 %v6512, 4294901760
    %6514 = vmatprep.mubr.f32.mxu0 %v6513
    %v6515 = vand.u32 %v1072, 4294901760
    %v6516 = vsub.f32 %v1072, %v6515
    %v6517 = vand.u32 %v6516, 4294901760
    %6518 = vmatmul.mubr.f32.gmra.mxu0 %v6517
    %v6519 = vpop.f32.mrf.mxu0
    %v6520 = vadd.f32 %v6223, %v6519
    %v6521 = vpop.f32.mrf.mxu0
    %v6522 = vadd.f32 %v6225, %v6521
    %v6523 = vand.u32 %v1076, 4294901760
    %v6524 = vsub.f32 %v1076, %v6523
    %v6525 = vand.u32 %v6524, 4294901760
    %6526 = vmatprep.mubr.f32.mxu0 %v6525
    %v6527 = vand.u32 %v1075, 4294901760
    %v6528 = vsub.f32 %v1075, %v6527
    %v6529 = vand.u32 %v6528, 4294901760
    %6530 = vmatmul.mubr.f32.gmra.mxu0 %v6529
    %v6531 = vpop.f32.mrf.mxu0
    %v6532 = vadd.f32 %v6233, %v6531
    %v6533 = vpop.f32.mrf.mxu0
    %v6534 = vadd.f32 %v6235, %v6533
    %v6535 = vand.u32 %v1079, 4294901760
    %v6536 = vsub.f32 %v1079, %v6535
    %v6537 = vand.u32 %v6536, 4294901760
    %6538 = vmatprep.mubr.f32.mxu0 %v6537
    %v6539 = vand.u32 %v1078, 4294901760
    %v6540 = vsub.f32 %v1078, %v6539
    %v6541 = vand.u32 %v6540, 4294901760
    %6542 = vmatmul.mubr.f32.gmra.mxu0 %v6541
    %v6543 = vpop.f32.mrf.mxu0
    %v6544 = vadd.f32 %v6243, %v6543
    %v6545 = vpop.f32.mrf.mxu0
    %v6546 = vadd.f32 %v6245, %v6545
    %v6547 = vand.u32 %v1082, 4294901760
    %v6548 = vsub.f32 %v1082, %v6547
    %v6549 = vand.u32 %v6548, 4294901760
    %6550 = vmatprep.mubr.f32.mxu0 %v6549
    %v6551 = vand.u32 %v1081, 4294901760
    %v6552 = vsub.f32 %v1081, %v6551
    %v6553 = vand.u32 %v6552, 4294901760
    %6554 = vmatmul.mubr.f32.gmra.mxu0 %v6553
    %v6555 = vpop.f32.mrf.mxu0
    %v6556 = vadd.f32 %v6253, %v6555
    %v6557 = vpop.f32.mrf.mxu0
    %v6558 = vadd.f32 %v6255, %v6557
    %v6559 = vand.u32 %v1085, 4294901760
    %v6560 = vsub.f32 %v1085, %v6559
    %v6561 = vand.u32 %v6560, 4294901760
    %6562 = vmatprep.mubr.f32.mxu0 %v6561
    %v6563 = vand.u32 %v1084, 4294901760
    %v6564 = vsub.f32 %v1084, %v6563
    %v6565 = vand.u32 %v6564, 4294901760
    %6566 = vmatmul.mubr.f32.gmra.mxu0 %v6565
    %v6567 = vpop.f32.mrf.mxu0
    %v6568 = vadd.f32 %v6263, %v6567
    %v6569 = vpop.f32.mrf.mxu0
    %v6570 = vadd.f32 %v6265, %v6569
    %v6571 = vand.u32 %v1088, 4294901760
    %v6572 = vsub.f32 %v1088, %v6571
    %v6573 = vand.u32 %v6572, 4294901760
    %6574 = vmatprep.mubr.f32.mxu0 %v6573
    %v6575 = vand.u32 %v1087, 4294901760
    %v6576 = vsub.f32 %v1087, %v6575
    %v6577 = vand.u32 %v6576, 4294901760
    %6578 = vmatmul.mubr.f32.gmra.mxu0 %v6577
    %v6579 = vpop.f32.mrf.mxu0
    %v6580 = vadd.f32 %v6273, %v6579
    %v6581 = vpop.f32.mrf.mxu0
    %v6582 = vadd.f32 %v6275, %v6581
    %v6583 = vand.u32 %v1091, 4294901760
    %v6584 = vsub.f32 %v1091, %v6583
    %v6585 = vand.u32 %v6584, 4294901760
    %6586 = vmatprep.mubr.f32.mxu0 %v6585
    %v6587 = vand.u32 %v1090, 4294901760
    %v6588 = vsub.f32 %v1090, %v6587
    %v6589 = vand.u32 %v6588, 4294901760
    %6590 = vmatmul.mubr.f32.gmra.mxu0 %v6589
    %v6591 = vpop.f32.mrf.mxu0
    %v6592 = vadd.f32 %v6283, %v6591
    %v6593 = vpop.f32.mrf.mxu0
    %v6594 = vadd.f32 %v6285, %v6593
    %v6595 = vand.u32 %v1094, 4294901760
    %v6596 = vsub.f32 %v1094, %v6595
    %v6597 = vand.u32 %v6596, 4294901760
    %6598 = vmatprep.mubr.f32.mxu0 %v6597
    %v6599 = vand.u32 %v1093, 4294901760
    %v6600 = vsub.f32 %v1093, %v6599
    %v6601 = vand.u32 %v6600, 4294901760
    %6602 = vmatmul.mubr.f32.gmra.mxu0 %v6601
    %v6603 = vpop.f32.mrf.mxu0
    %v6604 = vadd.f32 %v6293, %v6603
    %v6605 = vpop.f32.mrf.mxu0
    %v6606 = vadd.f32 %v6295, %v6605
    %v6607 = vand.u32 %v1097, 4294901760
    %v6608 = vsub.f32 %v1097, %v6607
    %v6609 = vand.u32 %v6608, 4294901760
    %6610 = vmatprep.mubr.f32.mxu0 %v6609
    %v6611 = vand.u32 %v1096, 4294901760
    %v6612 = vsub.f32 %v1096, %v6611
    %v6613 = vand.u32 %v6612, 4294901760
    %6614 = vmatmul.mubr.f32.gmra.mxu0 %v6613
    %v6615 = vpop.f32.mrf.mxu0
    %v6616 = vadd.f32 %v6303, %v6615
    %v6617 = vpop.f32.mrf.mxu0
    %v6618 = vadd.f32 %v6305, %v6617
    %v6619 = vand.u32 %v1100, 4294901760
    %v6620 = vsub.f32 %v1100, %v6619
    %v6621 = vand.u32 %v6620, 4294901760
    %6622 = vmatprep.mubr.f32.mxu0 %v6621
    %v6623 = vand.u32 %v1099, 4294901760
    %v6624 = vsub.f32 %v1099, %v6623
    %v6625 = vand.u32 %v6624, 4294901760
    %6626 = vmatmul.mubr.f32.gmra.mxu0 %v6625
    %v6627 = vpop.f32.mrf.mxu0
    %v6628 = vadd.f32 %v6313, %v6627
    %v6629 = vpop.f32.mrf.mxu0
    %v6630 = vadd.f32 %v6315, %v6629
    %v6631 = vand.u32 %v1103, 4294901760
    %v6632 = vsub.f32 %v1103, %v6631
    %v6633 = vand.u32 %v6632, 4294901760
    %6634 = vmatprep.mubr.f32.mxu0 %v6633
    %v6635 = vand.u32 %v1102, 4294901760
    %v6636 = vsub.f32 %v1102, %v6635
    %v6637 = vand.u32 %v6636, 4294901760
    %6638 = vmatmul.mubr.f32.gmra.mxu0 %v6637
    %v6639 = vpop.f32.mrf.mxu0
    %v6640 = vadd.f32 %v6323, %v6639
    %v6641 = vpop.f32.mrf.mxu0
    %v6642 = vadd.f32 %v6325, %v6641
    %v6643 = vand.u32 %v1106, 4294901760
    %v6644 = vsub.f32 %v1106, %v6643
    %v6645 = vand.u32 %v6644, 4294901760
    %6646 = vmatprep.mubr.f32.mxu0 %v6645
    %v6647 = vand.u32 %v1105, 4294901760
    %v6648 = vsub.f32 %v1105, %v6647
    %v6649 = vand.u32 %v6648, 4294901760
    %6650 = vmatmul.mubr.f32.gmra.mxu0 %v6649
    %v6651 = vpop.f32.mrf.mxu0
    %v6652 = vadd.f32 %v6333, %v6651
    %v6653 = vpop.f32.mrf.mxu0
    %v6654 = vadd.f32 %v6335, %v6653
    %v6655 = vand.u32 %v1109, 4294901760
    %v6656 = vsub.f32 %v1109, %v6655
    %v6657 = vand.u32 %v6656, 4294901760
    %6658 = vmatprep.mubr.f32.mxu0 %v6657
    %v6659 = vand.u32 %v1108, 4294901760
    %v6660 = vsub.f32 %v1108, %v6659
    %v6661 = vand.u32 %v6660, 4294901760
    %6662 = vmatmul.mubr.f32.gmra.mxu0 %v6661
    %v6663 = vpop.f32.mrf.mxu0
    %v6664 = vadd.f32 %v6343, %v6663
    %v6665 = vpop.f32.mrf.mxu0
    %v6666 = vadd.f32 %v6345, %v6665
    %6667 = vdwg.mxu0
    %v6668 = vand.u32 %v1174, 4294901760
    %v6669 = vsub.f32 %v1174, %v6668
    %v6670 = vand.u32 %v6669, 4294901760
    %6671 = vmatprep.subr.mxu0 %v6670
    %v6672 = vand.u32 %v1173, 4294901760
    %v6673 = vsub.f32 %v1173, %v6672
    %v6674 = vand.u32 %v6673, 4294901760
    %6675 = vmatpush1.msra.mxu0 %v6674
    %v6676 = vand.u32 %v1170, 4294901760
    %v6677 = vsub.f32 %v1170, %v6676
    %v6678 = vand.u32 %v6677, 4294901760
    %6679 = vmatprep.subr.mxu0 %v6678
    %v6680 = vand.u32 %v1169, 4294901760
    %v6681 = vsub.f32 %v1169, %v6680
    %v6682 = vand.u32 %v6681, 4294901760
    %6683 = vmatpush1.msra.mxu0 %v6682
    %v6684 = vand.u32 %v1166, 4294901760
    %v6685 = vsub.f32 %v1166, %v6684
    %v6686 = vand.u32 %v6685, 4294901760
    %6687 = vmatprep.subr.mxu0 %v6686
    %v6688 = vand.u32 %v1165, 4294901760
    %v6689 = vsub.f32 %v1165, %v6688
    %v6690 = vand.u32 %v6689, 4294901760
    %6691 = vmatpush1.msra.mxu0 %v6690
    %v6692 = vand.u32 %v1162, 4294901760
    %v6693 = vsub.f32 %v1162, %v6692
    %v6694 = vand.u32 %v6693, 4294901760
    %6695 = vmatprep.subr.mxu0 %v6694
    %v6696 = vand.u32 %v1161, 4294901760
    %v6697 = vsub.f32 %v1161, %v6696
    %v6698 = vand.u32 %v6697, 4294901760
    %6699 = vmatpush1.msra.mxu0 %v6698
    %v6700 = vand.u32 %v1158, 4294901760
    %v6701 = vsub.f32 %v1158, %v6700
    %v6702 = vand.u32 %v6701, 4294901760
    %6703 = vmatprep.subr.mxu0 %v6702
    %v6704 = vand.u32 %v1157, 4294901760
    %v6705 = vsub.f32 %v1157, %v6704
    %v6706 = vand.u32 %v6705, 4294901760
    %6707 = vmatpush1.msra.mxu0 %v6706
    %v6708 = vand.u32 %v1154, 4294901760
    %v6709 = vsub.f32 %v1154, %v6708
    %v6710 = vand.u32 %v6709, 4294901760
    %6711 = vmatprep.subr.mxu0 %v6710
    %v6712 = vand.u32 %v1153, 4294901760
    %v6713 = vsub.f32 %v1153, %v6712
    %v6714 = vand.u32 %v6713, 4294901760
    %6715 = vmatpush1.msra.mxu0 %v6714
    %v6716 = vand.u32 %v1150, 4294901760
    %v6717 = vsub.f32 %v1150, %v6716
    %v6718 = vand.u32 %v6717, 4294901760
    %6719 = vmatprep.subr.mxu0 %v6718
    %v6720 = vand.u32 %v1149, 4294901760
    %v6721 = vsub.f32 %v1149, %v6720
    %v6722 = vand.u32 %v6721, 4294901760
    %6723 = vmatpush1.msra.mxu0 %v6722
    %v6724 = vand.u32 %v1146, 4294901760
    %v6725 = vsub.f32 %v1146, %v6724
    %v6726 = vand.u32 %v6725, 4294901760
    %6727 = vmatprep.subr.mxu0 %v6726
    %v6728 = vand.u32 %v1145, 4294901760
    %v6729 = vsub.f32 %v1145, %v6728
    %v6730 = vand.u32 %v6729, 4294901760
    %6731 = vmatpush1.msra.mxu0 %v6730
    %v6732 = vand.u32 %v1142, 4294901760
    %v6733 = vsub.f32 %v1142, %v6732
    %v6734 = vand.u32 %v6733, 4294901760
    %6735 = vmatprep.subr.mxu0 %v6734
    %v6736 = vand.u32 %v1141, 4294901760
    %v6737 = vsub.f32 %v1141, %v6736
    %v6738 = vand.u32 %v6737, 4294901760
    %6739 = vmatpush1.msra.mxu0 %v6738
    %v6740 = vand.u32 %v1138, 4294901760
    %v6741 = vsub.f32 %v1138, %v6740
    %v6742 = vand.u32 %v6741, 4294901760
    %6743 = vmatprep.subr.mxu0 %v6742
    %v6744 = vand.u32 %v1137, 4294901760
    %v6745 = vsub.f32 %v1137, %v6744
    %v6746 = vand.u32 %v6745, 4294901760
    %6747 = vmatpush1.msra.mxu0 %v6746
    %v6748 = vand.u32 %v1134, 4294901760
    %v6749 = vsub.f32 %v1134, %v6748
    %v6750 = vand.u32 %v6749, 4294901760
    %6751 = vmatprep.subr.mxu0 %v6750
    %v6752 = vand.u32 %v1133, 4294901760
    %v6753 = vsub.f32 %v1133, %v6752
    %v6754 = vand.u32 %v6753, 4294901760
    %6755 = vmatpush1.msra.mxu0 %v6754
    %v6756 = vand.u32 %v1130, 4294901760
    %v6757 = vsub.f32 %v1130, %v6756
    %v6758 = vand.u32 %v6757, 4294901760
    %6759 = vmatprep.subr.mxu0 %v6758
    %v6760 = vand.u32 %v1129, 4294901760
    %v6761 = vsub.f32 %v1129, %v6760
    %v6762 = vand.u32 %v6761, 4294901760
    %6763 = vmatpush1.msra.mxu0 %v6762
    %v6764 = vand.u32 %v1126, 4294901760
    %v6765 = vsub.f32 %v1126, %v6764
    %v6766 = vand.u32 %v6765, 4294901760
    %6767 = vmatprep.subr.mxu0 %v6766
    %v6768 = vand.u32 %v1125, 4294901760
    %v6769 = vsub.f32 %v1125, %v6768
    %v6770 = vand.u32 %v6769, 4294901760
    %6771 = vmatpush1.msra.mxu0 %v6770
    %v6772 = vand.u32 %v1122, 4294901760
    %v6773 = vsub.f32 %v1122, %v6772
    %v6774 = vand.u32 %v6773, 4294901760
    %6775 = vmatprep.subr.mxu0 %v6774
    %v6776 = vand.u32 %v1121, 4294901760
    %v6777 = vsub.f32 %v1121, %v6776
    %v6778 = vand.u32 %v6777, 4294901760
    %6779 = vmatpush1.msra.mxu0 %v6778
    %v6780 = vand.u32 %v1118, 4294901760
    %v6781 = vsub.f32 %v1118, %v6780
    %v6782 = vand.u32 %v6781, 4294901760
    %6783 = vmatprep.subr.mxu0 %v6782
    %v6784 = vand.u32 %v1117, 4294901760
    %v6785 = vsub.f32 %v1117, %v6784
    %v6786 = vand.u32 %v6785, 4294901760
    %6787 = vmatpush1.msra.mxu0 %v6786
    %v6788 = vand.u32 %v1114, 4294901760
    %v6789 = vsub.f32 %v1114, %v6788
    %v6790 = vand.u32 %v6789, 4294901760
    %6791 = vmatprep.subr.mxu0 %v6790
    %v6792 = vand.u32 %v1113, 4294901760
    %v6793 = vsub.f32 %v1113, %v6792
    %v6794 = vand.u32 %v6793, 4294901760
    %6795 = vmatpush1.msra.mxu0 %v6794
    %v6796 = vand.u32 %v1238, 4294901760
    %v6797 = vsub.f32 %v1238, %v6796
    %v6798 = vand.u32 %v6797, 4294901760
    %6799 = vmatprep.subr.mxu0 %v6798
    %v6800 = vand.u32 %v1237, 4294901760
    %v6801 = vsub.f32 %v1237, %v6800
    %v6802 = vand.u32 %v6801, 4294901760
    %6803 = vmatpush2.msra.mxu0 %v6802
    %v6804 = vand.u32 %v1234, 4294901760
    %v6805 = vsub.f32 %v1234, %v6804
    %v6806 = vand.u32 %v6805, 4294901760
    %6807 = vmatprep.subr.mxu0 %v6806
    %v6808 = vand.u32 %v1233, 4294901760
    %v6809 = vsub.f32 %v1233, %v6808
    %v6810 = vand.u32 %v6809, 4294901760
    %6811 = vmatpush2.msra.mxu0 %v6810
    %v6812 = vand.u32 %v1230, 4294901760
    %v6813 = vsub.f32 %v1230, %v6812
    %v6814 = vand.u32 %v6813, 4294901760
    %6815 = vmatprep.subr.mxu0 %v6814
    %v6816 = vand.u32 %v1229, 4294901760
    %v6817 = vsub.f32 %v1229, %v6816
    %v6818 = vand.u32 %v6817, 4294901760
    %6819 = vmatpush2.msra.mxu0 %v6818
    %v6820 = vand.u32 %v1226, 4294901760
    %v6821 = vsub.f32 %v1226, %v6820
    %v6822 = vand.u32 %v6821, 4294901760
    %6823 = vmatprep.subr.mxu0 %v6822
    %v6824 = vand.u32 %v1225, 4294901760
    %v6825 = vsub.f32 %v1225, %v6824
    %v6826 = vand.u32 %v6825, 4294901760
    %6827 = vmatpush2.msra.mxu0 %v6826
    %v6828 = vand.u32 %v1222, 4294901760
    %v6829 = vsub.f32 %v1222, %v6828
    %v6830 = vand.u32 %v6829, 4294901760
    %6831 = vmatprep.subr.mxu0 %v6830
    %v6832 = vand.u32 %v1221, 4294901760
    %v6833 = vsub.f32 %v1221, %v6832
    %v6834 = vand.u32 %v6833, 4294901760
    %6835 = vmatpush2.msra.mxu0 %v6834
    %v6836 = vand.u32 %v1218, 4294901760
    %v6837 = vsub.f32 %v1218, %v6836
    %v6838 = vand.u32 %v6837, 4294901760
    %6839 = vmatprep.subr.mxu0 %v6838
    %v6840 = vand.u32 %v1217, 4294901760
    %v6841 = vsub.f32 %v1217, %v6840
    %v6842 = vand.u32 %v6841, 4294901760
    %6843 = vmatpush2.msra.mxu0 %v6842
    %v6844 = vand.u32 %v1214, 4294901760
    %v6845 = vsub.f32 %v1214, %v6844
    %v6846 = vand.u32 %v6845, 4294901760
    %6847 = vmatprep.subr.mxu0 %v6846
    %v6848 = vand.u32 %v1213, 4294901760
    %v6849 = vsub.f32 %v1213, %v6848
    %v6850 = vand.u32 %v6849, 4294901760
    %6851 = vmatpush2.msra.mxu0 %v6850
    %v6852 = vand.u32 %v1210, 4294901760
    %v6853 = vsub.f32 %v1210, %v6852
    %v6854 = vand.u32 %v6853, 4294901760
    %6855 = vmatprep.subr.mxu0 %v6854
    %v6856 = vand.u32 %v1209, 4294901760
    %v6857 = vsub.f32 %v1209, %v6856
    %v6858 = vand.u32 %v6857, 4294901760
    %6859 = vmatpush2.msra.mxu0 %v6858
    %v6860 = vand.u32 %v1206, 4294901760
    %v6861 = vsub.f32 %v1206, %v6860
    %v6862 = vand.u32 %v6861, 4294901760
    %6863 = vmatprep.subr.mxu0 %v6862
    %v6864 = vand.u32 %v1205, 4294901760
    %v6865 = vsub.f32 %v1205, %v6864
    %v6866 = vand.u32 %v6865, 4294901760
    %6867 = vmatpush2.msra.mxu0 %v6866
    %v6868 = vand.u32 %v1202, 4294901760
    %v6869 = vsub.f32 %v1202, %v6868
    %v6870 = vand.u32 %v6869, 4294901760
    %6871 = vmatprep.subr.mxu0 %v6870
    %v6872 = vand.u32 %v1201, 4294901760
    %v6873 = vsub.f32 %v1201, %v6872
    %v6874 = vand.u32 %v6873, 4294901760
    %6875 = vmatpush2.msra.mxu0 %v6874
    %v6876 = vand.u32 %v1198, 4294901760
    %v6877 = vsub.f32 %v1198, %v6876
    %v6878 = vand.u32 %v6877, 4294901760
    %6879 = vmatprep.subr.mxu0 %v6878
    %v6880 = vand.u32 %v1197, 4294901760
    %v6881 = vsub.f32 %v1197, %v6880
    %v6882 = vand.u32 %v6881, 4294901760
    %6883 = vmatpush2.msra.mxu0 %v6882
    %v6884 = vand.u32 %v1194, 4294901760
    %v6885 = vsub.f32 %v1194, %v6884
    %v6886 = vand.u32 %v6885, 4294901760
    %6887 = vmatprep.subr.mxu0 %v6886
    %v6888 = vand.u32 %v1193, 4294901760
    %v6889 = vsub.f32 %v1193, %v6888
    %v6890 = vand.u32 %v6889, 4294901760
    %6891 = vmatpush2.msra.mxu0 %v6890
    %v6892 = vand.u32 %v1190, 4294901760
    %v6893 = vsub.f32 %v1190, %v6892
    %v6894 = vand.u32 %v6893, 4294901760
    %6895 = vmatprep.subr.mxu0 %v6894
    %v6896 = vand.u32 %v1189, 4294901760
    %v6897 = vsub.f32 %v1189, %v6896
    %v6898 = vand.u32 %v6897, 4294901760
    %6899 = vmatpush2.msra.mxu0 %v6898
    %v6900 = vand.u32 %v1186, 4294901760
    %v6901 = vsub.f32 %v1186, %v6900
    %v6902 = vand.u32 %v6901, 4294901760
    %6903 = vmatprep.subr.mxu0 %v6902
    %v6904 = vand.u32 %v1185, 4294901760
    %v6905 = vsub.f32 %v1185, %v6904
    %v6906 = vand.u32 %v6905, 4294901760
    %6907 = vmatpush2.msra.mxu0 %v6906
    %v6908 = vand.u32 %v1182, 4294901760
    %v6909 = vsub.f32 %v1182, %v6908
    %v6910 = vand.u32 %v6909, 4294901760
    %6911 = vmatprep.subr.mxu0 %v6910
    %v6912 = vand.u32 %v1181, 4294901760
    %v6913 = vsub.f32 %v1181, %v6912
    %v6914 = vand.u32 %v6913, 4294901760
    %6915 = vmatpush2.msra.mxu0 %v6914
    %v6916 = vand.u32 %v1178, 4294901760
    %v6917 = vsub.f32 %v1178, %v6916
    %v6918 = vand.u32 %v6917, 4294901760
    %6919 = vmatprep.subr.mxu0 %v6918
    %v6920 = vand.u32 %v1177, 4294901760
    %v6921 = vsub.f32 %v1177, %v6920
    %v6922 = vand.u32 %v6921, 4294901760
    %6923 = vmatpush2.msra.mxu0 %v6922
    %v6924 = vand.u32 %v1064, 4294901760
    %6925 = vmatprep.mubr.f32.mxu0 %v6924
    %v6926 = vand.u32 %v1063, 4294901760
    %6927 = vmatmul.mubr.f32.gmra.mxu0 %v6926
    %v6928 = vpop.f32.mrf.mxu0
    %v6929 = vadd.f32 %v6484, %v6928
    %v6930 = vpop.f32.mrf.mxu0
    %v6931 = vadd.f32 %v6486, %v6930
    %v6932 = vand.u32 %v1067, 4294901760
    %6933 = vmatprep.mubr.f32.mxu0 %v6932
    %v6934 = vand.u32 %v1066, 4294901760
    %6935 = vmatmul.mubr.f32.gmra.mxu0 %v6934
    %v6936 = vpop.f32.mrf.mxu0
    %v6937 = vadd.f32 %v6496, %v6936
    %v6938 = vpop.f32.mrf.mxu0
    %v6939 = vadd.f32 %v6498, %v6938
    %v6940 = vand.u32 %v1070, 4294901760
    %6941 = vmatprep.mubr.f32.mxu0 %v6940
    %v6942 = vand.u32 %v1069, 4294901760
    %6943 = vmatmul.mubr.f32.gmra.mxu0 %v6942
    %v6944 = vpop.f32.mrf.mxu0
    %v6945 = vadd.f32 %v6508, %v6944
    %v6946 = vpop.f32.mrf.mxu0
    %v6947 = vadd.f32 %v6510, %v6946
    %v6948 = vand.u32 %v1073, 4294901760
    %6949 = vmatprep.mubr.f32.mxu0 %v6948
    %v6950 = vand.u32 %v1072, 4294901760
    %6951 = vmatmul.mubr.f32.gmra.mxu0 %v6950
    %v6952 = vpop.f32.mrf.mxu0
    %v6953 = vadd.f32 %v6520, %v6952
    %v6954 = vpop.f32.mrf.mxu0
    %v6955 = vadd.f32 %v6522, %v6954
    %v6956 = vand.u32 %v1076, 4294901760
    %6957 = vmatprep.mubr.f32.mxu0 %v6956
    %v6958 = vand.u32 %v1075, 4294901760
    %6959 = vmatmul.mubr.f32.gmra.mxu0 %v6958
    %v6960 = vpop.f32.mrf.mxu0
    %v6961 = vadd.f32 %v6532, %v6960
    %v6962 = vpop.f32.mrf.mxu0
    %v6963 = vadd.f32 %v6534, %v6962
    %v6964 = vand.u32 %v1079, 4294901760
    %6965 = vmatprep.mubr.f32.mxu0 %v6964
    %v6966 = vand.u32 %v1078, 4294901760
    %6967 = vmatmul.mubr.f32.gmra.mxu0 %v6966
    %v6968 = vpop.f32.mrf.mxu0
    %v6969 = vadd.f32 %v6544, %v6968
    %v6970 = vpop.f32.mrf.mxu0
    %v6971 = vadd.f32 %v6546, %v6970
    %v6972 = vand.u32 %v1082, 4294901760
    %6973 = vmatprep.mubr.f32.mxu0 %v6972
    %v6974 = vand.u32 %v1081, 4294901760
    %6975 = vmatmul.mubr.f32.gmra.mxu0 %v6974
    %v6976 = vpop.f32.mrf.mxu0
    %v6977 = vadd.f32 %v6556, %v6976
    %v6978 = vpop.f32.mrf.mxu0
    %v6979 = vadd.f32 %v6558, %v6978
    %v6980 = vand.u32 %v1085, 4294901760
    %6981 = vmatprep.mubr.f32.mxu0 %v6980
    %v6982 = vand.u32 %v1084, 4294901760
    %6983 = vmatmul.mubr.f32.gmra.mxu0 %v6982
    %v6984 = vpop.f32.mrf.mxu0
    %v6985 = vadd.f32 %v6568, %v6984
    %v6986 = vpop.f32.mrf.mxu0
    %v6987 = vadd.f32 %v6570, %v6986
    %v6988 = vand.u32 %v1088, 4294901760
    %6989 = vmatprep.mubr.f32.mxu0 %v6988
    %v6990 = vand.u32 %v1087, 4294901760
    %6991 = vmatmul.mubr.f32.gmra.mxu0 %v6990
    %v6992 = vpop.f32.mrf.mxu0
    %v6993 = vadd.f32 %v6580, %v6992
    %v6994 = vpop.f32.mrf.mxu0
    %v6995 = vadd.f32 %v6582, %v6994
    %v6996 = vand.u32 %v1091, 4294901760
    %6997 = vmatprep.mubr.f32.mxu0 %v6996
    %v6998 = vand.u32 %v1090, 4294901760
    %6999 = vmatmul.mubr.f32.gmra.mxu0 %v6998
    %v7000 = vpop.f32.mrf.mxu0
    %v7001 = vadd.f32 %v6592, %v7000
    %v7002 = vpop.f32.mrf.mxu0
    %v7003 = vadd.f32 %v6594, %v7002
    %v7004 = vand.u32 %v1094, 4294901760
    %7005 = vmatprep.mubr.f32.mxu0 %v7004
    %v7006 = vand.u32 %v1093, 4294901760
    %7007 = vmatmul.mubr.f32.gmra.mxu0 %v7006
    %v7008 = vpop.f32.mrf.mxu0
    %v7009 = vadd.f32 %v6604, %v7008
    %v7010 = vpop.f32.mrf.mxu0
    %v7011 = vadd.f32 %v6606, %v7010
    %v7012 = vand.u32 %v1097, 4294901760
    %7013 = vmatprep.mubr.f32.mxu0 %v7012
    %v7014 = vand.u32 %v1096, 4294901760
    %7015 = vmatmul.mubr.f32.gmra.mxu0 %v7014
    %v7016 = vpop.f32.mrf.mxu0
    %v7017 = vadd.f32 %v6616, %v7016
    %v7018 = vpop.f32.mrf.mxu0
    %v7019 = vadd.f32 %v6618, %v7018
    %v7020 = vand.u32 %v1100, 4294901760
    %7021 = vmatprep.mubr.f32.mxu0 %v7020
    %v7022 = vand.u32 %v1099, 4294901760
    %7023 = vmatmul.mubr.f32.gmra.mxu0 %v7022
    %v7024 = vpop.f32.mrf.mxu0
    %v7025 = vadd.f32 %v6628, %v7024
    %v7026 = vpop.f32.mrf.mxu0
    %v7027 = vadd.f32 %v6630, %v7026
    %v7028 = vand.u32 %v1103, 4294901760
    %7029 = vmatprep.mubr.f32.mxu0 %v7028
    %v7030 = vand.u32 %v1102, 4294901760
    %7031 = vmatmul.mubr.f32.gmra.mxu0 %v7030
    %v7032 = vpop.f32.mrf.mxu0
    %v7033 = vadd.f32 %v6640, %v7032
    %v7034 = vpop.f32.mrf.mxu0
    %v7035 = vadd.f32 %v6642, %v7034
    %v7036 = vand.u32 %v1106, 4294901760
    %7037 = vmatprep.mubr.f32.mxu0 %v7036
    %v7038 = vand.u32 %v1105, 4294901760
    %7039 = vmatmul.mubr.f32.gmra.mxu0 %v7038
    %v7040 = vpop.f32.mrf.mxu0
    %v7041 = vadd.f32 %v6652, %v7040
    %v7042 = vpop.f32.mrf.mxu0
    %v7043 = vadd.f32 %v6654, %v7042
    %v7044 = vand.u32 %v1109, 4294901760
    %7045 = vmatprep.mubr.f32.mxu0 %v7044
    %v7046 = vand.u32 %v1108, 4294901760
    %7047 = vmatmul.mubr.f32.gmra.mxu0 %v7046
    %v7048 = vpop.f32.mrf.mxu0
    %v7049 = vadd.f32 %v6664, %v7048
    %v7050 = vpop.f32.mrf.mxu0
    %v7051 = vadd.f32 %v6666, %v7050
    %7052 = vdwg.mxu0
    %v7053 = vand.u32 %v1174, 4294901760
    %7054 = vmatprep.subr.mxu0 %v7053
    %v7055 = vand.u32 %v1173, 4294901760
    %7056 = vmatpush1.msra.mxu0 %v7055
    %v7057 = vand.u32 %v1170, 4294901760
    %7058 = vmatprep.subr.mxu0 %v7057
    %v7059 = vand.u32 %v1169, 4294901760
    %7060 = vmatpush1.msra.mxu0 %v7059
    %v7061 = vand.u32 %v1166, 4294901760
    %7062 = vmatprep.subr.mxu0 %v7061
    %v7063 = vand.u32 %v1165, 4294901760
    %7064 = vmatpush1.msra.mxu0 %v7063
    %v7065 = vand.u32 %v1162, 4294901760
    %7066 = vmatprep.subr.mxu0 %v7065
    %v7067 = vand.u32 %v1161, 4294901760
    %7068 = vmatpush1.msra.mxu0 %v7067
    %v7069 = vand.u32 %v1158, 4294901760
    %7070 = vmatprep.subr.mxu0 %v7069
    %v7071 = vand.u32 %v1157, 4294901760
    %7072 = vmatpush1.msra.mxu0 %v7071
    %v7073 = vand.u32 %v1154, 4294901760
    %7074 = vmatprep.subr.mxu0 %v7073
    %v7075 = vand.u32 %v1153, 4294901760
    %7076 = vmatpush1.msra.mxu0 %v7075
    %v7077 = vand.u32 %v1150, 4294901760
    %7078 = vmatprep.subr.mxu0 %v7077
    %v7079 = vand.u32 %v1149, 4294901760
    %7080 = vmatpush1.msra.mxu0 %v7079
    %v7081 = vand.u32 %v1146, 4294901760
    %7082 = vmatprep.subr.mxu0 %v7081
    %v7083 = vand.u32 %v1145, 4294901760
    %7084 = vmatpush1.msra.mxu0 %v7083
    %v7085 = vand.u32 %v1142, 4294901760
    %7086 = vmatprep.subr.mxu0 %v7085
    %v7087 = vand.u32 %v1141, 4294901760
    %7088 = vmatpush1.msra.mxu0 %v7087
    %v7089 = vand.u32 %v1138, 4294901760
    %7090 = vmatprep.subr.mxu0 %v7089
    %v7091 = vand.u32 %v1137, 4294901760
    %7092 = vmatpush1.msra.mxu0 %v7091
    %v7093 = vand.u32 %v1134, 4294901760
    %7094 = vmatprep.subr.mxu0 %v7093
    %v7095 = vand.u32 %v1133, 4294901760
    %7096 = vmatpush1.msra.mxu0 %v7095
    %v7097 = vand.u32 %v1130, 4294901760
    %7098 = vmatprep.subr.mxu0 %v7097
    %v7099 = vand.u32 %v1129, 4294901760
    %7100 = vmatpush1.msra.mxu0 %v7099
    %v7101 = vand.u32 %v1126, 4294901760
    %7102 = vmatprep.subr.mxu0 %v7101
    %v7103 = vand.u32 %v1125, 4294901760
    %7104 = vmatpush1.msra.mxu0 %v7103
    %v7105 = vand.u32 %v1122, 4294901760
    %7106 = vmatprep.subr.mxu0 %v7105
    %v7107 = vand.u32 %v1121, 4294901760
    %7108 = vmatpush1.msra.mxu0 %v7107
    %v7109 = vand.u32 %v1118, 4294901760
    %7110 = vmatprep.subr.mxu0 %v7109
    %v7111 = vand.u32 %v1117, 4294901760
    %7112 = vmatpush1.msra.mxu0 %v7111
    %v7113 = vand.u32 %v1114, 4294901760
    %7114 = vmatprep.subr.mxu0 %v7113
    %v7115 = vand.u32 %v1113, 4294901760
    %7116 = vmatpush1.msra.mxu0 %v7115
    %v7117 = vand.u32 %v1238, 4294901760
    %7118 = vmatprep.subr.mxu0 %v7117
    %v7119 = vand.u32 %v1237, 4294901760
    %7120 = vmatpush2.msra.mxu0 %v7119
    %v7121 = vand.u32 %v1234, 4294901760
    %7122 = vmatprep.subr.mxu0 %v7121
    %v7123 = vand.u32 %v1233, 4294901760
    %7124 = vmatpush2.msra.mxu0 %v7123
    %v7125 = vand.u32 %v1230, 4294901760
    %7126 = vmatprep.subr.mxu0 %v7125
    %v7127 = vand.u32 %v1229, 4294901760
    %7128 = vmatpush2.msra.mxu0 %v7127
    %v7129 = vand.u32 %v1226, 4294901760
    %7130 = vmatprep.subr.mxu0 %v7129
    %v7131 = vand.u32 %v1225, 4294901760
    %7132 = vmatpush2.msra.mxu0 %v7131
    %v7133 = vand.u32 %v1222, 4294901760
    %7134 = vmatprep.subr.mxu0 %v7133
    %v7135 = vand.u32 %v1221, 4294901760
    %7136 = vmatpush2.msra.mxu0 %v7135
    %v7137 = vand.u32 %v1218, 4294901760
    %7138 = vmatprep.subr.mxu0 %v7137
    %v7139 = vand.u32 %v1217, 4294901760
    %7140 = vmatpush2.msra.mxu0 %v7139
    %v7141 = vand.u32 %v1214, 4294901760
    %7142 = vmatprep.subr.mxu0 %v7141
    %v7143 = vand.u32 %v1213, 4294901760
    %7144 = vmatpush2.msra.mxu0 %v7143
    %v7145 = vand.u32 %v1210, 4294901760
    %7146 = vmatprep.subr.mxu0 %v7145
    %v7147 = vand.u32 %v1209, 4294901760
    %7148 = vmatpush2.msra.mxu0 %v7147
    %v7149 = vand.u32 %v1206, 4294901760
    %7150 = vmatprep.subr.mxu0 %v7149
    %v7151 = vand.u32 %v1205, 4294901760
    %7152 = vmatpush2.msra.mxu0 %v7151
    %v7153 = vand.u32 %v1202, 4294901760
    %7154 = vmatprep.subr.mxu0 %v7153
    %v7155 = vand.u32 %v1201, 4294901760
    %7156 = vmatpush2.msra.mxu0 %v7155
    %v7157 = vand.u32 %v1198, 4294901760
    %7158 = vmatprep.subr.mxu0 %v7157
    %v7159 = vand.u32 %v1197, 4294901760
    %7160 = vmatpush2.msra.mxu0 %v7159
    %v7161 = vand.u32 %v1194, 4294901760
    %7162 = vmatprep.subr.mxu0 %v7161
    %v7163 = vand.u32 %v1193, 4294901760
    %7164 = vmatpush2.msra.mxu0 %v7163
    %v7165 = vand.u32 %v1190, 4294901760
    %7166 = vmatprep.subr.mxu0 %v7165
    %v7167 = vand.u32 %v1189, 4294901760
    %7168 = vmatpush2.msra.mxu0 %v7167
    %v7169 = vand.u32 %v1186, 4294901760
    %7170 = vmatprep.subr.mxu0 %v7169
    %v7171 = vand.u32 %v1185, 4294901760
    %7172 = vmatpush2.msra.mxu0 %v7171
    %v7173 = vand.u32 %v1182, 4294901760
    %7174 = vmatprep.subr.mxu0 %v7173
    %v7175 = vand.u32 %v1181, 4294901760
    %7176 = vmatpush2.msra.mxu0 %v7175
    %v7177 = vand.u32 %v1178, 4294901760
    %7178 = vmatprep.subr.mxu0 %v7177
    %v7179 = vand.u32 %v1177, 4294901760
    %7180 = vmatpush2.msra.mxu0 %v7179
    %v7181 = vand.u32 %v1064, 4294901760
    %7182 = vmatprep.mubr.f32.mxu0 %v7181
    %v7183 = vand.u32 %v1063, 4294901760
    %7184 = vmatmul.mubr.f32.gmra.mxu0 %v7183
    %v7185 = vpop.f32.mrf.mxu0
    %v7186 = vadd.f32 %v6929, %v7185
    %v7187 = vpop.f32.mrf.mxu0
    %v7188 = vadd.f32 %v6931, %v7187
    %v7189 = vand.u32 %v1067, 4294901760
    %7190 = vmatprep.mubr.f32.mxu0 %v7189
    %v7191 = vand.u32 %v1066, 4294901760
    %7192 = vmatmul.mubr.f32.gmra.mxu0 %v7191
    %v7193 = vpop.f32.mrf.mxu0
    %v7194 = vadd.f32 %v6937, %v7193
    %v7195 = vpop.f32.mrf.mxu0
    %v7196 = vadd.f32 %v6939, %v7195
    %v7197 = vand.u32 %v1070, 4294901760
    %7198 = vmatprep.mubr.f32.mxu0 %v7197
    %v7199 = vand.u32 %v1069, 4294901760
    %7200 = vmatmul.mubr.f32.gmra.mxu0 %v7199
    %v7201 = vpop.f32.mrf.mxu0
    %v7202 = vadd.f32 %v6945, %v7201
    %v7203 = vpop.f32.mrf.mxu0
    %v7204 = vadd.f32 %v6947, %v7203
    %v7205 = vand.u32 %v1073, 4294901760
    %7206 = vmatprep.mubr.f32.mxu0 %v7205
    %v7207 = vand.u32 %v1072, 4294901760
    %7208 = vmatmul.mubr.f32.gmra.mxu0 %v7207
    %v7209 = vpop.f32.mrf.mxu0
    %v7210 = vadd.f32 %v6953, %v7209
    %v7211 = vpop.f32.mrf.mxu0
    %v7212 = vadd.f32 %v6955, %v7211
    %v7213 = vand.u32 %v1076, 4294901760
    %7214 = vmatprep.mubr.f32.mxu0 %v7213
    %v7215 = vand.u32 %v1075, 4294901760
    %7216 = vmatmul.mubr.f32.gmra.mxu0 %v7215
    %v7217 = vpop.f32.mrf.mxu0
    %v7218 = vadd.f32 %v6961, %v7217
    %v7219 = vpop.f32.mrf.mxu0
    %v7220 = vadd.f32 %v6963, %v7219
    %v7221 = vand.u32 %v1079, 4294901760
    %7222 = vmatprep.mubr.f32.mxu0 %v7221
    %v7223 = vand.u32 %v1078, 4294901760
    %7224 = vmatmul.mubr.f32.gmra.mxu0 %v7223
    %v7225 = vpop.f32.mrf.mxu0
    %v7226 = vadd.f32 %v6969, %v7225
    %v7227 = vpop.f32.mrf.mxu0
    %v7228 = vadd.f32 %v6971, %v7227
    %v7229 = vand.u32 %v1082, 4294901760
    %7230 = vmatprep.mubr.f32.mxu0 %v7229
    %v7231 = vand.u32 %v1081, 4294901760
    %7232 = vmatmul.mubr.f32.gmra.mxu0 %v7231
    %v7233 = vpop.f32.mrf.mxu0
    %v7234 = vadd.f32 %v6977, %v7233
    %v7235 = vpop.f32.mrf.mxu0
    %v7236 = vadd.f32 %v6979, %v7235
    %v7237 = vand.u32 %v1085, 4294901760
    %7238 = vmatprep.mubr.f32.mxu0 %v7237
    %v7239 = vand.u32 %v1084, 4294901760
    %7240 = vmatmul.mubr.f32.gmra.mxu0 %v7239
    %v7241 = vpop.f32.mrf.mxu0
    %v7242 = vadd.f32 %v6985, %v7241
    %v7243 = vpop.f32.mrf.mxu0
    %v7244 = vadd.f32 %v6987, %v7243
    %v7245 = vand.u32 %v1088, 4294901760
    %7246 = vmatprep.mubr.f32.mxu0 %v7245
    %v7247 = vand.u32 %v1087, 4294901760
    %7248 = vmatmul.mubr.f32.gmra.mxu0 %v7247
    %v7249 = vpop.f32.mrf.mxu0
    %v7250 = vadd.f32 %v6993, %v7249
    %v7251 = vpop.f32.mrf.mxu0
    %v7252 = vadd.f32 %v6995, %v7251
    %v7253 = vand.u32 %v1091, 4294901760
    %7254 = vmatprep.mubr.f32.mxu0 %v7253
    %v7255 = vand.u32 %v1090, 4294901760
    %7256 = vmatmul.mubr.f32.gmra.mxu0 %v7255
    %v7257 = vpop.f32.mrf.mxu0
    %v7258 = vadd.f32 %v7001, %v7257
    %v7259 = vpop.f32.mrf.mxu0
    %v7260 = vadd.f32 %v7003, %v7259
    %v7261 = vand.u32 %v1094, 4294901760
    %7262 = vmatprep.mubr.f32.mxu0 %v7261
    %v7263 = vand.u32 %v1093, 4294901760
    %7264 = vmatmul.mubr.f32.gmra.mxu0 %v7263
    %v7265 = vpop.f32.mrf.mxu0
    %v7266 = vadd.f32 %v7009, %v7265
    %v7267 = vpop.f32.mrf.mxu0
    %v7268 = vadd.f32 %v7011, %v7267
    %v7269 = vand.u32 %v1097, 4294901760
    %7270 = vmatprep.mubr.f32.mxu0 %v7269
    %v7271 = vand.u32 %v1096, 4294901760
    %7272 = vmatmul.mubr.f32.gmra.mxu0 %v7271
    %v7273 = vpop.f32.mrf.mxu0
    %v7274 = vadd.f32 %v7017, %v7273
    %v7275 = vpop.f32.mrf.mxu0
    %v7276 = vadd.f32 %v7019, %v7275
    %v7277 = vand.u32 %v1100, 4294901760
    %7278 = vmatprep.mubr.f32.mxu0 %v7277
    %v7279 = vand.u32 %v1099, 4294901760
    %7280 = vmatmul.mubr.f32.gmra.mxu0 %v7279
    %v7281 = vpop.f32.mrf.mxu0
    %v7282 = vadd.f32 %v7025, %v7281
    %v7283 = vpop.f32.mrf.mxu0
    %v7284 = vadd.f32 %v7027, %v7283
    %v7285 = vand.u32 %v1103, 4294901760
    %7286 = vmatprep.mubr.f32.mxu0 %v7285
    %v7287 = vand.u32 %v1102, 4294901760
    %7288 = vmatmul.mubr.f32.gmra.mxu0 %v7287
    %v7289 = vpop.f32.mrf.mxu0
    %v7290 = vadd.f32 %v7033, %v7289
    %v7291 = vpop.f32.mrf.mxu0
    %v7292 = vadd.f32 %v7035, %v7291
    %v7293 = vand.u32 %v1106, 4294901760
    %7294 = vmatprep.mubr.f32.mxu0 %v7293
    %v7295 = vand.u32 %v1105, 4294901760
    %7296 = vmatmul.mubr.f32.gmra.mxu0 %v7295
    %v7297 = vpop.f32.mrf.mxu0
    %v7298 = vadd.f32 %v7041, %v7297
    %v7299 = vpop.f32.mrf.mxu0
    %v7300 = vadd.f32 %v7043, %v7299
    %v7301 = vand.u32 %v1109, 4294901760
    %7302 = vmatprep.mubr.f32.mxu0 %v7301
    %v7303 = vand.u32 %v1108, 4294901760
    %7304 = vmatmul.mubr.f32.gmra.mxu0 %v7303
    %v7305 = vpop.f32.mrf.mxu0
    %v7306 = vadd.f32 %v7049, %v7305
    %v7307 = vpop.f32.mrf.mxu0
    %v7308 = vadd.f32 %v7051, %v7307
    %7309 = vdwg.mxu0
    %7310 = vmatprep.subr.mxu0 0.0
    %7311 = vmatpush1.msra.mxu0 0.0
    %7312 = vmatprep.subr.mxu0 0.0
    %7313 = vmatpush1.msra.mxu0 0.0
    %v7314 = vand.u32 %v1294, 4294901760
    %7315 = vmatprep.subr.mxu0 %v7314
    %v7316 = vand.u32 %v1293, 4294901760
    %7317 = vmatpush1.msra.mxu0 %v7316
    %v7318 = vand.u32 %v1290, 4294901760
    %7319 = vmatprep.subr.mxu0 %v7318
    %v7320 = vand.u32 %v1289, 4294901760
    %7321 = vmatpush1.msra.mxu0 %v7320
    %v7322 = vand.u32 %v1286, 4294901760
    %7323 = vmatprep.subr.mxu0 %v7322
    %v7324 = vand.u32 %v1285, 4294901760
    %7325 = vmatpush1.msra.mxu0 %v7324
    %v7326 = vand.u32 %v1282, 4294901760
    %7327 = vmatprep.subr.mxu0 %v7326
    %v7328 = vand.u32 %v1281, 4294901760
    %7329 = vmatpush1.msra.mxu0 %v7328
    %v7330 = vand.u32 %v1278, 4294901760
    %7331 = vmatprep.subr.mxu0 %v7330
    %v7332 = vand.u32 %v1277, 4294901760
    %7333 = vmatpush1.msra.mxu0 %v7332
    %v7334 = vand.u32 %v1274, 4294901760
    %7335 = vmatprep.subr.mxu0 %v7334
    %v7336 = vand.u32 %v1273, 4294901760
    %7337 = vmatpush1.msra.mxu0 %v7336
    %v7338 = vand.u32 %v1270, 4294901760
    %7339 = vmatprep.subr.mxu0 %v7338
    %v7340 = vand.u32 %v1269, 4294901760
    %7341 = vmatpush1.msra.mxu0 %v7340
    %v7342 = vand.u32 %v1266, 4294901760
    %7343 = vmatprep.subr.mxu0 %v7342
    %v7344 = vand.u32 %v1265, 4294901760
    %7345 = vmatpush1.msra.mxu0 %v7344
    %v7346 = vand.u32 %v1262, 4294901760
    %7347 = vmatprep.subr.mxu0 %v7346
    %v7348 = vand.u32 %v1261, 4294901760
    %7349 = vmatpush1.msra.mxu0 %v7348
    %v7350 = vand.u32 %v1258, 4294901760
    %7351 = vmatprep.subr.mxu0 %v7350
    %v7352 = vand.u32 %v1257, 4294901760
    %7353 = vmatpush1.msra.mxu0 %v7352
    %v7354 = vand.u32 %v1254, 4294901760
    %7355 = vmatprep.subr.mxu0 %v7354
    %v7356 = vand.u32 %v1253, 4294901760
    %7357 = vmatpush1.msra.mxu0 %v7356
    %v7358 = vand.u32 %v1250, 4294901760
    %7359 = vmatprep.subr.mxu0 %v7358
    %v7360 = vand.u32 %v1249, 4294901760
    %7361 = vmatpush1.msra.mxu0 %v7360
    %v7362 = vand.u32 %v1246, 4294901760
    %7363 = vmatprep.subr.mxu0 %v7362
    %v7364 = vand.u32 %v1245, 4294901760
    %7365 = vmatpush1.msra.mxu0 %v7364
    %v7366 = vand.u32 %v1242, 4294901760
    %7367 = vmatprep.subr.mxu0 %v7366
    %v7368 = vand.u32 %v1241, 4294901760
    %7369 = vmatpush1.msra.mxu0 %v7368
    %7370 = vmatprep.subr.mxu0 0.0
    %7371 = vmatpush2.msra.mxu0 0.0
    %7372 = vmatprep.subr.mxu0 0.0
    %7373 = vmatpush2.msra.mxu0 0.0
    %7374 = vmatprep.subr.mxu0 0.0
    %7375 = vmatpush2.msra.mxu0 0.0
    %7376 = vmatprep.subr.mxu0 0.0
    %7377 = vmatpush2.msra.mxu0 0.0
    %7378 = vmatprep.subr.mxu0 0.0
    %7379 = vmatpush2.msra.mxu0 0.0
    %7380 = vmatprep.subr.mxu0 0.0
    %7381 = vmatpush2.msra.mxu0 0.0
    %7382 = vmatprep.subr.mxu0 0.0
    %7383 = vmatpush2.msra.mxu0 0.0
    %7384 = vmatprep.subr.mxu0 0.0
    %7385 = vmatpush2.msra.mxu0 0.0
    %7386 = vmatprep.subr.mxu0 0.0
    %7387 = vmatpush2.msra.mxu0 0.0
    %7388 = vmatprep.subr.mxu0 0.0
    %7389 = vmatpush2.msra.mxu0 0.0
    %7390 = vmatprep.subr.mxu0 0.0
    %7391 = vmatpush2.msra.mxu0 0.0
    %7392 = vmatprep.subr.mxu0 0.0
    %7393 = vmatpush2.msra.mxu0 0.0
    %7394 = vmatprep.subr.mxu0 0.0
    %7395 = vmatpush2.msra.mxu0 0.0
    %7396 = vmatprep.subr.mxu0 0.0
    %7397 = vmatpush2.msra.mxu0 0.0
    %7398 = vmatprep.subr.mxu0 0.0
    %7399 = vmatpush2.msra.mxu0 0.0
    %7400 = vmatprep.subr.mxu0 0.0
    %7401 = vmatpush2.msra.mxu0 0.0
    %7402 = vmatprep.mubr.f32.mxu0 0.0
    %v7403 = vand.u32 %v1297, 4294901760
    %v7404 = vsub.f32 %v1297, %v7403
    %v7405 = vand.u32 %v7404, 4294901760
    %v7406 = vsub.f32 %v7404, %v7405
    %v7407 = vand.u32 %v7406, 4294901760
    %7408 = vmatmul.mubr.f32.gmra.mxu0 %v7407
    %v7409 = vpop.f32.mrf.mxu0
    %v7410 = vadd.f32 %v7186, %v7409
    %v7411 = vpop.f32.mrf.mxu0
    %v7412 = vadd.f32 %v7188, %v7411
    %7413 = vmatprep.mubr.f32.mxu0 0.0
    %v7414 = vand.u32 %v1300, 4294901760
    %v7415 = vsub.f32 %v1300, %v7414
    %v7416 = vand.u32 %v7415, 4294901760
    %v7417 = vsub.f32 %v7415, %v7416
    %v7418 = vand.u32 %v7417, 4294901760
    %7419 = vmatmul.mubr.f32.gmra.mxu0 %v7418
    %v7420 = vpop.f32.mrf.mxu0
    %v7421 = vadd.f32 %v7194, %v7420
    %v7422 = vpop.f32.mrf.mxu0
    %v7423 = vadd.f32 %v7196, %v7422
    %7424 = vmatprep.mubr.f32.mxu0 0.0
    %v7425 = vand.u32 %v1303, 4294901760
    %v7426 = vsub.f32 %v1303, %v7425
    %v7427 = vand.u32 %v7426, 4294901760
    %v7428 = vsub.f32 %v7426, %v7427
    %v7429 = vand.u32 %v7428, 4294901760
    %7430 = vmatmul.mubr.f32.gmra.mxu0 %v7429
    %v7431 = vpop.f32.mrf.mxu0
    %v7432 = vadd.f32 %v7202, %v7431
    %v7433 = vpop.f32.mrf.mxu0
    %v7434 = vadd.f32 %v7204, %v7433
    %7435 = vmatprep.mubr.f32.mxu0 0.0
    %v7436 = vand.u32 %v1306, 4294901760
    %v7437 = vsub.f32 %v1306, %v7436
    %v7438 = vand.u32 %v7437, 4294901760
    %v7439 = vsub.f32 %v7437, %v7438
    %v7440 = vand.u32 %v7439, 4294901760
    %7441 = vmatmul.mubr.f32.gmra.mxu0 %v7440
    %v7442 = vpop.f32.mrf.mxu0
    %v7443 = vadd.f32 %v7210, %v7442
    %v7444 = vpop.f32.mrf.mxu0
    %v7445 = vadd.f32 %v7212, %v7444
    %7446 = vmatprep.mubr.f32.mxu0 0.0
    %v7447 = vand.u32 %v1309, 4294901760
    %v7448 = vsub.f32 %v1309, %v7447
    %v7449 = vand.u32 %v7448, 4294901760
    %v7450 = vsub.f32 %v7448, %v7449
    %v7451 = vand.u32 %v7450, 4294901760
    %7452 = vmatmul.mubr.f32.gmra.mxu0 %v7451
    %v7453 = vpop.f32.mrf.mxu0
    %v7454 = vadd.f32 %v7218, %v7453
    %v7455 = vpop.f32.mrf.mxu0
    %v7456 = vadd.f32 %v7220, %v7455
    %7457 = vmatprep.mubr.f32.mxu0 0.0
    %v7458 = vand.u32 %v1312, 4294901760
    %v7459 = vsub.f32 %v1312, %v7458
    %v7460 = vand.u32 %v7459, 4294901760
    %v7461 = vsub.f32 %v7459, %v7460
    %v7462 = vand.u32 %v7461, 4294901760
    %7463 = vmatmul.mubr.f32.gmra.mxu0 %v7462
    %v7464 = vpop.f32.mrf.mxu0
    %v7465 = vadd.f32 %v7226, %v7464
    %v7466 = vpop.f32.mrf.mxu0
    %v7467 = vadd.f32 %v7228, %v7466
    %7468 = vmatprep.mubr.f32.mxu0 0.0
    %v7469 = vand.u32 %v1315, 4294901760
    %v7470 = vsub.f32 %v1315, %v7469
    %v7471 = vand.u32 %v7470, 4294901760
    %v7472 = vsub.f32 %v7470, %v7471
    %v7473 = vand.u32 %v7472, 4294901760
    %7474 = vmatmul.mubr.f32.gmra.mxu0 %v7473
    %v7475 = vpop.f32.mrf.mxu0
    %v7476 = vadd.f32 %v7234, %v7475
    %v7477 = vpop.f32.mrf.mxu0
    %v7478 = vadd.f32 %v7236, %v7477
    %7479 = vmatprep.mubr.f32.mxu0 0.0
    %v7480 = vand.u32 %v1318, 4294901760
    %v7481 = vsub.f32 %v1318, %v7480
    %v7482 = vand.u32 %v7481, 4294901760
    %v7483 = vsub.f32 %v7481, %v7482
    %v7484 = vand.u32 %v7483, 4294901760
    %7485 = vmatmul.mubr.f32.gmra.mxu0 %v7484
    %v7486 = vpop.f32.mrf.mxu0
    %v7487 = vadd.f32 %v7242, %v7486
    %v7488 = vpop.f32.mrf.mxu0
    %v7489 = vadd.f32 %v7244, %v7488
    %7490 = vmatprep.mubr.f32.mxu0 0.0
    %v7491 = vand.u32 %v1321, 4294901760
    %v7492 = vsub.f32 %v1321, %v7491
    %v7493 = vand.u32 %v7492, 4294901760
    %v7494 = vsub.f32 %v7492, %v7493
    %v7495 = vand.u32 %v7494, 4294901760
    %7496 = vmatmul.mubr.f32.gmra.mxu0 %v7495
    %v7497 = vpop.f32.mrf.mxu0
    %v7498 = vadd.f32 %v7250, %v7497
    %v7499 = vpop.f32.mrf.mxu0
    %v7500 = vadd.f32 %v7252, %v7499
    %7501 = vmatprep.mubr.f32.mxu0 0.0
    %v7502 = vand.u32 %v1324, 4294901760
    %v7503 = vsub.f32 %v1324, %v7502
    %v7504 = vand.u32 %v7503, 4294901760
    %v7505 = vsub.f32 %v7503, %v7504
    %v7506 = vand.u32 %v7505, 4294901760
    %7507 = vmatmul.mubr.f32.gmra.mxu0 %v7506
    %v7508 = vpop.f32.mrf.mxu0
    %v7509 = vadd.f32 %v7258, %v7508
    %v7510 = vpop.f32.mrf.mxu0
    %v7511 = vadd.f32 %v7260, %v7510
    %7512 = vmatprep.mubr.f32.mxu0 0.0
    %v7513 = vand.u32 %v1327, 4294901760
    %v7514 = vsub.f32 %v1327, %v7513
    %v7515 = vand.u32 %v7514, 4294901760
    %v7516 = vsub.f32 %v7514, %v7515
    %v7517 = vand.u32 %v7516, 4294901760
    %7518 = vmatmul.mubr.f32.gmra.mxu0 %v7517
    %v7519 = vpop.f32.mrf.mxu0
    %v7520 = vadd.f32 %v7266, %v7519
    %v7521 = vpop.f32.mrf.mxu0
    %v7522 = vadd.f32 %v7268, %v7521
    %7523 = vmatprep.mubr.f32.mxu0 0.0
    %v7524 = vand.u32 %v1330, 4294901760
    %v7525 = vsub.f32 %v1330, %v7524
    %v7526 = vand.u32 %v7525, 4294901760
    %v7527 = vsub.f32 %v7525, %v7526
    %v7528 = vand.u32 %v7527, 4294901760
    %7529 = vmatmul.mubr.f32.gmra.mxu0 %v7528
    %v7530 = vpop.f32.mrf.mxu0
    %v7531 = vadd.f32 %v7274, %v7530
    %v7532 = vpop.f32.mrf.mxu0
    %v7533 = vadd.f32 %v7276, %v7532
    %7534 = vmatprep.mubr.f32.mxu0 0.0
    %v7535 = vand.u32 %v1333, 4294901760
    %v7536 = vsub.f32 %v1333, %v7535
    %v7537 = vand.u32 %v7536, 4294901760
    %v7538 = vsub.f32 %v7536, %v7537
    %v7539 = vand.u32 %v7538, 4294901760
    %7540 = vmatmul.mubr.f32.gmra.mxu0 %v7539
    %v7541 = vpop.f32.mrf.mxu0
    %v7542 = vadd.f32 %v7282, %v7541
    %v7543 = vpop.f32.mrf.mxu0
    %v7544 = vadd.f32 %v7284, %v7543
    %7545 = vmatprep.mubr.f32.mxu0 0.0
    %v7546 = vand.u32 %v1336, 4294901760
    %v7547 = vsub.f32 %v1336, %v7546
    %v7548 = vand.u32 %v7547, 4294901760
    %v7549 = vsub.f32 %v7547, %v7548
    %v7550 = vand.u32 %v7549, 4294901760
    %7551 = vmatmul.mubr.f32.gmra.mxu0 %v7550
    %v7552 = vpop.f32.mrf.mxu0
    %v7553 = vadd.f32 %v7290, %v7552
    %v7554 = vpop.f32.mrf.mxu0
    %v7555 = vadd.f32 %v7292, %v7554
    %7556 = vmatprep.mubr.f32.mxu0 0.0
    %v7557 = vand.u32 %v1339, 4294901760
    %v7558 = vsub.f32 %v1339, %v7557
    %v7559 = vand.u32 %v7558, 4294901760
    %v7560 = vsub.f32 %v7558, %v7559
    %v7561 = vand.u32 %v7560, 4294901760
    %7562 = vmatmul.mubr.f32.gmra.mxu0 %v7561
    %v7563 = vpop.f32.mrf.mxu0
    %v7564 = vadd.f32 %v7298, %v7563
    %v7565 = vpop.f32.mrf.mxu0
    %v7566 = vadd.f32 %v7300, %v7565
    %7567 = vmatprep.mubr.f32.mxu0 0.0
    %v7568 = vand.u32 %v1342, 4294901760
    %v7569 = vsub.f32 %v1342, %v7568
    %v7570 = vand.u32 %v7569, 4294901760
    %v7571 = vsub.f32 %v7569, %v7570
    %v7572 = vand.u32 %v7571, 4294901760
    %7573 = vmatmul.mubr.f32.gmra.mxu0 %v7572
    %v7574 = vpop.f32.mrf.mxu0
    %v7575 = vadd.f32 %v7306, %v7574
    %v7576 = vpop.f32.mrf.mxu0
    %v7577 = vadd.f32 %v7308, %v7576
    %7578 = vdwg.mxu0
    %7579 = vmatprep.subr.mxu0 0.0
    %7580 = vmatpush1.msra.mxu0 0.0
    %7581 = vmatprep.subr.mxu0 0.0
    %7582 = vmatpush1.msra.mxu0 0.0
    %v7583 = vand.u32 %v1294, 4294901760
    %v7584 = vsub.f32 %v1294, %v7583
    %v7585 = vand.u32 %v7584, 4294901760
    %v7586 = vsub.f32 %v7584, %v7585
    %v7587 = vand.u32 %v7586, 4294901760
    %7588 = vmatprep.subr.mxu0 %v7587
    %v7589 = vand.u32 %v1293, 4294901760
    %v7590 = vsub.f32 %v1293, %v7589
    %v7591 = vand.u32 %v7590, 4294901760
    %v7592 = vsub.f32 %v7590, %v7591
    %v7593 = vand.u32 %v7592, 4294901760
    %7594 = vmatpush1.msra.mxu0 %v7593
    %v7595 = vand.u32 %v1290, 4294901760
    %v7596 = vsub.f32 %v1290, %v7595
    %v7597 = vand.u32 %v7596, 4294901760
    %v7598 = vsub.f32 %v7596, %v7597
    %v7599 = vand.u32 %v7598, 4294901760
    %7600 = vmatprep.subr.mxu0 %v7599
    %v7601 = vand.u32 %v1289, 4294901760
    %v7602 = vsub.f32 %v1289, %v7601
    %v7603 = vand.u32 %v7602, 4294901760
    %v7604 = vsub.f32 %v7602, %v7603
    %v7605 = vand.u32 %v7604, 4294901760
    %7606 = vmatpush1.msra.mxu0 %v7605
    %v7607 = vand.u32 %v1286, 4294901760
    %v7608 = vsub.f32 %v1286, %v7607
    %v7609 = vand.u32 %v7608, 4294901760
    %v7610 = vsub.f32 %v7608, %v7609
    %v7611 = vand.u32 %v7610, 4294901760
    %7612 = vmatprep.subr.mxu0 %v7611
    %v7613 = vand.u32 %v1285, 4294901760
    %v7614 = vsub.f32 %v1285, %v7613
    %v7615 = vand.u32 %v7614, 4294901760
    %v7616 = vsub.f32 %v7614, %v7615
    %v7617 = vand.u32 %v7616, 4294901760
    %7618 = vmatpush1.msra.mxu0 %v7617
    %v7619 = vand.u32 %v1282, 4294901760
    %v7620 = vsub.f32 %v1282, %v7619
    %v7621 = vand.u32 %v7620, 4294901760
    %v7622 = vsub.f32 %v7620, %v7621
    %v7623 = vand.u32 %v7622, 4294901760
    %7624 = vmatprep.subr.mxu0 %v7623
    %v7625 = vand.u32 %v1281, 4294901760
    %v7626 = vsub.f32 %v1281, %v7625
    %v7627 = vand.u32 %v7626, 4294901760
    %v7628 = vsub.f32 %v7626, %v7627
    %v7629 = vand.u32 %v7628, 4294901760
    %7630 = vmatpush1.msra.mxu0 %v7629
    %v7631 = vand.u32 %v1278, 4294901760
    %v7632 = vsub.f32 %v1278, %v7631
    %v7633 = vand.u32 %v7632, 4294901760
    %v7634 = vsub.f32 %v7632, %v7633
    %v7635 = vand.u32 %v7634, 4294901760
    %7636 = vmatprep.subr.mxu0 %v7635
    %v7637 = vand.u32 %v1277, 4294901760
    %v7638 = vsub.f32 %v1277, %v7637
    %v7639 = vand.u32 %v7638, 4294901760
    %v7640 = vsub.f32 %v7638, %v7639
    %v7641 = vand.u32 %v7640, 4294901760
    %7642 = vmatpush1.msra.mxu0 %v7641
    %v7643 = vand.u32 %v1274, 4294901760
    %v7644 = vsub.f32 %v1274, %v7643
    %v7645 = vand.u32 %v7644, 4294901760
    %v7646 = vsub.f32 %v7644, %v7645
    %v7647 = vand.u32 %v7646, 4294901760
    %7648 = vmatprep.subr.mxu0 %v7647
    %v7649 = vand.u32 %v1273, 4294901760
    %v7650 = vsub.f32 %v1273, %v7649
    %v7651 = vand.u32 %v7650, 4294901760
    %v7652 = vsub.f32 %v7650, %v7651
    %v7653 = vand.u32 %v7652, 4294901760
    %7654 = vmatpush1.msra.mxu0 %v7653
    %v7655 = vand.u32 %v1270, 4294901760
    %v7656 = vsub.f32 %v1270, %v7655
    %v7657 = vand.u32 %v7656, 4294901760
    %v7658 = vsub.f32 %v7656, %v7657
    %v7659 = vand.u32 %v7658, 4294901760
    %7660 = vmatprep.subr.mxu0 %v7659
    %v7661 = vand.u32 %v1269, 4294901760
    %v7662 = vsub.f32 %v1269, %v7661
    %v7663 = vand.u32 %v7662, 4294901760
    %v7664 = vsub.f32 %v7662, %v7663
    %v7665 = vand.u32 %v7664, 4294901760
    %7666 = vmatpush1.msra.mxu0 %v7665
    %v7667 = vand.u32 %v1266, 4294901760
    %v7668 = vsub.f32 %v1266, %v7667
    %v7669 = vand.u32 %v7668, 4294901760
    %v7670 = vsub.f32 %v7668, %v7669
    %v7671 = vand.u32 %v7670, 4294901760
    %7672 = vmatprep.subr.mxu0 %v7671
    %v7673 = vand.u32 %v1265, 4294901760
    %v7674 = vsub.f32 %v1265, %v7673
    %v7675 = vand.u32 %v7674, 4294901760
    %v7676 = vsub.f32 %v7674, %v7675
    %v7677 = vand.u32 %v7676, 4294901760
    %7678 = vmatpush1.msra.mxu0 %v7677
    %v7679 = vand.u32 %v1262, 4294901760
    %v7680 = vsub.f32 %v1262, %v7679
    %v7681 = vand.u32 %v7680, 4294901760
    %v7682 = vsub.f32 %v7680, %v7681
    %v7683 = vand.u32 %v7682, 4294901760
    %7684 = vmatprep.subr.mxu0 %v7683
    %v7685 = vand.u32 %v1261, 4294901760
    %v7686 = vsub.f32 %v1261, %v7685
    %v7687 = vand.u32 %v7686, 4294901760
    %v7688 = vsub.f32 %v7686, %v7687
    %v7689 = vand.u32 %v7688, 4294901760
    %7690 = vmatpush1.msra.mxu0 %v7689
    %v7691 = vand.u32 %v1258, 4294901760
    %v7692 = vsub.f32 %v1258, %v7691
    %v7693 = vand.u32 %v7692, 4294901760
    %v7694 = vsub.f32 %v7692, %v7693
    %v7695 = vand.u32 %v7694, 4294901760
    %7696 = vmatprep.subr.mxu0 %v7695
    %v7697 = vand.u32 %v1257, 4294901760
    %v7698 = vsub.f32 %v1257, %v7697
    %v7699 = vand.u32 %v7698, 4294901760
    %v7700 = vsub.f32 %v7698, %v7699
    %v7701 = vand.u32 %v7700, 4294901760
    %7702 = vmatpush1.msra.mxu0 %v7701
    %v7703 = vand.u32 %v1254, 4294901760
    %v7704 = vsub.f32 %v1254, %v7703
    %v7705 = vand.u32 %v7704, 4294901760
    %v7706 = vsub.f32 %v7704, %v7705
    %v7707 = vand.u32 %v7706, 4294901760
    %7708 = vmatprep.subr.mxu0 %v7707
    %v7709 = vand.u32 %v1253, 4294901760
    %v7710 = vsub.f32 %v1253, %v7709
    %v7711 = vand.u32 %v7710, 4294901760
    %v7712 = vsub.f32 %v7710, %v7711
    %v7713 = vand.u32 %v7712, 4294901760
    %7714 = vmatpush1.msra.mxu0 %v7713
    %v7715 = vand.u32 %v1250, 4294901760
    %v7716 = vsub.f32 %v1250, %v7715
    %v7717 = vand.u32 %v7716, 4294901760
    %v7718 = vsub.f32 %v7716, %v7717
    %v7719 = vand.u32 %v7718, 4294901760
    %7720 = vmatprep.subr.mxu0 %v7719
    %v7721 = vand.u32 %v1249, 4294901760
    %v7722 = vsub.f32 %v1249, %v7721
    %v7723 = vand.u32 %v7722, 4294901760
    %v7724 = vsub.f32 %v7722, %v7723
    %v7725 = vand.u32 %v7724, 4294901760
    %7726 = vmatpush1.msra.mxu0 %v7725
    %v7727 = vand.u32 %v1246, 4294901760
    %v7728 = vsub.f32 %v1246, %v7727
    %v7729 = vand.u32 %v7728, 4294901760
    %v7730 = vsub.f32 %v7728, %v7729
    %v7731 = vand.u32 %v7730, 4294901760
    %7732 = vmatprep.subr.mxu0 %v7731
    %v7733 = vand.u32 %v1245, 4294901760
    %v7734 = vsub.f32 %v1245, %v7733
    %v7735 = vand.u32 %v7734, 4294901760
    %v7736 = vsub.f32 %v7734, %v7735
    %v7737 = vand.u32 %v7736, 4294901760
    %7738 = vmatpush1.msra.mxu0 %v7737
    %v7739 = vand.u32 %v1242, 4294901760
    %v7740 = vsub.f32 %v1242, %v7739
    %v7741 = vand.u32 %v7740, 4294901760
    %v7742 = vsub.f32 %v7740, %v7741
    %v7743 = vand.u32 %v7742, 4294901760
    %7744 = vmatprep.subr.mxu0 %v7743
    %v7745 = vand.u32 %v1241, 4294901760
    %v7746 = vsub.f32 %v1241, %v7745
    %v7747 = vand.u32 %v7746, 4294901760
    %v7748 = vsub.f32 %v7746, %v7747
    %v7749 = vand.u32 %v7748, 4294901760
    %7750 = vmatpush1.msra.mxu0 %v7749
    %7751 = vmatprep.subr.mxu0 0.0
    %7752 = vmatpush2.msra.mxu0 0.0
    %7753 = vmatprep.subr.mxu0 0.0
    %7754 = vmatpush2.msra.mxu0 0.0
    %7755 = vmatprep.subr.mxu0 0.0
    %7756 = vmatpush2.msra.mxu0 0.0
    %7757 = vmatprep.subr.mxu0 0.0
    %7758 = vmatpush2.msra.mxu0 0.0
    %7759 = vmatprep.subr.mxu0 0.0
    %7760 = vmatpush2.msra.mxu0 0.0
    %7761 = vmatprep.subr.mxu0 0.0
    %7762 = vmatpush2.msra.mxu0 0.0
    %7763 = vmatprep.subr.mxu0 0.0
    %7764 = vmatpush2.msra.mxu0 0.0
    %7765 = vmatprep.subr.mxu0 0.0
    %7766 = vmatpush2.msra.mxu0 0.0
    %7767 = vmatprep.subr.mxu0 0.0
    %7768 = vmatpush2.msra.mxu0 0.0
    %7769 = vmatprep.subr.mxu0 0.0
    %7770 = vmatpush2.msra.mxu0 0.0
    %7771 = vmatprep.subr.mxu0 0.0
    %7772 = vmatpush2.msra.mxu0 0.0
    %7773 = vmatprep.subr.mxu0 0.0
    %7774 = vmatpush2.msra.mxu0 0.0
    %7775 = vmatprep.subr.mxu0 0.0
    %7776 = vmatpush2.msra.mxu0 0.0
    %7777 = vmatprep.subr.mxu0 0.0
    %7778 = vmatpush2.msra.mxu0 0.0
    %7779 = vmatprep.subr.mxu0 0.0
    %7780 = vmatpush2.msra.mxu0 0.0
    %7781 = vmatprep.subr.mxu0 0.0
    %7782 = vmatpush2.msra.mxu0 0.0
    %7783 = vmatprep.mubr.f32.mxu0 0.0
    %v7784 = vand.u32 %v1297, 4294901760
    %7785 = vmatmul.mubr.f32.gmra.mxu0 %v7784
    %v7786 = vpop.f32.mrf.mxu0
    %v7787 = vadd.f32 %v7410, %v7786
    %v7788 = vpop.f32.mrf.mxu0
    %v7789 = vadd.f32 %v7412, %v7788
    %7790 = vmatprep.mubr.f32.mxu0 0.0
    %v7791 = vand.u32 %v1300, 4294901760
    %7792 = vmatmul.mubr.f32.gmra.mxu0 %v7791
    %v7793 = vpop.f32.mrf.mxu0
    %v7794 = vadd.f32 %v7421, %v7793
    %v7795 = vpop.f32.mrf.mxu0
    %v7796 = vadd.f32 %v7423, %v7795
    %7797 = vmatprep.mubr.f32.mxu0 0.0
    %v7798 = vand.u32 %v1303, 4294901760
    %7799 = vmatmul.mubr.f32.gmra.mxu0 %v7798
    %v7800 = vpop.f32.mrf.mxu0
    %v7801 = vadd.f32 %v7432, %v7800
    %v7802 = vpop.f32.mrf.mxu0
    %v7803 = vadd.f32 %v7434, %v7802
    %7804 = vmatprep.mubr.f32.mxu0 0.0
    %v7805 = vand.u32 %v1306, 4294901760
    %7806 = vmatmul.mubr.f32.gmra.mxu0 %v7805
    %v7807 = vpop.f32.mrf.mxu0
    %v7808 = vadd.f32 %v7443, %v7807
    %v7809 = vpop.f32.mrf.mxu0
    %v7810 = vadd.f32 %v7445, %v7809
    %7811 = vmatprep.mubr.f32.mxu0 0.0
    %v7812 = vand.u32 %v1309, 4294901760
    %7813 = vmatmul.mubr.f32.gmra.mxu0 %v7812
    %v7814 = vpop.f32.mrf.mxu0
    %v7815 = vadd.f32 %v7454, %v7814
    %v7816 = vpop.f32.mrf.mxu0
    %v7817 = vadd.f32 %v7456, %v7816
    %7818 = vmatprep.mubr.f32.mxu0 0.0
    %v7819 = vand.u32 %v1312, 4294901760
    %7820 = vmatmul.mubr.f32.gmra.mxu0 %v7819
    %v7821 = vpop.f32.mrf.mxu0
    %v7822 = vadd.f32 %v7465, %v7821
    %v7823 = vpop.f32.mrf.mxu0
    %v7824 = vadd.f32 %v7467, %v7823
    %7825 = vmatprep.mubr.f32.mxu0 0.0
    %v7826 = vand.u32 %v1315, 4294901760
    %7827 = vmatmul.mubr.f32.gmra.mxu0 %v7826
    %v7828 = vpop.f32.mrf.mxu0
    %v7829 = vadd.f32 %v7476, %v7828
    %v7830 = vpop.f32.mrf.mxu0
    %v7831 = vadd.f32 %v7478, %v7830
    %7832 = vmatprep.mubr.f32.mxu0 0.0
    %v7833 = vand.u32 %v1318, 4294901760
    %7834 = vmatmul.mubr.f32.gmra.mxu0 %v7833
    %v7835 = vpop.f32.mrf.mxu0
    %v7836 = vadd.f32 %v7487, %v7835
    %v7837 = vpop.f32.mrf.mxu0
    %v7838 = vadd.f32 %v7489, %v7837
    %7839 = vmatprep.mubr.f32.mxu0 0.0
    %v7840 = vand.u32 %v1321, 4294901760
    %7841 = vmatmul.mubr.f32.gmra.mxu0 %v7840
    %v7842 = vpop.f32.mrf.mxu0
    %v7843 = vadd.f32 %v7498, %v7842
    %v7844 = vpop.f32.mrf.mxu0
    %v7845 = vadd.f32 %v7500, %v7844
    %7846 = vmatprep.mubr.f32.mxu0 0.0
    %v7847 = vand.u32 %v1324, 4294901760
    %7848 = vmatmul.mubr.f32.gmra.mxu0 %v7847
    %v7849 = vpop.f32.mrf.mxu0
    %v7850 = vadd.f32 %v7509, %v7849
    %v7851 = vpop.f32.mrf.mxu0
    %v7852 = vadd.f32 %v7511, %v7851
    %7853 = vmatprep.mubr.f32.mxu0 0.0
    %v7854 = vand.u32 %v1327, 4294901760
    %7855 = vmatmul.mubr.f32.gmra.mxu0 %v7854
    %v7856 = vpop.f32.mrf.mxu0
    %v7857 = vadd.f32 %v7520, %v7856
    %v7858 = vpop.f32.mrf.mxu0
    %v7859 = vadd.f32 %v7522, %v7858
    %7860 = vmatprep.mubr.f32.mxu0 0.0
    %v7861 = vand.u32 %v1330, 4294901760
    %7862 = vmatmul.mubr.f32.gmra.mxu0 %v7861
    %v7863 = vpop.f32.mrf.mxu0
    %v7864 = vadd.f32 %v7531, %v7863
    %v7865 = vpop.f32.mrf.mxu0
    %v7866 = vadd.f32 %v7533, %v7865
    %7867 = vmatprep.mubr.f32.mxu0 0.0
    %v7868 = vand.u32 %v1333, 4294901760
    %7869 = vmatmul.mubr.f32.gmra.mxu0 %v7868
    %v7870 = vpop.f32.mrf.mxu0
    %v7871 = vadd.f32 %v7542, %v7870
    %v7872 = vpop.f32.mrf.mxu0
    %v7873 = vadd.f32 %v7544, %v7872
    %7874 = vmatprep.mubr.f32.mxu0 0.0
    %v7875 = vand.u32 %v1336, 4294901760
    %7876 = vmatmul.mubr.f32.gmra.mxu0 %v7875
    %v7877 = vpop.f32.mrf.mxu0
    %v7878 = vadd.f32 %v7553, %v7877
    %v7879 = vpop.f32.mrf.mxu0
    %v7880 = vadd.f32 %v7555, %v7879
    %7881 = vmatprep.mubr.f32.mxu0 0.0
    %v7882 = vand.u32 %v1339, 4294901760
    %7883 = vmatmul.mubr.f32.gmra.mxu0 %v7882
    %v7884 = vpop.f32.mrf.mxu0
    %v7885 = vadd.f32 %v7564, %v7884
    %v7886 = vpop.f32.mrf.mxu0
    %v7887 = vadd.f32 %v7566, %v7886
    %7888 = vmatprep.mubr.f32.mxu0 0.0
    %v7889 = vand.u32 %v1342, 4294901760
    %7890 = vmatmul.mubr.f32.gmra.mxu0 %v7889
    %v7891 = vpop.f32.mrf.mxu0
    %v7892 = vadd.f32 %v7575, %v7891
    %v7893 = vpop.f32.mrf.mxu0
    %v7894 = vadd.f32 %v7577, %v7893
    %7895 = vdwg.mxu0
    %7896 = vmatprep.subr.mxu0 0.0
    %7897 = vmatpush1.msra.mxu0 0.0
    %7898 = vmatprep.subr.mxu0 0.0
    %7899 = vmatpush1.msra.mxu0 0.0
    %v7900 = vand.u32 %v1294, 4294901760
    %v7901 = vsub.f32 %v1294, %v7900
    %7902 = vmatprep.subr.mxu0 %v7901
    %v7903 = vand.u32 %v1293, 4294901760
    %v7904 = vsub.f32 %v1293, %v7903
    %7905 = vmatpush1.msra.mxu0 %v7904
    %v7906 = vand.u32 %v1290, 4294901760
    %v7907 = vsub.f32 %v1290, %v7906
    %7908 = vmatprep.subr.mxu0 %v7907
    %v7909 = vand.u32 %v1289, 4294901760
    %v7910 = vsub.f32 %v1289, %v7909
    %7911 = vmatpush1.msra.mxu0 %v7910
    %v7912 = vand.u32 %v1286, 4294901760
    %v7913 = vsub.f32 %v1286, %v7912
    %7914 = vmatprep.subr.mxu0 %v7913
    %v7915 = vand.u32 %v1285, 4294901760
    %v7916 = vsub.f32 %v1285, %v7915
    %7917 = vmatpush1.msra.mxu0 %v7916
    %v7918 = vand.u32 %v1282, 4294901760
    %v7919 = vsub.f32 %v1282, %v7918
    %7920 = vmatprep.subr.mxu0 %v7919
    %v7921 = vand.u32 %v1281, 4294901760
    %v7922 = vsub.f32 %v1281, %v7921
    %7923 = vmatpush1.msra.mxu0 %v7922
    %v7924 = vand.u32 %v1278, 4294901760
    %v7925 = vsub.f32 %v1278, %v7924
    %7926 = vmatprep.subr.mxu0 %v7925
    %v7927 = vand.u32 %v1277, 4294901760
    %v7928 = vsub.f32 %v1277, %v7927
    %7929 = vmatpush1.msra.mxu0 %v7928
    %v7930 = vand.u32 %v1274, 4294901760
    %v7931 = vsub.f32 %v1274, %v7930
    %7932 = vmatprep.subr.mxu0 %v7931
    %v7933 = vand.u32 %v1273, 4294901760
    %v7934 = vsub.f32 %v1273, %v7933
    %7935 = vmatpush1.msra.mxu0 %v7934
    %v7936 = vand.u32 %v1270, 4294901760
    %v7937 = vsub.f32 %v1270, %v7936
    %7938 = vmatprep.subr.mxu0 %v7937
    %v7939 = vand.u32 %v1269, 4294901760
    %v7940 = vsub.f32 %v1269, %v7939
    %7941 = vmatpush1.msra.mxu0 %v7940
    %v7942 = vand.u32 %v1266, 4294901760
    %v7943 = vsub.f32 %v1266, %v7942
    %7944 = vmatprep.subr.mxu0 %v7943
    %v7945 = vand.u32 %v1265, 4294901760
    %v7946 = vsub.f32 %v1265, %v7945
    %7947 = vmatpush1.msra.mxu0 %v7946
    %v7948 = vand.u32 %v1262, 4294901760
    %v7949 = vsub.f32 %v1262, %v7948
    %7950 = vmatprep.subr.mxu0 %v7949
    %v7951 = vand.u32 %v1261, 4294901760
    %v7952 = vsub.f32 %v1261, %v7951
    %7953 = vmatpush1.msra.mxu0 %v7952
    %v7954 = vand.u32 %v1258, 4294901760
    %v7955 = vsub.f32 %v1258, %v7954
    %7956 = vmatprep.subr.mxu0 %v7955
    %v7957 = vand.u32 %v1257, 4294901760
    %v7958 = vsub.f32 %v1257, %v7957
    %7959 = vmatpush1.msra.mxu0 %v7958
    %v7960 = vand.u32 %v1254, 4294901760
    %v7961 = vsub.f32 %v1254, %v7960
    %7962 = vmatprep.subr.mxu0 %v7961
    %v7963 = vand.u32 %v1253, 4294901760
    %v7964 = vsub.f32 %v1253, %v7963
    %7965 = vmatpush1.msra.mxu0 %v7964
    %v7966 = vand.u32 %v1250, 4294901760
    %v7967 = vsub.f32 %v1250, %v7966
    %7968 = vmatprep.subr.mxu0 %v7967
    %v7969 = vand.u32 %v1249, 4294901760
    %v7970 = vsub.f32 %v1249, %v7969
    %7971 = vmatpush1.msra.mxu0 %v7970
    %v7972 = vand.u32 %v1246, 4294901760
    %v7973 = vsub.f32 %v1246, %v7972
    %7974 = vmatprep.subr.mxu0 %v7973
    %v7975 = vand.u32 %v1245, 4294901760
    %v7976 = vsub.f32 %v1245, %v7975
    %7977 = vmatpush1.msra.mxu0 %v7976
    %v7978 = vand.u32 %v1242, 4294901760
    %v7979 = vsub.f32 %v1242, %v7978
    %7980 = vmatprep.subr.mxu0 %v7979
    %v7981 = vand.u32 %v1241, 4294901760
    %v7982 = vsub.f32 %v1241, %v7981
    %7983 = vmatpush1.msra.mxu0 %v7982
    %7984 = vmatprep.subr.mxu0 0.0
    %7985 = vmatpush2.msra.mxu0 0.0
    %7986 = vmatprep.subr.mxu0 0.0
    %7987 = vmatpush2.msra.mxu0 0.0
    %7988 = vmatprep.subr.mxu0 0.0
    %7989 = vmatpush2.msra.mxu0 0.0
    %7990 = vmatprep.subr.mxu0 0.0
    %7991 = vmatpush2.msra.mxu0 0.0
    %7992 = vmatprep.subr.mxu0 0.0
    %7993 = vmatpush2.msra.mxu0 0.0
    %7994 = vmatprep.subr.mxu0 0.0
    %7995 = vmatpush2.msra.mxu0 0.0
    %7996 = vmatprep.subr.mxu0 0.0
    %7997 = vmatpush2.msra.mxu0 0.0
    %7998 = vmatprep.subr.mxu0 0.0
    %7999 = vmatpush2.msra.mxu0 0.0
    %8000 = vmatprep.subr.mxu0 0.0
    %8001 = vmatpush2.msra.mxu0 0.0
    %8002 = vmatprep.subr.mxu0 0.0
    %8003 = vmatpush2.msra.mxu0 0.0
    %8004 = vmatprep.subr.mxu0 0.0
    %8005 = vmatpush2.msra.mxu0 0.0
    %8006 = vmatprep.subr.mxu0 0.0
    %8007 = vmatpush2.msra.mxu0 0.0
    %8008 = vmatprep.subr.mxu0 0.0
    %8009 = vmatpush2.msra.mxu0 0.0
    %8010 = vmatprep.subr.mxu0 0.0
    %8011 = vmatpush2.msra.mxu0 0.0
    %8012 = vmatprep.subr.mxu0 0.0
    %8013 = vmatpush2.msra.mxu0 0.0
    %8014 = vmatprep.subr.mxu0 0.0
    %8015 = vmatpush2.msra.mxu0 0.0
    %8016 = vmatprep.mubr.f32.mxu0 0.0
    %v8017 = vand.u32 %v1297, 4294901760
    %v8018 = vsub.f32 %v1297, %v8017
    %8019 = vmatmul.mubr.f32.gmra.mxu0 %v8018
    %v8020 = vpop.f32.mrf.mxu0
    %v8021 = vadd.f32 %v7787, %v8020
    %v8022 = vpop.f32.mrf.mxu0
    %v8023 = vadd.f32 %v7789, %v8022
    %8024 = vmatprep.mubr.f32.mxu0 0.0
    %v8025 = vand.u32 %v1300, 4294901760
    %v8026 = vsub.f32 %v1300, %v8025
    %8027 = vmatmul.mubr.f32.gmra.mxu0 %v8026
    %v8028 = vpop.f32.mrf.mxu0
    %v8029 = vadd.f32 %v7794, %v8028
    %v8030 = vpop.f32.mrf.mxu0
    %v8031 = vadd.f32 %v7796, %v8030
    %8032 = vmatprep.mubr.f32.mxu0 0.0
    %v8033 = vand.u32 %v1303, 4294901760
    %v8034 = vsub.f32 %v1303, %v8033
    %8035 = vmatmul.mubr.f32.gmra.mxu0 %v8034
    %v8036 = vpop.f32.mrf.mxu0
    %v8037 = vadd.f32 %v7801, %v8036
    %v8038 = vpop.f32.mrf.mxu0
    %v8039 = vadd.f32 %v7803, %v8038
    %8040 = vmatprep.mubr.f32.mxu0 0.0
    %v8041 = vand.u32 %v1306, 4294901760
    %v8042 = vsub.f32 %v1306, %v8041
    %8043 = vmatmul.mubr.f32.gmra.mxu0 %v8042
    %v8044 = vpop.f32.mrf.mxu0
    %v8045 = vadd.f32 %v7808, %v8044
    %v8046 = vpop.f32.mrf.mxu0
    %v8047 = vadd.f32 %v7810, %v8046
    %8048 = vmatprep.mubr.f32.mxu0 0.0
    %v8049 = vand.u32 %v1309, 4294901760
    %v8050 = vsub.f32 %v1309, %v8049
    %8051 = vmatmul.mubr.f32.gmra.mxu0 %v8050
    %v8052 = vpop.f32.mrf.mxu0
    %v8053 = vadd.f32 %v7815, %v8052
    %v8054 = vpop.f32.mrf.mxu0
    %v8055 = vadd.f32 %v7817, %v8054
    %8056 = vmatprep.mubr.f32.mxu0 0.0
    %v8057 = vand.u32 %v1312, 4294901760
    %v8058 = vsub.f32 %v1312, %v8057
    %8059 = vmatmul.mubr.f32.gmra.mxu0 %v8058
    %v8060 = vpop.f32.mrf.mxu0
    %v8061 = vadd.f32 %v7822, %v8060
    %v8062 = vpop.f32.mrf.mxu0
    %v8063 = vadd.f32 %v7824, %v8062
    %8064 = vmatprep.mubr.f32.mxu0 0.0
    %v8065 = vand.u32 %v1315, 4294901760
    %v8066 = vsub.f32 %v1315, %v8065
    %8067 = vmatmul.mubr.f32.gmra.mxu0 %v8066
    %v8068 = vpop.f32.mrf.mxu0
    %v8069 = vadd.f32 %v7829, %v8068
    %v8070 = vpop.f32.mrf.mxu0
    %v8071 = vadd.f32 %v7831, %v8070
    %8072 = vmatprep.mubr.f32.mxu0 0.0
    %v8073 = vand.u32 %v1318, 4294901760
    %v8074 = vsub.f32 %v1318, %v8073
    %8075 = vmatmul.mubr.f32.gmra.mxu0 %v8074
    %v8076 = vpop.f32.mrf.mxu0
    %v8077 = vadd.f32 %v7836, %v8076
    %v8078 = vpop.f32.mrf.mxu0
    %v8079 = vadd.f32 %v7838, %v8078
    %8080 = vmatprep.mubr.f32.mxu0 0.0
    %v8081 = vand.u32 %v1321, 4294901760
    %v8082 = vsub.f32 %v1321, %v8081
    %8083 = vmatmul.mubr.f32.gmra.mxu0 %v8082
    %v8084 = vpop.f32.mrf.mxu0
    %v8085 = vadd.f32 %v7843, %v8084
    %v8086 = vpop.f32.mrf.mxu0
    %v8087 = vadd.f32 %v7845, %v8086
    %8088 = vmatprep.mubr.f32.mxu0 0.0
    %v8089 = vand.u32 %v1324, 4294901760
    %v8090 = vsub.f32 %v1324, %v8089
    %8091 = vmatmul.mubr.f32.gmra.mxu0 %v8090
    %v8092 = vpop.f32.mrf.mxu0
    %v8093 = vadd.f32 %v7850, %v8092
    %v8094 = vpop.f32.mrf.mxu0
    %v8095 = vadd.f32 %v7852, %v8094
    %8096 = vmatprep.mubr.f32.mxu0 0.0
    %v8097 = vand.u32 %v1327, 4294901760
    %v8098 = vsub.f32 %v1327, %v8097
    %8099 = vmatmul.mubr.f32.gmra.mxu0 %v8098
    %v8100 = vpop.f32.mrf.mxu0
    %v8101 = vadd.f32 %v7857, %v8100
    %v8102 = vpop.f32.mrf.mxu0
    %v8103 = vadd.f32 %v7859, %v8102
    %8104 = vmatprep.mubr.f32.mxu0 0.0
    %v8105 = vand.u32 %v1330, 4294901760
    %v8106 = vsub.f32 %v1330, %v8105
    %8107 = vmatmul.mubr.f32.gmra.mxu0 %v8106
    %v8108 = vpop.f32.mrf.mxu0
    %v8109 = vadd.f32 %v7864, %v8108
    %v8110 = vpop.f32.mrf.mxu0
    %v8111 = vadd.f32 %v7866, %v8110
    %8112 = vmatprep.mubr.f32.mxu0 0.0
    %v8113 = vand.u32 %v1333, 4294901760
    %v8114 = vsub.f32 %v1333, %v8113
    %8115 = vmatmul.mubr.f32.gmra.mxu0 %v8114
    %v8116 = vpop.f32.mrf.mxu0
    %v8117 = vadd.f32 %v7871, %v8116
    %v8118 = vpop.f32.mrf.mxu0
    %v8119 = vadd.f32 %v7873, %v8118
    %8120 = vmatprep.mubr.f32.mxu0 0.0
    %v8121 = vand.u32 %v1336, 4294901760
    %v8122 = vsub.f32 %v1336, %v8121
    %8123 = vmatmul.mubr.f32.gmra.mxu0 %v8122
    %v8124 = vpop.f32.mrf.mxu0
    %v8125 = vadd.f32 %v7878, %v8124
    %v8126 = vpop.f32.mrf.mxu0
    %v8127 = vadd.f32 %v7880, %v8126
    %8128 = vmatprep.mubr.f32.mxu0 0.0
    %v8129 = vand.u32 %v1339, 4294901760
    %v8130 = vsub.f32 %v1339, %v8129
    %8131 = vmatmul.mubr.f32.gmra.mxu0 %v8130
    %v8132 = vpop.f32.mrf.mxu0
    %v8133 = vadd.f32 %v7885, %v8132
    %v8134 = vpop.f32.mrf.mxu0
    %v8135 = vadd.f32 %v7887, %v8134
    %8136 = vmatprep.mubr.f32.mxu0 0.0
    %v8137 = vand.u32 %v1342, 4294901760
    %v8138 = vsub.f32 %v1342, %v8137
    %8139 = vmatmul.mubr.f32.gmra.mxu0 %v8138
    %v8140 = vpop.f32.mrf.mxu0
    %v8141 = vadd.f32 %v7892, %v8140
    %v8142 = vpop.f32.mrf.mxu0
    %v8143 = vadd.f32 %v7894, %v8142
    %8144 = vdwg.mxu0
    %8145 = vmatprep.subr.mxu0 0.0
    %8146 = vmatpush1.msra.mxu0 0.0
    %8147 = vmatprep.subr.mxu0 0.0
    %8148 = vmatpush1.msra.mxu0 0.0
    %v8149 = vand.u32 %v1294, 4294901760
    %8150 = vmatprep.subr.mxu0 %v8149
    %v8151 = vand.u32 %v1293, 4294901760
    %8152 = vmatpush1.msra.mxu0 %v8151
    %v8153 = vand.u32 %v1290, 4294901760
    %8154 = vmatprep.subr.mxu0 %v8153
    %v8155 = vand.u32 %v1289, 4294901760
    %8156 = vmatpush1.msra.mxu0 %v8155
    %v8157 = vand.u32 %v1286, 4294901760
    %8158 = vmatprep.subr.mxu0 %v8157
    %v8159 = vand.u32 %v1285, 4294901760
    %8160 = vmatpush1.msra.mxu0 %v8159
    %v8161 = vand.u32 %v1282, 4294901760
    %8162 = vmatprep.subr.mxu0 %v8161
    %v8163 = vand.u32 %v1281, 4294901760
    %8164 = vmatpush1.msra.mxu0 %v8163
    %v8165 = vand.u32 %v1278, 4294901760
    %8166 = vmatprep.subr.mxu0 %v8165
    %v8167 = vand.u32 %v1277, 4294901760
    %8168 = vmatpush1.msra.mxu0 %v8167
    %v8169 = vand.u32 %v1274, 4294901760
    %8170 = vmatprep.subr.mxu0 %v8169
    %v8171 = vand.u32 %v1273, 4294901760
    %8172 = vmatpush1.msra.mxu0 %v8171
    %v8173 = vand.u32 %v1270, 4294901760
    %8174 = vmatprep.subr.mxu0 %v8173
    %v8175 = vand.u32 %v1269, 4294901760
    %8176 = vmatpush1.msra.mxu0 %v8175
    %v8177 = vand.u32 %v1266, 4294901760
    %8178 = vmatprep.subr.mxu0 %v8177
    %v8179 = vand.u32 %v1265, 4294901760
    %8180 = vmatpush1.msra.mxu0 %v8179
    %v8181 = vand.u32 %v1262, 4294901760
    %8182 = vmatprep.subr.mxu0 %v8181
    %v8183 = vand.u32 %v1261, 4294901760
    %8184 = vmatpush1.msra.mxu0 %v8183
    %v8185 = vand.u32 %v1258, 4294901760
    %8186 = vmatprep.subr.mxu0 %v8185
    %v8187 = vand.u32 %v1257, 4294901760
    %8188 = vmatpush1.msra.mxu0 %v8187
    %v8189 = vand.u32 %v1254, 4294901760
    %8190 = vmatprep.subr.mxu0 %v8189
    %v8191 = vand.u32 %v1253, 4294901760
    %8192 = vmatpush1.msra.mxu0 %v8191
    %v8193 = vand.u32 %v1250, 4294901760
    %8194 = vmatprep.subr.mxu0 %v8193
    %v8195 = vand.u32 %v1249, 4294901760
    %8196 = vmatpush1.msra.mxu0 %v8195
    %v8197 = vand.u32 %v1246, 4294901760
    %8198 = vmatprep.subr.mxu0 %v8197
    %v8199 = vand.u32 %v1245, 4294901760
    %8200 = vmatpush1.msra.mxu0 %v8199
    %v8201 = vand.u32 %v1242, 4294901760
    %8202 = vmatprep.subr.mxu0 %v8201
    %v8203 = vand.u32 %v1241, 4294901760
    %8204 = vmatpush1.msra.mxu0 %v8203
    %8205 = vmatprep.subr.mxu0 0.0
    %8206 = vmatpush2.msra.mxu0 0.0
    %8207 = vmatprep.subr.mxu0 0.0
    %8208 = vmatpush2.msra.mxu0 0.0
    %8209 = vmatprep.subr.mxu0 0.0
    %8210 = vmatpush2.msra.mxu0 0.0
    %8211 = vmatprep.subr.mxu0 0.0
    %8212 = vmatpush2.msra.mxu0 0.0
    %8213 = vmatprep.subr.mxu0 0.0
    %8214 = vmatpush2.msra.mxu0 0.0
    %8215 = vmatprep.subr.mxu0 0.0
    %8216 = vmatpush2.msra.mxu0 0.0
    %8217 = vmatprep.subr.mxu0 0.0
    %8218 = vmatpush2.msra.mxu0 0.0
    %8219 = vmatprep.subr.mxu0 0.0
    %8220 = vmatpush2.msra.mxu0 0.0
    %8221 = vmatprep.subr.mxu0 0.0
    %8222 = vmatpush2.msra.mxu0 0.0
    %8223 = vmatprep.subr.mxu0 0.0
    %8224 = vmatpush2.msra.mxu0 0.0
    %8225 = vmatprep.subr.mxu0 0.0
    %8226 = vmatpush2.msra.mxu0 0.0
    %8227 = vmatprep.subr.mxu0 0.0
    %8228 = vmatpush2.msra.mxu0 0.0
    %8229 = vmatprep.subr.mxu0 0.0
    %8230 = vmatpush2.msra.mxu0 0.0
    %8231 = vmatprep.subr.mxu0 0.0
    %8232 = vmatpush2.msra.mxu0 0.0
    %8233 = vmatprep.subr.mxu0 0.0
    %8234 = vmatpush2.msra.mxu0 0.0
    %8235 = vmatprep.subr.mxu0 0.0
    %8236 = vmatpush2.msra.mxu0 0.0
    %8237 = vmatprep.mubr.f32.mxu0 0.0
    %v8238 = vand.u32 %v1297, 4294901760
    %v8239 = vsub.f32 %v1297, %v8238
    %v8240 = vand.u32 %v8239, 4294901760
    %8241 = vmatmul.mubr.f32.gmra.mxu0 %v8240
    %v8242 = vpop.f32.mrf.mxu0
    %v8243 = vadd.f32 %v8021, %v8242
    %v8244 = vpop.f32.mrf.mxu0
    %v8245 = vadd.f32 %v8023, %v8244
    %8246 = vmatprep.mubr.f32.mxu0 0.0
    %v8247 = vand.u32 %v1300, 4294901760
    %v8248 = vsub.f32 %v1300, %v8247
    %v8249 = vand.u32 %v8248, 4294901760
    %8250 = vmatmul.mubr.f32.gmra.mxu0 %v8249
    %v8251 = vpop.f32.mrf.mxu0
    %v8252 = vadd.f32 %v8029, %v8251
    %v8253 = vpop.f32.mrf.mxu0
    %v8254 = vadd.f32 %v8031, %v8253
    %8255 = vmatprep.mubr.f32.mxu0 0.0
    %v8256 = vand.u32 %v1303, 4294901760
    %v8257 = vsub.f32 %v1303, %v8256
    %v8258 = vand.u32 %v8257, 4294901760
    %8259 = vmatmul.mubr.f32.gmra.mxu0 %v8258
    %v8260 = vpop.f32.mrf.mxu0
    %v8261 = vadd.f32 %v8037, %v8260
    %v8262 = vpop.f32.mrf.mxu0
    %v8263 = vadd.f32 %v8039, %v8262
    %8264 = vmatprep.mubr.f32.mxu0 0.0
    %v8265 = vand.u32 %v1306, 4294901760
    %v8266 = vsub.f32 %v1306, %v8265
    %v8267 = vand.u32 %v8266, 4294901760
    %8268 = vmatmul.mubr.f32.gmra.mxu0 %v8267
    %v8269 = vpop.f32.mrf.mxu0
    %v8270 = vadd.f32 %v8045, %v8269
    %v8271 = vpop.f32.mrf.mxu0
    %v8272 = vadd.f32 %v8047, %v8271
    %8273 = vmatprep.mubr.f32.mxu0 0.0
    %v8274 = vand.u32 %v1309, 4294901760
    %v8275 = vsub.f32 %v1309, %v8274
    %v8276 = vand.u32 %v8275, 4294901760
    %8277 = vmatmul.mubr.f32.gmra.mxu0 %v8276
    %v8278 = vpop.f32.mrf.mxu0
    %v8279 = vadd.f32 %v8053, %v8278
    %v8280 = vpop.f32.mrf.mxu0
    %v8281 = vadd.f32 %v8055, %v8280
    %8282 = vmatprep.mubr.f32.mxu0 0.0
    %v8283 = vand.u32 %v1312, 4294901760
    %v8284 = vsub.f32 %v1312, %v8283
    %v8285 = vand.u32 %v8284, 4294901760
    %8286 = vmatmul.mubr.f32.gmra.mxu0 %v8285
    %v8287 = vpop.f32.mrf.mxu0
    %v8288 = vadd.f32 %v8061, %v8287
    %v8289 = vpop.f32.mrf.mxu0
    %v8290 = vadd.f32 %v8063, %v8289
    %8291 = vmatprep.mubr.f32.mxu0 0.0
    %v8292 = vand.u32 %v1315, 4294901760
    %v8293 = vsub.f32 %v1315, %v8292
    %v8294 = vand.u32 %v8293, 4294901760
    %8295 = vmatmul.mubr.f32.gmra.mxu0 %v8294
    %v8296 = vpop.f32.mrf.mxu0
    %v8297 = vadd.f32 %v8069, %v8296
    %v8298 = vpop.f32.mrf.mxu0
    %v8299 = vadd.f32 %v8071, %v8298
    %8300 = vmatprep.mubr.f32.mxu0 0.0
    %v8301 = vand.u32 %v1318, 4294901760
    %v8302 = vsub.f32 %v1318, %v8301
    %v8303 = vand.u32 %v8302, 4294901760
    %8304 = vmatmul.mubr.f32.gmra.mxu0 %v8303
    %v8305 = vpop.f32.mrf.mxu0
    %v8306 = vadd.f32 %v8077, %v8305
    %v8307 = vpop.f32.mrf.mxu0
    %v8308 = vadd.f32 %v8079, %v8307
    %8309 = vmatprep.mubr.f32.mxu0 0.0
    %v8310 = vand.u32 %v1321, 4294901760
    %v8311 = vsub.f32 %v1321, %v8310
    %v8312 = vand.u32 %v8311, 4294901760
    %8313 = vmatmul.mubr.f32.gmra.mxu0 %v8312
    %v8314 = vpop.f32.mrf.mxu0
    %v8315 = vadd.f32 %v8085, %v8314
    %v8316 = vpop.f32.mrf.mxu0
    %v8317 = vadd.f32 %v8087, %v8316
    %8318 = vmatprep.mubr.f32.mxu0 0.0
    %v8319 = vand.u32 %v1324, 4294901760
    %v8320 = vsub.f32 %v1324, %v8319
    %v8321 = vand.u32 %v8320, 4294901760
    %8322 = vmatmul.mubr.f32.gmra.mxu0 %v8321
    %v8323 = vpop.f32.mrf.mxu0
    %v8324 = vadd.f32 %v8093, %v8323
    %v8325 = vpop.f32.mrf.mxu0
    %v8326 = vadd.f32 %v8095, %v8325
    %8327 = vmatprep.mubr.f32.mxu0 0.0
    %v8328 = vand.u32 %v1327, 4294901760
    %v8329 = vsub.f32 %v1327, %v8328
    %v8330 = vand.u32 %v8329, 4294901760
    %8331 = vmatmul.mubr.f32.gmra.mxu0 %v8330
    %v8332 = vpop.f32.mrf.mxu0
    %v8333 = vadd.f32 %v8101, %v8332
    %v8334 = vpop.f32.mrf.mxu0
    %v8335 = vadd.f32 %v8103, %v8334
    %8336 = vmatprep.mubr.f32.mxu0 0.0
    %v8337 = vand.u32 %v1330, 4294901760
    %v8338 = vsub.f32 %v1330, %v8337
    %v8339 = vand.u32 %v8338, 4294901760
    %8340 = vmatmul.mubr.f32.gmra.mxu0 %v8339
    %v8341 = vpop.f32.mrf.mxu0
    %v8342 = vadd.f32 %v8109, %v8341
    %v8343 = vpop.f32.mrf.mxu0
    %v8344 = vadd.f32 %v8111, %v8343
    %8345 = vmatprep.mubr.f32.mxu0 0.0
    %v8346 = vand.u32 %v1333, 4294901760
    %v8347 = vsub.f32 %v1333, %v8346
    %v8348 = vand.u32 %v8347, 4294901760
    %8349 = vmatmul.mubr.f32.gmra.mxu0 %v8348
    %v8350 = vpop.f32.mrf.mxu0
    %v8351 = vadd.f32 %v8117, %v8350
    %v8352 = vpop.f32.mrf.mxu0
    %v8353 = vadd.f32 %v8119, %v8352
    %8354 = vmatprep.mubr.f32.mxu0 0.0
    %v8355 = vand.u32 %v1336, 4294901760
    %v8356 = vsub.f32 %v1336, %v8355
    %v8357 = vand.u32 %v8356, 4294901760
    %8358 = vmatmul.mubr.f32.gmra.mxu0 %v8357
    %v8359 = vpop.f32.mrf.mxu0
    %v8360 = vadd.f32 %v8125, %v8359
    %v8361 = vpop.f32.mrf.mxu0
    %v8362 = vadd.f32 %v8127, %v8361
    %8363 = vmatprep.mubr.f32.mxu0 0.0
    %v8364 = vand.u32 %v1339, 4294901760
    %v8365 = vsub.f32 %v1339, %v8364
    %v8366 = vand.u32 %v8365, 4294901760
    %8367 = vmatmul.mubr.f32.gmra.mxu0 %v8366
    %v8368 = vpop.f32.mrf.mxu0
    %v8369 = vadd.f32 %v8133, %v8368
    %v8370 = vpop.f32.mrf.mxu0
    %v8371 = vadd.f32 %v8135, %v8370
    %8372 = vmatprep.mubr.f32.mxu0 0.0
    %v8373 = vand.u32 %v1342, 4294901760
    %v8374 = vsub.f32 %v1342, %v8373
    %v8375 = vand.u32 %v8374, 4294901760
    %8376 = vmatmul.mubr.f32.gmra.mxu0 %v8375
    %v8377 = vpop.f32.mrf.mxu0
    %v8378 = vadd.f32 %v8141, %v8377
    %v8379 = vpop.f32.mrf.mxu0
    %v8380 = vadd.f32 %v8143, %v8379
    %8381 = vdwg.mxu0
    %8382 = vmatprep.subr.mxu0 0.0
    %8383 = vmatpush1.msra.mxu0 0.0
    %8384 = vmatprep.subr.mxu0 0.0
    %8385 = vmatpush1.msra.mxu0 0.0
    %v8386 = vand.u32 %v1294, 4294901760
    %v8387 = vsub.f32 %v1294, %v8386
    %v8388 = vand.u32 %v8387, 4294901760
    %8389 = vmatprep.subr.mxu0 %v8388
    %v8390 = vand.u32 %v1293, 4294901760
    %v8391 = vsub.f32 %v1293, %v8390
    %v8392 = vand.u32 %v8391, 4294901760
    %8393 = vmatpush1.msra.mxu0 %v8392
    %v8394 = vand.u32 %v1290, 4294901760
    %v8395 = vsub.f32 %v1290, %v8394
    %v8396 = vand.u32 %v8395, 4294901760
    %8397 = vmatprep.subr.mxu0 %v8396
    %v8398 = vand.u32 %v1289, 4294901760
    %v8399 = vsub.f32 %v1289, %v8398
    %v8400 = vand.u32 %v8399, 4294901760
    %8401 = vmatpush1.msra.mxu0 %v8400
    %v8402 = vand.u32 %v1286, 4294901760
    %v8403 = vsub.f32 %v1286, %v8402
    %v8404 = vand.u32 %v8403, 4294901760
    %8405 = vmatprep.subr.mxu0 %v8404
    %v8406 = vand.u32 %v1285, 4294901760
    %v8407 = vsub.f32 %v1285, %v8406
    %v8408 = vand.u32 %v8407, 4294901760
    %8409 = vmatpush1.msra.mxu0 %v8408
    %v8410 = vand.u32 %v1282, 4294901760
    %v8411 = vsub.f32 %v1282, %v8410
    %v8412 = vand.u32 %v8411, 4294901760
    %8413 = vmatprep.subr.mxu0 %v8412
    %v8414 = vand.u32 %v1281, 4294901760
    %v8415 = vsub.f32 %v1281, %v8414
    %v8416 = vand.u32 %v8415, 4294901760
    %8417 = vmatpush1.msra.mxu0 %v8416
    %v8418 = vand.u32 %v1278, 4294901760
    %v8419 = vsub.f32 %v1278, %v8418
    %v8420 = vand.u32 %v8419, 4294901760
    %8421 = vmatprep.subr.mxu0 %v8420
    %v8422 = vand.u32 %v1277, 4294901760
    %v8423 = vsub.f32 %v1277, %v8422
    %v8424 = vand.u32 %v8423, 4294901760
    %8425 = vmatpush1.msra.mxu0 %v8424
    %v8426 = vand.u32 %v1274, 4294901760
    %v8427 = vsub.f32 %v1274, %v8426
    %v8428 = vand.u32 %v8427, 4294901760
    %8429 = vmatprep.subr.mxu0 %v8428
    %v8430 = vand.u32 %v1273, 4294901760
    %v8431 = vsub.f32 %v1273, %v8430
    %v8432 = vand.u32 %v8431, 4294901760
    %8433 = vmatpush1.msra.mxu0 %v8432
    %v8434 = vand.u32 %v1270, 4294901760
    %v8435 = vsub.f32 %v1270, %v8434
    %v8436 = vand.u32 %v8435, 4294901760
    %8437 = vmatprep.subr.mxu0 %v8436
    %v8438 = vand.u32 %v1269, 4294901760
    %v8439 = vsub.f32 %v1269, %v8438
    %v8440 = vand.u32 %v8439, 4294901760
    %8441 = vmatpush1.msra.mxu0 %v8440
    %v8442 = vand.u32 %v1266, 4294901760
    %v8443 = vsub.f32 %v1266, %v8442
    %v8444 = vand.u32 %v8443, 4294901760
    %8445 = vmatprep.subr.mxu0 %v8444
    %v8446 = vand.u32 %v1265, 4294901760
    %v8447 = vsub.f32 %v1265, %v8446
    %v8448 = vand.u32 %v8447, 4294901760
    %8449 = vmatpush1.msra.mxu0 %v8448
    %v8450 = vand.u32 %v1262, 4294901760
    %v8451 = vsub.f32 %v1262, %v8450
    %v8452 = vand.u32 %v8451, 4294901760
    %8453 = vmatprep.subr.mxu0 %v8452
    %v8454 = vand.u32 %v1261, 4294901760
    %v8455 = vsub.f32 %v1261, %v8454
    %v8456 = vand.u32 %v8455, 4294901760
    %8457 = vmatpush1.msra.mxu0 %v8456
    %v8458 = vand.u32 %v1258, 4294901760
    %v8459 = vsub.f32 %v1258, %v8458
    %v8460 = vand.u32 %v8459, 4294901760
    %8461 = vmatprep.subr.mxu0 %v8460
    %v8462 = vand.u32 %v1257, 4294901760
    %v8463 = vsub.f32 %v1257, %v8462
    %v8464 = vand.u32 %v8463, 4294901760
    %8465 = vmatpush1.msra.mxu0 %v8464
    %v8466 = vand.u32 %v1254, 4294901760
    %v8467 = vsub.f32 %v1254, %v8466
    %v8468 = vand.u32 %v8467, 4294901760
    %8469 = vmatprep.subr.mxu0 %v8468
    %v8470 = vand.u32 %v1253, 4294901760
    %v8471 = vsub.f32 %v1253, %v8470
    %v8472 = vand.u32 %v8471, 4294901760
    %8473 = vmatpush1.msra.mxu0 %v8472
    %v8474 = vand.u32 %v1250, 4294901760
    %v8475 = vsub.f32 %v1250, %v8474
    %v8476 = vand.u32 %v8475, 4294901760
    %8477 = vmatprep.subr.mxu0 %v8476
    %v8478 = vand.u32 %v1249, 4294901760
    %v8479 = vsub.f32 %v1249, %v8478
    %v8480 = vand.u32 %v8479, 4294901760
    %8481 = vmatpush1.msra.mxu0 %v8480
    %v8482 = vand.u32 %v1246, 4294901760
    %v8483 = vsub.f32 %v1246, %v8482
    %v8484 = vand.u32 %v8483, 4294901760
    %8485 = vmatprep.subr.mxu0 %v8484
    %v8486 = vand.u32 %v1245, 4294901760
    %v8487 = vsub.f32 %v1245, %v8486
    %v8488 = vand.u32 %v8487, 4294901760
    %8489 = vmatpush1.msra.mxu0 %v8488
    %v8490 = vand.u32 %v1242, 4294901760
    %v8491 = vsub.f32 %v1242, %v8490
    %v8492 = vand.u32 %v8491, 4294901760
    %8493 = vmatprep.subr.mxu0 %v8492
    %v8494 = vand.u32 %v1241, 4294901760
    %v8495 = vsub.f32 %v1241, %v8494
    %v8496 = vand.u32 %v8495, 4294901760
    %8497 = vmatpush1.msra.mxu0 %v8496
    %8498 = vmatprep.subr.mxu0 0.0
    %8499 = vmatpush2.msra.mxu0 0.0
    %8500 = vmatprep.subr.mxu0 0.0
    %8501 = vmatpush2.msra.mxu0 0.0
    %8502 = vmatprep.subr.mxu0 0.0
    %8503 = vmatpush2.msra.mxu0 0.0
    %8504 = vmatprep.subr.mxu0 0.0
    %8505 = vmatpush2.msra.mxu0 0.0
    %8506 = vmatprep.subr.mxu0 0.0
    %8507 = vmatpush2.msra.mxu0 0.0
    %8508 = vmatprep.subr.mxu0 0.0
    %8509 = vmatpush2.msra.mxu0 0.0
    %8510 = vmatprep.subr.mxu0 0.0
    %8511 = vmatpush2.msra.mxu0 0.0
    %8512 = vmatprep.subr.mxu0 0.0
    %8513 = vmatpush2.msra.mxu0 0.0
    %8514 = vmatprep.subr.mxu0 0.0
    %8515 = vmatpush2.msra.mxu0 0.0
    %8516 = vmatprep.subr.mxu0 0.0
    %8517 = vmatpush2.msra.mxu0 0.0
    %8518 = vmatprep.subr.mxu0 0.0
    %8519 = vmatpush2.msra.mxu0 0.0
    %8520 = vmatprep.subr.mxu0 0.0
    %8521 = vmatpush2.msra.mxu0 0.0
    %8522 = vmatprep.subr.mxu0 0.0
    %8523 = vmatpush2.msra.mxu0 0.0
    %8524 = vmatprep.subr.mxu0 0.0
    %8525 = vmatpush2.msra.mxu0 0.0
    %8526 = vmatprep.subr.mxu0 0.0
    %8527 = vmatpush2.msra.mxu0 0.0
    %8528 = vmatprep.subr.mxu0 0.0
    %8529 = vmatpush2.msra.mxu0 0.0
    %8530 = vmatprep.mubr.f32.mxu0 0.0
    %v8531 = vand.u32 %v1297, 4294901760
    %8532 = vmatmul.mubr.f32.gmra.mxu0 %v8531
    %v8533 = vpop.f32.mrf.mxu0
    %v8534 = vadd.f32 %v8243, %v8533
    %v8535 = vpop.f32.mrf.mxu0
    %v8536 = vadd.f32 %v8245, %v8535
    %8537 = vmatprep.mubr.f32.mxu0 0.0
    %v8538 = vand.u32 %v1300, 4294901760
    %8539 = vmatmul.mubr.f32.gmra.mxu0 %v8538
    %v8540 = vpop.f32.mrf.mxu0
    %v8541 = vadd.f32 %v8252, %v8540
    %v8542 = vpop.f32.mrf.mxu0
    %v8543 = vadd.f32 %v8254, %v8542
    %8544 = vmatprep.mubr.f32.mxu0 0.0
    %v8545 = vand.u32 %v1303, 4294901760
    %8546 = vmatmul.mubr.f32.gmra.mxu0 %v8545
    %v8547 = vpop.f32.mrf.mxu0
    %v8548 = vadd.f32 %v8261, %v8547
    %v8549 = vpop.f32.mrf.mxu0
    %v8550 = vadd.f32 %v8263, %v8549
    %8551 = vmatprep.mubr.f32.mxu0 0.0
    %v8552 = vand.u32 %v1306, 4294901760
    %8553 = vmatmul.mubr.f32.gmra.mxu0 %v8552
    %v8554 = vpop.f32.mrf.mxu0
    %v8555 = vadd.f32 %v8270, %v8554
    %v8556 = vpop.f32.mrf.mxu0
    %v8557 = vadd.f32 %v8272, %v8556
    %8558 = vmatprep.mubr.f32.mxu0 0.0
    %v8559 = vand.u32 %v1309, 4294901760
    %8560 = vmatmul.mubr.f32.gmra.mxu0 %v8559
    %v8561 = vpop.f32.mrf.mxu0
    %v8562 = vadd.f32 %v8279, %v8561
    %v8563 = vpop.f32.mrf.mxu0
    %v8564 = vadd.f32 %v8281, %v8563
    %8565 = vmatprep.mubr.f32.mxu0 0.0
    %v8566 = vand.u32 %v1312, 4294901760
    %8567 = vmatmul.mubr.f32.gmra.mxu0 %v8566
    %v8568 = vpop.f32.mrf.mxu0
    %v8569 = vadd.f32 %v8288, %v8568
    %v8570 = vpop.f32.mrf.mxu0
    %v8571 = vadd.f32 %v8290, %v8570
    %8572 = vmatprep.mubr.f32.mxu0 0.0
    %v8573 = vand.u32 %v1315, 4294901760
    %8574 = vmatmul.mubr.f32.gmra.mxu0 %v8573
    %v8575 = vpop.f32.mrf.mxu0
    %v8576 = vadd.f32 %v8297, %v8575
    %v8577 = vpop.f32.mrf.mxu0
    %v8578 = vadd.f32 %v8299, %v8577
    %8579 = vmatprep.mubr.f32.mxu0 0.0
    %v8580 = vand.u32 %v1318, 4294901760
    %8581 = vmatmul.mubr.f32.gmra.mxu0 %v8580
    %v8582 = vpop.f32.mrf.mxu0
    %v8583 = vadd.f32 %v8306, %v8582
    %v8584 = vpop.f32.mrf.mxu0
    %v8585 = vadd.f32 %v8308, %v8584
    %8586 = vmatprep.mubr.f32.mxu0 0.0
    %v8587 = vand.u32 %v1321, 4294901760
    %8588 = vmatmul.mubr.f32.gmra.mxu0 %v8587
    %v8589 = vpop.f32.mrf.mxu0
    %v8590 = vadd.f32 %v8315, %v8589
    %v8591 = vpop.f32.mrf.mxu0
    %v8592 = vadd.f32 %v8317, %v8591
    %8593 = vmatprep.mubr.f32.mxu0 0.0
    %v8594 = vand.u32 %v1324, 4294901760
    %8595 = vmatmul.mubr.f32.gmra.mxu0 %v8594
    %v8596 = vpop.f32.mrf.mxu0
    %v8597 = vadd.f32 %v8324, %v8596
    %v8598 = vpop.f32.mrf.mxu0
    %v8599 = vadd.f32 %v8326, %v8598
    %8600 = vmatprep.mubr.f32.mxu0 0.0
    %v8601 = vand.u32 %v1327, 4294901760
    %8602 = vmatmul.mubr.f32.gmra.mxu0 %v8601
    %v8603 = vpop.f32.mrf.mxu0
    %v8604 = vadd.f32 %v8333, %v8603
    %v8605 = vpop.f32.mrf.mxu0
    %v8606 = vadd.f32 %v8335, %v8605
    %8607 = vmatprep.mubr.f32.mxu0 0.0
    %v8608 = vand.u32 %v1330, 4294901760
    %8609 = vmatmul.mubr.f32.gmra.mxu0 %v8608
    %v8610 = vpop.f32.mrf.mxu0
    %v8611 = vadd.f32 %v8342, %v8610
    %v8612 = vpop.f32.mrf.mxu0
    %v8613 = vadd.f32 %v8344, %v8612
    %8614 = vmatprep.mubr.f32.mxu0 0.0
    %v8615 = vand.u32 %v1333, 4294901760
    %8616 = vmatmul.mubr.f32.gmra.mxu0 %v8615
    %v8617 = vpop.f32.mrf.mxu0
    %v8618 = vadd.f32 %v8351, %v8617
    %v8619 = vpop.f32.mrf.mxu0
    %v8620 = vadd.f32 %v8353, %v8619
    %8621 = vmatprep.mubr.f32.mxu0 0.0
    %v8622 = vand.u32 %v1336, 4294901760
    %8623 = vmatmul.mubr.f32.gmra.mxu0 %v8622
    %v8624 = vpop.f32.mrf.mxu0
    %v8625 = vadd.f32 %v8360, %v8624
    %v8626 = vpop.f32.mrf.mxu0
    %v8627 = vadd.f32 %v8362, %v8626
    %8628 = vmatprep.mubr.f32.mxu0 0.0
    %v8629 = vand.u32 %v1339, 4294901760
    %8630 = vmatmul.mubr.f32.gmra.mxu0 %v8629
    %v8631 = vpop.f32.mrf.mxu0
    %v8632 = vadd.f32 %v8369, %v8631
    %v8633 = vpop.f32.mrf.mxu0
    %v8634 = vadd.f32 %v8371, %v8633
    %8635 = vmatprep.mubr.f32.mxu0 0.0
    %v8636 = vand.u32 %v1342, 4294901760
    %8637 = vmatmul.mubr.f32.gmra.mxu0 %v8636
    %v8638 = vpop.f32.mrf.mxu0
    %v8639 = vadd.f32 %v8378, %v8638
    %v8640 = vpop.f32.mrf.mxu0
    %v8641 = vadd.f32 %v8380, %v8640
    %8642 = vdwg.mxu0
    %8643 = vmatprep.subr.mxu0 0.0
    %8644 = vmatpush1.msra.mxu0 0.0
    %8645 = vmatprep.subr.mxu0 0.0
    %8646 = vmatpush1.msra.mxu0 0.0
    %v8647 = vand.u32 %v1294, 4294901760
    %8648 = vmatprep.subr.mxu0 %v8647
    %v8649 = vand.u32 %v1293, 4294901760
    %8650 = vmatpush1.msra.mxu0 %v8649
    %v8651 = vand.u32 %v1290, 4294901760
    %8652 = vmatprep.subr.mxu0 %v8651
    %v8653 = vand.u32 %v1289, 4294901760
    %8654 = vmatpush1.msra.mxu0 %v8653
    %v8655 = vand.u32 %v1286, 4294901760
    %8656 = vmatprep.subr.mxu0 %v8655
    %v8657 = vand.u32 %v1285, 4294901760
    %8658 = vmatpush1.msra.mxu0 %v8657
    %v8659 = vand.u32 %v1282, 4294901760
    %8660 = vmatprep.subr.mxu0 %v8659
    %v8661 = vand.u32 %v1281, 4294901760
    %8662 = vmatpush1.msra.mxu0 %v8661
    %v8663 = vand.u32 %v1278, 4294901760
    %8664 = vmatprep.subr.mxu0 %v8663
    %v8665 = vand.u32 %v1277, 4294901760
    %8666 = vmatpush1.msra.mxu0 %v8665
    %v8667 = vand.u32 %v1274, 4294901760
    %8668 = vmatprep.subr.mxu0 %v8667
    %v8669 = vand.u32 %v1273, 4294901760
    %8670 = vmatpush1.msra.mxu0 %v8669
    %v8671 = vand.u32 %v1270, 4294901760
    %8672 = vmatprep.subr.mxu0 %v8671
    %v8673 = vand.u32 %v1269, 4294901760
    %8674 = vmatpush1.msra.mxu0 %v8673
    %v8675 = vand.u32 %v1266, 4294901760
    %8676 = vmatprep.subr.mxu0 %v8675
    %v8677 = vand.u32 %v1265, 4294901760
    %8678 = vmatpush1.msra.mxu0 %v8677
    %v8679 = vand.u32 %v1262, 4294901760
    %8680 = vmatprep.subr.mxu0 %v8679
    %v8681 = vand.u32 %v1261, 4294901760
    %8682 = vmatpush1.msra.mxu0 %v8681
    %v8683 = vand.u32 %v1258, 4294901760
    %8684 = vmatprep.subr.mxu0 %v8683
    %v8685 = vand.u32 %v1257, 4294901760
    %8686 = vmatpush1.msra.mxu0 %v8685
    %v8687 = vand.u32 %v1254, 4294901760
    %8688 = vmatprep.subr.mxu0 %v8687
    %v8689 = vand.u32 %v1253, 4294901760
    %8690 = vmatpush1.msra.mxu0 %v8689
    %v8691 = vand.u32 %v1250, 4294901760
    %8692 = vmatprep.subr.mxu0 %v8691
    %v8693 = vand.u32 %v1249, 4294901760
    %8694 = vmatpush1.msra.mxu0 %v8693
    %v8695 = vand.u32 %v1246, 4294901760
    %8696 = vmatprep.subr.mxu0 %v8695
    %v8697 = vand.u32 %v1245, 4294901760
    %8698 = vmatpush1.msra.mxu0 %v8697
    %v8699 = vand.u32 %v1242, 4294901760
    %8700 = vmatprep.subr.mxu0 %v8699
    %v8701 = vand.u32 %v1241, 4294901760
    %8702 = vmatpush1.msra.mxu0 %v8701
    %8703 = vmatprep.subr.mxu0 0.0
    %8704 = vmatpush2.msra.mxu0 0.0
    %8705 = vmatprep.subr.mxu0 0.0
    %8706 = vmatpush2.msra.mxu0 0.0
    %8707 = vmatprep.subr.mxu0 0.0
    %8708 = vmatpush2.msra.mxu0 0.0
    %8709 = vmatprep.subr.mxu0 0.0
    %8710 = vmatpush2.msra.mxu0 0.0
    %8711 = vmatprep.subr.mxu0 0.0
    %8712 = vmatpush2.msra.mxu0 0.0
    %8713 = vmatprep.subr.mxu0 0.0
    %8714 = vmatpush2.msra.mxu0 0.0
    %8715 = vmatprep.subr.mxu0 0.0
    %8716 = vmatpush2.msra.mxu0 0.0
    %8717 = vmatprep.subr.mxu0 0.0
    %8718 = vmatpush2.msra.mxu0 0.0
    %8719 = vmatprep.subr.mxu0 0.0
    %8720 = vmatpush2.msra.mxu0 0.0
    %8721 = vmatprep.subr.mxu0 0.0
    %8722 = vmatpush2.msra.mxu0 0.0
    %8723 = vmatprep.subr.mxu0 0.0
    %8724 = vmatpush2.msra.mxu0 0.0
    %8725 = vmatprep.subr.mxu0 0.0
    %8726 = vmatpush2.msra.mxu0 0.0
    %8727 = vmatprep.subr.mxu0 0.0
    %8728 = vmatpush2.msra.mxu0 0.0
    %8729 = vmatprep.subr.mxu0 0.0
    %8730 = vmatpush2.msra.mxu0 0.0
    %8731 = vmatprep.subr.mxu0 0.0
    %8732 = vmatpush2.msra.mxu0 0.0
    %8733 = vmatprep.subr.mxu0 0.0
    %8734 = vmatpush2.msra.mxu0 0.0
    %8735 = vmatprep.mubr.f32.mxu0 0.0
    %v8736 = vand.u32 %v1297, 4294901760
    %8737 = vmatmul.mubr.f32.gmra.mxu0 %v8736
    %v8738 = vpop.f32.mrf.mxu0
    %v8739 = vadd.f32 %v8534, %v8738
    %v8740 = vpop.f32.mrf.mxu0
    %v8741 = vadd.f32 %v8536, %v8740
    %8742 = vmatprep.mubr.f32.mxu0 0.0
    %v8743 = vand.u32 %v1300, 4294901760
    %8744 = vmatmul.mubr.f32.gmra.mxu0 %v8743
    %v8745 = vpop.f32.mrf.mxu0
    %v8746 = vadd.f32 %v8541, %v8745
    %v8747 = vpop.f32.mrf.mxu0
    %v8748 = vadd.f32 %v8543, %v8747
    %8749 = vmatprep.mubr.f32.mxu0 0.0
    %v8750 = vand.u32 %v1303, 4294901760
    %8751 = vmatmul.mubr.f32.gmra.mxu0 %v8750
    %v8752 = vpop.f32.mrf.mxu0
    %v8753 = vadd.f32 %v8548, %v8752
    %v8754 = vpop.f32.mrf.mxu0
    %v8755 = vadd.f32 %v8550, %v8754
    %8756 = vmatprep.mubr.f32.mxu0 0.0
    %v8757 = vand.u32 %v1306, 4294901760
    %8758 = vmatmul.mubr.f32.gmra.mxu0 %v8757
    %v8759 = vpop.f32.mrf.mxu0
    %v8760 = vadd.f32 %v8555, %v8759
    %v8761 = vpop.f32.mrf.mxu0
    %v8762 = vadd.f32 %v8557, %v8761
    %8763 = vmatprep.mubr.f32.mxu0 0.0
    %v8764 = vand.u32 %v1309, 4294901760
    %8765 = vmatmul.mubr.f32.gmra.mxu0 %v8764
    %v8766 = vpop.f32.mrf.mxu0
    %v8767 = vadd.f32 %v8562, %v8766
    %v8768 = vpop.f32.mrf.mxu0
    %v8769 = vadd.f32 %v8564, %v8768
    %8770 = vmatprep.mubr.f32.mxu0 0.0
    %v8771 = vand.u32 %v1312, 4294901760
    %8772 = vmatmul.mubr.f32.gmra.mxu0 %v8771
    %v8773 = vpop.f32.mrf.mxu0
    %v8774 = vadd.f32 %v8569, %v8773
    %v8775 = vpop.f32.mrf.mxu0
    %v8776 = vadd.f32 %v8571, %v8775
    %8777 = vmatprep.mubr.f32.mxu0 0.0
    %v8778 = vand.u32 %v1315, 4294901760
    %8779 = vmatmul.mubr.f32.gmra.mxu0 %v8778
    %v8780 = vpop.f32.mrf.mxu0
    %v8781 = vadd.f32 %v8576, %v8780
    %v8782 = vpop.f32.mrf.mxu0
    %v8783 = vadd.f32 %v8578, %v8782
    %8784 = vmatprep.mubr.f32.mxu0 0.0
    %v8785 = vand.u32 %v1318, 4294901760
    %8786 = vmatmul.mubr.f32.gmra.mxu0 %v8785
    %v8787 = vpop.f32.mrf.mxu0
    %v8788 = vadd.f32 %v8583, %v8787
    %v8789 = vpop.f32.mrf.mxu0
    %v8790 = vadd.f32 %v8585, %v8789
    %8791 = vmatprep.mubr.f32.mxu0 0.0
    %v8792 = vand.u32 %v1321, 4294901760
    %8793 = vmatmul.mubr.f32.gmra.mxu0 %v8792
    %v8794 = vpop.f32.mrf.mxu0
    %v8795 = vadd.f32 %v8590, %v8794
    %v8796 = vpop.f32.mrf.mxu0
    %v8797 = vadd.f32 %v8592, %v8796
    %8798 = vmatprep.mubr.f32.mxu0 0.0
    %v8799 = vand.u32 %v1324, 4294901760
    %8800 = vmatmul.mubr.f32.gmra.mxu0 %v8799
    %v8801 = vpop.f32.mrf.mxu0
    %v8802 = vadd.f32 %v8597, %v8801
    %v8803 = vpop.f32.mrf.mxu0
    %v8804 = vadd.f32 %v8599, %v8803
    %8805 = vmatprep.mubr.f32.mxu0 0.0
    %v8806 = vand.u32 %v1327, 4294901760
    %8807 = vmatmul.mubr.f32.gmra.mxu0 %v8806
    %v8808 = vpop.f32.mrf.mxu0
    %v8809 = vadd.f32 %v8604, %v8808
    %v8810 = vpop.f32.mrf.mxu0
    %v8811 = vadd.f32 %v8606, %v8810
    %8812 = vmatprep.mubr.f32.mxu0 0.0
    %v8813 = vand.u32 %v1330, 4294901760
    %8814 = vmatmul.mubr.f32.gmra.mxu0 %v8813
    %v8815 = vpop.f32.mrf.mxu0
    %v8816 = vadd.f32 %v8611, %v8815
    %v8817 = vpop.f32.mrf.mxu0
    %v8818 = vadd.f32 %v8613, %v8817
    %8819 = vmatprep.mubr.f32.mxu0 0.0
    %v8820 = vand.u32 %v1333, 4294901760
    %8821 = vmatmul.mubr.f32.gmra.mxu0 %v8820
    %v8822 = vpop.f32.mrf.mxu0
    %v8823 = vadd.f32 %v8618, %v8822
    %v8824 = vpop.f32.mrf.mxu0
    %v8825 = vadd.f32 %v8620, %v8824
    %8826 = vmatprep.mubr.f32.mxu0 0.0
    %v8827 = vand.u32 %v1336, 4294901760
    %8828 = vmatmul.mubr.f32.gmra.mxu0 %v8827
    %v8829 = vpop.f32.mrf.mxu0
    %v8830 = vadd.f32 %v8625, %v8829
    %v8831 = vpop.f32.mrf.mxu0
    %v8832 = vadd.f32 %v8627, %v8831
    %8833 = vmatprep.mubr.f32.mxu0 0.0
    %v8834 = vand.u32 %v1339, 4294901760
    %8835 = vmatmul.mubr.f32.gmra.mxu0 %v8834
    %v8836 = vpop.f32.mrf.mxu0
    %v8837 = vadd.f32 %v8632, %v8836
    %v8838 = vpop.f32.mrf.mxu0
    %v8839 = vadd.f32 %v8634, %v8838
    %8840 = vmatprep.mubr.f32.mxu0 0.0
    %v8841 = vand.u32 %v1342, 4294901760
    %8842 = vmatmul.mubr.f32.gmra.mxu0 %v8841
    %v8843 = vpop.f32.mrf.mxu0
    %v8844 = vadd.f32 %v8639, %v8843
    %v8845 = vpop.f32.mrf.mxu0
    %v8846 = vadd.f32 %v8641, %v8845
    %8847 = vdwg.mxu0
    %v8848 = vmul.f32 %v4987, 0.5
    %v8849 = vmul.f32 %v4989, 0.5
    %v8850 = vmul.f32 %v8739, 0.5
    %v8851 = vmul.f32 %v8741, 0.5
    %v8852 = vmul.f32 %v4994, 0.5
    %v8853 = vmul.f32 %v4996, 0.5
    %v8854 = vmul.f32 %v8746, 0.5
    %v8855 = vmul.f32 %v8748, 0.5
    %v8856 = vmul.f32 %v5001, 0.5
    %v8857 = vmul.f32 %v5003, 0.5
    %v8858 = vmul.f32 %v8753, 0.5
    %v8859 = vmul.f32 %v8755, 0.5
    %v8860 = vmul.f32 %v5008, 0.5
    %v8861 = vmul.f32 %v5010, 0.5
    %v8862 = vmul.f32 %v8760, 0.5
    %v8863 = vmul.f32 %v8762, 0.5
    %v8864 = vmul.f32 %v5015, 0.5
    %v8865 = vmul.f32 %v5017, 0.5
    %v8866 = vmul.f32 %v8767, 0.5
    %v8867 = vmul.f32 %v8769, 0.5
    %v8868 = vmul.f32 %v5022, 0.5
    %v8869 = vmul.f32 %v5024, 0.5
    %v8870 = vmul.f32 %v8774, 0.5
    %v8871 = vmul.f32 %v8776, 0.5
    %v8872 = vmul.f32 %v5029, 0.5
    %v8873 = vmul.f32 %v5031, 0.5
    %v8874 = vmul.f32 %v8781, 0.5
    %v8875 = vmul.f32 %v8783, 0.5
    %v8876 = vmul.f32 %v5036, 0.5
    %v8877 = vmul.f32 %v5038, 0.5
    %v8878 = vmul.f32 %v8788, 0.5
    %v8879 = vmul.f32 %v8790, 0.5
    %v8880 = vmul.f32 %v5043, 0.5
    %v8881 = vmul.f32 %v5045, 0.5
    %v8882 = vmul.f32 %v8795, 0.5
    %v8883 = vmul.f32 %v8797, 0.5
    %v8884 = vmul.f32 %v5050, 0.5
    %v8885 = vmul.f32 %v5052, 0.5
    %v8886 = vmul.f32 %v8802, 0.5
    %v8887 = vmul.f32 %v8804, 0.5
    %v8888 = vmul.f32 %v5057, 0.5
    %v8889 = vmul.f32 %v5059, 0.5
    %v8890 = vmul.f32 %v8809, 0.5
    %v8891 = vmul.f32 %v8811, 0.5
    %v8892 = vmul.f32 %v5064, 0.5
    %v8893 = vmul.f32 %v5066, 0.5
    %v8894 = vmul.f32 %v8816, 0.5
    %v8895 = vmul.f32 %v8818, 0.5
    %v8896 = vtanh.pop %v8848
    %v8897 = vtanh.pop %v8849
    %v8898 = vtanh.pop %v8850
    %v8899 = vtanh.pop %v8851
    %v8900 = vtanh.pop %v8852
    %v8901 = vtanh.pop %v8853
    %v8902 = vtanh.pop %v8854
    %v8903 = vtanh.pop %v8855
    %v8904 = vtanh.pop %v8856
    %v8905 = vtanh.pop %v8857
    %v8906 = vtanh.pop %v8858
    %v8907 = vtanh.pop %v8859
    %v8908 = vtanh.pop %v8860
    %v8909 = vtanh.pop %v8861
    %v8910 = vtanh.pop %v8862
    %v8911 = vtanh.pop %v8863
    %v8912 = vtanh.pop %v8864
    %v8913 = vtanh.pop %v8865
    %v8914 = vtanh.pop %v8866
    %v8915 = vtanh.pop %v8867
    %v8916 = vtanh.pop %v8868
    %v8917 = vtanh.pop %v8869
    %v8918 = vtanh.pop %v8870
    %v8919 = vtanh.pop %v8871
    %v8920 = vtanh.pop %v8872
    %v8921 = vtanh.pop %v8873
    %v8922 = vtanh.pop %v8874
    %v8923 = vtanh.pop %v8875
    %v8924 = vtanh.pop %v8876
    %v8925 = vtanh.pop %v8877
    %v8926 = vtanh.pop %v8878
    %v8927 = vtanh.pop %v8879
    %v8928 = vtanh.pop %v8880
    %v8929 = vtanh.pop %v8881
    %v8930 = vtanh.pop %v8882
    %v8931 = vtanh.pop %v8883
    %v8932 = vtanh.pop %v8884
    %v8933 = vtanh.pop %v8885
    %v8934 = vtanh.pop %v8886
    %v8935 = vtanh.pop %v8887
    %v8936 = vtanh.pop %v8888
    %v8937 = vtanh.pop %v8889
    %v8938 = vtanh.pop %v8890
    %v8939 = vtanh.pop %v8891
    %v8940 = vtanh.pop %v8892
    %v8941 = vtanh.pop %v8893
    %v8942 = vtanh.pop %v8894
    %v8943 = vtanh.pop %v8895
    %v8944 = vadd.f32 %v8896, 1.0
    %v8945 = vadd.f32 %v8897, 1.0
    %v8946 = vadd.f32 %v8898, 1.0
    %v8947 = vadd.f32 %v8899, 1.0
    %v8948 = vadd.f32 %v8900, 1.0
    %v8949 = vadd.f32 %v8901, 1.0
    %v8950 = vadd.f32 %v8902, 1.0
    %v8951 = vadd.f32 %v8903, 1.0
    %v8952 = vadd.f32 %v8904, 1.0
    %v8953 = vadd.f32 %v8905, 1.0
    %v8954 = vadd.f32 %v8906, 1.0
    %v8955 = vadd.f32 %v8907, 1.0
    %v8956 = vadd.f32 %v8908, 1.0
    %v8957 = vadd.f32 %v8909, 1.0
    %v8958 = vadd.f32 %v8910, 1.0
    %v8959 = vadd.f32 %v8911, 1.0
    %v8960 = vadd.f32 %v8912, 1.0
    %v8961 = vadd.f32 %v8913, 1.0
    %v8962 = vadd.f32 %v8914, 1.0
    %v8963 = vadd.f32 %v8915, 1.0
    %v8964 = vadd.f32 %v8916, 1.0
    %v8965 = vadd.f32 %v8917, 1.0
    %v8966 = vadd.f32 %v8918, 1.0
    %v8967 = vadd.f32 %v8919, 1.0
    %v8968 = vadd.f32 %v8920, 1.0
    %v8969 = vadd.f32 %v8921, 1.0
    %v8970 = vadd.f32 %v8922, 1.0
    %v8971 = vadd.f32 %v8923, 1.0
    %v8972 = vadd.f32 %v8924, 1.0
    %v8973 = vadd.f32 %v8925, 1.0
    %v8974 = vadd.f32 %v8926, 1.0
    %v8975 = vadd.f32 %v8927, 1.0
    %v8976 = vadd.f32 %v8928, 1.0
    %v8977 = vadd.f32 %v8929, 1.0
    %v8978 = vadd.f32 %v8930, 1.0
    %v8979 = vadd.f32 %v8931, 1.0
    %v8980 = vadd.f32 %v8932, 1.0
    %v8981 = vadd.f32 %v8933, 1.0
    %v8982 = vadd.f32 %v8934, 1.0
    %v8983 = vadd.f32 %v8935, 1.0
    %v8984 = vadd.f32 %v8936, 1.0
    %v8985 = vadd.f32 %v8937, 1.0
    %v8986 = vadd.f32 %v8938, 1.0
    %v8987 = vadd.f32 %v8939, 1.0
    %v8988 = vadd.f32 %v8940, 1.0
    %v8989 = vadd.f32 %v8941, 1.0
    %v8990 = vadd.f32 %v8942, 1.0
    %v8991 = vadd.f32 %v8943, 1.0
    %v8992 = vmul.f32 %v8944, 0.5
    %v8993 = vmul.f32 %v8945, 0.5
    %v8994 = vmul.f32 %v8946, 0.5
    %v8995 = vmul.f32 %v8947, 0.5
    %v8996 = vmul.f32 %v8948, 0.5
    %v8997 = vmul.f32 %v8949, 0.5
    %v8998 = vmul.f32 %v8950, 0.5
    %v8999 = vmul.f32 %v8951, 0.5
    %v9000 = vmul.f32 %v8952, 0.5
    %v9001 = vmul.f32 %v8953, 0.5
    %v9002 = vmul.f32 %v8954, 0.5
    %v9003 = vmul.f32 %v8955, 0.5
    %v9004 = vmul.f32 %v8956, 0.5
    %v9005 = vmul.f32 %v8957, 0.5
    %v9006 = vmul.f32 %v8958, 0.5
    %v9007 = vmul.f32 %v8959, 0.5
    %v9008 = vmul.f32 %v8960, 0.5
    %v9009 = vmul.f32 %v8961, 0.5
    %v9010 = vmul.f32 %v8962, 0.5
    %v9011 = vmul.f32 %v8963, 0.5
    %v9012 = vmul.f32 %v8964, 0.5
    %v9013 = vmul.f32 %v8965, 0.5
    %v9014 = vmul.f32 %v8966, 0.5
    %v9015 = vmul.f32 %v8967, 0.5
    %v9016 = vmul.f32 %v8968, 0.5
    %v9017 = vmul.f32 %v8969, 0.5
    %v9018 = vmul.f32 %v8970, 0.5
    %v9019 = vmul.f32 %v8971, 0.5
    %v9020 = vmul.f32 %v8972, 0.5
    %v9021 = vmul.f32 %v8973, 0.5
    %v9022 = vmul.f32 %v8974, 0.5
    %v9023 = vmul.f32 %v8975, 0.5
    %v9024 = vmul.f32 %v8976, 0.5
    %v9025 = vmul.f32 %v8977, 0.5
    %v9026 = vmul.f32 %v8978, 0.5
    %v9027 = vmul.f32 %v8979, 0.5
    %v9028 = vmul.f32 %v8980, 0.5
    %v9029 = vmul.f32 %v8981, 0.5
    %v9030 = vmul.f32 %v8982, 0.5
    %v9031 = vmul.f32 %v8983, 0.5
    %v9032 = vmul.f32 %v8984, 0.5
    %v9033 = vmul.f32 %v8985, 0.5
    %v9034 = vmul.f32 %v8986, 0.5
    %v9035 = vmul.f32 %v8987, 0.5
    %v9036 = vmul.f32 %v8988, 0.5
    %v9037 = vmul.f32 %v8989, 0.5
    %v9038 = vmul.f32 %v8990, 0.5
    %v9039 = vmul.f32 %v8991, 0.5
    %v9040 = vtanh.pop %v5071
    %v9041 = vtanh.pop %v5073
    %v9042 = vtanh.pop %v8823
    %v9043 = vtanh.pop %v8825
    %v9044 = vtanh.pop %v5078
    %v9045 = vtanh.pop %v5080
    %v9046 = vtanh.pop %v8830
    %v9047 = vtanh.pop %v8832
    %v9048 = vtanh.pop %v5085
    %v9049 = vtanh.pop %v5087
    %v9050 = vtanh.pop %v8837
    %v9051 = vtanh.pop %v8839
    %v9052 = vtanh.pop %v5092
    %v9053 = vtanh.pop %v5094
    %v9054 = vtanh.pop %v8844
    %v9055 = vtanh.pop %v8846
    %v9056 = vld [vmem:[%s1] sm:$0xff]
    %v9057 = vld [vmem:[%s1 + $0x8] sm:$0xff]
    %v9058 = vld [vmem:[%s1 + $0x10] sm:$0xff]
    %v9059 = vld [vmem:[%s1 + $0x18] sm:$0xff]
    %v9060 = vld [vmem:[%s1 + $0x20] sm:$0xff]
    %v9061 = vld [vmem:[%s1 + $0x28] sm:$0xff]
    %v9062 = vld [vmem:[%s1 + $0x30] sm:$0xff]
    %v9063 = vld [vmem:[%s1 + $0x38] sm:$0xff]
    %v9064 = vld [vmem:[%s1 + $0x40] sm:$0xff]
    %v9065 = vld [vmem:[%s1 + $0x48] sm:$0xff]
    %v9066 = vld [vmem:[%s1 + $0x50] sm:$0xff]
    %v9067 = vld [vmem:[%s1 + $0x58] sm:$0xff]
    %v9068 = vld [vmem:[%s1 + $0x60] sm:$0xff]
    %v9069 = vld [vmem:[%s1 + $0x68] sm:$0xff]
    %v9070 = vld [vmem:[%s1 + $0x70] sm:$0xff]
    %v9071 = vld [vmem:[%s1 + $0x78] sm:$0xff]
    %v9072 = vmul.f32 %v9008, %v9056
    %v9073 = vmul.f32 %v9009, %v9057
    %v9074 = vmul.f32 %v9010, %v9058
    %v9075 = vmul.f32 %v9011, %v9059
    %v9076 = vmul.f32 %v9012, %v9060
    %v9077 = vmul.f32 %v9013, %v9061
    %v9078 = vmul.f32 %v9014, %v9062
    %v9079 = vmul.f32 %v9015, %v9063
    %v9080 = vmul.f32 %v9016, %v9064
    %v9081 = vmul.f32 %v9017, %v9065
    %v9082 = vmul.f32 %v9018, %v9066
    %v9083 = vmul.f32 %v9019, %v9067
    %v9084 = vmul.f32 %v9020, %v9068
    %v9085 = vmul.f32 %v9021, %v9069
    %v9086 = vmul.f32 %v9022, %v9070
    %v9087 = vmul.f32 %v9023, %v9071
    %v9088 = vmul.f32 %v8992, %v9040
    %v9089 = vmul.f32 %v8993, %v9041
    %v9090 = vmul.f32 %v8994, %v9042
    %v9091 = vmul.f32 %v8995, %v9043
    %v9092 = vmul.f32 %v8996, %v9044
    %v9093 = vmul.f32 %v8997, %v9045
    %v9094 = vmul.f32 %v8998, %v9046
    %v9095 = vmul.f32 %v8999, %v9047
    %v9096 = vmul.f32 %v9000, %v9048
    %v9097 = vmul.f32 %v9001, %v9049
    %v9098 = vmul.f32 %v9002, %v9050
    %v9099 = vmul.f32 %v9003, %v9051
    %v9100 = vmul.f32 %v9004, %v9052
    %v9101 = vmul.f32 %v9005, %v9053
    %v9102 = vmul.f32 %v9006, %v9054
    %v9103 = vmul.f32 %v9007, %v9055
    %v9104 = vadd.f32 %v9072, %v9088
    %v9105 = vadd.f32 %v9073, %v9089
    %v9106 = vadd.f32 %v9074, %v9090
    %v9107 = vadd.f32 %v9075, %v9091
    %v9108 = vadd.f32 %v9076, %v9092
    %v9109 = vadd.f32 %v9077, %v9093
    %v9110 = vadd.f32 %v9078, %v9094
    %v9111 = vadd.f32 %v9079, %v9095
    %v9112 = vadd.f32 %v9080, %v9096
    %v9113 = vadd.f32 %v9081, %v9097
    %v9114 = vadd.f32 %v9082, %v9098
    %v9115 = vadd.f32 %v9083, %v9099
    %v9116 = vadd.f32 %v9084, %v9100
    %v9117 = vadd.f32 %v9085, %v9101
    %v9118 = vadd.f32 %v9086, %v9102
    %v9119 = vadd.f32 %v9087, %v9103
    %v9120 = vtanh.pop %v9104
    %v9121 = vtanh.pop %v9105
    %v9122 = vtanh.pop %v9106
    %v9123 = vtanh.pop %v9107
    %v9124 = vtanh.pop %v9108
    %v9125 = vtanh.pop %v9109
    %v9126 = vtanh.pop %v9110
    %v9127 = vtanh.pop %v9111
    %v9128 = vtanh.pop %v9112
    %v9129 = vtanh.pop %v9113
    %v9130 = vtanh.pop %v9114
    %v9131 = vtanh.pop %v9115
    %v9132 = vtanh.pop %v9116
    %v9133 = vtanh.pop %v9117
    %v9134 = vtanh.pop %v9118
    %v9135 = vtanh.pop %v9119
    %v9136 = vmul.f32 %v9024, %v9120
    %v9137 = vmul.f32 %v9025, %v9121
    %v9138 = vmul.f32 %v9026, %v9122
    %v9139 = vmul.f32 %v9027, %v9123
    %v9140 = vmul.f32 %v9028, %v9124
    %v9141 = vmul.f32 %v9029, %v9125
    %v9142 = vmul.f32 %v9030, %v9126
    %v9143 = vmul.f32 %v9031, %v9127
    %v9144 = vmul.f32 %v9032, %v9128
    %v9145 = vmul.f32 %v9033, %v9129
    %v9146 = vmul.f32 %v9034, %v9130
    %v9147 = vmul.f32 %v9035, %v9131
    %v9148 = vmul.f32 %v9036, %v9132
    %v9149 = vmul.f32 %v9037, %v9133
    %v9150 = vmul.f32 %v9038, %v9134
    %v9151 = vmul.f32 %v9039, %v9135
    %9152 = vst [vmem:[#allocation5] sm:$0xff] %v9104
    %9153 = vst [vmem:[#allocation5 + $0x8] sm:$0xff] %v9105
    %9154 = vst [vmem:[#allocation5 + $0x10] sm:$0xff] %v9106
    %9155 = vst [vmem:[#allocation5 + $0x18] sm:$0xff] %v9107
    %9156 = vst [vmem:[#allocation5 + $0x20] sm:$0xff] %v9108
    %9157 = vst [vmem:[#allocation5 + $0x28] sm:$0xff] %v9109
    %9158 = vst [vmem:[#allocation5 + $0x30] sm:$0xff] %v9110
    %9159 = vst [vmem:[#allocation5 + $0x38] sm:$0xff] %v9111
    %9160 = vst [vmem:[#allocation5 + $0x40] sm:$0xff] %v9112
    %9161 = vst [vmem:[#allocation5 + $0x48] sm:$0xff] %v9113
    %9162 = vst [vmem:[#allocation5 + $0x50] sm:$0xff] %v9114
    %9163 = vst [vmem:[#allocation5 + $0x58] sm:$0xff] %v9115
    %9164 = vst [vmem:[#allocation5 + $0x60] sm:$0xff] %v9116
    %9165 = vst [vmem:[#allocation5 + $0x68] sm:$0xff] %v9117
    %9166 = vst [vmem:[#allocation5 + $0x70] sm:$0xff] %v9118
    %9167 = vst [vmem:[#allocation5 + $0x78] sm:$0xff] %v9119
    %9168 = vst [vmem:[#allocation3] sm:$0xff] %v9136
    %9169 = vst [vmem:[#allocation3 + $0x8] sm:$0xff] %v9137
    %9170 = vst [vmem:[#allocation3 + $0x10] sm:$0xff] %v9138
    %9171 = vst [vmem:[#allocation3 + $0x18] sm:$0xff] %v9139
    %9172 = vst [vmem:[#allocation3 + $0x20] sm:$0xff] %v9140
    %9173 = vst [vmem:[#allocation3 + $0x28] sm:$0xff] %v9141
    %9174 = vst [vmem:[#allocation3 + $0x30] sm:$0xff] %v9142
    %9175 = vst [vmem:[#allocation3 + $0x38] sm:$0xff] %v9143
    %9176 = vst [vmem:[#allocation3 + $0x40] sm:$0xff] %v9144
    %9177 = vst [vmem:[#allocation3 + $0x48] sm:$0xff] %v9145
    %9178 = vst [vmem:[#allocation3 + $0x50] sm:$0xff] %v9146
    %9179 = vst [vmem:[#allocation3 + $0x58] sm:$0xff] %v9147
    %9180 = vst [vmem:[#allocation3 + $0x60] sm:$0xff] %v9148
    %9181 = vst [vmem:[#allocation3 + $0x68] sm:$0xff] %v9149
    %9182 = vst [vmem:[#allocation3 + $0x70] sm:$0xff] %v9150
    %9183 = vst [vmem:[#allocation3 + $0x78] sm:$0xff] %v9151
    // Predicated region
    $region18: #{tpu_custom_call.1} parent=1 // pred_check
      _
    $region19: #{tpu_custom_call.1} parent=1 // pred_check_branch
      %9185 = sbr.rel (0) target = $region21
    $region20: #{tpu_custom_call.1} parent=1 // pred_region
      %s9187 = ssub.s32 2048, 2048
      %9188 = vsyncadd [#allocation4], %s9187
      %s9189 = sshll.u32 [#allocation3], 4
      %s9190 = int_to_ptr.vmem [resolvable:$true] %s9189
      %9195 = dma.vmem_to_hbm [thread:$0]  %s9190, 2048, %s4, [#allocation4], 512, 512, 32
    $region21: #{tpu_custom_call.1} parent=1 // pred_fallthru
      _
    // Predicated region
    $region22: #{tpu_custom_call.1} parent=1 // pred_check
      _
    $region23: #{tpu_custom_call.1} parent=1 // pred_check_branch
      %9197 = sbr.rel (0) target = $region25
    $region24: #{tpu_custom_call.1} parent=1 // pred_region
      %s9199 = ssub.s32 2048, 2048
      %9200 = vsyncadd [#allocation6], %s9199
      %s9201 = sshll.u32 [#allocation5], 4
      %s9202 = int_to_ptr.vmem [resolvable:$true] %s9201
      %9207 = dma.vmem_to_hbm [thread:$0]  %s9202, 2048, %s5, [#allocation6], 512, 512, 32
    $region25: #{tpu_custom_call.1} parent=1 // pred_fallthru
      _
    // Predicated region
    $region26: #{tpu_custom_call.1} parent=1 // pred_check
      _
    $region27: #{tpu_custom_call.1} parent=1 // pred_check_branch
      %9209 = sbr.rel (0) target = $region29
    $region28: #{tpu_custom_call.1} parent=1 // pred_region
      %9210 = dma.done [#allocation4], 2048
    $region29: #{tpu_custom_call.1} parent=1 // pred_fallthru
      _
    // Predicated region
    $region30: #{tpu_custom_call.1} parent=1 // pred_check
      _
    $region31: #{tpu_custom_call.1} parent=1 // pred_check_branch
      %9212 = sbr.rel (0) target = $region33
    $region32: #{tpu_custom_call.1} parent=1 // pred_region
      %9213 = dma.done [#allocation6], 2048
    $region33: #{tpu_custom_call.1} parent=1 // pred_fallthru
      _
    %9214 = vsyncpa [#allocation4], 1
    %9215 = vsyncpa [#allocation6], 1

</llo_original>
